<compile_context>
chip_gen: v7x
topology: tpu7x:2x2x1
jax: 0.10.0
libtpu: 0.0.40
codegen_flags: <defaults>
</compile_context>

<pallas_src>
from functools import partial

import jax
import jax.numpy as jnp
import numpy as np
from jax.experimental import pallas as pl
from jax.experimental.pallas import tpu as pltpu


_N_MHA_W = 10           # wq, bq, wk, bk, wv, bv, wfc, bfc, gamma, beta
_N_FFN_W = 6            # w1, b1, w2, b2, gamma, beta
_N_W = 2 * _N_MHA_W + _N_FFN_W


# ---------------------------------------------------------------------------
# In-kernel sub-layers (traced inline into the fused decoder kernel)
# ---------------------------------------------------------------------------
def _mha_sublayer(q_rows, kv_rows, w_refs, attn_ref, q_s, k_s, v_s, cat_s, *,
                  n_head, d_k, d_v, bb, len_q, len_k, inv_temp, ln_eps):
    """MultiHeadAttention (QKV proj + attention + fc + residual + LayerNorm)
    on a (bb*len_q, d_model) row slab.  Dropouts are identity (eval mode)."""
    wq, bq, wk, bk, wv, bv, wfc, bfc, gamma, beta = [r[...] for r in w_refs]
    bf16 = jnp.bfloat16
    rows_q = bb * len_q
    rows_k = bb * len_k

    # --- Q/K/V projections: wide MXU matmuls over all rows & heads at once ---
    # bf16 operands, f32 accumulation (bf16-native MXUs on v5e/v6e/v7x).
    q_bf = q_rows.astype(bf16)
    kv_bf = kv_rows.astype(bf16)
    # Full-width, lane-dense stores to the VMEM slabs (no narrow masked vst);
    # 1/temperature is folded into Q once (cheaper than scaling (Lq,Lk) scores).
    q_s[...] = (jnp.dot(q_bf, wq, preferred_element_type=jnp.float32) + bq) * inv_temp
    k_s[0:rows_k, :] = jnp.dot(kv_bf, wk, preferred_element_type=jnp.float32) + bk
    v_s[0:rows_k, :] = jnp.dot(kv_bf, wv, preferred_element_type=jnp.float32) + bv

    # --- per-head attention, batched over the bb batch elements -------------
    for h in range(n_head):
        # Per-head tiles come out of the slabs as cheap lane-window loads.
        qh = q_s[:, h * d_k:(h + 1) * d_k].reshape(bb, len_q, d_k).astype(bf16)
        kh = k_s[0:rows_k, h * d_k:(h + 1) * d_k].reshape(bb, len_k, d_k).astype(bf16)
        vh = v_s[0:rows_k, h * d_v:(h + 1) * d_v].reshape(bb, len_k, d_v).astype(bf16)

        # scores: one batched contraction, no explicit K transpose.
        s = jax.lax.dot_general(qh, kh, (((2,), (2,)), ((0,), (0,))),
                                preferred_element_type=jnp.float32)   # (bb,Lq,Lk)
        s = s - jnp.max(s, axis=-1, keepdims=True)
        e = jnp.exp(s)
        # One approximate (EUP-slot) reciprocal per row instead of a divide.
        p = e * pl.reciprocal(jnp.sum(e, axis=-1, keepdims=True), approx=True)

        # PV matmul with bf16 probabilities (stats stayed in f32).
        ctx = jax.lax.dot_general(p.astype(bf16), vh,
                                  (((2,), (1,)), ((0,), (0,))),
                                  preferred_element_type=jnp.float32)  # (bb,Lq,dv)

        # Head concat via a single window store per head (one pass over ctx;
        # replaces the old 5x(bb*n_head) narrow-store relayout loops).
        cat_s[:, h * d_v:(h + 1) * d_v] = ctx.reshape(rows_q, d_v)
        if attn_ref is not None:
            attn_ref[:, h * len_k:(h + 1) * len_k] = (
                p.reshape(rows_q, len_k).astype(attn_ref.dtype))

    # --- output projection + residual + LayerNorm on the full row slab ------
    proj = jnp.dot(cat_s[...].astype(bf16), wfc,
                   preferred_element_type=jnp.float32) + bfc
    x = proj + q_rows                       # residual (dropout = identity)
    mean = jnp.mean(x, axis=-1, keepdims=True)
    xc = x - mean
    var = jnp.mean(xc * xc, axis=-1, keepdims=True)
    return xc * jax.lax.rsqrt(var + ln_eps) * gamma + beta


def _ffn_sublayer(x_rows, w_refs, *, ln_eps):
    """PositionwiseFeedForward (1x1 convs == linears) + residual + LayerNorm."""
    w1, b1, w2, b2, gamma, beta = [r[...] for r in w_refs]
    bf16 = jnp.bfloat16
    h = jnp.dot(x_rows.astype(bf16), w1, preferred_element_type=jnp.float32) + b1
    h = jnp.maximum(h, 0.0)                                 # ReLU
    o = jnp.dot(h.astype(bf16), w2, preferred_element_type=jnp.float32) + b2
    y = o + x_rows                                          # residual
    mean = jnp.mean(y, axis=-1, keepdims=True)
    yc = y - mean
    var = jnp.mean(yc * yc, axis=-1, keepdims=True)
    return yc * jax.lax.rsqrt(var + ln_eps) * gamma + beta


def _decoder_layer_kernel(dec_ref, enc_ref, *refs, n_head, d_k, d_v, bb,
                          len_dec, len_enc, inv_temp, ln_eps, emit_attn):
    w = refs[:_N_W]
    n_out = 3 if emit_attn else 1
    outs = refs[_N_W:_N_W + n_out]
    q_s, k_s, v_s, cat_s = refs[_N_W + n_out:]
    slf_w = w[0:_N_MHA_W]
    enc_w = w[_N_MHA_W:2 * _N_MHA_W]
    ffn_w = w[2 * _N_MHA_W:]
    if emit_attn:
        out_ref, slf_attn_ref, enc_attn_ref = outs
    else:
        (out_ref,) = outs
        slf_attn_ref = enc_attn_ref = None

    dec_rows = dec_ref[...]                                 # (bb*len_dec, d_model)
    enc_rows = enc_ref[...]                                 # (bb*len_enc, d_model)

    # Self attention: MHA(dec, dec, dec)
    dec1 = _mha_sublayer(dec_rows, dec_rows, slf_w, slf_attn_ref,
                         q_s, k_s, v_s, cat_s, n_head=n_head, d_k=d_k, d_v=d_v,
                         bb=bb, len_q=len_dec, len_k=len_dec,
                         inv_temp=inv_temp, ln_eps=ln_eps)
    # Encoder-decoder attention: MHA(dec1, enc, enc)
    dec2 = _mha_sublayer(dec1, enc_rows, enc_w, enc_attn_ref,
                         q_s, k_s, v_s, cat_s, n_head=n_head, d_k=d_k, d_v=d_v,
                         bb=bb, len_q=len_dec, len_k=len_enc,
                         inv_temp=inv_temp, ln_eps=ln_eps)
    # Position-wise feed-forward
    dec3 = _ffn_sublayer(dec2, ffn_w, ln_eps=ln_eps)
    out_ref[...] = dec3.astype(out_ref.dtype)


# ---------------------------------------------------------------------------
# Wrapper
# ---------------------------------------------------------------------------
def _flatten_mha(p):
    return [p["wq"], p["bq"], p["wk"], p["bk"], p["wv"], p["bv"],
            p["wfc"], p["bfc"], p["gamma"], p["beta"]]


def _flatten_ffn(p):
    return [p["w1"], p["b1"], p["w2"], p["b2"], p["gamma"], p["beta"]]


def _pick_batch_block(sz_b, len_dec, len_enc):
    # Prefer a grid with >= 2 steps (both v7x TensorCores get work), using the
    # largest batch block whose row slabs stay sublane aligned (multiple of 16
    # covers the f32 activations and the bf16 attention output slabs alike).
    for n_blocks in range(2, sz_b + 1):
        if sz_b % n_blocks:
            continue
        bb = sz_b // n_blocks
        if (bb * len_dec) % 16 == 0 and (bb * len_enc) % 16 == 0:
            return bb
    return sz_b


def _vmem_limit_bytes():
    # Generation-aware VMEM budget: ~85% of physical capacity
    # (v5e/v6e: 128 MiB -> ~109 MiB, v7x: 64 MiB -> ~54 MiB).
    try:
        cap = pltpu.get_tpu_info().vmem_capacity_bytes
    except Exception:
        cap = 64 * 1024 * 1024
    return int(cap * 0.85)


def _attn_to_head_major(attn2d, sz_b, len_q, n_head, len_k):
    # Recover PyTorch's (n_head*sz_b, len_q, len_k) layout (free XLA plumbing).
    return jnp.transpose(attn2d.reshape(sz_b, len_q, n_head, len_k),
                         (2, 0, 1, 3)).reshape(n_head * sz_b, len_q, len_k)


def decoder_layer(dec_input, enc_output, params, *, n_head, d_k, d_v,
                  batch_block=None, with_attn=True, attn_dtype=jnp.bfloat16):
    sz_b, len_dec, d_model = dec_input.shape
    sz_b2, len_enc, d_model2 = enc_output.shape
    assert sz_b2 == sz_b and d_model2 == d_model

    bb = _pick_batch_block(sz_b, len_dec, len_enc) if batch_block is None \
        else batch_block
    assert sz_b % bb == 0, "batch_block must divide the batch size"
    n_blocks = sz_b // bb
    rows_dec = bb * len_dec
    rows_enc = bb * len_enc
    if n_blocks > 1:
        # (8,128) rule: blocked row dims must be sublane multiples; 16 covers
        # both the f32 activation slabs and the bf16 attention output slabs.
        assert rows_dec % 16 == 0 and rows_enc % 16 == 0, (
            "batch_block * seq_len must be a multiple of 16 when the grid has "
            "more than one step")

    inv_temp = float(1.0 / np.sqrt(d_k))
    dec2d = dec_input.reshape(sz_b * len_dec, d_model)
    enc2d = enc_output.reshape(sz_b * len_enc, d_model)

    weights = (_flatten_mha(params["slf_attn"]) + _flatten_mha(params["enc_attn"])
               + _flatten_ffn(params["pos_ffn"]))

    kernel = partial(_decoder_layer_kernel, n_head=n_head, d_k=d_k, d_v=d_v,
                     bb=bb, len_dec=len_dec, len_enc=len_enc,
                     inv_temp=inv_temp, ln_eps=1e-5, emit_attn=with_attn)

    out_shape = [jax.ShapeDtypeStruct((sz_b * len_dec, d_model), jnp.float32)]
    out_specs = [pl.BlockSpec((rows_dec, d_model), lambda i: (i, 0))]
    if with_attn:
        out_shape += [
            jax.ShapeDtypeStruct((sz_b * len_dec, n_head * len_dec), attn_dtype),
            jax.ShapeDtypeStruct((sz_b * len_dec, n_head * len_enc), attn_dtype)]
        out_specs += [
            pl.BlockSpec((rows_dec, n_head * len_dec), lambda i: (i, 0)),
            pl.BlockSpec((rows_dec, n_head * len_enc), lambda i: (i, 0))]

    rows_kv = bb * max(len_dec, len_enc)
    scratch_shapes = [
        pltpu.VMEM((rows_dec, n_head * d_k), jnp.float32),   # Q slab
        pltpu.VMEM((rows_kv, n_head * d_k), jnp.float32),    # K slab
        pltpu.VMEM((rows_kv, n_head * d_v), jnp.float32),    # V slab
        pltpu.VMEM((rows_dec, n_head * d_v), jnp.float32),   # concat(ctx) slab
    ]

    def run(weight_buffered):
        def const_spec(shape):
            if weight_buffered:
                # Constant-index weight blocks only need a single VMEM buffer.
                return pl.BlockSpec(shape, lambda i: (0, 0),
                                    pipeline_mode=pl.Buffered(1))
            return pl.BlockSpec(shape, lambda i: (0, 0))

        in_specs = ([pl.BlockSpec((rows_dec, d_model), lambda i: (i, 0)),
                     pl.BlockSpec((rows_enc, d_model), lambda i: (i, 0))]
                    + [const_spec(w.shape) for w in weights])
        return pl.pallas_call(
            kernel,
            grid=(n_blocks,),
            in_specs=in_specs,
            out_specs=out_specs,
            out_shape=out_shape,
            scratch_shapes=scratch_shapes,
            compiler_params=pltpu.CompilerParams(
                dimension_semantics=("parallel",),
                vmem_limit_bytes=_vmem_limit_bytes()),
        )(dec2d, enc2d, *weights)

    try:
        outs = run(weight_buffered=True)
    except Exception:
        # Fallback for jax builds that reject Buffered(1) on this path.
        outs = run(weight_buffered=False)

    dec_out = outs[0].reshape(sz_b, len_dec, d_model)
    if not with_attn:
        return dec_out, None, None
    slf_attn = _attn_to_head_major(outs[1], sz_b, len_dec, n_head, len_dec)
    enc_attn = _attn_to_head_major(outs[2], sz_b, len_dec, n_head, len_enc)
    return dec_out, slf_attn, enc_attn


# ---------------------------------------------------------------------------
# Pure-JAX reference mirroring the PyTorch forward (eval mode) with the same
# bf16 matmul operand casts as the kernel (f32 softmax / LayerNorm stats).
# ---------------------------------------------------------------------------
def _bf16_matmul(a, b):
    return jnp.dot(a.astype(jnp.bfloat16), b.astype(jnp.bfloat16),
                   preferred_element_type=jnp.float32)


def _layer_norm(x, gamma, beta, eps=1e-5):
    mean = jnp.mean(x, axis=-1, keepdims=True)
    var = jnp.mean((x - mean) ** 2, axis=-1, keepdims=True)
    return (x - mean) / jnp.sqrt(var + eps) * gamma + beta


def _mha_reference(q, k, v, p, *, n_head, d_k, d_v):
    sz_b, len_q, d_model = q.shape
    len_k = k.shape[1]
    bf = jnp.bfloat16
    Q = (_bf16_matmul(q.reshape(-1, d_model), p["wq"]) + p["bq"]) / np.power(d_k, 0.5)
    K = _bf16_matmul(k.reshape(-1, d_model), p["wk"]) + p["bk"]
    V = _bf16_matmul(v.reshape(-1, d_model), p["wv"]) + p["bv"]
    Q = Q.reshape(sz_b, len_q, n_head, d_k).transpose(0, 2, 1, 3)
    K = K.reshape(sz_b, len_k, n_head, d_k).transpose(0, 2, 1, 3)
    V = V.reshape(sz_b, len_k, n_head, d_v).transpose(0, 2, 1, 3)
    s = jnp.einsum("bhqd,bhkd->bhqk", Q.astype(bf), K.astype(bf),
                   preferred_element_type=jnp.float32)
    attn = jax.nn.softmax(s, axis=-1)
    ctx = jnp.einsum("bhqk,bhkd->bhqd", attn.astype(bf), V.astype(bf),
                     preferred_element_type=jnp.float32)
    cat = ctx.transpose(0, 2, 1, 3).reshape(sz_b * len_q, n_head * d_v)
    o = (_bf16_matmul(cat, p["wfc"]) + p["bfc"]).reshape(sz_b, len_q, d_model)
    out = _layer_norm(o + q, p["gamma"], p["beta"])
    attn_hm = attn.transpose(1, 0, 2, 3).reshape(n_head * sz_b, len_q, len_k)
    return out, attn_hm


def _ffn_reference(x, p):
    sz_b, L, d_model = x.shape
    x2 = x.reshape(-1, d_model)
    h = jnp.maximum(_bf16_matmul(x2, p["w1"]) + p["b1"], 0.0)
    o = _bf16_matmul(h, p["w2"]) + p["b2"]
    return _layer_norm((o + x2).reshape(sz_b, L, d_model), p["gamma"], p["beta"])


def _decoder_reference(dec_input, enc_output, params, *, n_head, d_k, d_v):
    d1, a1 = _mha_reference(dec_input, dec_input, dec_input,
                            params["slf_attn"], n_head=n_head, d_k=d_k, d_v=d_v)
    d2, a2 = _mha_reference(d1, enc_output, enc_output,
                            params["enc_attn"], n_head=n_head, d_k=d_k, d_v=d_v)
    d3 = _ffn_reference(d2, params["pos_ffn"])
    return d3, a1, a2


# ---------------------------------------------------------------------------
# Parameter construction (matmul weights stored as bf16, biases/LN in f32)
# ---------------------------------------------------------------------------
def make_mha_params(key, d_model, n_head, d_k, d_v):
    ks = jax.random.split(key, 8)
    std_qk = np.sqrt(2.0 / (d_model + d_k))
    std_v = np.sqrt(2.0 / (d_model + d_v))
    std_fc = np.sqrt(2.0 / (n_head * d_v + d_model))
    b_in = 1.0 / np.sqrt(d_model)
    b_fc = 1.0 / np.sqrt(n_head * d_v)
    bf = jnp.bfloat16
    return {
        "wq": (std_qk * jax.random.normal(ks[0], (d_model, n_head * d_k), jnp.float32)).astype(bf),
        "bq": jax.random.uniform(ks[1], (1, n_head * d_k), jnp.float32, -b_in, b_in),
        "wk": (std_qk * jax.random.normal(ks[2], (d_model, n_head * d_k), jnp.float32)).astype(bf),
        "bk": jax.random.uniform(ks[3], (1, n_head * d_k), jnp.float32, -b_in, b_in),
        "wv": (std_v * jax.random.normal(ks[4], (d_model, n_head * d_v), jnp.float32)).astype(bf),
        "bv": jax.random.uniform(ks[5], (1, n_head * d_v), jnp.float32, -b_in, b_in),
        "wfc": (std_fc * jax.random.normal(ks[6], (n_head * d_v, d_model), jnp.float32)).astype(bf),
        "bfc": jax.random.uniform(ks[7], (1, d_model), jnp.float32, -b_fc, b_fc),
        "gamma": jnp.ones((1, d_model), jnp.float32),
        "beta": jnp.zeros((1, d_model), jnp.float32),
    }


def make_ffn_params(key, d_model, d_inner):
    ks = jax.random.split(key, 4)
    s = np.sqrt(2.0 / (d_model + d_inner))
    bf = jnp.bfloat16
    return {
        "w1": (s * jax.random.normal(ks[0], (d_model, d_inner), jnp.float32)).astype(bf),
        "b1": 0.1 * jax.random.normal(ks[1], (1, d_inner), jnp.float32),
        "w2": (s * jax.random.normal(ks[2], (d_inner, d_model), jnp.float32)).astype(bf),
        "b2": 0.1 * jax.random.normal(ks[3], (1, d_model), jnp.float32),
        "gamma": jnp.ones((1, d_model), jnp.float32),
        "beta": jnp.zeros((1, d_model), jnp.float32),
    }


if __name__ == "__main__":
    sz_b, seq_len, d_model = 2, 16, 32
    n_head, d_k, d_v, d_inner = 4, 8, 8, 64

    key = jax.random.PRNGKey(0)
    k_dec, k_enc, k1, k2, k3 = jax.random.split(key, 5)
    dec_input = jax.random.normal(k_dec, (sz_b, seq_len, d_model), jnp.float32)
    enc_output = jax.random.normal(k_enc, (sz_b, seq_len, d_model), jnp.float32)
    params = {
        "slf_attn": make_mha_params(k1, d_model, n_head, d_k, d_v),
        "enc_attn": make_mha_params(k2, d_model, n_head, d_k, d_v),
        "pos_ffn": make_ffn_params(k3, d_model, d_inner),
    }

    dec_out, slf_attn, enc_attn = decoder_layer(
        dec_input, enc_output, params, n_head=n_head, d_k=d_k, d_v=d_v)
    dec_out = jax.block_until_ready(dec_out)
    slf_attn = jax.block_until_ready(slf_attn)
    enc_attn = jax.block_until_ready(enc_attn)

    ref_out, ref_slf, ref_enc = _decoder_reference(
        dec_input, enc_output, params, n_head=n_head, d_k=d_k, d_v=d_v)

    tol = dict(rtol=3e-2, atol=3e-2)   # bf16 matmuls / bf16 attn / approx recip
    np.testing.assert_allclose(np.asarray(dec_out.astype(jnp.float32)),
                               np.asarray(ref_out.astype(jnp.float32)), **tol)
    np.testing.assert_allclose(np.asarray(slf_attn.astype(jnp.float32)),
                               np.asarray(ref_slf.astype(jnp.float32)), **tol)
    np.testing.assert_allclose(np.asarray(enc_attn.astype(jnp.float32)),
                               np.asarray(ref_enc.astype(jnp.float32)), **tol)

    print("KERNEL_OK")
</pallas_src>

<mosaic_0001>
module attributes {stable_mosaic.version = 11 : i64} {
  func.func @_decoder_layer_kernel(%arg0: i32, %arg1: memref<16x32xf32, #tpu.memory_space<vmem>>, %arg2: memref<16x32xf32, #tpu.memory_space<vmem>>, %arg3: memref<32x32xbf16, #tpu.memory_space<vmem>>, %arg4: memref<1x32xf32, #tpu.memory_space<vmem>>, %arg5: memref<32x32xbf16, #tpu.memory_space<vmem>>, %arg6: memref<1x32xf32, #tpu.memory_space<vmem>>, %arg7: memref<32x32xbf16, #tpu.memory_space<vmem>>, %arg8: memref<1x32xf32, #tpu.memory_space<vmem>>, %arg9: memref<32x32xbf16, #tpu.memory_space<vmem>>, %arg10: memref<1x32xf32, #tpu.memory_space<vmem>>, %arg11: memref<1x32xf32, #tpu.memory_space<vmem>>, %arg12: memref<1x32xf32, #tpu.memory_space<vmem>>, %arg13: memref<32x32xbf16, #tpu.memory_space<vmem>>, %arg14: memref<1x32xf32, #tpu.memory_space<vmem>>, %arg15: memref<32x32xbf16, #tpu.memory_space<vmem>>, %arg16: memref<1x32xf32, #tpu.memory_space<vmem>>, %arg17: memref<32x32xbf16, #tpu.memory_space<vmem>>, %arg18: memref<1x32xf32, #tpu.memory_space<vmem>>, %arg19: memref<32x32xbf16, #tpu.memory_space<vmem>>, %arg20: memref<1x32xf32, #tpu.memory_space<vmem>>, %arg21: memref<1x32xf32, #tpu.memory_space<vmem>>, %arg22: memref<1x32xf32, #tpu.memory_space<vmem>>, %arg23: memref<32x64xbf16, #tpu.memory_space<vmem>>, %arg24: memref<1x64xf32, #tpu.memory_space<vmem>>, %arg25: memref<64x32xbf16, #tpu.memory_space<vmem>>, %arg26: memref<1x32xf32, #tpu.memory_space<vmem>>, %arg27: memref<1x32xf32, #tpu.memory_space<vmem>>, %arg28: memref<1x32xf32, #tpu.memory_space<vmem>>, %arg29: memref<16x32xf32, #tpu.memory_space<vmem>>, %arg30: memref<16x64xbf16, #tpu.memory_space<vmem>>, %arg31: memref<16x64xbf16, #tpu.memory_space<vmem>>, %arg32: memref<16x32xf32, #tpu.memory_space<vmem>>, %arg33: memref<16x32xf32, #tpu.memory_space<vmem>>, %arg34: memref<16x32xf32, #tpu.memory_space<vmem>>, %arg35: memref<16x32xf32, #tpu.memory_space<vmem>>) attributes {dimension_semantics = [#tpu.dimension_semantics<parallel>], iteration_bounds = array<i64: 2>, scalar_prefetch = 0 : i64, scratch_operands = 4 : i64, tpu.core_type = #tpu.core_type<tc>, window_params = [{transform_indices = @transform_0, window_bounds = array<i64: 16, 32>}, {transform_indices = @transform_1, window_bounds = array<i64: 16, 32>}, {pipeline_mode = #tpu.pipeline_mode<synchronous>, transform_indices = @transform_2, window_bounds = array<i64: 32, 32>}, {pipeline_mode = #tpu.pipeline_mode<synchronous>, transform_indices = @transform_3, window_bounds = array<i64: 1, 32>}, {pipeline_mode = #tpu.pipeline_mode<synchronous>, transform_indices = @transform_4, window_bounds = array<i64: 32, 32>}, {pipeline_mode = #tpu.pipeline_mode<synchronous>, transform_indices = @transform_5, window_bounds = array<i64: 1, 32>}, {pipeline_mode = #tpu.pipeline_mode<synchronous>, transform_indices = @transform_6, window_bounds = array<i64: 32, 32>}, {pipeline_mode = #tpu.pipeline_mode<synchronous>, transform_indices = @transform_7, window_bounds = array<i64: 1, 32>}, {pipeline_mode = #tpu.pipeline_mode<synchronous>, transform_indices = @transform_8, window_bounds = array<i64: 32, 32>}, {pipeline_mode = #tpu.pipeline_mode<synchronous>, transform_indices = @transform_9, window_bounds = array<i64: 1, 32>}, {pipeline_mode = #tpu.pipeline_mode<synchronous>, transform_indices = @transform_10, window_bounds = array<i64: 1, 32>}, {pipeline_mode = #tpu.pipeline_mode<synchronous>, transform_indices = @transform_11, window_bounds = array<i64: 1, 32>}, {pipeline_mode = #tpu.pipeline_mode<synchronous>, transform_indices = @transform_12, window_bounds = array<i64: 32, 32>}, {pipeline_mode = #tpu.pipeline_mode<synchronous>, transform_indices = @transform_13, window_bounds = array<i64: 1, 32>}, {pipeline_mode = #tpu.pipeline_mode<synchronous>, transform_indices = @transform_14, window_bounds = array<i64: 32, 32>}, {pipeline_mode = #tpu.pipeline_mode<synchronous>, transform_indices = @transform_15, window_bounds = array<i64: 1, 32>}, {pipeline_mode = #tpu.pipeline_mode<synchronous>, transform_indices = @transform_16, window_bounds = array<i64: 32, 32>}, {pipeline_mode = #tpu.pipeline_mode<synchronous>, transform_indices = @transform_17, window_bounds = array<i64: 1, 32>}, {pipeline_mode = #tpu.pipeline_mode<synchronous>, transform_indices = @transform_18, window_bounds = array<i64: 32, 32>}, {pipeline_mode = #tpu.pipeline_mode<synchronous>, transform_indices = @transform_19, window_bounds = array<i64: 1, 32>}, {pipeline_mode = #tpu.pipeline_mode<synchronous>, transform_indices = @transform_20, window_bounds = array<i64: 1, 32>}, {pipeline_mode = #tpu.pipeline_mode<synchronous>, transform_indices = @transform_21, window_bounds = array<i64: 1, 32>}, {pipeline_mode = #tpu.pipeline_mode<synchronous>, transform_indices = @transform_22, window_bounds = array<i64: 32, 64>}, {pipeline_mode = #tpu.pipeline_mode<synchronous>, transform_indices = @transform_23, window_bounds = array<i64: 1, 64>}, {pipeline_mode = #tpu.pipeline_mode<synchronous>, transform_indices = @transform_24, window_bounds = array<i64: 64, 32>}, {pipeline_mode = #tpu.pipeline_mode<synchronous>, transform_indices = @transform_25, window_bounds = array<i64: 1, 32>}, {pipeline_mode = #tpu.pipeline_mode<synchronous>, transform_indices = @transform_26, window_bounds = array<i64: 1, 32>}, {pipeline_mode = #tpu.pipeline_mode<synchronous>, transform_indices = @transform_27, window_bounds = array<i64: 1, 32>}, {transform_indices = @transform_28, window_bounds = array<i64: 16, 32>}, {transform_indices = @transform_29, window_bounds = array<i64: 16, 64>}, {transform_indices = @transform_30, window_bounds = array<i64: 16, 64>}]} {
    %c0 = arith.constant 0 : index
    %c0_0 = arith.constant 0 : index
    %0 = vector.load %arg1[%c0, %c0_0] : memref<16x32xf32, #tpu.memory_space<vmem>>, vector<16x32xf32>
    %c0_1 = arith.constant 0 : index
    %c0_2 = arith.constant 0 : index
    %1 = vector.load %arg2[%c0_1, %c0_2] : memref<16x32xf32, #tpu.memory_space<vmem>>, vector<16x32xf32>
    %c0_3 = arith.constant 0 : index
    %c0_4 = arith.constant 0 : index
    %2 = vector.load %arg3[%c0_3, %c0_4] : memref<32x32xbf16, #tpu.memory_space<vmem>>, vector<32x32xbf16>
    %c0_5 = arith.constant 0 : index
    %c0_6 = arith.constant 0 : index
    %3 = vector.load %arg4[%c0_5, %c0_6] : memref<1x32xf32, #tpu.memory_space<vmem>>, vector<1x32xf32>
    %c0_7 = arith.constant 0 : index
    %c0_8 = arith.constant 0 : index
    %4 = vector.load %arg5[%c0_7, %c0_8] : memref<32x32xbf16, #tpu.memory_space<vmem>>, vector<32x32xbf16>
    %c0_9 = arith.constant 0 : index
    %c0_10 = arith.constant 0 : index
    %5 = vector.load %arg6[%c0_9, %c0_10] : memref<1x32xf32, #tpu.memory_space<vmem>>, vector<1x32xf32>
    %c0_11 = arith.constant 0 : index
    %c0_12 = arith.constant 0 : index
    %6 = vector.load %arg7[%c0_11, %c0_12] : memref<32x32xbf16, #tpu.memory_space<vmem>>, vector<32x32xbf16>
    %c0_13 = arith.constant 0 : index
    %c0_14 = arith.constant 0 : index
    %7 = vector.load %arg8[%c0_13, %c0_14] : memref<1x32xf32, #tpu.memory_space<vmem>>, vector<1x32xf32>
    %c0_15 = arith.constant 0 : index
    %c0_16 = arith.constant 0 : index
    %8 = vector.load %arg9[%c0_15, %c0_16] : memref<32x32xbf16, #tpu.memory_space<vmem>>, vector<32x32xbf16>
    %c0_17 = arith.constant 0 : index
    %c0_18 = arith.constant 0 : index
    %9 = vector.load %arg10[%c0_17, %c0_18] : memref<1x32xf32, #tpu.memory_space<vmem>>, vector<1x32xf32>
    %c0_19 = arith.constant 0 : index
    %c0_20 = arith.constant 0 : index
    %10 = vector.load %arg11[%c0_19, %c0_20] : memref<1x32xf32, #tpu.memory_space<vmem>>, vector<1x32xf32>
    %c0_21 = arith.constant 0 : index
    %c0_22 = arith.constant 0 : index
    %11 = vector.load %arg12[%c0_21, %c0_22] : memref<1x32xf32, #tpu.memory_space<vmem>>, vector<1x32xf32>
    %12 = arith.truncf %0 : vector<16x32xf32> to vector<16x32xbf16>
    %13 = arith.truncf %0 : vector<16x32xf32> to vector<16x32xbf16>
    %cst = arith.constant dense<0.000000e+00> : vector<16x32xf32>
    %14 = tpu.matmul %12, %2, %cst {dimension_numbers = #tpu.dot_dimension_numbers<[1], [0], [0], [1], [0, 0, 1, 1], [], []>} : vector<16x32xbf16>, vector<32x32xbf16>, vector<16x32xf32> -> vector<16x32xf32>
    %15 = vector.broadcast %3 : vector<1x32xf32> to vector<16x32xf32>
    %16 = arith.addf %14, %15 : vector<16x32xf32>
    %cst_23 = arith.constant 0.353553385 : f32
    %17 = vector.broadcast %cst_23 : f32 to vector<16x32xf32>
    %18 = arith.mulf %16, %17 : vector<16x32xf32>
    %c0_24 = arith.constant 0 : index
    %c0_25 = arith.constant 0 : index
    %19 = vector.load %arg32[%c0_24, %c0_25] : memref<16x32xf32, #tpu.memory_space<vmem>>, vector<16x32xf32>
    tpu.vector_store %arg32[%c0_24, %c0_25], %18 {strides = array<i32>} : memref<16x32xf32, #tpu.memory_space<vmem>>, vector<16x32xf32>,
    %cst_26 = arith.constant dense<0.000000e+00> : vector<16x32xf32>
    %20 = tpu.matmul %13, %4, %cst_26 {dimension_numbers = #tpu.dot_dimension_numbers<[1], [0], [0], [1], [0, 0, 1, 1], [], []>} : vector<16x32xbf16>, vector<32x32xbf16>, vector<16x32xf32> -> vector<16x32xf32>
    %21 = vector.broadcast %5 : vector<1x32xf32> to vector<16x32xf32>
    %22 = arith.addf %20, %21 : vector<16x32xf32>
    %c0_27 = arith.constant 0 : index
    %c0_28 = arith.constant 0 : index
    %23 = vector.load %arg33[%c0_27, %c0_28] : memref<16x32xf32, #tpu.memory_space<vmem>>, vector<16x32xf32>
    tpu.vector_store %arg33[%c0_27, %c0_28], %22 {strides = array<i32>} : memref<16x32xf32, #tpu.memory_space<vmem>>, vector<16x32xf32>,
    %cst_29 = arith.constant dense<0.000000e+00> : vector<16x32xf32>
    %24 = tpu.matmul %13, %6, %cst_29 {dimension_numbers = #tpu.dot_dimension_numbers<[1], [0], [0], [1], [0, 0, 1, 1], [], []>} : vector<16x32xbf16>, vector<32x32xbf16>, vector<16x32xf32> -> vector<16x32xf32>
    %25 = vector.broadcast %7 : vector<1x32xf32> to vector<16x32xf32>
    %26 = arith.addf %24, %25 : vector<16x32xf32>
    %c0_30 = arith.constant 0 : index
    %c0_31 = arith.constant 0 : index
    %27 = vector.load %arg34[%c0_30, %c0_31] : memref<16x32xf32, #tpu.memory_space<vmem>>, vector<16x32xf32>
    tpu.vector_store %arg34[%c0_30, %c0_31], %26 {strides = array<i32>} : memref<16x32xf32, #tpu.memory_space<vmem>>, vector<16x32xf32>,
    %c0_32 = arith.constant 0 : index
    %c0_33 = arith.constant 0 : index
    %28 = vector.load %arg32[%c0_32, %c0_33] : memref<16x32xf32, #tpu.memory_space<vmem>>, vector<16x8xf32>
    %29 = vector.shape_cast %28 : vector<16x8xf32> to vector<1x16x8xf32>
    %30 = arith.truncf %29 : vector<1x16x8xf32> to vector<1x16x8xbf16>
    %c0_34 = arith.constant 0 : index
    %c0_35 = arith.constant 0 : index
    %31 = vector.load %arg33[%c0_34, %c0_35] : memref<16x32xf32, #tpu.memory_space<vmem>>, vector<16x8xf32>
    %32 = vector.shape_cast %31 : vector<16x8xf32> to vector<1x16x8xf32>
    %33 = arith.truncf %32 : vector<1x16x8xf32> to vector<1x16x8xbf16>
    %c0_36 = arith.constant 0 : index
    %c0_37 = arith.constant 0 : index
    %34 = vector.load %arg34[%c0_36, %c0_37] : memref<16x32xf32, #tpu.memory_space<vmem>>, vector<16x8xf32>
    %35 = vector.shape_cast %34 : vector<16x8xf32> to vector<1x16x8xf32>
    %36 = arith.truncf %35 : vector<1x16x8xf32> to vector<1x16x8xbf16>
    %cst_38 = arith.constant dense<0.000000e+00> : vector<1x16x16xf32>
    %37 = tpu.matmul %30, %33, %cst_38 {dimension_numbers = #tpu.dot_dimension_numbers<[2], [2], [1], [1], [0, 0, 0, 1, 1, 1], [0], [0]>} : vector<1x16x8xbf16>, vector<1x16x8xbf16>, vector<1x16x16xf32> -> vector<1x16x16xf32>
    %cst_39 = arith.constant dense<0xFF800000> : vector<1x16xf32>
    %38 = vector.multi_reduction <maximumf>, %37, %cst_39 [2] : vector<1x16x16xf32> to vector<1x16xf32>
    %39 = vector.shape_cast %38 : vector<1x16xf32> to vector<1x16x1xf32>
    %40 = vector.broadcast %39 : vector<1x16x1xf32> to vector<1x16x16xf32>
    %41 = arith.subf %37, %40 : vector<1x16x16xf32>
    %42 = math.exp %41 : vector<1x16x16xf32>
    %cst_40 = arith.constant dense<0.000000e+00> : vector<1x16xf32>
    %43 = vector.multi_reduction <add>, %42, %cst_40 [2] : vector<1x16x16xf32> to vector<1x16xf32>
    %44 = vector.shape_cast %43 : vector<1x16xf32> to vector<1x16x1xf32>
    %45 = tpu.reciprocal %44 {approx = true} : vector<1x16x1xf32> -> vector<1x16x1xf32>
    %46 = vector.broadcast %45 : vector<1x16x1xf32> to vector<1x16x16xf32>
    %47 = arith.mulf %42, %46 : vector<1x16x16xf32>
    %48 = arith.truncf %47 : vector<1x16x16xf32> to vector<1x16x16xbf16>
    %cst_41 = arith.constant dense<0.000000e+00> : vector<1x16x8xf32>
    %49 = tpu.matmul %48, %36, %cst_41 {dimension_numbers = #tpu.dot_dimension_numbers<[2], [1], [1], [2], [0, 0, 0, 1, 1, 2], [0], [0]>} : vector<1x16x16xbf16>, vector<1x16x8xbf16>, vector<1x16x8xf32> -> vector<1x16x8xf32>
    %50 = vector.shape_cast %49 : vector<1x16x8xf32> to vector<16x8xf32>
    %c0_42 = arith.constant 0 : index
    %c0_43 = arith.constant 0 : index
    %51 = vector.load %arg35[%c0_42, %c0_43] : memref<16x32xf32, #tpu.memory_space<vmem>>, vector<16x8xf32>
    tpu.vector_store %arg35[%c0_42, %c0_43], %50 {strides = array<i32>} : memref<16x32xf32, #tpu.memory_space<vmem>>, vector<16x8xf32>,
    %52 = vector.shape_cast %47 : vector<1x16x16xf32> to vector<16x16xf32>
    %53 = arith.truncf %52 : vector<16x16xf32> to vector<16x16xbf16>
    %c0_44 = arith.constant 0 : index
    %c0_45 = arith.constant 0 : index
    %54 = vector.load %arg30[%c0_44, %c0_45] : memref<16x64xbf16, #tpu.memory_space<vmem>>, vector<16x16xbf16>
    tpu.vector_store %arg30[%c0_44, %c0_45], %53 {strides = array<i32>} : memref<16x64xbf16, #tpu.memory_space<vmem>>, vector<16x16xbf16>,
    %c0_46 = arith.constant 0 : index
    %c8 = arith.constant 8 : index
    %55 = vector.load %arg32[%c0_46, %c8] : memref<16x32xf32, #tpu.memory_space<vmem>>, vector<16x8xf32>
    %56 = vector.shape_cast %55 : vector<16x8xf32> to vector<1x16x8xf32>
    %57 = arith.truncf %56 : vector<1x16x8xf32> to vector<1x16x8xbf16>
    %c0_47 = arith.constant 0 : index
    %c8_48 = arith.constant 8 : index
    %58 = vector.load %arg33[%c0_47, %c8_48] : memref<16x32xf32, #tpu.memory_space<vmem>>, vector<16x8xf32>
    %59 = vector.shape_cast %58 : vector<16x8xf32> to vector<1x16x8xf32>
    %60 = arith.truncf %59 : vector<1x16x8xf32> to vector<1x16x8xbf16>
    %c0_49 = arith.constant 0 : index
    %c8_50 = arith.constant 8 : index
    %61 = vector.load %arg34[%c0_49, %c8_50] : memref<16x32xf32, #tpu.memory_space<vmem>>, vector<16x8xf32>
    %62 = vector.shape_cast %61 : vector<16x8xf32> to vector<1x16x8xf32>
    %63 = arith.truncf %62 : vector<1x16x8xf32> to vector<1x16x8xbf16>
    %cst_51 = arith.constant dense<0.000000e+00> : vector<1x16x16xf32>
    %64 = tpu.matmul %57, %60, %cst_51 {dimension_numbers = #tpu.dot_dimension_numbers<[2], [2], [1], [1], [0, 0, 0, 1, 1, 1], [0], [0]>} : vector<1x16x8xbf16>, vector<1x16x8xbf16>, vector<1x16x16xf32> -> vector<1x16x16xf32>
    %cst_52 = arith.constant dense<0xFF800000> : vector<1x16xf32>
    %65 = vector.multi_reduction <maximumf>, %64, %cst_52 [2] : vector<1x16x16xf32> to vector<1x16xf32>
    %66 = vector.shape_cast %65 : vector<1x16xf32> to vector<1x16x1xf32>
    %67 = vector.broadcast %66 : vector<1x16x1xf32> to vector<1x16x16xf32>
    %68 = arith.subf %64, %67 : vector<1x16x16xf32>
    %69 = math.exp %68 : vector<1x16x16xf32>
    %cst_53 = arith.constant dense<0.000000e+00> : vector<1x16xf32>
    %70 = vector.multi_reduction <add>, %69, %cst_53 [2] : vector<1x16x16xf32> to vector<1x16xf32>
    %71 = vector.shape_cast %70 : vector<1x16xf32> to vector<1x16x1xf32>
    %72 = tpu.reciprocal %71 {approx = true} : vector<1x16x1xf32> -> vector<1x16x1xf32>
    %73 = vector.broadcast %72 : vector<1x16x1xf32> to vector<1x16x16xf32>
    %74 = arith.mulf %69, %73 : vector<1x16x16xf32>
    %75 = arith.truncf %74 : vector<1x16x16xf32> to vector<1x16x16xbf16>
    %cst_54 = arith.constant dense<0.000000e+00> : vector<1x16x8xf32>
    %76 = tpu.matmul %75, %63, %cst_54 {dimension_numbers = #tpu.dot_dimension_numbers<[2], [1], [1], [2], [0, 0, 0, 1, 1, 2], [0], [0]>} : vector<1x16x16xbf16>, vector<1x16x8xbf16>, vector<1x16x8xf32> -> vector<1x16x8xf32>
    %77 = vector.shape_cast %76 : vector<1x16x8xf32> to vector<16x8xf32>
    %c0_55 = arith.constant 0 : index
    %c8_56 = arith.constant 8 : index
    %78 = vector.load %arg35[%c0_55, %c8_56] : memref<16x32xf32, #tpu.memory_space<vmem>>, vector<16x8xf32>
    tpu.vector_store %arg35[%c0_55, %c8_56], %77 {strides = array<i32>} : memref<16x32xf32, #tpu.memory_space<vmem>>, vector<16x8xf32>,
    %79 = vector.shape_cast %74 : vector<1x16x16xf32> to vector<16x16xf32>
    %80 = arith.truncf %79 : vector<16x16xf32> to vector<16x16xbf16>
    %c0_57 = arith.constant 0 : index
    %c16 = arith.constant 16 : index
    %81 = vector.load %arg30[%c0_57, %c16] : memref<16x64xbf16, #tpu.memory_space<vmem>>, vector<16x16xbf16>
    tpu.vector_store %arg30[%c0_57, %c16], %80 {strides = array<i32>} : memref<16x64xbf16, #tpu.memory_space<vmem>>, vector<16x16xbf16>,
    %c0_58 = arith.constant 0 : index
    %c16_59 = arith.constant 16 : index
    %82 = vector.load %arg32[%c0_58, %c16_59] : memref<16x32xf32, #tpu.memory_space<vmem>>, vector<16x8xf32>
    %83 = vector.shape_cast %82 : vector<16x8xf32> to vector<1x16x8xf32>
    %84 = arith.truncf %83 : vector<1x16x8xf32> to vector<1x16x8xbf16>
    %c0_60 = arith.constant 0 : index
    %c16_61 = arith.constant 16 : index
    %85 = vector.load %arg33[%c0_60, %c16_61] : memref<16x32xf32, #tpu.memory_space<vmem>>, vector<16x8xf32>
    %86 = vector.shape_cast %85 : vector<16x8xf32> to vector<1x16x8xf32>
    %87 = arith.truncf %86 : vector<1x16x8xf32> to vector<1x16x8xbf16>
    %c0_62 = arith.constant 0 : index
    %c16_63 = arith.constant 16 : index
    %88 = vector.load %arg34[%c0_62, %c16_63] : memref<16x32xf32, #tpu.memory_space<vmem>>, vector<16x8xf32>
    %89 = vector.shape_cast %88 : vector<16x8xf32> to vector<1x16x8xf32>
    %90 = arith.truncf %89 : vector<1x16x8xf32> to vector<1x16x8xbf16>
    %cst_64 = arith.constant dense<0.000000e+00> : vector<1x16x16xf32>
    %91 = tpu.matmul %84, %87, %cst_64 {dimension_numbers = #tpu.dot_dimension_numbers<[2], [2], [1], [1], [0, 0, 0, 1, 1, 1], [0], [0]>} : vector<1x16x8xbf16>, vector<1x16x8xbf16>, vector<1x16x16xf32> -> vector<1x16x16xf32>
    %cst_65 = arith.constant dense<0xFF800000> : vector<1x16xf32>
    %92 = vector.multi_reduction <maximumf>, %91, %cst_65 [2] : vector<1x16x16xf32> to vector<1x16xf32>
    %93 = vector.shape_cast %92 : vector<1x16xf32> to vector<1x16x1xf32>
    %94 = vector.broadcast %93 : vector<1x16x1xf32> to vector<1x16x16xf32>
    %95 = arith.subf %91, %94 : vector<1x16x16xf32>
    %96 = math.exp %95 : vector<1x16x16xf32>
    %cst_66 = arith.constant dense<0.000000e+00> : vector<1x16xf32>
    %97 = vector.multi_reduction <add>, %96, %cst_66 [2] : vector<1x16x16xf32> to vector<1x16xf32>
    %98 = vector.shape_cast %97 : vector<1x16xf32> to vector<1x16x1xf32>
    %99 = tpu.reciprocal %98 {approx = true} : vector<1x16x1xf32> -> vector<1x16x1xf32>
    %100 = vector.broadcast %99 : vector<1x16x1xf32> to vector<1x16x16xf32>
    %101 = arith.mulf %96, %100 : vector<1x16x16xf32>
    %102 = arith.truncf %101 : vector<1x16x16xf32> to vector<1x16x16xbf16>
    %cst_67 = arith.constant dense<0.000000e+00> : vector<1x16x8xf32>
    %103 = tpu.matmul %102, %90, %cst_67 {dimension_numbers = #tpu.dot_dimension_numbers<[2], [1], [1], [2], [0, 0, 0, 1, 1, 2], [0], [0]>} : vector<1x16x16xbf16>, vector<1x16x8xbf16>, vector<1x16x8xf32> -> vector<1x16x8xf32>
    %104 = vector.shape_cast %103 : vector<1x16x8xf32> to vector<16x8xf32>
    %c0_68 = arith.constant 0 : index
    %c16_69 = arith.constant 16 : index
    %105 = vector.load %arg35[%c0_68, %c16_69] : memref<16x32xf32, #tpu.memory_space<vmem>>, vector<16x8xf32>
    tpu.vector_store %arg35[%c0_68, %c16_69], %104 {strides = array<i32>} : memref<16x32xf32, #tpu.memory_space<vmem>>, vector<16x8xf32>,
    %106 = vector.shape_cast %101 : vector<1x16x16xf32> to vector<16x16xf32>
    %107 = arith.truncf %106 : vector<16x16xf32> to vector<16x16xbf16>
    %c0_70 = arith.constant 0 : index
    %c32 = arith.constant 32 : index
    %108 = vector.load %arg30[%c0_70, %c32] : memref<16x64xbf16, #tpu.memory_space<vmem>>, vector<16x16xbf16>
    tpu.vector_store %arg30[%c0_70, %c32], %107 {strides = array<i32>} : memref<16x64xbf16, #tpu.memory_space<vmem>>, vector<16x16xbf16>,
    %c0_71 = arith.constant 0 : index
    %c24 = arith.constant 24 : index
    %109 = vector.load %arg32[%c0_71, %c24] : memref<16x32xf32, #tpu.memory_space<vmem>>, vector<16x8xf32>
    %110 = vector.shape_cast %109 : vector<16x8xf32> to vector<1x16x8xf32>
    %111 = arith.truncf %110 : vector<1x16x8xf32> to vector<1x16x8xbf16>
    %c0_72 = arith.constant 0 : index
    %c24_73 = arith.constant 24 : index
    %112 = vector.load %arg33[%c0_72, %c24_73] : memref<16x32xf32, #tpu.memory_space<vmem>>, vector<16x8xf32>
    %113 = vector.shape_cast %112 : vector<16x8xf32> to vector<1x16x8xf32>
    %114 = arith.truncf %113 : vector<1x16x8xf32> to vector<1x16x8xbf16>
    %c0_74 = arith.constant 0 : index
    %c24_75 = arith.constant 24 : index
    %115 = vector.load %arg34[%c0_74, %c24_75] : memref<16x32xf32, #tpu.memory_space<vmem>>, vector<16x8xf32>
    %116 = vector.shape_cast %115 : vector<16x8xf32> to vector<1x16x8xf32>
    %117 = arith.truncf %116 : vector<1x16x8xf32> to vector<1x16x8xbf16>
    %cst_76 = arith.constant dense<0.000000e+00> : vector<1x16x16xf32>
    %118 = tpu.matmul %111, %114, %cst_76 {dimension_numbers = #tpu.dot_dimension_numbers<[2], [2], [1], [1], [0, 0, 0, 1, 1, 1], [0], [0]>} : vector<1x16x8xbf16>, vector<1x16x8xbf16>, vector<1x16x16xf32> -> vector<1x16x16xf32>
    %cst_77 = arith.constant dense<0xFF800000> : vector<1x16xf32>
    %119 = vector.multi_reduction <maximumf>, %118, %cst_77 [2] : vector<1x16x16xf32> to vector<1x16xf32>
    %120 = vector.shape_cast %119 : vector<1x16xf32> to vector<1x16x1xf32>
    %121 = vector.broadcast %120 : vector<1x16x1xf32> to vector<1x16x16xf32>
    %122 = arith.subf %118, %121 : vector<1x16x16xf32>
    %123 = math.exp %122 : vector<1x16x16xf32>
    %cst_78 = arith.constant dense<0.000000e+00> : vector<1x16xf32>
    %124 = vector.multi_reduction <add>, %123, %cst_78 [2] : vector<1x16x16xf32> to vector<1x16xf32>
    %125 = vector.shape_cast %124 : vector<1x16xf32> to vector<1x16x1xf32>
    %126 = tpu.reciprocal %125 {approx = true} : vector<1x16x1xf32> -> vector<1x16x1xf32>
    %127 = vector.broadcast %126 : vector<1x16x1xf32> to vector<1x16x16xf32>
    %128 = arith.mulf %123, %127 : vector<1x16x16xf32>
    %129 = arith.truncf %128 : vector<1x16x16xf32> to vector<1x16x16xbf16>
    %cst_79 = arith.constant dense<0.000000e+00> : vector<1x16x8xf32>
    %130 = tpu.matmul %129, %117, %cst_79 {dimension_numbers = #tpu.dot_dimension_numbers<[2], [1], [1], [2], [0, 0, 0, 1, 1, 2], [0], [0]>} : vector<1x16x16xbf16>, vector<1x16x8xbf16>, vector<1x16x8xf32> -> vector<1x16x8xf32>
    %131 = vector.shape_cast %130 : vector<1x16x8xf32> to vector<16x8xf32>
    %c0_80 = arith.constant 0 : index
    %c24_81 = arith.constant 24 : index
    %132 = vector.load %arg35[%c0_80, %c24_81] : memref<16x32xf32, #tpu.memory_space<vmem>>, vector<16x8xf32>
    tpu.vector_store %arg35[%c0_80, %c24_81], %131 {strides = array<i32>} : memref<16x32xf32, #tpu.memory_space<vmem>>, vector<16x8xf32>,
    %133 = vector.shape_cast %128 : vector<1x16x16xf32> to vector<16x16xf32>
    %134 = arith.truncf %133 : vector<16x16xf32> to vector<16x16xbf16>
    %c0_82 = arith.constant 0 : index
    %c48 = arith.constant 48 : index
    %135 = vector.load %arg30[%c0_82, %c48] : memref<16x64xbf16, #tpu.memory_space<vmem>>, vector<16x16xbf16>
    tpu.vector_store %arg30[%c0_82, %c48], %134 {strides = array<i32>} : memref<16x64xbf16, #tpu.memory_space<vmem>>, vector<16x16xbf16>,
    %c0_83 = arith.constant 0 : index
    %c0_84 = arith.constant 0 : index
    %136 = vector.load %arg35[%c0_83, %c0_84] : memref<16x32xf32, #tpu.memory_space<vmem>>, vector<16x32xf32>
    %137 = arith.truncf %136 : vector<16x32xf32> to vector<16x32xbf16>
    %cst_85 = arith.constant dense<0.000000e+00> : vector<16x32xf32>
    %138 = tpu.matmul %137, %8, %cst_85 {dimension_numbers = #tpu.dot_dimension_numbers<[1], [0], [0], [1], [0, 0, 1, 1], [], []>} : vector<16x32xbf16>, vector<32x32xbf16>, vector<16x32xf32> -> vector<16x32xf32>
    %139 = vector.broadcast %9 : vector<1x32xf32> to vector<16x32xf32>
    %140 = arith.addf %138, %139 : vector<16x32xf32>
    %141 = arith.addf %140, %0 : vector<16x32xf32>
    %cst_86 = arith.constant dense<0.000000e+00> : vector<16xf32>
    %142 = vector.multi_reduction <add>, %141, %cst_86 [1] : vector<16x32xf32> to vector<16xf32>
    %143 = vector.shape_cast %142 : vector<16xf32> to vector<16x1xf32>
    %cst_87 = arith.constant 3.200000e+01 : f32
    %144 = vector.broadcast %cst_87 : f32 to vector<16x1xf32>
    %145 = arith.divf %143, %144 : vector<16x1xf32>
    %146 = vector.broadcast %145 : vector<16x1xf32> to vector<16x32xf32>
    %147 = arith.subf %141, %146 : vector<16x32xf32>
    %148 = arith.mulf %147, %147 : vector<16x32xf32>
    %cst_88 = arith.constant dense<0.000000e+00> : vector<16xf32>
    %149 = vector.multi_reduction <add>, %148, %cst_88 [1] : vector<16x32xf32> to vector<16xf32>
    %150 = vector.shape_cast %149 : vector<16xf32> to vector<16x1xf32>
    %cst_89 = arith.constant 3.200000e+01 : f32
    %151 = vector.broadcast %cst_89 : f32 to vector<16x1xf32>
    %152 = arith.divf %150, %151 : vector<16x1xf32>
    %cst_90 = arith.constant 9.99999974E-6 : f32
    %153 = vector.broadcast %cst_90 : f32 to vector<16x1xf32>
    %154 = arith.addf %152, %153 : vector<16x1xf32>
    %155 = math.rsqrt %154 : vector<16x1xf32>
    %156 = vector.broadcast %155 : vector<16x1xf32> to vector<16x32xf32>
    %157 = arith.mulf %147, %156 : vector<16x32xf32>
    %158 = vector.broadcast %10 : vector<1x32xf32> to vector<16x32xf32>
    %159 = arith.mulf %157, %158 : vector<16x32xf32>
    %160 = vector.broadcast %11 : vector<1x32xf32> to vector<16x32xf32>
    %161 = arith.addf %159, %160 : vector<16x32xf32>
    %c0_91 = arith.constant 0 : index
    %c0_92 = arith.constant 0 : index
    %162 = vector.load %arg13[%c0_91, %c0_92] : memref<32x32xbf16, #tpu.memory_space<vmem>>, vector<32x32xbf16>
    %c0_93 = arith.constant 0 : index
    %c0_94 = arith.constant 0 : index
    %163 = vector.load %arg14[%c0_93, %c0_94] : memref<1x32xf32, #tpu.memory_space<vmem>>, vector<1x32xf32>
    %c0_95 = arith.constant 0 : index
    %c0_96 = arith.constant 0 : index
    %164 = vector.load %arg15[%c0_95, %c0_96] : memref<32x32xbf16, #tpu.memory_space<vmem>>, vector<32x32xbf16>
    %c0_97 = arith.constant 0 : index
    %c0_98 = arith.constant 0 : index
    %165 = vector.load %arg16[%c0_97, %c0_98] : memref<1x32xf32, #tpu.memory_space<vmem>>, vector<1x32xf32>
    %c0_99 = arith.constant 0 : index
    %c0_100 = arith.constant 0 : index
    %166 = vector.load %arg17[%c0_99, %c0_100] : memref<32x32xbf16, #tpu.memory_space<vmem>>, vector<32x32xbf16>
    %c0_101 = arith.constant 0 : index
    %c0_102 = arith.constant 0 : index
    %167 = vector.load %arg18[%c0_101, %c0_102] : memref<1x32xf32, #tpu.memory_space<vmem>>, vector<1x32xf32>
    %c0_103 = arith.constant 0 : index
    %c0_104 = arith.constant 0 : index
    %168 = vector.load %arg19[%c0_103, %c0_104] : memref<32x32xbf16, #tpu.memory_space<vmem>>, vector<32x32xbf16>
    %c0_105 = arith.constant 0 : index
    %c0_106 = arith.constant 0 : index
    %169 = vector.load %arg20[%c0_105, %c0_106] : memref<1x32xf32, #tpu.memory_space<vmem>>, vector<1x32xf32>
    %c0_107 = arith.constant 0 : index
    %c0_108 = arith.constant 0 : index
    %170 = vector.load %arg21[%c0_107, %c0_108] : memref<1x32xf32, #tpu.memory_space<vmem>>, vector<1x32xf32>
    %c0_109 = arith.constant 0 : index
    %c0_110 = arith.constant 0 : index
    %171 = vector.load %arg22[%c0_109, %c0_110] : memref<1x32xf32, #tpu.memory_space<vmem>>, vector<1x32xf32>
    %172 = arith.truncf %161 : vector<16x32xf32> to vector<16x32xbf16>
    %173 = arith.truncf %1 : vector<16x32xf32> to vector<16x32xbf16>
    %cst_111 = arith.constant dense<0.000000e+00> : vector<16x32xf32>
    %174 = tpu.matmul %172, %162, %cst_111 {dimension_numbers = #tpu.dot_dimension_numbers<[1], [0], [0], [1], [0, 0, 1, 1], [], []>} : vector<16x32xbf16>, vector<32x32xbf16>, vector<16x32xf32> -> vector<16x32xf32>
    %175 = vector.broadcast %163 : vector<1x32xf32> to vector<16x32xf32>
    %176 = arith.addf %174, %175 : vector<16x32xf32>
    %cst_112 = arith.constant 0.353553385 : f32
    %177 = vector.broadcast %cst_112 : f32 to vector<16x32xf32>
    %178 = arith.mulf %176, %177 : vector<16x32xf32>
    %c0_113 = arith.constant 0 : index
    %c0_114 = arith.constant 0 : index
    %179 = vector.load %arg32[%c0_113, %c0_114] : memref<16x32xf32, #tpu.memory_space<vmem>>, vector<16x32xf32>
    tpu.vector_store %arg32[%c0_113, %c0_114], %178 {strides = array<i32>} : memref<16x32xf32, #tpu.memory_space<vmem>>, vector<16x32xf32>,
    %cst_115 = arith.constant dense<0.000000e+00> : vector<16x32xf32>
    %180 = tpu.matmul %173, %164, %cst_115 {dimension_numbers = #tpu.dot_dimension_numbers<[1], [0], [0], [1], [0, 0, 1, 1], [], []>} : vector<16x32xbf16>, vector<32x32xbf16>, vector<16x32xf32> -> vector<16x32xf32>
    %181 = vector.broadcast %165 : vector<1x32xf32> to vector<16x32xf32>
    %182 = arith.addf %180, %181 : vector<16x32xf32>
    %c0_116 = arith.constant 0 : index
    %c0_117 = arith.constant 0 : index
    %183 = vector.load %arg33[%c0_116, %c0_117] : memref<16x32xf32, #tpu.memory_space<vmem>>, vector<16x32xf32>
    tpu.vector_store %arg33[%c0_116, %c0_117], %182 {strides = array<i32>} : memref<16x32xf32, #tpu.memory_space<vmem>>, vector<16x32xf32>,
    %cst_118 = arith.constant dense<0.000000e+00> : vector<16x32xf32>
    %184 = tpu.matmul %173, %166, %cst_118 {dimension_numbers = #tpu.dot_dimension_numbers<[1], [0], [0], [1], [0, 0, 1, 1], [], []>} : vector<16x32xbf16>, vector<32x32xbf16>, vector<16x32xf32> -> vector<16x32xf32>
    %185 = vector.broadcast %167 : vector<1x32xf32> to vector<16x32xf32>
    %186 = arith.addf %184, %185 : vector<16x32xf32>
    %c0_119 = arith.constant 0 : index
    %c0_120 = arith.constant 0 : index
    %187 = vector.load %arg34[%c0_119, %c0_120] : memref<16x32xf32, #tpu.memory_space<vmem>>, vector<16x32xf32>
    tpu.vector_store %arg34[%c0_119, %c0_120], %186 {strides = array<i32>} : memref<16x32xf32, #tpu.memory_space<vmem>>, vector<16x32xf32>,
    %c0_121 = arith.constant 0 : index
    %c0_122 = arith.constant 0 : index
    %188 = vector.load %arg32[%c0_121, %c0_122] : memref<16x32xf32, #tpu.memory_space<vmem>>, vector<16x8xf32>
    %189 = vector.shape_cast %188 : vector<16x8xf32> to vector<1x16x8xf32>
    %190 = arith.truncf %189 : vector<1x16x8xf32> to vector<1x16x8xbf16>
    %c0_123 = arith.constant 0 : index
    %c0_124 = arith.constant 0 : index
    %191 = vector.load %arg33[%c0_123, %c0_124] : memref<16x32xf32, #tpu.memory_space<vmem>>, vector<16x8xf32>
    %192 = vector.shape_cast %191 : vector<16x8xf32> to vector<1x16x8xf32>
    %193 = arith.truncf %192 : vector<1x16x8xf32> to vector<1x16x8xbf16>
    %c0_125 = arith.constant 0 : index
    %c0_126 = arith.constant 0 : index
    %194 = vector.load %arg34[%c0_125, %c0_126] : memref<16x32xf32, #tpu.memory_space<vmem>>, vector<16x8xf32>
    %195 = vector.shape_cast %194 : vector<16x8xf32> to vector<1x16x8xf32>
    %196 = arith.truncf %195 : vector<1x16x8xf32> to vector<1x16x8xbf16>
    %cst_127 = arith.constant dense<0.000000e+00> : vector<1x16x16xf32>
    %197 = tpu.matmul %190, %193, %cst_127 {dimension_numbers = #tpu.dot_dimension_numbers<[2], [2], [1], [1], [0, 0, 0, 1, 1, 1], [0], [0]>} : vector<1x16x8xbf16>, vector<1x16x8xbf16>, vector<1x16x16xf32> -> vector<1x16x16xf32>
    %cst_128 = arith.constant dense<0xFF800000> : vector<1x16xf32>
    %198 = vector.multi_reduction <maximumf>, %197, %cst_128 [2] : vector<1x16x16xf32> to vector<1x16xf32>
    %199 = vector.shape_cast %198 : vector<1x16xf32> to vector<1x16x1xf32>
    %200 = vector.broadcast %199 : vector<1x16x1xf32> to vector<1x16x16xf32>
    %201 = arith.subf %197, %200 : vector<1x16x16xf32>
    %202 = math.exp %201 : vector<1x16x16xf32>
    %cst_129 = arith.constant dense<0.000000e+00> : vector<1x16xf32>
    %203 = vector.multi_reduction <add>, %202, %cst_129 [2] : vector<1x16x16xf32> to vector<1x16xf32>
    %204 = vector.shape_cast %203 : vector<1x16xf32> to vector<1x16x1xf32>
    %205 = tpu.reciprocal %204 {approx = true} : vector<1x16x1xf32> -> vector<1x16x1xf32>
    %206 = vector.broadcast %205 : vector<1x16x1xf32> to vector<1x16x16xf32>
    %207 = arith.mulf %202, %206 : vector<1x16x16xf32>
    %208 = arith.truncf %207 : vector<1x16x16xf32> to vector<1x16x16xbf16>
    %cst_130 = arith.constant dense<0.000000e+00> : vector<1x16x8xf32>
    %209 = tpu.matmul %208, %196, %cst_130 {dimension_numbers = #tpu.dot_dimension_numbers<[2], [1], [1], [2], [0, 0, 0, 1, 1, 2], [0], [0]>} : vector<1x16x16xbf16>, vector<1x16x8xbf16>, vector<1x16x8xf32> -> vector<1x16x8xf32>
    %210 = vector.shape_cast %209 : vector<1x16x8xf32> to vector<16x8xf32>
    %c0_131 = arith.constant 0 : index
    %c0_132 = arith.constant 0 : index
    %211 = vector.load %arg35[%c0_131, %c0_132] : memref<16x32xf32, #tpu.memory_space<vmem>>, vector<16x8xf32>
    tpu.vector_store %arg35[%c0_131, %c0_132], %210 {strides = array<i32>} : memref<16x32xf32, #tpu.memory_space<vmem>>, vector<16x8xf32>,
    %212 = vector.shape_cast %207 : vector<1x16x16xf32> to vector<16x16xf32>
    %213 = arith.truncf %212 : vector<16x16xf32> to vector<16x16xbf16>
    %c0_133 = arith.constant 0 : index
    %c0_134 = arith.constant 0 : index
    %214 = vector.load %arg31[%c0_133, %c0_134] : memref<16x64xbf16, #tpu.memory_space<vmem>>, vector<16x16xbf16>
    tpu.vector_store %arg31[%c0_133, %c0_134], %213 {strides = array<i32>} : memref<16x64xbf16, #tpu.memory_space<vmem>>, vector<16x16xbf16>,
    %c0_135 = arith.constant 0 : index
    %c8_136 = arith.constant 8 : index
    %215 = vector.load %arg32[%c0_135, %c8_136] : memref<16x32xf32, #tpu.memory_space<vmem>>, vector<16x8xf32>
    %216 = vector.shape_cast %215 : vector<16x8xf32> to vector<1x16x8xf32>
    %217 = arith.truncf %216 : vector<1x16x8xf32> to vector<1x16x8xbf16>
    %c0_137 = arith.constant 0 : index
    %c8_138 = arith.constant 8 : index
    %218 = vector.load %arg33[%c0_137, %c8_138] : memref<16x32xf32, #tpu.memory_space<vmem>>, vector<16x8xf32>
    %219 = vector.shape_cast %218 : vector<16x8xf32> to vector<1x16x8xf32>
    %220 = arith.truncf %219 : vector<1x16x8xf32> to vector<1x16x8xbf16>
    %c0_139 = arith.constant 0 : index
    %c8_140 = arith.constant 8 : index
    %221 = vector.load %arg34[%c0_139, %c8_140] : memref<16x32xf32, #tpu.memory_space<vmem>>, vector<16x8xf32>
    %222 = vector.shape_cast %221 : vector<16x8xf32> to vector<1x16x8xf32>
    %223 = arith.truncf %222 : vector<1x16x8xf32> to vector<1x16x8xbf16>
    %cst_141 = arith.constant dense<0.000000e+00> : vector<1x16x16xf32>
    %224 = tpu.matmul %217, %220, %cst_141 {dimension_numbers = #tpu.dot_dimension_numbers<[2], [2], [1], [1], [0, 0, 0, 1, 1, 1], [0], [0]>} : vector<1x16x8xbf16>, vector<1x16x8xbf16>, vector<1x16x16xf32> -> vector<1x16x16xf32>
    %cst_142 = arith.constant dense<0xFF800000> : vector<1x16xf32>
    %225 = vector.multi_reduction <maximumf>, %224, %cst_142 [2] : vector<1x16x16xf32> to vector<1x16xf32>
    %226 = vector.shape_cast %225 : vector<1x16xf32> to vector<1x16x1xf32>
    %227 = vector.broadcast %226 : vector<1x16x1xf32> to vector<1x16x16xf32>
    %228 = arith.subf %224, %227 : vector<1x16x16xf32>
    %229 = math.exp %228 : vector<1x16x16xf32>
    %cst_143 = arith.constant dense<0.000000e+00> : vector<1x16xf32>
    %230 = vector.multi_reduction <add>, %229, %cst_143 [2] : vector<1x16x16xf32> to vector<1x16xf32>
    %231 = vector.shape_cast %230 : vector<1x16xf32> to vector<1x16x1xf32>
    %232 = tpu.reciprocal %231 {approx = true} : vector<1x16x1xf32> -> vector<1x16x1xf32>
    %233 = vector.broadcast %232 : vector<1x16x1xf32> to vector<1x16x16xf32>
    %234 = arith.mulf %229, %233 : vector<1x16x16xf32>
    %235 = arith.truncf %234 : vector<1x16x16xf32> to vector<1x16x16xbf16>
    %cst_144 = arith.constant dense<0.000000e+00> : vector<1x16x8xf32>
    %236 = tpu.matmul %235, %223, %cst_144 {dimension_numbers = #tpu.dot_dimension_numbers<[2], [1], [1], [2], [0, 0, 0, 1, 1, 2], [0], [0]>} : vector<1x16x16xbf16>, vector<1x16x8xbf16>, vector<1x16x8xf32> -> vector<1x16x8xf32>
    %237 = vector.shape_cast %236 : vector<1x16x8xf32> to vector<16x8xf32>
    %c0_145 = arith.constant 0 : index
    %c8_146 = arith.constant 8 : index
    %238 = vector.load %arg35[%c0_145, %c8_146] : memref<16x32xf32, #tpu.memory_space<vmem>>, vector<16x8xf32>
    tpu.vector_store %arg35[%c0_145, %c8_146], %237 {strides = array<i32>} : memref<16x32xf32, #tpu.memory_space<vmem>>, vector<16x8xf32>,
    %239 = vector.shape_cast %234 : vector<1x16x16xf32> to vector<16x16xf32>
    %240 = arith.truncf %239 : vector<16x16xf32> to vector<16x16xbf16>
    %c0_147 = arith.constant 0 : index
    %c16_148 = arith.constant 16 : index
    %241 = vector.load %arg31[%c0_147, %c16_148] : memref<16x64xbf16, #tpu.memory_space<vmem>>, vector<16x16xbf16>
    tpu.vector_store %arg31[%c0_147, %c16_148], %240 {strides = array<i32>} : memref<16x64xbf16, #tpu.memory_space<vmem>>, vector<16x16xbf16>,
    %c0_149 = arith.constant 0 : index
    %c16_150 = arith.constant 16 : index
    %242 = vector.load %arg32[%c0_149, %c16_150] : memref<16x32xf32, #tpu.memory_space<vmem>>, vector<16x8xf32>
    %243 = vector.shape_cast %242 : vector<16x8xf32> to vector<1x16x8xf32>
    %244 = arith.truncf %243 : vector<1x16x8xf32> to vector<1x16x8xbf16>
    %c0_151 = arith.constant 0 : index
    %c16_152 = arith.constant 16 : index
    %245 = vector.load %arg33[%c0_151, %c16_152] : memref<16x32xf32, #tpu.memory_space<vmem>>, vector<16x8xf32>
    %246 = vector.shape_cast %245 : vector<16x8xf32> to vector<1x16x8xf32>
    %247 = arith.truncf %246 : vector<1x16x8xf32> to vector<1x16x8xbf16>
    %c0_153 = arith.constant 0 : index
    %c16_154 = arith.constant 16 : index
    %248 = vector.load %arg34[%c0_153, %c16_154] : memref<16x32xf32, #tpu.memory_space<vmem>>, vector<16x8xf32>
    %249 = vector.shape_cast %248 : vector<16x8xf32> to vector<1x16x8xf32>
    %250 = arith.truncf %249 : vector<1x16x8xf32> to vector<1x16x8xbf16>
    %cst_155 = arith.constant dense<0.000000e+00> : vector<1x16x16xf32>
    %251 = tpu.matmul %244, %247, %cst_155 {dimension_numbers = #tpu.dot_dimension_numbers<[2], [2], [1], [1], [0, 0, 0, 1, 1, 1], [0], [0]>} : vector<1x16x8xbf16>, vector<1x16x8xbf16>, vector<1x16x16xf32> -> vector<1x16x16xf32>
    %cst_156 = arith.constant dense<0xFF800000> : vector<1x16xf32>
    %252 = vector.multi_reduction <maximumf>, %251, %cst_156 [2] : vector<1x16x16xf32> to vector<1x16xf32>
    %253 = vector.shape_cast %252 : vector<1x16xf32> to vector<1x16x1xf32>
    %254 = vector.broadcast %253 : vector<1x16x1xf32> to vector<1x16x16xf32>
    %255 = arith.subf %251, %254 : vector<1x16x16xf32>
    %256 = math.exp %255 : vector<1x16x16xf32>
    %cst_157 = arith.constant dense<0.000000e+00> : vector<1x16xf32>
    %257 = vector.multi_reduction <add>, %256, %cst_157 [2] : vector<1x16x16xf32> to vector<1x16xf32>
    %258 = vector.shape_cast %257 : vector<1x16xf32> to vector<1x16x1xf32>
    %259 = tpu.reciprocal %258 {approx = true} : vector<1x16x1xf32> -> vector<1x16x1xf32>
    %260 = vector.broadcast %259 : vector<1x16x1xf32> to vector<1x16x16xf32>
    %261 = arith.mulf %256, %260 : vector<1x16x16xf32>
    %262 = arith.truncf %261 : vector<1x16x16xf32> to vector<1x16x16xbf16>
    %cst_158 = arith.constant dense<0.000000e+00> : vector<1x16x8xf32>
    %263 = tpu.matmul %262, %250, %cst_158 {dimension_numbers = #tpu.dot_dimension_numbers<[2], [1], [1], [2], [0, 0, 0, 1, 1, 2], [0], [0]>} : vector<1x16x16xbf16>, vector<1x16x8xbf16>, vector<1x16x8xf32> -> vector<1x16x8xf32>
    %264 = vector.shape_cast %263 : vector<1x16x8xf32> to vector<16x8xf32>
    %c0_159 = arith.constant 0 : index
    %c16_160 = arith.constant 16 : index
    %265 = vector.load %arg35[%c0_159, %c16_160] : memref<16x32xf32, #tpu.memory_space<vmem>>, vector<16x8xf32>
    tpu.vector_store %arg35[%c0_159, %c16_160], %264 {strides = array<i32>} : memref<16x32xf32, #tpu.memory_space<vmem>>, vector<16x8xf32>,
    %266 = vector.shape_cast %261 : vector<1x16x16xf32> to vector<16x16xf32>
    %267 = arith.truncf %266 : vector<16x16xf32> to vector<16x16xbf16>
    %c0_161 = arith.constant 0 : index
    %c32_162 = arith.constant 32 : index
    %268 = vector.load %arg31[%c0_161, %c32_162] : memref<16x64xbf16, #tpu.memory_space<vmem>>, vector<16x16xbf16>
    tpu.vector_store %arg31[%c0_161, %c32_162], %267 {strides = array<i32>} : memref<16x64xbf16, #tpu.memory_space<vmem>>, vector<16x16xbf16>,
    %c0_163 = arith.constant 0 : index
    %c24_164 = arith.constant 24 : index
    %269 = vector.load %arg32[%c0_163, %c24_164] : memref<16x32xf32, #tpu.memory_space<vmem>>, vector<16x8xf32>
    %270 = vector.shape_cast %269 : vector<16x8xf32> to vector<1x16x8xf32>
    %271 = arith.truncf %270 : vector<1x16x8xf32> to vector<1x16x8xbf16>
    %c0_165 = arith.constant 0 : index
    %c24_166 = arith.constant 24 : index
    %272 = vector.load %arg33[%c0_165, %c24_166] : memref<16x32xf32, #tpu.memory_space<vmem>>, vector<16x8xf32>
    %273 = vector.shape_cast %272 : vector<16x8xf32> to vector<1x16x8xf32>
    %274 = arith.truncf %273 : vector<1x16x8xf32> to vector<1x16x8xbf16>
    %c0_167 = arith.constant 0 : index
    %c24_168 = arith.constant 24 : index
    %275 = vector.load %arg34[%c0_167, %c24_168] : memref<16x32xf32, #tpu.memory_space<vmem>>, vector<16x8xf32>
    %276 = vector.shape_cast %275 : vector<16x8xf32> to vector<1x16x8xf32>
    %277 = arith.truncf %276 : vector<1x16x8xf32> to vector<1x16x8xbf16>
    %cst_169 = arith.constant dense<0.000000e+00> : vector<1x16x16xf32>
    %278 = tpu.matmul %271, %274, %cst_169 {dimension_numbers = #tpu.dot_dimension_numbers<[2], [2], [1], [1], [0, 0, 0, 1, 1, 1], [0], [0]>} : vector<1x16x8xbf16>, vector<1x16x8xbf16>, vector<1x16x16xf32> -> vector<1x16x16xf32>
    %cst_170 = arith.constant dense<0xFF800000> : vector<1x16xf32>
    %279 = vector.multi_reduction <maximumf>, %278, %cst_170 [2] : vector<1x16x16xf32> to vector<1x16xf32>
    %280 = vector.shape_cast %279 : vector<1x16xf32> to vector<1x16x1xf32>
    %281 = vector.broadcast %280 : vector<1x16x1xf32> to vector<1x16x16xf32>
    %282 = arith.subf %278, %281 : vector<1x16x16xf32>
    %283 = math.exp %282 : vector<1x16x16xf32>
    %cst_171 = arith.constant dense<0.000000e+00> : vector<1x16xf32>
    %284 = vector.multi_reduction <add>, %283, %cst_171 [2] : vector<1x16x16xf32> to vector<1x16xf32>
    %285 = vector.shape_cast %284 : vector<1x16xf32> to vector<1x16x1xf32>
    %286 = tpu.reciprocal %285 {approx = true} : vector<1x16x1xf32> -> vector<1x16x1xf32>
    %287 = vector.broadcast %286 : vector<1x16x1xf32> to vector<1x16x16xf32>
    %288 = arith.mulf %283, %287 : vector<1x16x16xf32>
    %289 = arith.truncf %288 : vector<1x16x16xf32> to vector<1x16x16xbf16>
    %cst_172 = arith.constant dense<0.000000e+00> : vector<1x16x8xf32>
    %290 = tpu.matmul %289, %277, %cst_172 {dimension_numbers = #tpu.dot_dimension_numbers<[2], [1], [1], [2], [0, 0, 0, 1, 1, 2], [0], [0]>} : vector<1x16x16xbf16>, vector<1x16x8xbf16>, vector<1x16x8xf32> -> vector<1x16x8xf32>
    %291 = vector.shape_cast %290 : vector<1x16x8xf32> to vector<16x8xf32>
    %c0_173 = arith.constant 0 : index
    %c24_174 = arith.constant 24 : index
    %292 = vector.load %arg35[%c0_173, %c24_174] : memref<16x32xf32, #tpu.memory_space<vmem>>, vector<16x8xf32>
    tpu.vector_store %arg35[%c0_173, %c24_174], %291 {strides = array<i32>} : memref<16x32xf32, #tpu.memory_space<vmem>>, vector<16x8xf32>,
    %293 = vector.shape_cast %288 : vector<1x16x16xf32> to vector<16x16xf32>
    %294 = arith.truncf %293 : vector<16x16xf32> to vector<16x16xbf16>
    %c0_175 = arith.constant 0 : index
    %c48_176 = arith.constant 48 : index
    %295 = vector.load %arg31[%c0_175, %c48_176] : memref<16x64xbf16, #tpu.memory_space<vmem>>, vector<16x16xbf16>
    tpu.vector_store %arg31[%c0_175, %c48_176], %294 {strides = array<i32>} : memref<16x64xbf16, #tpu.memory_space<vmem>>, vector<16x16xbf16>,
    %c0_177 = arith.constant 0 : index
    %c0_178 = arith.constant 0 : index
    %296 = vector.load %arg35[%c0_177, %c0_178] : memref<16x32xf32, #tpu.memory_space<vmem>>, vector<16x32xf32>
    %297 = arith.truncf %296 : vector<16x32xf32> to vector<16x32xbf16>
    %cst_179 = arith.constant dense<0.000000e+00> : vector<16x32xf32>
    %298 = tpu.matmul %297, %168, %cst_179 {dimension_numbers = #tpu.dot_dimension_numbers<[1], [0], [0], [1], [0, 0, 1, 1], [], []>} : vector<16x32xbf16>, vector<32x32xbf16>, vector<16x32xf32> -> vector<16x32xf32>
    %299 = vector.broadcast %169 : vector<1x32xf32> to vector<16x32xf32>
    %300 = arith.addf %298, %299 : vector<16x32xf32>
    %301 = arith.addf %300, %161 : vector<16x32xf32>
    %cst_180 = arith.constant dense<0.000000e+00> : vector<16xf32>
    %302 = vector.multi_reduction <add>, %301, %cst_180 [1] : vector<16x32xf32> to vector<16xf32>
    %303 = vector.shape_cast %302 : vector<16xf32> to vector<16x1xf32>
    %cst_181 = arith.constant 3.200000e+01 : f32
    %304 = vector.broadcast %cst_181 : f32 to vector<16x1xf32>
    %305 = arith.divf %303, %304 : vector<16x1xf32>
    %306 = vector.broadcast %305 : vector<16x1xf32> to vector<16x32xf32>
    %307 = arith.subf %301, %306 : vector<16x32xf32>
    %308 = arith.mulf %307, %307 : vector<16x32xf32>
    %cst_182 = arith.constant dense<0.000000e+00> : vector<16xf32>
    %309 = vector.multi_reduction <add>, %308, %cst_182 [1] : vector<16x32xf32> to vector<16xf32>
    %310 = vector.shape_cast %309 : vector<16xf32> to vector<16x1xf32>
    %cst_183 = arith.constant 3.200000e+01 : f32
    %311 = vector.broadcast %cst_183 : f32 to vector<16x1xf32>
    %312 = arith.divf %310, %311 : vector<16x1xf32>
    %cst_184 = arith.constant 9.99999974E-6 : f32
    %313 = vector.broadcast %cst_184 : f32 to vector<16x1xf32>
    %314 = arith.addf %312, %313 : vector<16x1xf32>
    %315 = math.rsqrt %314 : vector<16x1xf32>
    %316 = vector.broadcast %315 : vector<16x1xf32> to vector<16x32xf32>
    %317 = arith.mulf %307, %316 : vector<16x32xf32>
    %318 = vector.broadcast %170 : vector<1x32xf32> to vector<16x32xf32>
    %319 = arith.mulf %317, %318 : vector<16x32xf32>
    %320 = vector.broadcast %171 : vector<1x32xf32> to vector<16x32xf32>
    %321 = arith.addf %319, %320 : vector<16x32xf32>
    %c0_185 = arith.constant 0 : index
    %c0_186 = arith.constant 0 : index
    %322 = vector.load %arg23[%c0_185, %c0_186] : memref<32x64xbf16, #tpu.memory_space<vmem>>, vector<32x64xbf16>
    %c0_187 = arith.constant 0 : index
    %c0_188 = arith.constant 0 : index
    %323 = vector.load %arg24[%c0_187, %c0_188] : memref<1x64xf32, #tpu.memory_space<vmem>>, vector<1x64xf32>
    %c0_189 = arith.constant 0 : index
    %c0_190 = arith.constant 0 : index
    %324 = vector.load %arg25[%c0_189, %c0_190] : memref<64x32xbf16, #tpu.memory_space<vmem>>, vector<64x32xbf16>
    %c0_191 = arith.constant 0 : index
    %c0_192 = arith.constant 0 : index
    %325 = vector.load %arg26[%c0_191, %c0_192] : memref<1x32xf32, #tpu.memory_space<vmem>>, vector<1x32xf32>
    %c0_193 = arith.constant 0 : index
    %c0_194 = arith.constant 0 : index
    %326 = vector.load %arg27[%c0_193, %c0_194] : memref<1x32xf32, #tpu.memory_space<vmem>>, vector<1x32xf32>
    %c0_195 = arith.constant 0 : index
    %c0_196 = arith.constant 0 : index
    %327 = vector.load %arg28[%c0_195, %c0_196] : memref<1x32xf32, #tpu.memory_space<vmem>>, vector<1x32xf32>
    %328 = arith.truncf %321 : vector<16x32xf32> to vector<16x32xbf16>
    %cst_197 = arith.constant dense<0.000000e+00> : vector<16x64xf32>
    %329 = tpu.matmul %328, %322, %cst_197 {dimension_numbers = #tpu.dot_dimension_numbers<[1], [0], [0], [1], [0, 0, 1, 1], [], []>} : vector<16x32xbf16>, vector<32x64xbf16>, vector<16x64xf32> -> vector<16x64xf32>
    %330 = vector.broadcast %323 : vector<1x64xf32> to vector<16x64xf32>
    %331 = arith.addf %329, %330 : vector<16x64xf32>
    %cst_198 = arith.constant 0.000000e+00 : f32
    %332 = vector.broadcast %cst_198 : f32 to vector<16x64xf32>
    %333 = arith.maximumf %331, %332 : vector<16x64xf32>
    %334 = arith.truncf %333 : vector<16x64xf32> to vector<16x64xbf16>
    %cst_199 = arith.constant dense<0.000000e+00> : vector<16x32xf32>
    %335 = tpu.matmul %334, %324, %cst_199 {dimension_numbers = #tpu.dot_dimension_numbers<[1], [0], [0], [1], [0, 0, 1, 1], [], []>} : vector<16x64xbf16>, vector<64x32xbf16>, vector<16x32xf32> -> vector<16x32xf32>
    %336 = vector.broadcast %325 : vector<1x32xf32> to vector<16x32xf32>
    %337 = arith.addf %335, %336 : vector<16x32xf32>
    %338 = arith.addf %337, %321 : vector<16x32xf32>
    %cst_200 = arith.constant dense<0.000000e+00> : vector<16xf32>
    %339 = vector.multi_reduction <add>, %338, %cst_200 [1] : vector<16x32xf32> to vector<16xf32>
    %340 = vector.shape_cast %339 : vector<16xf32> to vector<16x1xf32>
    %cst_201 = arith.constant 3.200000e+01 : f32
    %341 = vector.broadcast %cst_201 : f32 to vector<16x1xf32>
    %342 = arith.divf %340, %341 : vector<16x1xf32>
    %343 = vector.broadcast %342 : vector<16x1xf32> to vector<16x32xf32>
    %344 = arith.subf %338, %343 : vector<16x32xf32>
    %345 = arith.mulf %344, %344 : vector<16x32xf32>
    %cst_202 = arith.constant dense<0.000000e+00> : vector<16xf32>
    %346 = vector.multi_reduction <add>, %345, %cst_202 [1] : vector<16x32xf32> to vector<16xf32>
    %347 = vector.shape_cast %346 : vector<16xf32> to vector<16x1xf32>
    %cst_203 = arith.constant 3.200000e+01 : f32
    %348 = vector.broadcast %cst_203 : f32 to vector<16x1xf32>
    %349 = arith.divf %347, %348 : vector<16x1xf32>
    %cst_204 = arith.constant 9.99999974E-6 : f32
    %350 = vector.broadcast %cst_204 : f32 to vector<16x1xf32>
    %351 = arith.addf %349, %350 : vector<16x1xf32>
    %352 = math.rsqrt %351 : vector<16x1xf32>
    %353 = vector.broadcast %352 : vector<16x1xf32> to vector<16x32xf32>
    %354 = arith.mulf %344, %353 : vector<16x32xf32>
    %355 = vector.broadcast %326 : vector<1x32xf32> to vector<16x32xf32>
    %356 = arith.mulf %354, %355 : vector<16x32xf32>
    %357 = vector.broadcast %327 : vector<1x32xf32> to vector<16x32xf32>
    %358 = arith.addf %356, %357 : vector<16x32xf32>
    %c0_205 = arith.constant 0 : index
    %c0_206 = arith.constant 0 : index
    %359 = vector.load %arg29[%c0_205, %c0_206] : memref<16x32xf32, #tpu.memory_space<vmem>>, vector<16x32xf32>
    tpu.vector_store %arg29[%c0_205, %c0_206], %358 {strides = array<i32>} : memref<16x32xf32, #tpu.memory_space<vmem>>, vector<16x32xf32>,
    return
  }
  func.func @transform_0(%arg0: i32) -> (i32, i32) {
    %c0_i32 = arith.constant 0 : i32
    %c0_i32_0 = arith.constant 0 : i32
    return %arg0, %c0_i32 : i32, i32
  }
  func.func @transform_1(%arg0: i32) -> (i32, i32) {
    %c0_i32 = arith.constant 0 : i32
    %c0_i32_0 = arith.constant 0 : i32
    return %arg0, %c0_i32 : i32, i32
  }
  func.func @transform_2(%arg0: i32) -> (i32, i32) {
    %c0_i32 = arith.constant 0 : i32
    %c0_i32_0 = arith.constant 0 : i32
    %c0_i32_1 = arith.constant 0 : i32
    return %c0_i32, %c0_i32_0 : i32, i32
  }
  func.func @transform_3(%arg0: i32) -> (i32, i32) {
    %c0_i32 = arith.constant 0 : i32
    %c0_i32_0 = arith.constant 0 : i32
    %c0_i32_1 = arith.constant 0 : i32
    return %c0_i32, %c0_i32_0 : i32, i32
  }
  func.func @transform_4(%arg0: i32) -> (i32, i32) {
    %c0_i32 = arith.constant 0 : i32
    %c0_i32_0 = arith.constant 0 : i32
    %c0_i32_1 = arith.constant 0 : i32
    return %c0_i32, %c0_i32_0 : i32, i32
  }
  func.func @transform_5(%arg0: i32) -> (i32, i32) {
    %c0_i32 = arith.constant 0 : i32
    %c0_i32_0 = arith.constant 0 : i32
    %c0_i32_1 = arith.constant 0 : i32
    return %c0_i32, %c0_i32_0 : i32, i32
  }
  func.func @transform_6(%arg0: i32) -> (i32, i32) {
    %c0_i32 = arith.constant 0 : i32
    %c0_i32_0 = arith.constant 0 : i32
    %c0_i32_1 = arith.constant 0 : i32
    return %c0_i32, %c0_i32_0 : i32, i32
  }
  func.func @transform_7(%arg0: i32) -> (i32, i32) {
    %c0_i32 = arith.constant 0 : i32
    %c0_i32_0 = arith.constant 0 : i32
    %c0_i32_1 = arith.constant 0 : i32
    return %c0_i32, %c0_i32_0 : i32, i32
  }
  func.func @transform_8(%arg0: i32) -> (i32, i32) {
    %c0_i32 = arith.constant 0 : i32
    %c0_i32_0 = arith.constant 0 : i32
    %c0_i32_1 = arith.constant 0 : i32
    return %c0_i32, %c0_i32_0 : i32, i32
  }
  func.func @transform_9(%arg0: i32) -> (i32, i32) {
    %c0_i32 = arith.constant 0 : i32
    %c0_i32_0 = arith.constant 0 : i32
    %c0_i32_1 = arith.constant 0 : i32
    return %c0_i32, %c0_i32_0 : i32, i32
  }
  func.func @transform_10(%arg0: i32) -> (i32, i32) {
    %c0_i32 = arith.constant 0 : i32
    %c0_i32_0 = arith.constant 0 : i32
    %c0_i32_1 = arith.constant 0 : i32
    return %c0_i32, %c0_i32_0 : i32, i32
  }
  func.func @transform_11(%arg0: i32) -> (i32, i32) {
    %c0_i32 = arith.constant 0 : i32
    %c0_i32_0 = arith.constant 0 : i32
    %c0_i32_1 = arith.constant 0 : i32
    return %c0_i32, %c0_i32_0 : i32, i32
  }
  func.func @transform_12(%arg0: i32) -> (i32, i32) {
    %c0_i32 = arith.constant 0 : i32
    %c0_i32_0 = arith.constant 0 : i32
    %c0_i32_1 = arith.constant 0 : i32
    return %c0_i32, %c0_i32_0 : i32, i32
  }
  func.func @transform_13(%arg0: i32) -> (i32, i32) {
    %c0_i32 = arith.constant 0 : i32
    %c0_i32_0 = arith.constant 0 : i32
    %c0_i32_1 = arith.constant 0 : i32
    return %c0_i32, %c0_i32_0 : i32, i32
  }
  func.func @transform_14(%arg0: i32) -> (i32, i32) {
    %c0_i32 = arith.constant 0 : i32
    %c0_i32_0 = arith.constant 0 : i32
    %c0_i32_1 = arith.constant 0 : i32
    return %c0_i32, %c0_i32_0 : i32, i32
  }
  func.func @transform_15(%arg0: i32) -> (i32, i32) {
    %c0_i32 = arith.constant 0 : i32
    %c0_i32_0 = arith.constant 0 : i32
    %c0_i32_1 = arith.constant 0 : i32
    return %c0_i32, %c0_i32_0 : i32, i32
  }
  func.func @transform_16(%arg0: i32) -> (i32, i32) {
    %c0_i32 = arith.constant 0 : i32
    %c0_i32_0 = arith.constant 0 : i32
    %c0_i32_1 = arith.constant 0 : i32
    return %c0_i32, %c0_i32_0 : i32, i32
  }
  func.func @transform_17(%arg0: i32) -> (i32, i32) {
    %c0_i32 = arith.constant 0 : i32
    %c0_i32_0 = arith.constant 0 : i32
    %c0_i32_1 = arith.constant 0 : i32
    return %c0_i32, %c0_i32_0 : i32, i32
  }
  func.func @transform_18(%arg0: i32) -> (i32, i32) {
    %c0_i32 = arith.constant 0 : i32
    %c0_i32_0 = arith.constant 0 : i32
    %c0_i32_1 = arith.constant 0 : i32
    return %c0_i32, %c0_i32_0 : i32, i32
  }
  func.func @transform_19(%arg0: i32) -> (i32, i32) {
    %c0_i32 = arith.constant 0 : i32
    %c0_i32_0 = arith.constant 0 : i32
    %c0_i32_1 = arith.constant 0 : i32
    return %c0_i32, %c0_i32_0 : i32, i32
  }
  func.func @transform_20(%arg0: i32) -> (i32, i32) {
    %c0_i32 = arith.constant 0 : i32
    %c0_i32_0 = arith.constant 0 : i32
    %c0_i32_1 = arith.constant 0 : i32
    return %c0_i32, %c0_i32_0 : i32, i32
  }
  func.func @transform_21(%arg0: i32) -> (i32, i32) {
    %c0_i32 = arith.constant 0 : i32
    %c0_i32_0 = arith.constant 0 : i32
    %c0_i32_1 = arith.constant 0 : i32
    return %c0_i32, %c0_i32_0 : i32, i32
  }
  func.func @transform_22(%arg0: i32) -> (i32, i32) {
    %c0_i32 = arith.constant 0 : i32
    %c0_i32_0 = arith.constant 0 : i32
    %c0_i32_1 = arith.constant 0 : i32
    return %c0_i32, %c0_i32_0 : i32, i32
  }
  func.func @transform_23(%arg0: i32) -> (i32, i32) {
    %c0_i32 = arith.constant 0 : i32
    %c0_i32_0 = arith.constant 0 : i32
    %c0_i32_1 = arith.constant 0 : i32
    return %c0_i32, %c0_i32_0 : i32, i32
  }
  func.func @transform_24(%arg0: i32) -> (i32, i32) {
    %c0_i32 = arith.constant 0 : i32
    %c0_i32_0 = arith.constant 0 : i32
    %c0_i32_1 = arith.constant 0 : i32
    return %c0_i32, %c0_i32_0 : i32, i32
  }
  func.func @transform_25(%arg0: i32) -> (i32, i32) {
    %c0_i32 = arith.constant 0 : i32
    %c0_i32_0 = arith.constant 0 : i32
    %c0_i32_1 = arith.constant 0 : i32
    return %c0_i32, %c0_i32_0 : i32, i32
  }
  func.func @transform_26(%arg0: i32) -> (i32, i32) {
    %c0_i32 = arith.constant 0 : i32
    %c0_i32_0 = arith.constant 0 : i32
    %c0_i32_1 = arith.constant 0 : i32
    return %c0_i32, %c0_i32_0 : i32, i32
  }
  func.func @transform_27(%arg0: i32) -> (i32, i32) {
    %c0_i32 = arith.constant 0 : i32
    %c0_i32_0 = arith.constant 0 : i32
    %c0_i32_1 = arith.constant 0 : i32
    return %c0_i32, %c0_i32_0 : i32, i32
  }
  func.func @transform_28(%arg0: i32) -> (i32, i32) {
    %c0_i32 = arith.constant 0 : i32
    %c0_i32_0 = arith.constant 0 : i32
    return %arg0, %c0_i32 : i32, i32
  }
  func.func @transform_29(%arg0: i32) -> (i32, i32) {
    %c0_i32 = arith.constant 0 : i32
    %c0_i32_0 = arith.constant 0 : i32
    return %arg0, %c0_i32 : i32, i32
  }
  func.func @transform_30(%arg0: i32) -> (i32, i32) {
    %c0_i32 = arith.constant 0 : i32
    %c0_i32_0 = arith.constant 0 : i32
    return %arg0, %c0_i32 : i32, i32
  }
}

module attributes {stable_mosaic.version = 11 : i64} {
  func.func @_decoder_layer_kernel(%arg0: i32, %arg1: memref<16x32xf32, #tpu.memory_space<vmem>>, %arg2: memref<16x32xf32, #tpu.memory_space<vmem>>, %arg3: memref<32x32xbf16, #tpu.memory_space<vmem>>, %arg4: memref<1x32xf32, #tpu.memory_space<vmem>>, %arg5: memref<32x32xbf16, #tpu.memory_space<vmem>>, %arg6: memref<1x32xf32, #tpu.memory_space<vmem>>, %arg7: memref<32x32xbf16, #tpu.memory_space<vmem>>, %arg8: memref<1x32xf32, #tpu.memory_space<vmem>>, %arg9: memref<32x32xbf16, #tpu.memory_space<vmem>>, %arg10: memref<1x32xf32, #tpu.memory_space<vmem>>, %arg11: memref<1x32xf32, #tpu.memory_space<vmem>>, %arg12: memref<1x32xf32, #tpu.memory_space<vmem>>, %arg13: memref<32x32xbf16, #tpu.memory_space<vmem>>, %arg14: memref<1x32xf32, #tpu.memory_space<vmem>>, %arg15: memref<32x32xbf16, #tpu.memory_space<vmem>>, %arg16: memref<1x32xf32, #tpu.memory_space<vmem>>, %arg17: memref<32x32xbf16, #tpu.memory_space<vmem>>, %arg18: memref<1x32xf32, #tpu.memory_space<vmem>>, %arg19: memref<32x32xbf16, #tpu.memory_space<vmem>>, %arg20: memref<1x32xf32, #tpu.memory_space<vmem>>, %arg21: memref<1x32xf32, #tpu.memory_space<vmem>>, %arg22: memref<1x32xf32, #tpu.memory_space<vmem>>, %arg23: memref<32x64xbf16, #tpu.memory_space<vmem>>, %arg24: memref<1x64xf32, #tpu.memory_space<vmem>>, %arg25: memref<64x32xbf16, #tpu.memory_space<vmem>>, %arg26: memref<1x32xf32, #tpu.memory_space<vmem>>, %arg27: memref<1x32xf32, #tpu.memory_space<vmem>>, %arg28: memref<1x32xf32, #tpu.memory_space<vmem>>, %arg29: memref<16x32xf32, #tpu.memory_space<vmem>>, %arg30: memref<16x64xbf16, #tpu.memory_space<vmem>>, %arg31: memref<16x64xbf16, #tpu.memory_space<vmem>>, %arg32: memref<16x32xf32, #tpu.memory_space<vmem>>, %arg33: memref<16x32xf32, #tpu.memory_space<vmem>>, %arg34: memref<16x32xf32, #tpu.memory_space<vmem>>, %arg35: memref<16x32xf32, #tpu.memory_space<vmem>>) attributes {dimension_semantics = [#tpu.dimension_semantics<parallel>], iteration_bounds = array<i64: 2>, scalar_prefetch = 0 : i64, scratch_operands = 4 : i64, tpu.core_type = #tpu.core_type<tc>, window_params = [{transform_indices = @transform_0, window_bounds = array<i64: 16, 32>}, {transform_indices = @transform_1, window_bounds = array<i64: 16, 32>}, {pipeline_mode = #tpu.pipeline_mode<synchronous>, transform_indices = @transform_2, window_bounds = array<i64: 32, 32>}, {pipeline_mode = #tpu.pipeline_mode<synchronous>, transform_indices = @transform_3, window_bounds = array<i64: 1, 32>}, {pipeline_mode = #tpu.pipeline_mode<synchronous>, transform_indices = @transform_4, window_bounds = array<i64: 32, 32>}, {pipeline_mode = #tpu.pipeline_mode<synchronous>, transform_indices = @transform_5, window_bounds = array<i64: 1, 32>}, {pipeline_mode = #tpu.pipeline_mode<synchronous>, transform_indices = @transform_6, window_bounds = array<i64: 32, 32>}, {pipeline_mode = #tpu.pipeline_mode<synchronous>, transform_indices = @transform_7, window_bounds = array<i64: 1, 32>}, {pipeline_mode = #tpu.pipeline_mode<synchronous>, transform_indices = @transform_8, window_bounds = array<i64: 32, 32>}, {pipeline_mode = #tpu.pipeline_mode<synchronous>, transform_indices = @transform_9, window_bounds = array<i64: 1, 32>}, {pipeline_mode = #tpu.pipeline_mode<synchronous>, transform_indices = @transform_10, window_bounds = array<i64: 1, 32>}, {pipeline_mode = #tpu.pipeline_mode<synchronous>, transform_indices = @transform_11, window_bounds = array<i64: 1, 32>}, {pipeline_mode = #tpu.pipeline_mode<synchronous>, transform_indices = @transform_12, window_bounds = array<i64: 32, 32>}, {pipeline_mode = #tpu.pipeline_mode<synchronous>, transform_indices = @transform_13, window_bounds = array<i64: 1, 32>}, {pipeline_mode = #tpu.pipeline_mode<synchronous>, transform_indices = @transform_14, window_bounds = array<i64: 32, 32>}, {pipeline_mode = #tpu.pipeline_mode<synchronous>, transform_indices = @transform_15, window_bounds = array<i64: 1, 32>}, {pipeline_mode = #tpu.pipeline_mode<synchronous>, transform_indices = @transform_16, window_bounds = array<i64: 32, 32>}, {pipeline_mode = #tpu.pipeline_mode<synchronous>, transform_indices = @transform_17, window_bounds = array<i64: 1, 32>}, {pipeline_mode = #tpu.pipeline_mode<synchronous>, transform_indices = @transform_18, window_bounds = array<i64: 32, 32>}, {pipeline_mode = #tpu.pipeline_mode<synchronous>, transform_indices = @transform_19, window_bounds = array<i64: 1, 32>}, {pipeline_mode = #tpu.pipeline_mode<synchronous>, transform_indices = @transform_20, window_bounds = array<i64: 1, 32>}, {pipeline_mode = #tpu.pipeline_mode<synchronous>, transform_indices = @transform_21, window_bounds = array<i64: 1, 32>}, {pipeline_mode = #tpu.pipeline_mode<synchronous>, transform_indices = @transform_22, window_bounds = array<i64: 32, 64>}, {pipeline_mode = #tpu.pipeline_mode<synchronous>, transform_indices = @transform_23, window_bounds = array<i64: 1, 64>}, {pipeline_mode = #tpu.pipeline_mode<synchronous>, transform_indices = @transform_24, window_bounds = array<i64: 64, 32>}, {pipeline_mode = #tpu.pipeline_mode<synchronous>, transform_indices = @transform_25, window_bounds = array<i64: 1, 32>}, {pipeline_mode = #tpu.pipeline_mode<synchronous>, transform_indices = @transform_26, window_bounds = array<i64: 1, 32>}, {pipeline_mode = #tpu.pipeline_mode<synchronous>, transform_indices = @transform_27, window_bounds = array<i64: 1, 32>}, {transform_indices = @transform_28, window_bounds = array<i64: 16, 32>}, {transform_indices = @transform_29, window_bounds = array<i64: 16, 64>}, {transform_indices = @transform_30, window_bounds = array<i64: 16, 64>}]} {
    %c0 = arith.constant 0 : index
    %c0_0 = arith.constant 0 : index
    %0 = vector.load %arg1[%c0, %c0_0] : memref<16x32xf32, #tpu.memory_space<vmem>>, vector<16x32xf32>
    %c0_1 = arith.constant 0 : index
    %c0_2 = arith.constant 0 : index
    %1 = vector.load %arg2[%c0_1, %c0_2] : memref<16x32xf32, #tpu.memory_space<vmem>>, vector<16x32xf32>
    %c0_3 = arith.constant 0 : index
    %c0_4 = arith.constant 0 : index
    %2 = vector.load %arg3[%c0_3, %c0_4] : memref<32x32xbf16, #tpu.memory_space<vmem>>, vector<32x32xbf16>
    %c0_5 = arith.constant 0 : index
    %c0_6 = arith.constant 0 : index
    %3 = vector.load %arg4[%c0_5, %c0_6] : memref<1x32xf32, #tpu.memory_space<vmem>>, vector<1x32xf32>
    %c0_7 = arith.constant 0 : index
    %c0_8 = arith.constant 0 : index
    %4 = vector.load %arg5[%c0_7, %c0_8] : memref<32x32xbf16, #tpu.memory_space<vmem>>, vector<32x32xbf16>
    %c0_9 = arith.constant 0 : index
    %c0_10 = arith.constant 0 : index
    %5 = vector.load %arg6[%c0_9, %c0_10] : memref<1x32xf32, #tpu.memory_space<vmem>>, vector<1x32xf32>
    %c0_11 = arith.constant 0 : index
    %c0_12 = arith.constant 0 : index
    %6 = vector.load %arg7[%c0_11, %c0_12] : memref<32x32xbf16, #tpu.memory_space<vmem>>, vector<32x32xbf16>
    %c0_13 = arith.constant 0 : index
    %c0_14 = arith.constant 0 : index
    %7 = vector.load %arg8[%c0_13, %c0_14] : memref<1x32xf32, #tpu.memory_space<vmem>>, vector<1x32xf32>
    %c0_15 = arith.constant 0 : index
    %c0_16 = arith.constant 0 : index
    %8 = vector.load %arg9[%c0_15, %c0_16] : memref<32x32xbf16, #tpu.memory_space<vmem>>, vector<32x32xbf16>
    %c0_17 = arith.constant 0 : index
    %c0_18 = arith.constant 0 : index
    %9 = vector.load %arg10[%c0_17, %c0_18] : memref<1x32xf32, #tpu.memory_space<vmem>>, vector<1x32xf32>
    %c0_19 = arith.constant 0 : index
    %c0_20 = arith.constant 0 : index
    %10 = vector.load %arg11[%c0_19, %c0_20] : memref<1x32xf32, #tpu.memory_space<vmem>>, vector<1x32xf32>
    %c0_21 = arith.constant 0 : index
    %c0_22 = arith.constant 0 : index
    %11 = vector.load %arg12[%c0_21, %c0_22] : memref<1x32xf32, #tpu.memory_space<vmem>>, vector<1x32xf32>
    %12 = arith.truncf %0 : vector<16x32xf32> to vector<16x32xbf16>
    %13 = arith.truncf %0 : vector<16x32xf32> to vector<16x32xbf16>
    %cst = arith.constant dense<0.000000e+00> : vector<16x32xf32>
    %14 = tpu.matmul %12, %2, %cst {dimension_numbers = #tpu.dot_dimension_numbers<[1], [0], [0], [1], [0, 0, 1, 1], [], []>} : vector<16x32xbf16>, vector<32x32xbf16>, vector<16x32xf32> -> vector<16x32xf32>
    %15 = vector.broadcast %3 : vector<1x32xf32> to vector<16x32xf32>
    %16 = arith.addf %14, %15 : vector<16x32xf32>
    %cst_23 = arith.constant 0.353553385 : f32
    %17 = vector.broadcast %cst_23 : f32 to vector<16x32xf32>
    %18 = arith.mulf %16, %17 : vector<16x32xf32>
    %c0_24 = arith.constant 0 : index
    %c0_25 = arith.constant 0 : index
    %19 = vector.load %arg32[%c0_24, %c0_25] : memref<16x32xf32, #tpu.memory_space<vmem>>, vector<16x32xf32>
    tpu.vector_store %arg32[%c0_24, %c0_25], %18 {strides = array<i32>} : memref<16x32xf32, #tpu.memory_space<vmem>>, vector<16x32xf32>,
    %cst_26 = arith.constant dense<0.000000e+00> : vector<16x32xf32>
    %20 = tpu.matmul %13, %4, %cst_26 {dimension_numbers = #tpu.dot_dimension_numbers<[1], [0], [0], [1], [0, 0, 1, 1], [], []>} : vector<16x32xbf16>, vector<32x32xbf16>, vector<16x32xf32> -> vector<16x32xf32>
    %21 = vector.broadcast %5 : vector<1x32xf32> to vector<16x32xf32>
    %22 = arith.addf %20, %21 : vector<16x32xf32>
    %c0_27 = arith.constant 0 : index
    %c0_28 = arith.constant 0 : index
    %23 = vector.load %arg33[%c0_27, %c0_28] : memref<16x32xf32, #tpu.memory_space<vmem>>, vector<16x32xf32>
    tpu.vector_store %arg33[%c0_27, %c0_28], %22 {strides = array<i32>} : memref<16x32xf32, #tpu.memory_space<vmem>>, vector<16x32xf32>,
    %cst_29 = arith.constant dense<0.000000e+00> : vector<16x32xf32>
    %24 = tpu.matmul %13, %6, %cst_29 {dimension_numbers = #tpu.dot_dimension_numbers<[1], [0], [0], [1], [0, 0, 1, 1], [], []>} : vector<16x32xbf16>, vector<32x32xbf16>, vector<16x32xf32> -> vector<16x32xf32>
    %25 = vector.broadcast %7 : vector<1x32xf32> to vector<16x32xf32>
    %26 = arith.addf %24, %25 : vector<16x32xf32>
    %c0_30 = arith.constant 0 : index
    %c0_31 = arith.constant 0 : index
    %27 = vector.load %arg34[%c0_30, %c0_31] : memref<16x32xf32, #tpu.memory_space<vmem>>, vector<16x32xf32>
    tpu.vector_store %arg34[%c0_30, %c0_31], %26 {strides = array<i32>} : memref<16x32xf32, #tpu.memory_space<vmem>>, vector<16x32xf32>,
    %c0_32 = arith.constant 0 : index
    %c0_33 = arith.constant 0 : index
    %28 = vector.load %arg32[%c0_32, %c0_33] : memref<16x32xf32, #tpu.memory_space<vmem>>, vector<16x8xf32>
    %29 = vector.shape_cast %28 : vector<16x8xf32> to vector<1x16x8xf32>
    %30 = arith.truncf %29 : vector<1x16x8xf32> to vector<1x16x8xbf16>
    %c0_34 = arith.constant 0 : index
    %c0_35 = arith.constant 0 : index
    %31 = vector.load %arg33[%c0_34, %c0_35] : memref<16x32xf32, #tpu.memory_space<vmem>>, vector<16x8xf32>
    %32 = vector.shape_cast %31 : vector<16x8xf32> to vector<1x16x8xf32>
    %33 = arith.truncf %32 : vector<1x16x8xf32> to vector<1x16x8xbf16>
    %c0_36 = arith.constant 0 : index
    %c0_37 = arith.constant 0 : index
    %34 = vector.load %arg34[%c0_36, %c0_37] : memref<16x32xf32, #tpu.memory_space<vmem>>, vector<16x8xf32>
    %35 = vector.shape_cast %34 : vector<16x8xf32> to vector<1x16x8xf32>
    %36 = arith.truncf %35 : vector<1x16x8xf32> to vector<1x16x8xbf16>
    %cst_38 = arith.constant dense<0.000000e+00> : vector<1x16x16xf32>
    %37 = tpu.matmul %30, %33, %cst_38 {dimension_numbers = #tpu.dot_dimension_numbers<[2], [2], [1], [1], [0, 0, 0, 1, 1, 1], [0], [0]>} : vector<1x16x8xbf16>, vector<1x16x8xbf16>, vector<1x16x16xf32> -> vector<1x16x16xf32>
    %cst_39 = arith.constant dense<0xFF800000> : vector<1x16xf32>
    %38 = vector.multi_reduction <maximumf>, %37, %cst_39 [2] : vector<1x16x16xf32> to vector<1x16xf32>
    %39 = vector.shape_cast %38 : vector<1x16xf32> to vector<1x16x1xf32>
    %40 = vector.broadcast %39 : vector<1x16x1xf32> to vector<1x16x16xf32>
    %41 = arith.subf %37, %40 : vector<1x16x16xf32>
    %42 = math.exp %41 : vector<1x16x16xf32>
    %cst_40 = arith.constant dense<0.000000e+00> : vector<1x16xf32>
    %43 = vector.multi_reduction <add>, %42, %cst_40 [2] : vector<1x16x16xf32> to vector<1x16xf32>
    %44 = vector.shape_cast %43 : vector<1x16xf32> to vector<1x16x1xf32>
    %45 = tpu.reciprocal %44 {approx = true} : vector<1x16x1xf32> -> vector<1x16x1xf32>
    %46 = vector.broadcast %45 : vector<1x16x1xf32> to vector<1x16x16xf32>
    %47 = arith.mulf %42, %46 : vector<1x16x16xf32>
    %48 = arith.truncf %47 : vector<1x16x16xf32> to vector<1x16x16xbf16>
    %cst_41 = arith.constant dense<0.000000e+00> : vector<1x16x8xf32>
    %49 = tpu.matmul %48, %36, %cst_41 {dimension_numbers = #tpu.dot_dimension_numbers<[2], [1], [1], [2], [0, 0, 0, 1, 1, 2], [0], [0]>} : vector<1x16x16xbf16>, vector<1x16x8xbf16>, vector<1x16x8xf32> -> vector<1x16x8xf32>
    %50 = vector.shape_cast %49 : vector<1x16x8xf32> to vector<16x8xf32>
    %c0_42 = arith.constant 0 : index
    %c0_43 = arith.constant 0 : index
    %51 = vector.load %arg35[%c0_42, %c0_43] : memref<16x32xf32, #tpu.memory_space<vmem>>, vector<16x8xf32>
    tpu.vector_store %arg35[%c0_42, %c0_43], %50 {strides = array<i32>} : memref<16x32xf32, #tpu.memory_space<vmem>>, vector<16x8xf32>,
    %52 = vector.shape_cast %47 : vector<1x16x16xf32> to vector<16x16xf32>
    %53 = arith.truncf %52 : vector<16x16xf32> to vector<16x16xbf16>
    %c0_44 = arith.constant 0 : index
    %c0_45 = arith.constant 0 : index
    %54 = vector.load %arg30[%c0_44, %c0_45] : memref<16x64xbf16, #tpu.memory_space<vmem>>, vector<16x16xbf16>
    tpu.vector_store %arg30[%c0_44, %c0_45], %53 {strides = array<i32>} : memref<16x64xbf16, #tpu.memory_space<vmem>>, vector<16x16xbf16>,
    %c0_46 = arith.constant 0 : index
    %c8 = arith.constant 8 : index
    %55 = vector.load %arg32[%c0_46, %c8] : memref<16x32xf32, #tpu.memory_space<vmem>>, vector<16x8xf32>
    %56 = vector.shape_cast %55 : vector<16x8xf32> to vector<1x16x8xf32>
    %57 = arith.truncf %56 : vector<1x16x8xf32> to vector<1x16x8xbf16>
    %c0_47 = arith.constant 0 : index
    %c8_48 = arith.constant 8 : index
    %58 = vector.load %arg33[%c0_47, %c8_48] : memref<16x32xf32, #tpu.memory_space<vmem>>, vector<16x8xf32>
    %59 = vector.shape_cast %58 : vector<16x8xf32> to vector<1x16x8xf32>
    %60 = arith.truncf %59 : vector<1x16x8xf32> to vector<1x16x8xbf16>
    %c0_49 = arith.constant 0 : index
    %c8_50 = arith.constant 8 : index
    %61 = vector.load %arg34[%c0_49, %c8_50] : memref<16x32xf32, #tpu.memory_space<vmem>>, vector<16x8xf32>
    %62 = vector.shape_cast %61 : vector<16x8xf32> to vector<1x16x8xf32>
    %63 = arith.truncf %62 : vector<1x16x8xf32> to vector<1x16x8xbf16>
    %cst_51 = arith.constant dense<0.000000e+00> : vector<1x16x16xf32>
    %64 = tpu.matmul %57, %60, %cst_51 {dimension_numbers = #tpu.dot_dimension_numbers<[2], [2], [1], [1], [0, 0, 0, 1, 1, 1], [0], [0]>} : vector<1x16x8xbf16>, vector<1x16x8xbf16>, vector<1x16x16xf32> -> vector<1x16x16xf32>
    %cst_52 = arith.constant dense<0xFF800000> : vector<1x16xf32>
    %65 = vector.multi_reduction <maximumf>, %64, %cst_52 [2] : vector<1x16x16xf32> to vector<1x16xf32>
    %66 = vector.shape_cast %65 : vector<1x16xf32> to vector<1x16x1xf32>
    %67 = vector.broadcast %66 : vector<1x16x1xf32> to vector<1x16x16xf32>
    %68 = arith.subf %64, %67 : vector<1x16x16xf32>
    %69 = math.exp %68 : vector<1x16x16xf32>
    %cst_53 = arith.constant dense<0.000000e+00> : vector<1x16xf32>
    %70 = vector.multi_reduction <add>, %69, %cst_53 [2] : vector<1x16x16xf32> to vector<1x16xf32>
    %71 = vector.shape_cast %70 : vector<1x16xf32> to vector<1x16x1xf32>
    %72 = tpu.reciprocal %71 {approx = true} : vector<1x16x1xf32> -> vector<1x16x1xf32>
    %73 = vector.broadcast %72 : vector<1x16x1xf32> to vector<1x16x16xf32>
    %74 = arith.mulf %69, %73 : vector<1x16x16xf32>
    %75 = arith.truncf %74 : vector<1x16x16xf32> to vector<1x16x16xbf16>
    %cst_54 = arith.constant dense<0.000000e+00> : vector<1x16x8xf32>
    %76 = tpu.matmul %75, %63, %cst_54 {dimension_numbers = #tpu.dot_dimension_numbers<[2], [1], [1], [2], [0, 0, 0, 1, 1, 2], [0], [0]>} : vector<1x16x16xbf16>, vector<1x16x8xbf16>, vector<1x16x8xf32> -> vector<1x16x8xf32>
    %77 = vector.shape_cast %76 : vector<1x16x8xf32> to vector<16x8xf32>
    %c0_55 = arith.constant 0 : index
    %c8_56 = arith.constant 8 : index
    %78 = vector.load %arg35[%c0_55, %c8_56] : memref<16x32xf32, #tpu.memory_space<vmem>>, vector<16x8xf32>
    tpu.vector_store %arg35[%c0_55, %c8_56], %77 {strides = array<i32>} : memref<16x32xf32, #tpu.memory_space<vmem>>, vector<16x8xf32>,
    %79 = vector.shape_cast %74 : vector<1x16x16xf32> to vector<16x16xf32>
    %80 = arith.truncf %79 : vector<16x16xf32> to vector<16x16xbf16>
    %c0_57 = arith.constant 0 : index
    %c16 = arith.constant 16 : index
    %81 = vector.load %arg30[%c0_57, %c16] : memref<16x64xbf16, #tpu.memory_space<vmem>>, vector<16x16xbf16>
    tpu.vector_store %arg30[%c0_57, %c16], %80 {strides = array<i32>} : memref<16x64xbf16, #tpu.memory_space<vmem>>, vector<16x16xbf16>,
    %c0_58 = arith.constant 0 : index
    %c16_59 = arith.constant 16 : index
    %82 = vector.load %arg32[%c0_58, %c16_59] : memref<16x32xf32, #tpu.memory_space<vmem>>, vector<16x8xf32>
    %83 = vector.shape_cast %82 : vector<16x8xf32> to vector<1x16x8xf32>
    %84 = arith.truncf %83 : vector<1x16x8xf32> to vector<1x16x8xbf16>
    %c0_60 = arith.constant 0 : index
    %c16_61 = arith.constant 16 : index
    %85 = vector.load %arg33[%c0_60, %c16_61] : memref<16x32xf32, #tpu.memory_space<vmem>>, vector<16x8xf32>
    %86 = vector.shape_cast %85 : vector<16x8xf32> to vector<1x16x8xf32>
    %87 = arith.truncf %86 : vector<1x16x8xf32> to vector<1x16x8xbf16>
    %c0_62 = arith.constant 0 : index
    %c16_63 = arith.constant 16 : index
    %88 = vector.load %arg34[%c0_62, %c16_63] : memref<16x32xf32, #tpu.memory_space<vmem>>, vector<16x8xf32>
    %89 = vector.shape_cast %88 : vector<16x8xf32> to vector<1x16x8xf32>
    %90 = arith.truncf %89 : vector<1x16x8xf32> to vector<1x16x8xbf16>
    %cst_64 = arith.constant dense<0.000000e+00> : vector<1x16x16xf32>
    %91 = tpu.matmul %84, %87, %cst_64 {dimension_numbers = #tpu.dot_dimension_numbers<[2], [2], [1], [1], [0, 0, 0, 1, 1, 1], [0], [0]>} : vector<1x16x8xbf16>, vector<1x16x8xbf16>, vector<1x16x16xf32> -> vector<1x16x16xf32>
    %cst_65 = arith.constant dense<0xFF800000> : vector<1x16xf32>
    %92 = vector.multi_reduction <maximumf>, %91, %cst_65 [2] : vector<1x16x16xf32> to vector<1x16xf32>
    %93 = vector.shape_cast %92 : vector<1x16xf32> to vector<1x16x1xf32>
    %94 = vector.broadcast %93 : vector<1x16x1xf32> to vector<1x16x16xf32>
    %95 = arith.subf %91, %94 : vector<1x16x16xf32>
    %96 = math.exp %95 : vector<1x16x16xf32>
    %cst_66 = arith.constant dense<0.000000e+00> : vector<1x16xf32>
    %97 = vector.multi_reduction <add>, %96, %cst_66 [2] : vector<1x16x16xf32> to vector<1x16xf32>
    %98 = vector.shape_cast %97 : vector<1x16xf32> to vector<1x16x1xf32>
    %99 = tpu.reciprocal %98 {approx = true} : vector<1x16x1xf32> -> vector<1x16x1xf32>
    %100 = vector.broadcast %99 : vector<1x16x1xf32> to vector<1x16x16xf32>
    %101 = arith.mulf %96, %100 : vector<1x16x16xf32>
    %102 = arith.truncf %101 : vector<1x16x16xf32> to vector<1x16x16xbf16>
    %cst_67 = arith.constant dense<0.000000e+00> : vector<1x16x8xf32>
    %103 = tpu.matmul %102, %90, %cst_67 {dimension_numbers = #tpu.dot_dimension_numbers<[2], [1], [1], [2], [0, 0, 0, 1, 1, 2], [0], [0]>} : vector<1x16x16xbf16>, vector<1x16x8xbf16>, vector<1x16x8xf32> -> vector<1x16x8xf32>
    %104 = vector.shape_cast %103 : vector<1x16x8xf32> to vector<16x8xf32>
    %c0_68 = arith.constant 0 : index
    %c16_69 = arith.constant 16 : index
    %105 = vector.load %arg35[%c0_68, %c16_69] : memref<16x32xf32, #tpu.memory_space<vmem>>, vector<16x8xf32>
    tpu.vector_store %arg35[%c0_68, %c16_69], %104 {strides = array<i32>} : memref<16x32xf32, #tpu.memory_space<vmem>>, vector<16x8xf32>,
    %106 = vector.shape_cast %101 : vector<1x16x16xf32> to vector<16x16xf32>
    %107 = arith.truncf %106 : vector<16x16xf32> to vector<16x16xbf16>
    %c0_70 = arith.constant 0 : index
    %c32 = arith.constant 32 : index
    %108 = vector.load %arg30[%c0_70, %c32] : memref<16x64xbf16, #tpu.memory_space<vmem>>, vector<16x16xbf16>
    tpu.vector_store %arg30[%c0_70, %c32], %107 {strides = array<i32>} : memref<16x64xbf16, #tpu.memory_space<vmem>>, vector<16x16xbf16>,
    %c0_71 = arith.constant 0 : index
    %c24 = arith.constant 24 : index
    %109 = vector.load %arg32[%c0_71, %c24] : memref<16x32xf32, #tpu.memory_space<vmem>>, vector<16x8xf32>
    %110 = vector.shape_cast %109 : vector<16x8xf32> to vector<1x16x8xf32>
    %111 = arith.truncf %110 : vector<1x16x8xf32> to vector<1x16x8xbf16>
    %c0_72 = arith.constant 0 : index
    %c24_73 = arith.constant 24 : index
    %112 = vector.load %arg33[%c0_72, %c24_73] : memref<16x32xf32, #tpu.memory_space<vmem>>, vector<16x8xf32>
    %113 = vector.shape_cast %112 : vector<16x8xf32> to vector<1x16x8xf32>
    %114 = arith.truncf %113 : vector<1x16x8xf32> to vector<1x16x8xbf16>
    %c0_74 = arith.constant 0 : index
    %c24_75 = arith.constant 24 : index
    %115 = vector.load %arg34[%c0_74, %c24_75] : memref<16x32xf32, #tpu.memory_space<vmem>>, vector<16x8xf32>
    %116 = vector.shape_cast %115 : vector<16x8xf32> to vector<1x16x8xf32>
    %117 = arith.truncf %116 : vector<1x16x8xf32> to vector<1x16x8xbf16>
    %cst_76 = arith.constant dense<0.000000e+00> : vector<1x16x16xf32>
    %118 = tpu.matmul %111, %114, %cst_76 {dimension_numbers = #tpu.dot_dimension_numbers<[2], [2], [1], [1], [0, 0, 0, 1, 1, 1], [0], [0]>} : vector<1x16x8xbf16>, vector<1x16x8xbf16>, vector<1x16x16xf32> -> vector<1x16x16xf32>
    %cst_77 = arith.constant dense<0xFF800000> : vector<1x16xf32>
    %119 = vector.multi_reduction <maximumf>, %118, %cst_77 [2] : vector<1x16x16xf32> to vector<1x16xf32>
    %120 = vector.shape_cast %119 : vector<1x16xf32> to vector<1x16x1xf32>
    %121 = vector.broadcast %120 : vector<1x16x1xf32> to vector<1x16x16xf32>
    %122 = arith.subf %118, %121 : vector<1x16x16xf32>
    %123 = math.exp %122 : vector<1x16x16xf32>
    %cst_78 = arith.constant dense<0.000000e+00> : vector<1x16xf32>
    %124 = vector.multi_reduction <add>, %123, %cst_78 [2] : vector<1x16x16xf32> to vector<1x16xf32>
    %125 = vector.shape_cast %124 : vector<1x16xf32> to vector<1x16x1xf32>
    %126 = tpu.reciprocal %125 {approx = true} : vector<1x16x1xf32> -> vector<1x16x1xf32>
    %127 = vector.broadcast %126 : vector<1x16x1xf32> to vector<1x16x16xf32>
    %128 = arith.mulf %123, %127 : vector<1x16x16xf32>
    %129 = arith.truncf %128 : vector<1x16x16xf32> to vector<1x16x16xbf16>
    %cst_79 = arith.constant dense<0.000000e+00> : vector<1x16x8xf32>
    %130 = tpu.matmul %129, %117, %cst_79 {dimension_numbers = #tpu.dot_dimension_numbers<[2], [1], [1], [2], [0, 0, 0, 1, 1, 2], [0], [0]>} : vector<1x16x16xbf16>, vector<1x16x8xbf16>, vector<1x16x8xf32> -> vector<1x16x8xf32>
    %131 = vector.shape_cast %130 : vector<1x16x8xf32> to vector<16x8xf32>
    %c0_80 = arith.constant 0 : index
    %c24_81 = arith.constant 24 : index
    %132 = vector.load %arg35[%c0_80, %c24_81] : memref<16x32xf32, #tpu.memory_space<vmem>>, vector<16x8xf32>
    tpu.vector_store %arg35[%c0_80, %c24_81], %131 {strides = array<i32>} : memref<16x32xf32, #tpu.memory_space<vmem>>, vector<16x8xf32>,
    %133 = vector.shape_cast %128 : vector<1x16x16xf32> to vector<16x16xf32>
    %134 = arith.truncf %133 : vector<16x16xf32> to vector<16x16xbf16>
    %c0_82 = arith.constant 0 : index
    %c48 = arith.constant 48 : index
    %135 = vector.load %arg30[%c0_82, %c48] : memref<16x64xbf16, #tpu.memory_space<vmem>>, vector<16x16xbf16>
    tpu.vector_store %arg30[%c0_82, %c48], %134 {strides = array<i32>} : memref<16x64xbf16, #tpu.memory_space<vmem>>, vector<16x16xbf16>,
    %c0_83 = arith.constant 0 : index
    %c0_84 = arith.constant 0 : index
    %136 = vector.load %arg35[%c0_83, %c0_84] : memref<16x32xf32, #tpu.memory_space<vmem>>, vector<16x32xf32>
    %137 = arith.truncf %136 : vector<16x32xf32> to vector<16x32xbf16>
    %cst_85 = arith.constant dense<0.000000e+00> : vector<16x32xf32>
    %138 = tpu.matmul %137, %8, %cst_85 {dimension_numbers = #tpu.dot_dimension_numbers<[1], [0], [0], [1], [0, 0, 1, 1], [], []>} : vector<16x32xbf16>, vector<32x32xbf16>, vector<16x32xf32> -> vector<16x32xf32>
    %139 = vector.broadcast %9 : vector<1x32xf32> to vector<16x32xf32>
    %140 = arith.addf %138, %139 : vector<16x32xf32>
    %141 = arith.addf %140, %0 : vector<16x32xf32>
    %cst_86 = arith.constant dense<0.000000e+00> : vector<16xf32>
    %142 = vector.multi_reduction <add>, %141, %cst_86 [1] : vector<16x32xf32> to vector<16xf32>
    %143 = vector.shape_cast %142 : vector<16xf32> to vector<16x1xf32>
    %cst_87 = arith.constant 3.200000e+01 : f32
    %144 = vector.broadcast %cst_87 : f32 to vector<16x1xf32>
    %145 = arith.divf %143, %144 : vector<16x1xf32>
    %146 = vector.broadcast %145 : vector<16x1xf32> to vector<16x32xf32>
    %147 = arith.subf %141, %146 : vector<16x32xf32>
    %148 = arith.mulf %147, %147 : vector<16x32xf32>
    %cst_88 = arith.constant dense<0.000000e+00> : vector<16xf32>
    %149 = vector.multi_reduction <add>, %148, %cst_88 [1] : vector<16x32xf32> to vector<16xf32>
    %150 = vector.shape_cast %149 : vector<16xf32> to vector<16x1xf32>
    %cst_89 = arith.constant 3.200000e+01 : f32
    %151 = vector.broadcast %cst_89 : f32 to vector<16x1xf32>
    %152 = arith.divf %150, %151 : vector<16x1xf32>
    %cst_90 = arith.constant 9.99999974E-6 : f32
    %153 = vector.broadcast %cst_90 : f32 to vector<16x1xf32>
    %154 = arith.addf %152, %153 : vector<16x1xf32>
    %155 = math.rsqrt %154 : vector<16x1xf32>
    %156 = vector.broadcast %155 : vector<16x1xf32> to vector<16x32xf32>
    %157 = arith.mulf %147, %156 : vector<16x32xf32>
    %158 = vector.broadcast %10 : vector<1x32xf32> to vector<16x32xf32>
    %159 = arith.mulf %157, %158 : vector<16x32xf32>
    %160 = vector.broadcast %11 : vector<1x32xf32> to vector<16x32xf32>
    %161 = arith.addf %159, %160 : vector<16x32xf32>
    %c0_91 = arith.constant 0 : index
    %c0_92 = arith.constant 0 : index
    %162 = vector.load %arg13[%c0_91, %c0_92] : memref<32x32xbf16, #tpu.memory_space<vmem>>, vector<32x32xbf16>
    %c0_93 = arith.constant 0 : index
    %c0_94 = arith.constant 0 : index
    %163 = vector.load %arg14[%c0_93, %c0_94] : memref<1x32xf32, #tpu.memory_space<vmem>>, vector<1x32xf32>
    %c0_95 = arith.constant 0 : index
    %c0_96 = arith.constant 0 : index
    %164 = vector.load %arg15[%c0_95, %c0_96] : memref<32x32xbf16, #tpu.memory_space<vmem>>, vector<32x32xbf16>
    %c0_97 = arith.constant 0 : index
    %c0_98 = arith.constant 0 : index
    %165 = vector.load %arg16[%c0_97, %c0_98] : memref<1x32xf32, #tpu.memory_space<vmem>>, vector<1x32xf32>
    %c0_99 = arith.constant 0 : index
    %c0_100 = arith.constant 0 : index
    %166 = vector.load %arg17[%c0_99, %c0_100] : memref<32x32xbf16, #tpu.memory_space<vmem>>, vector<32x32xbf16>
    %c0_101 = arith.constant 0 : index
    %c0_102 = arith.constant 0 : index
    %167 = vector.load %arg18[%c0_101, %c0_102] : memref<1x32xf32, #tpu.memory_space<vmem>>, vector<1x32xf32>
    %c0_103 = arith.constant 0 : index
    %c0_104 = arith.constant 0 : index
    %168 = vector.load %arg19[%c0_103, %c0_104] : memref<32x32xbf16, #tpu.memory_space<vmem>>, vector<32x32xbf16>
    %c0_105 = arith.constant 0 : index
    %c0_106 = arith.constant 0 : index
    %169 = vector.load %arg20[%c0_105, %c0_106] : memref<1x32xf32, #tpu.memory_space<vmem>>, vector<1x32xf32>
    %c0_107 = arith.constant 0 : index
    %c0_108 = arith.constant 0 : index
    %170 = vector.load %arg21[%c0_107, %c0_108] : memref<1x32xf32, #tpu.memory_space<vmem>>, vector<1x32xf32>
    %c0_109 = arith.constant 0 : index
    %c0_110 = arith.constant 0 : index
    %171 = vector.load %arg22[%c0_109, %c0_110] : memref<1x32xf32, #tpu.memory_space<vmem>>, vector<1x32xf32>
    %172 = arith.truncf %161 : vector<16x32xf32> to vector<16x32xbf16>
    %173 = arith.truncf %1 : vector<16x32xf32> to vector<16x32xbf16>
    %cst_111 = arith.constant dense<0.000000e+00> : vector<16x32xf32>
    %174 = tpu.matmul %172, %162, %cst_111 {dimension_numbers = #tpu.dot_dimension_numbers<[1], [0], [0], [1], [0, 0, 1, 1], [], []>} : vector<16x32xbf16>, vector<32x32xbf16>, vector<16x32xf32> -> vector<16x32xf32>
    %175 = vector.broadcast %163 : vector<1x32xf32> to vector<16x32xf32>
    %176 = arith.addf %174, %175 : vector<16x32xf32>
    %cst_112 = arith.constant 0.353553385 : f32
    %177 = vector.broadcast %cst_112 : f32 to vector<16x32xf32>
    %178 = arith.mulf %176, %177 : vector<16x32xf32>
    %c0_113 = arith.constant 0 : index
    %c0_114 = arith.constant 0 : index
    %179 = vector.load %arg32[%c0_113, %c0_114] : memref<16x32xf32, #tpu.memory_space<vmem>>, vector<16x32xf32>
    tpu.vector_store %arg32[%c0_113, %c0_114], %178 {strides = array<i32>} : memref<16x32xf32, #tpu.memory_space<vmem>>, vector<16x32xf32>,
    %cst_115 = arith.constant dense<0.000000e+00> : vector<16x32xf32>
    %180 = tpu.matmul %173, %164, %cst_115 {dimension_numbers = #tpu.dot_dimension_numbers<[1], [0], [0], [1], [0, 0, 1, 1], [], []>} : vector<16x32xbf16>, vector<32x32xbf16>, vector<16x32xf32> -> vector<16x32xf32>
    %181 = vector.broadcast %165 : vector<1x32xf32> to vector<16x32xf32>
    %182 = arith.addf %180, %181 : vector<16x32xf32>
    %c0_116 = arith.constant 0 : index
    %c0_117 = arith.constant 0 : index
    %183 = vector.load %arg33[%c0_116, %c0_117] : memref<16x32xf32, #tpu.memory_space<vmem>>, vector<16x32xf32>
    tpu.vector_store %arg33[%c0_116, %c0_117], %182 {strides = array<i32>} : memref<16x32xf32, #tpu.memory_space<vmem>>, vector<16x32xf32>,
    %cst_118 = arith.constant dense<0.000000e+00> : vector<16x32xf32>
    %184 = tpu.matmul %173, %166, %cst_118 {dimension_numbers = #tpu.dot_dimension_numbers<[1], [0], [0], [1], [0, 0, 1, 1], [], []>} : vector<16x32xbf16>, vector<32x32xbf16>, vector<16x32xf32> -> vector<16x32xf32>
    %185 = vector.broadcast %167 : vector<1x32xf32> to vector<16x32xf32>
    %186 = arith.addf %184, %185 : vector<16x32xf32>
    %c0_119 = arith.constant 0 : index
    %c0_120 = arith.constant 0 : index
    %187 = vector.load %arg34[%c0_119, %c0_120] : memref<16x32xf32, #tpu.memory_space<vmem>>, vector<16x32xf32>
    tpu.vector_store %arg34[%c0_119, %c0_120], %186 {strides = array<i32>} : memref<16x32xf32, #tpu.memory_space<vmem>>, vector<16x32xf32>,
    %c0_121 = arith.constant 0 : index
    %c0_122 = arith.constant 0 : index
    %188 = vector.load %arg32[%c0_121, %c0_122] : memref<16x32xf32, #tpu.memory_space<vmem>>, vector<16x8xf32>
    %189 = vector.shape_cast %188 : vector<16x8xf32> to vector<1x16x8xf32>
    %190 = arith.truncf %189 : vector<1x16x8xf32> to vector<1x16x8xbf16>
    %c0_123 = arith.constant 0 : index
    %c0_124 = arith.constant 0 : index
    %191 = vector.load %arg33[%c0_123, %c0_124] : memref<16x32xf32, #tpu.memory_space<vmem>>, vector<16x8xf32>
    %192 = vector.shape_cast %191 : vector<16x8xf32> to vector<1x16x8xf32>
    %193 = arith.truncf %192 : vector<1x16x8xf32> to vector<1x16x8xbf16>
    %c0_125 = arith.constant 0 : index
    %c0_126 = arith.constant 0 : index
    %194 = vector.load %arg34[%c0_125, %c0_126] : memref<16x32xf32, #tpu.memory_space<vmem>>, vector<16x8xf32>
    %195 = vector.shape_cast %194 : vector<16x8xf32> to vector<1x16x8xf32>
    %196 = arith.truncf %195 : vector<1x16x8xf32> to vector<1x16x8xbf16>
    %cst_127 = arith.constant dense<0.000000e+00> : vector<1x16x16xf32>
    %197 = tpu.matmul %190, %193, %cst_127 {dimension_numbers = #tpu.dot_dimension_numbers<[2], [2], [1], [1], [0, 0, 0, 1, 1, 1], [0], [0]>} : vector<1x16x8xbf16>, vector<1x16x8xbf16>, vector<1x16x16xf32> -> vector<1x16x16xf32>
    %cst_128 = arith.constant dense<0xFF800000> : vector<1x16xf32>
    %198 = vector.multi_reduction <maximumf>, %197, %cst_128 [2] : vector<1x16x16xf32> to vector<1x16xf32>
    %199 = vector.shape_cast %198 : vector<1x16xf32> to vector<1x16x1xf32>
    %200 = vector.broadcast %199 : vector<1x16x1xf32> to vector<1x16x16xf32>
    %201 = arith.subf %197, %200 : vector<1x16x16xf32>
    %202 = math.exp %201 : vector<1x16x16xf32>
    %cst_129 = arith.constant dense<0.000000e+00> : vector<1x16xf32>
    %203 = vector.multi_reduction <add>, %202, %cst_129 [2] : vector<1x16x16xf32> to vector<1x16xf32>
    %204 = vector.shape_cast %203 : vector<1x16xf32> to vector<1x16x1xf32>
    %205 = tpu.reciprocal %204 {approx = true} : vector<1x16x1xf32> -> vector<1x16x1xf32>
    %206 = vector.broadcast %205 : vector<1x16x1xf32> to vector<1x16x16xf32>
    %207 = arith.mulf %202, %206 : vector<1x16x16xf32>
    %208 = arith.truncf %207 : vector<1x16x16xf32> to vector<1x16x16xbf16>
    %cst_130 = arith.constant dense<0.000000e+00> : vector<1x16x8xf32>
    %209 = tpu.matmul %208, %196, %cst_130 {dimension_numbers = #tpu.dot_dimension_numbers<[2], [1], [1], [2], [0, 0, 0, 1, 1, 2], [0], [0]>} : vector<1x16x16xbf16>, vector<1x16x8xbf16>, vector<1x16x8xf32> -> vector<1x16x8xf32>
    %210 = vector.shape_cast %209 : vector<1x16x8xf32> to vector<16x8xf32>
    %c0_131 = arith.constant 0 : index
    %c0_132 = arith.constant 0 : index
    %211 = vector.load %arg35[%c0_131, %c0_132] : memref<16x32xf32, #tpu.memory_space<vmem>>, vector<16x8xf32>
    tpu.vector_store %arg35[%c0_131, %c0_132], %210 {strides = array<i32>} : memref<16x32xf32, #tpu.memory_space<vmem>>, vector<16x8xf32>,
    %212 = vector.shape_cast %207 : vector<1x16x16xf32> to vector<16x16xf32>
    %213 = arith.truncf %212 : vector<16x16xf32> to vector<16x16xbf16>
    %c0_133 = arith.constant 0 : index
    %c0_134 = arith.constant 0 : index
    %214 = vector.load %arg31[%c0_133, %c0_134] : memref<16x64xbf16, #tpu.memory_space<vmem>>, vector<16x16xbf16>
    tpu.vector_store %arg31[%c0_133, %c0_134], %213 {strides = array<i32>} : memref<16x64xbf16, #tpu.memory_space<vmem>>, vector<16x16xbf16>,
    %c0_135 = arith.constant 0 : index
    %c8_136 = arith.constant 8 : index
    %215 = vector.load %arg32[%c0_135, %c8_136] : memref<16x32xf32, #tpu.memory_space<vmem>>, vector<16x8xf32>
    %216 = vector.shape_cast %215 : vector<16x8xf32> to vector<1x16x8xf32>
    %217 = arith.truncf %216 : vector<1x16x8xf32> to vector<1x16x8xbf16>
    %c0_137 = arith.constant 0 : index
    %c8_138 = arith.constant 8 : index
    %218 = vector.load %arg33[%c0_137, %c8_138] : memref<16x32xf32, #tpu.memory_space<vmem>>, vector<16x8xf32>
    %219 = vector.shape_cast %218 : vector<16x8xf32> to vector<1x16x8xf32>
    %220 = arith.truncf %219 : vector<1x16x8xf32> to vector<1x16x8xbf16>
    %c0_139 = arith.constant 0 : index
    %c8_140 = arith.constant 8 : index
    %221 = vector.load %arg34[%c0_139, %c8_140] : memref<16x32xf32, #tpu.memory_space<vmem>>, vector<16x8xf32>
    %222 = vector.shape_cast %221 : vector<16x8xf32> to vector<1x16x8xf32>
    %223 = arith.truncf %222 : vector<1x16x8xf32> to vector<1x16x8xbf16>
    %cst_141 = arith.constant dense<0.000000e+00> : vector<1x16x16xf32>
    %224 = tpu.matmul %217, %220, %cst_141 {dimension_numbers = #tpu.dot_dimension_numbers<[2], [2], [1], [1], [0, 0, 0, 1, 1, 1], [0], [0]>} : vector<1x16x8xbf16>, vector<1x16x8xbf16>, vector<1x16x16xf32> -> vector<1x16x16xf32>
    %cst_142 = arith.constant dense<0xFF800000> : vector<1x16xf32>
    %225 = vector.multi_reduction <maximumf>, %224, %cst_142 [2] : vector<1x16x16xf32> to vector<1x16xf32>
    %226 = vector.shape_cast %225 : vector<1x16xf32> to vector<1x16x1xf32>
    %227 = vector.broadcast %226 : vector<1x16x1xf32> to vector<1x16x16xf32>
    %228 = arith.subf %224, %227 : vector<1x16x16xf32>
    %229 = math.exp %228 : vector<1x16x16xf32>
    %cst_143 = arith.constant dense<0.000000e+00> : vector<1x16xf32>
    %230 = vector.multi_reduction <add>, %229, %cst_143 [2] : vector<1x16x16xf32> to vector<1x16xf32>
    %231 = vector.shape_cast %230 : vector<1x16xf32> to vector<1x16x1xf32>
    %232 = tpu.reciprocal %231 {approx = true} : vector<1x16x1xf32> -> vector<1x16x1xf32>
    %233 = vector.broadcast %232 : vector<1x16x1xf32> to vector<1x16x16xf32>
    %234 = arith.mulf %229, %233 : vector<1x16x16xf32>
    %235 = arith.truncf %234 : vector<1x16x16xf32> to vector<1x16x16xbf16>
    %cst_144 = arith.constant dense<0.000000e+00> : vector<1x16x8xf32>
    %236 = tpu.matmul %235, %223, %cst_144 {dimension_numbers = #tpu.dot_dimension_numbers<[2], [1], [1], [2], [0, 0, 0, 1, 1, 2], [0], [0]>} : vector<1x16x16xbf16>, vector<1x16x8xbf16>, vector<1x16x8xf32> -> vector<1x16x8xf32>
    %237 = vector.shape_cast %236 : vector<1x16x8xf32> to vector<16x8xf32>
    %c0_145 = arith.constant 0 : index
    %c8_146 = arith.constant 8 : index
    %238 = vector.load %arg35[%c0_145, %c8_146] : memref<16x32xf32, #tpu.memory_space<vmem>>, vector<16x8xf32>
    tpu.vector_store %arg35[%c0_145, %c8_146], %237 {strides = array<i32>} : memref<16x32xf32, #tpu.memory_space<vmem>>, vector<16x8xf32>,
    %239 = vector.shape_cast %234 : vector<1x16x16xf32> to vector<16x16xf32>
    %240 = arith.truncf %239 : vector<16x16xf32> to vector<16x16xbf16>
    %c0_147 = arith.constant 0 : index
    %c16_148 = arith.constant 16 : index
    %241 = vector.load %arg31[%c0_147, %c16_148] : memref<16x64xbf16, #tpu.memory_space<vmem>>, vector<16x16xbf16>
    tpu.vector_store %arg31[%c0_147, %c16_148], %240 {strides = array<i32>} : memref<16x64xbf16, #tpu.memory_space<vmem>>, vector<16x16xbf16>,
    %c0_149 = arith.constant 0 : index
    %c16_150 = arith.constant 16 : index
    %242 = vector.load %arg32[%c0_149, %c16_150] : memref<16x32xf32, #tpu.memory_space<vmem>>, vector<16x8xf32>
    %243 = vector.shape_cast %242 : vector<16x8xf32> to vector<1x16x8xf32>
    %244 = arith.truncf %243 : vector<1x16x8xf32> to vector<1x16x8xbf16>
    %c0_151 = arith.constant 0 : index
    %c16_152 = arith.constant 16 : index
    %245 = vector.load %arg33[%c0_151, %c16_152] : memref<16x32xf32, #tpu.memory_space<vmem>>, vector<16x8xf32>
    %246 = vector.shape_cast %245 : vector<16x8xf32> to vector<1x16x8xf32>
    %247 = arith.truncf %246 : vector<1x16x8xf32> to vector<1x16x8xbf16>
    %c0_153 = arith.constant 0 : index
    %c16_154 = arith.constant 16 : index
    %248 = vector.load %arg34[%c0_153, %c16_154] : memref<16x32xf32, #tpu.memory_space<vmem>>, vector<16x8xf32>
    %249 = vector.shape_cast %248 : vector<16x8xf32> to vector<1x16x8xf32>
    %250 = arith.truncf %249 : vector<1x16x8xf32> to vector<1x16x8xbf16>
    %cst_155 = arith.constant dense<0.000000e+00> : vector<1x16x16xf32>
    %251 = tpu.matmul %244, %247, %cst_155 {dimension_numbers = #tpu.dot_dimension_numbers<[2], [2], [1], [1], [0, 0, 0, 1, 1, 1], [0], [0]>} : vector<1x16x8xbf16>, vector<1x16x8xbf16>, vector<1x16x16xf32> -> vector<1x16x16xf32>
    %cst_156 = arith.constant dense<0xFF800000> : vector<1x16xf32>
    %252 = vector.multi_reduction <maximumf>, %251, %cst_156 [2] : vector<1x16x16xf32> to vector<1x16xf32>
    %253 = vector.shape_cast %252 : vector<1x16xf32> to vector<1x16x1xf32>
    %254 = vector.broadcast %253 : vector<1x16x1xf32> to vector<1x16x16xf32>
    %255 = arith.subf %251, %254 : vector<1x16x16xf32>
    %256 = math.exp %255 : vector<1x16x16xf32>
    %cst_157 = arith.constant dense<0.000000e+00> : vector<1x16xf32>
    %257 = vector.multi_reduction <add>, %256, %cst_157 [2] : vector<1x16x16xf32> to vector<1x16xf32>
    %258 = vector.shape_cast %257 : vector<1x16xf32> to vector<1x16x1xf32>
    %259 = tpu.reciprocal %258 {approx = true} : vector<1x16x1xf32> -> vector<1x16x1xf32>
    %260 = vector.broadcast %259 : vector<1x16x1xf32> to vector<1x16x16xf32>
    %261 = arith.mulf %256, %260 : vector<1x16x16xf32>
    %262 = arith.truncf %261 : vector<1x16x16xf32> to vector<1x16x16xbf16>
    %cst_158 = arith.constant dense<0.000000e+00> : vector<1x16x8xf32>
    %263 = tpu.matmul %262, %250, %cst_158 {dimension_numbers = #tpu.dot_dimension_numbers<[2], [1], [1], [2], [0, 0, 0, 1, 1, 2], [0], [0]>} : vector<1x16x16xbf16>, vector<1x16x8xbf16>, vector<1x16x8xf32> -> vector<1x16x8xf32>
    %264 = vector.shape_cast %263 : vector<1x16x8xf32> to vector<16x8xf32>
    %c0_159 = arith.constant 0 : index
    %c16_160 = arith.constant 16 : index
    %265 = vector.load %arg35[%c0_159, %c16_160] : memref<16x32xf32, #tpu.memory_space<vmem>>, vector<16x8xf32>
    tpu.vector_store %arg35[%c0_159, %c16_160], %264 {strides = array<i32>} : memref<16x32xf32, #tpu.memory_space<vmem>>, vector<16x8xf32>,
    %266 = vector.shape_cast %261 : vector<1x16x16xf32> to vector<16x16xf32>
    %267 = arith.truncf %266 : vector<16x16xf32> to vector<16x16xbf16>
    %c0_161 = arith.constant 0 : index
    %c32_162 = arith.constant 32 : index
    %268 = vector.load %arg31[%c0_161, %c32_162] : memref<16x64xbf16, #tpu.memory_space<vmem>>, vector<16x16xbf16>
    tpu.vector_store %arg31[%c0_161, %c32_162], %267 {strides = array<i32>} : memref<16x64xbf16, #tpu.memory_space<vmem>>, vector<16x16xbf16>,
    %c0_163 = arith.constant 0 : index
    %c24_164 = arith.constant 24 : index
    %269 = vector.load %arg32[%c0_163, %c24_164] : memref<16x32xf32, #tpu.memory_space<vmem>>, vector<16x8xf32>
    %270 = vector.shape_cast %269 : vector<16x8xf32> to vector<1x16x8xf32>
    %271 = arith.truncf %270 : vector<1x16x8xf32> to vector<1x16x8xbf16>
    %c0_165 = arith.constant 0 : index
    %c24_166 = arith.constant 24 : index
    %272 = vector.load %arg33[%c0_165, %c24_166] : memref<16x32xf32, #tpu.memory_space<vmem>>, vector<16x8xf32>
    %273 = vector.shape_cast %272 : vector<16x8xf32> to vector<1x16x8xf32>
    %274 = arith.truncf %273 : vector<1x16x8xf32> to vector<1x16x8xbf16>
    %c0_167 = arith.constant 0 : index
    %c24_168 = arith.constant 24 : index
    %275 = vector.load %arg34[%c0_167, %c24_168] : memref<16x32xf32, #tpu.memory_space<vmem>>, vector<16x8xf32>
    %276 = vector.shape_cast %275 : vector<16x8xf32> to vector<1x16x8xf32>
    %277 = arith.truncf %276 : vector<1x16x8xf32> to vector<1x16x8xbf16>
    %cst_169 = arith.constant dense<0.000000e+00> : vector<1x16x16xf32>
    %278 = tpu.matmul %271, %274, %cst_169 {dimension_numbers = #tpu.dot_dimension_numbers<[2], [2], [1], [1], [0, 0, 0, 1, 1, 1], [0], [0]>} : vector<1x16x8xbf16>, vector<1x16x8xbf16>, vector<1x16x16xf32> -> vector<1x16x16xf32>
    %cst_170 = arith.constant dense<0xFF800000> : vector<1x16xf32>
    %279 = vector.multi_reduction <maximumf>, %278, %cst_170 [2] : vector<1x16x16xf32> to vector<1x16xf32>
    %280 = vector.shape_cast %279 : vector<1x16xf32> to vector<1x16x1xf32>
    %281 = vector.broadcast %280 : vector<1x16x1xf32> to vector<1x16x16xf32>
    %282 = arith.subf %278, %281 : vector<1x16x16xf32>
    %283 = math.exp %282 : vector<1x16x16xf32>
    %cst_171 = arith.constant dense<0.000000e+00> : vector<1x16xf32>
    %284 = vector.multi_reduction <add>, %283, %cst_171 [2] : vector<1x16x16xf32> to vector<1x16xf32>
    %285 = vector.shape_cast %284 : vector<1x16xf32> to vector<1x16x1xf32>
    %286 = tpu.reciprocal %285 {approx = true} : vector<1x16x1xf32> -> vector<1x16x1xf32>
    %287 = vector.broadcast %286 : vector<1x16x1xf32> to vector<1x16x16xf32>
    %288 = arith.mulf %283, %287 : vector<1x16x16xf32>
    %289 = arith.truncf %288 : vector<1x16x16xf32> to vector<1x16x16xbf16>
    %cst_172 = arith.constant dense<0.000000e+00> : vector<1x16x8xf32>
    %290 = tpu.matmul %289, %277, %cst_172 {dimension_numbers = #tpu.dot_dimension_numbers<[2], [1], [1], [2], [0, 0, 0, 1, 1, 2], [0], [0]>} : vector<1x16x16xbf16>, vector<1x16x8xbf16>, vector<1x16x8xf32> -> vector<1x16x8xf32>
    %291 = vector.shape_cast %290 : vector<1x16x8xf32> to vector<16x8xf32>
    %c0_173 = arith.constant 0 : index
    %c24_174 = arith.constant 24 : index
    %292 = vector.load %arg35[%c0_173, %c24_174] : memref<16x32xf32, #tpu.memory_space<vmem>>, vector<16x8xf32>
    tpu.vector_store %arg35[%c0_173, %c24_174], %291 {strides = array<i32>} : memref<16x32xf32, #tpu.memory_space<vmem>>, vector<16x8xf32>,
    %293 = vector.shape_cast %288 : vector<1x16x16xf32> to vector<16x16xf32>
    %294 = arith.truncf %293 : vector<16x16xf32> to vector<16x16xbf16>
    %c0_175 = arith.constant 0 : index
    %c48_176 = arith.constant 48 : index
    %295 = vector.load %arg31[%c0_175, %c48_176] : memref<16x64xbf16, #tpu.memory_space<vmem>>, vector<16x16xbf16>
    tpu.vector_store %arg31[%c0_175, %c48_176], %294 {strides = array<i32>} : memref<16x64xbf16, #tpu.memory_space<vmem>>, vector<16x16xbf16>,
    %c0_177 = arith.constant 0 : index
    %c0_178 = arith.constant 0 : index
    %296 = vector.load %arg35[%c0_177, %c0_178] : memref<16x32xf32, #tpu.memory_space<vmem>>, vector<16x32xf32>
    %297 = arith.truncf %296 : vector<16x32xf32> to vector<16x32xbf16>
    %cst_179 = arith.constant dense<0.000000e+00> : vector<16x32xf32>
    %298 = tpu.matmul %297, %168, %cst_179 {dimension_numbers = #tpu.dot_dimension_numbers<[1], [0], [0], [1], [0, 0, 1, 1], [], []>} : vector<16x32xbf16>, vector<32x32xbf16>, vector<16x32xf32> -> vector<16x32xf32>
    %299 = vector.broadcast %169 : vector<1x32xf32> to vector<16x32xf32>
    %300 = arith.addf %298, %299 : vector<16x32xf32>
    %301 = arith.addf %300, %161 : vector<16x32xf32>
    %cst_180 = arith.constant dense<0.000000e+00> : vector<16xf32>
    %302 = vector.multi_reduction <add>, %301, %cst_180 [1] : vector<16x32xf32> to vector<16xf32>
    %303 = vector.shape_cast %302 : vector<16xf32> to vector<16x1xf32>
    %cst_181 = arith.constant 3.200000e+01 : f32
    %304 = vector.broadcast %cst_181 : f32 to vector<16x1xf32>
    %305 = arith.divf %303, %304 : vector<16x1xf32>
    %306 = vector.broadcast %305 : vector<16x1xf32> to vector<16x32xf32>
    %307 = arith.subf %301, %306 : vector<16x32xf32>
    %308 = arith.mulf %307, %307 : vector<16x32xf32>
    %cst_182 = arith.constant dense<0.000000e+00> : vector<16xf32>
    %309 = vector.multi_reduction <add>, %308, %cst_182 [1] : vector<16x32xf32> to vector<16xf32>
    %310 = vector.shape_cast %309 : vector<16xf32> to vector<16x1xf32>
    %cst_183 = arith.constant 3.200000e+01 : f32
    %311 = vector.broadcast %cst_183 : f32 to vector<16x1xf32>
    %312 = arith.divf %310, %311 : vector<16x1xf32>
    %cst_184 = arith.constant 9.99999974E-6 : f32
    %313 = vector.broadcast %cst_184 : f32 to vector<16x1xf32>
    %314 = arith.addf %312, %313 : vector<16x1xf32>
    %315 = math.rsqrt %314 : vector<16x1xf32>
    %316 = vector.broadcast %315 : vector<16x1xf32> to vector<16x32xf32>
    %317 = arith.mulf %307, %316 : vector<16x32xf32>
    %318 = vector.broadcast %170 : vector<1x32xf32> to vector<16x32xf32>
    %319 = arith.mulf %317, %318 : vector<16x32xf32>
    %320 = vector.broadcast %171 : vector<1x32xf32> to vector<16x32xf32>
    %321 = arith.addf %319, %320 : vector<16x32xf32>
    %c0_185 = arith.constant 0 : index
    %c0_186 = arith.constant 0 : index
    %322 = vector.load %arg23[%c0_185, %c0_186] : memref<32x64xbf16, #tpu.memory_space<vmem>>, vector<32x64xbf16>
    %c0_187 = arith.constant 0 : index
    %c0_188 = arith.constant 0 : index
    %323 = vector.load %arg24[%c0_187, %c0_188] : memref<1x64xf32, #tpu.memory_space<vmem>>, vector<1x64xf32>
    %c0_189 = arith.constant 0 : index
    %c0_190 = arith.constant 0 : index
    %324 = vector.load %arg25[%c0_189, %c0_190] : memref<64x32xbf16, #tpu.memory_space<vmem>>, vector<64x32xbf16>
    %c0_191 = arith.constant 0 : index
    %c0_192 = arith.constant 0 : index
    %325 = vector.load %arg26[%c0_191, %c0_192] : memref<1x32xf32, #tpu.memory_space<vmem>>, vector<1x32xf32>
    %c0_193 = arith.constant 0 : index
    %c0_194 = arith.constant 0 : index
    %326 = vector.load %arg27[%c0_193, %c0_194] : memref<1x32xf32, #tpu.memory_space<vmem>>, vector<1x32xf32>
    %c0_195 = arith.constant 0 : index
    %c0_196 = arith.constant 0 : index
    %327 = vector.load %arg28[%c0_195, %c0_196] : memref<1x32xf32, #tpu.memory_space<vmem>>, vector<1x32xf32>
    %328 = arith.truncf %321 : vector<16x32xf32> to vector<16x32xbf16>
    %cst_197 = arith.constant dense<0.000000e+00> : vector<16x64xf32>
    %329 = tpu.matmul %328, %322, %cst_197 {dimension_numbers = #tpu.dot_dimension_numbers<[1], [0], [0], [1], [0, 0, 1, 1], [], []>} : vector<16x32xbf16>, vector<32x64xbf16>, vector<16x64xf32> -> vector<16x64xf32>
    %330 = vector.broadcast %323 : vector<1x64xf32> to vector<16x64xf32>
    %331 = arith.addf %329, %330 : vector<16x64xf32>
    %cst_198 = arith.constant 0.000000e+00 : f32
    %332 = vector.broadcast %cst_198 : f32 to vector<16x64xf32>
    %333 = arith.maximumf %331, %332 : vector<16x64xf32>
    %334 = arith.truncf %333 : vector<16x64xf32> to vector<16x64xbf16>
    %cst_199 = arith.constant dense<0.000000e+00> : vector<16x32xf32>
    %335 = tpu.matmul %334, %324, %cst_199 {dimension_numbers = #tpu.dot_dimension_numbers<[1], [0], [0], [1], [0, 0, 1, 1], [], []>} : vector<16x64xbf16>, vector<64x32xbf16>, vector<16x32xf32> -> vector<16x32xf32>
    %336 = vector.broadcast %325 : vector<1x32xf32> to vector<16x32xf32>
    %337 = arith.addf %335, %336 : vector<16x32xf32>
    %338 = arith.addf %337, %321 : vector<16x32xf32>
    %cst_200 = arith.constant dense<0.000000e+00> : vector<16xf32>
    %339 = vector.multi_reduction <add>, %338, %cst_200 [1] : vector<16x32xf32> to vector<16xf32>
    %340 = vector.shape_cast %339 : vector<16xf32> to vector<16x1xf32>
    %cst_201 = arith.constant 3.200000e+01 : f32
    %341 = vector.broadcast %cst_201 : f32 to vector<16x1xf32>
    %342 = arith.divf %340, %341 : vector<16x1xf32>
    %343 = vector.broadcast %342 : vector<16x1xf32> to vector<16x32xf32>
    %344 = arith.subf %338, %343 : vector<16x32xf32>
    %345 = arith.mulf %344, %344 : vector<16x32xf32>
    %cst_202 = arith.constant dense<0.000000e+00> : vector<16xf32>
    %346 = vector.multi_reduction <add>, %345, %cst_202 [1] : vector<16x32xf32> to vector<16xf32>
    %347 = vector.shape_cast %346 : vector<16xf32> to vector<16x1xf32>
    %cst_203 = arith.constant 3.200000e+01 : f32
    %348 = vector.broadcast %cst_203 : f32 to vector<16x1xf32>
    %349 = arith.divf %347, %348 : vector<16x1xf32>
    %cst_204 = arith.constant 9.99999974E-6 : f32
    %350 = vector.broadcast %cst_204 : f32 to vector<16x1xf32>
    %351 = arith.addf %349, %350 : vector<16x1xf32>
    %352 = math.rsqrt %351 : vector<16x1xf32>
    %353 = vector.broadcast %352 : vector<16x1xf32> to vector<16x32xf32>
    %354 = arith.mulf %344, %353 : vector<16x32xf32>
    %355 = vector.broadcast %326 : vector<1x32xf32> to vector<16x32xf32>
    %356 = arith.mulf %354, %355 : vector<16x32xf32>
    %357 = vector.broadcast %327 : vector<1x32xf32> to vector<16x32xf32>
    %358 = arith.addf %356, %357 : vector<16x32xf32>
    %c0_205 = arith.constant 0 : index
    %c0_206 = arith.constant 0 : index
    %359 = vector.load %arg29[%c0_205, %c0_206] : memref<16x32xf32, #tpu.memory_space<vmem>>, vector<16x32xf32>
    tpu.vector_store %arg29[%c0_205, %c0_206], %358 {strides = array<i32>} : memref<16x32xf32, #tpu.memory_space<vmem>>, vector<16x32xf32>,
    return
  }
  func.func @transform_0(%arg0: i32) -> (i32, i32) {
    %c0_i32 = arith.constant 0 : i32
    %c0_i32_0 = arith.constant 0 : i32
    return %arg0, %c0_i32 : i32, i32
  }
  func.func @transform_1(%arg0: i32) -> (i32, i32) {
    %c0_i32 = arith.constant 0 : i32
    %c0_i32_0 = arith.constant 0 : i32
    return %arg0, %c0_i32 : i32, i32
  }
  func.func @transform_2(%arg0: i32) -> (i32, i32) {
    %c0_i32 = arith.constant 0 : i32
    %c0_i32_0 = arith.constant 0 : i32
    %c0_i32_1 = arith.constant 0 : i32
    return %c0_i32, %c0_i32_0 : i32, i32
  }
  func.func @transform_3(%arg0: i32) -> (i32, i32) {
    %c0_i32 = arith.constant 0 : i32
    %c0_i32_0 = arith.constant 0 : i32
    %c0_i32_1 = arith.constant 0 : i32
    return %c0_i32, %c0_i32_0 : i32, i32
  }
  func.func @transform_4(%arg0: i32) -> (i32, i32) {
    %c0_i32 = arith.constant 0 : i32
    %c0_i32_0 = arith.constant 0 : i32
    %c0_i32_1 = arith.constant 0 : i32
    return %c0_i32, %c0_i32_0 : i32, i32
  }
  func.func @transform_5(%arg0: i32) -> (i32, i32) {
    %c0_i32 = arith.constant 0 : i32
    %c0_i32_0 = arith.constant 0 : i32
    %c0_i32_1 = arith.constant 0 : i32
    return %c0_i32, %c0_i32_0 : i32, i32
  }
  func.func @transform_6(%arg0: i32) -> (i32, i32) {
    %c0_i32 = arith.constant 0 : i32
    %c0_i32_0 = arith.constant 0 : i32
    %c0_i32_1 = arith.constant 0 : i32
    return %c0_i32, %c0_i32_0 : i32, i32
  }
  func.func @transform_7(%arg0: i32) -> (i32, i32) {
    %c0_i32 = arith.constant 0 : i32
    %c0_i32_0 = arith.constant 0 : i32
    %c0_i32_1 = arith.constant 0 : i32
    return %c0_i32, %c0_i32_0 : i32, i32
  }
  func.func @transform_8(%arg0: i32) -> (i32, i32) {
    %c0_i32 = arith.constant 0 : i32
    %c0_i32_0 = arith.constant 0 : i32
    %c0_i32_1 = arith.constant 0 : i32
    return %c0_i32, %c0_i32_0 : i32, i32
  }
  func.func @transform_9(%arg0: i32) -> (i32, i32) {
    %c0_i32 = arith.constant 0 : i32
    %c0_i32_0 = arith.constant 0 : i32
    %c0_i32_1 = arith.constant 0 : i32
    return %c0_i32, %c0_i32_0 : i32, i32
  }
  func.func @transform_10(%arg0: i32) -> (i32, i32) {
    %c0_i32 = arith.constant 0 : i32
    %c0_i32_0 = arith.constant 0 : i32
    %c0_i32_1 = arith.constant 0 : i32
    return %c0_i32, %c0_i32_0 : i32, i32
  }
  func.func @transform_11(%arg0: i32) -> (i32, i32) {
    %c0_i32 = arith.constant 0 : i32
    %c0_i32_0 = arith.constant 0 : i32
    %c0_i32_1 = arith.constant 0 : i32
    return %c0_i32, %c0_i32_0 : i32, i32
  }
  func.func @transform_12(%arg0: i32) -> (i32, i32) {
    %c0_i32 = arith.constant 0 : i32
    %c0_i32_0 = arith.constant 0 : i32
    %c0_i32_1 = arith.constant 0 : i32
    return %c0_i32, %c0_i32_0 : i32, i32
  }
  func.func @transform_13(%arg0: i32) -> (i32, i32) {
    %c0_i32 = arith.constant 0 : i32
    %c0_i32_0 = arith.constant 0 : i32
    %c0_i32_1 = arith.constant 0 : i32
    return %c0_i32, %c0_i32_0 : i32, i32
  }
  func.func @transform_14(%arg0: i32) -> (i32, i32) {
    %c0_i32 = arith.constant 0 : i32
    %c0_i32_0 = arith.constant 0 : i32
    %c0_i32_1 = arith.constant 0 : i32
    return %c0_i32, %c0_i32_0 : i32, i32
  }
  func.func @transform_15(%arg0: i32) -> (i32, i32) {
    %c0_i32 = arith.constant 0 : i32
    %c0_i32_0 = arith.constant 0 : i32
    %c0_i32_1 = arith.constant 0 : i32
    return %c0_i32, %c0_i32_0 : i32, i32
  }
  func.func @transform_16(%arg0: i32) -> (i32, i32) {
    %c0_i32 = arith.constant 0 : i32
    %c0_i32_0 = arith.constant 0 : i32
    %c0_i32_1 = arith.constant 0 : i32
    return %c0_i32, %c0_i32_0 : i32, i32
  }
  func.func @transform_17(%arg0: i32) -> (i32, i32) {
    %c0_i32 = arith.constant 0 : i32
    %c0_i32_0 = arith.constant 0 : i32
    %c0_i32_1 = arith.constant 0 : i32
    return %c0_i32, %c0_i32_0 : i32, i32
  }
  func.func @transform_18(%arg0: i32) -> (i32, i32) {
    %c0_i32 = arith.constant 0 : i32
    %c0_i32_0 = arith.constant 0 : i32
    %c0_i32_1 = arith.constant 0 : i32
    return %c0_i32, %c0_i32_0 : i32, i32
  }
  func.func @transform_19(%arg0: i32) -> (i32, i32) {
    %c0_i32 = arith.constant 0 : i32
    %c0_i32_0 = arith.constant 0 : i32
    %c0_i32_1 = arith.constant 0 : i32
    return %c0_i32, %c0_i32_0 : i32, i32
  }
  func.func @transform_20(%arg0: i32) -> (i32, i32) {
    %c0_i32 = arith.constant 0 : i32
    %c0_i32_0 = arith.constant 0 : i32
    %c0_i32_1 = arith.constant 0 : i32
    return %c0_i32, %c0_i32_0 : i32, i32
  }
  func.func @transform_21(%arg0: i32) -> (i32, i32) {
    %c0_i32 = arith.constant 0 : i32
    %c0_i32_0 = arith.constant 0 : i32
    %c0_i32_1 = arith.constant 0 : i32
    return %c0_i32, %c0_i32_0 : i32, i32
  }
  func.func @transform_22(%arg0: i32) -> (i32, i32) {
    %c0_i32 = arith.constant 0 : i32
    %c0_i32_0 = arith.constant 0 : i32
    %c0_i32_1 = arith.constant 0 : i32
    return %c0_i32, %c0_i32_0 : i32, i32
  }
  func.func @transform_23(%arg0: i32) -> (i32, i32) {
    %c0_i32 = arith.constant 0 : i32
    %c0_i32_0 = arith.constant 0 : i32
    %c0_i32_1 = arith.constant 0 : i32
    return %c0_i32, %c0_i32_0 : i32, i32
  }
  func.func @transform_24(%arg0: i32) -> (i32, i32) {
    %c0_i32 = arith.constant 0 : i32
    %c0_i32_0 = arith.constant 0 : i32
    %c0_i32_1 = arith.constant 0 : i32
    return %c0_i32, %c0_i32_0 : i32, i32
  }
  func.func @transform_25(%arg0: i32) -> (i32, i32) {
    %c0_i32 = arith.constant 0 : i32
    %c0_i32_0 = arith.constant 0 : i32
    %c0_i32_1 = arith.constant 0 : i32
    return %c0_i32, %c0_i32_0 : i32, i32
  }
  func.func @transform_26(%arg0: i32) -> (i32, i32) {
    %c0_i32 = arith.constant 0 : i32
    %c0_i32_0 = arith.constant 0 : i32
    %c0_i32_1 = arith.constant 0 : i32
    return %c0_i32, %c0_i32_0 : i32, i32
  }
  func.func @transform_27(%arg0: i32) -> (i32, i32) {
    %c0_i32 = arith.constant 0 : i32
    %c0_i32_0 = arith.constant 0 : i32
    %c0_i32_1 = arith.constant 0 : i32
    return %c0_i32, %c0_i32_0 : i32, i32
  }
  func.func @transform_28(%arg0: i32) -> (i32, i32) {
    %c0_i32 = arith.constant 0 : i32
    %c0_i32_0 = arith.constant 0 : i32
    return %arg0, %c0_i32 : i32, i32
  }
  func.func @transform_29(%arg0: i32) -> (i32, i32) {
    %c0_i32 = arith.constant 0 : i32
    %c0_i32_0 = arith.constant 0 : i32
    return %arg0, %c0_i32 : i32, i32
  }
  func.func @transform_30(%arg0: i32) -> (i32, i32) {
    %c0_i32 = arith.constant 0 : i32
    %c0_i32_0 = arith.constant 0 : i32
    return %arg0, %c0_i32 : i32, i32
  }
}

</mosaic_0001>

<llo_original>
// kernel: tpu_custom_call.1
$region0: #{tpu_custom_call.1}
  #allocation0 [shape = 'u32[]', space=smem, size = 0x4, offset = 0x4, fixed_abs, tag = 'smem constant byte address 0x4 - core index']
  #allocation1 [shape = 'u32[144,128]{1,0:T(1,128)}', space=vmem, size = 0x12000, scoped, tag = 'internal scratch']
  #allocation2 [shape = 'f32[16,32]{1,0:T(8,128)}', space=vmem, size = 0x2000, scoped, tag = 'scratch operand']
  #allocation3 [shape = 'f32[16,32]{1,0:T(8,128)}', space=vmem, size = 0x2000, scoped, tag = 'scratch operand']
  #allocation4 [shape = 'f32[16,32]{1,0:T(8,128)}', space=vmem, size = 0x2000, scoped, tag = 'scratch operand']
  #allocation5 [shape = 'f32[16,32]{1,0:T(8,128)}', space=vmem, size = 0x2000, scoped, tag = 'scratch operand']
  %s0 = inlined_call_operand.smem [shape: u32[31], index: -1, kind: input, shape index: {}]
  %s1 = sld [smem:[%s0]]
  %s2 = scalar_lea.smem %s0, 1
  %s3 = sld [smem:[%s2]]
  %s4 = scalar_lea.smem %s0, 2
  %s5 = sld [smem:[%s4]]
  %s6 = scalar_lea.smem %s0, 3
  %s7 = sld [smem:[%s6]]
  %s8 = scalar_lea.smem %s0, 4
  %s9 = sld [smem:[%s8]]
  %s10 = scalar_lea.smem %s0, 5
  %s11 = sld [smem:[%s10]]
  %s12 = scalar_lea.smem %s0, 6
  %s13 = sld [smem:[%s12]]
  %s14 = scalar_lea.smem %s0, 7
  %s15 = sld [smem:[%s14]]
  %s16 = scalar_lea.smem %s0, 8
  %s17 = sld [smem:[%s16]]
  %s18 = scalar_lea.smem %s0, 9
  %s19 = sld [smem:[%s18]]
  %s20 = scalar_lea.smem %s0, 10
  %s21 = sld [smem:[%s20]]
  %s22 = scalar_lea.smem %s0, 11
  %s23 = sld [smem:[%s22]]
  %s24 = scalar_lea.smem %s0, 12
  %s25 = sld [smem:[%s24]]
  %s26 = scalar_lea.smem %s0, 13
  %s27 = sld [smem:[%s26]]
  %s28 = scalar_lea.smem %s0, 14
  %s29 = sld [smem:[%s28]]
  %s30 = scalar_lea.smem %s0, 15
  %s31 = sld [smem:[%s30]]
  %s32 = scalar_lea.smem %s0, 16
  %s33 = sld [smem:[%s32]]
  %s34 = scalar_lea.smem %s0, 17
  %s35 = sld [smem:[%s34]]
  %s36 = scalar_lea.smem %s0, 18
  %s37 = sld [smem:[%s36]]
  %s38 = scalar_lea.smem %s0, 19
  %s39 = sld [smem:[%s38]]
  %s40 = scalar_lea.smem %s0, 20
  %s41 = sld [smem:[%s40]]
  %s42 = scalar_lea.smem %s0, 21
  %s43 = sld [smem:[%s42]]
  %s44 = scalar_lea.smem %s0, 22
  %s45 = sld [smem:[%s44]]
  %s46 = scalar_lea.smem %s0, 23
  %s47 = sld [smem:[%s46]]
  %s48 = scalar_lea.smem %s0, 24
  %s49 = sld [smem:[%s48]]
  %s50 = scalar_lea.smem %s0, 25
  %s51 = sld [smem:[%s50]]
  %s52 = scalar_lea.smem %s0, 26
  %s53 = sld [smem:[%s52]]
  %s54 = scalar_lea.smem %s0, 27
  %s55 = sld [smem:[%s54]]
  %s56 = scalar_lea.smem %s0, 28
  %s57 = sld [smem:[%s56]]
  %s58 = scalar_lea.smem %s0, 29
  %s59 = sld [smem:[%s58]]
  %s60 = scalar_lea.smem %s0, 30
  %s61 = sld [smem:[%s60]]
  %62 = xla_tuple %s57, %s59, %s61
  %s63 = sld [smem:[#allocation0]]
  $region217: #{tpu_custom_call.1} parent=0
    _
  %s65 = ssub.s32 1, %s63
  %s66 = scalar_select 0, %s65, %s63
  $region1: #{tpu_custom_call.1} parent=0
    #allocation6 [shape = 'u8[16384]{0}', space=vmem, size = 0x4000, scoped, tag = 'input window, operand 1']
    #allocation7 [shape = 's32[2]{0}', space=sflag, size = 0x8, scoped, tag = 'scoped memory for tpu_custom_call.1']
    #allocation8 [shape = 's32[2]{0}', space=sflag, size = 0x8, scoped, tag = 'scoped memory for tpu_custom_call.1']
    #allocation9 [shape = 'u8[512]{0}', space=vmem, size = 0x400, scoped, tag = 'input window, operand 3, single buffered']
    #allocation10 [shape = 's32[1]{0}', space=sflag, size = 0x4, scoped, tag = 'scoped memory for tpu_custom_call.1']
    #allocation11 [shape = 'u8[8192]{0}', space=vmem, size = 0x2000, scoped, tag = 'input window, operand 4, single buffered']
    #allocation12 [shape = 'u8[512]{0}', space=vmem, size = 0x400, scoped, tag = 'input window, operand 5, single buffered']
    #allocation13 [shape = 's32[1]{0}', space=sflag, size = 0x4, scoped, tag = 'scoped memory for tpu_custom_call.1']
    #allocation14 [shape = 'u8[8192]{0}', space=vmem, size = 0x2000, scoped, tag = 'input window, operand 6, single buffered']
    #allocation15 [shape = 'u8[512]{0}', space=vmem, size = 0x400, scoped, tag = 'input window, operand 7, single buffered']
    #allocation16 [shape = 's32[1]{0}', space=sflag, size = 0x4, scoped, tag = 'scoped memory for tpu_custom_call.1']
    #allocation17 [shape = 'u8[8192]{0}', space=vmem, size = 0x2000, scoped, tag = 'input window, operand 8, single buffered']
    #allocation18 [shape = 'u8[512]{0}', space=vmem, size = 0x400, scoped, tag = 'input window, operand 9, single buffered']
    #allocation19 [shape = 's32[1]{0}', space=sflag, size = 0x4, scoped, tag = 'scoped memory for tpu_custom_call.1']
    #allocation20 [shape = 'u8[512]{0}', space=vmem, size = 0x400, scoped, tag = 'input window, operand 10, single buffered']
    #allocation21 [shape = 'u8[512]{0}', space=vmem, size = 0x400, scoped, tag = 'input window, operand 11, single buffered']
    #allocation22 [shape = 's32[1]{0}', space=sflag, size = 0x4, scoped, tag = 'scoped memory for tpu_custom_call.1']
    #allocation23 [shape = 'u8[512]{0}', space=vmem, size = 0x400, scoped, tag = 'input window, operand 13, single buffered']
    #allocation24 [shape = 'u8[512]{0}', space=vmem, size = 0x400, scoped, tag = 'input window, operand 15, single buffered']
    #allocation25 [shape = 's32[1]{0}', space=sflag, size = 0x4, scoped, tag = 'scoped memory for tpu_custom_call.1']
    #allocation26 [shape = 'u8[8192]{0}', space=vmem, size = 0x2000, scoped, tag = 'input window, operand 16, single buffered']
    #allocation27 [shape = 'u8[512]{0}', space=vmem, size = 0x400, scoped, tag = 'input window, operand 17, single buffered']
    #allocation28 [shape = 's32[1]{0}', space=sflag, size = 0x4, scoped, tag = 'scoped memory for tpu_custom_call.1']
    #allocation29 [shape = 'u8[16384]{0}', space=vmem, size = 0x4000, scoped, tag = 'output window, operand 0']
    #allocation30 [shape = 'u8[8192]{0}', space=vmem, size = 0x2000, scoped, tag = 'output window, operand 1']
    #allocation31 [shape = 's32[2]{0}', space=sflag, size = 0x8, scoped, tag = 'scoped memory for tpu_custom_call.1']
    #allocation32 [shape = 'u8[8192]{0}', space=vmem, size = 0x2000, scoped, tag = 'output window, operand 2']
    %67 = vsyncpa [#allocation7], 0
    %s68 = scalar_lea.sflag [#allocation7], 1
    %69 = vsyncpa %s68, 0
    %70 = vsyncpa [#allocation10], 0
    %71 = vsyncpa [#allocation13], 0
    %72 = vsyncpa [#allocation16], 0
    %73 = vsyncpa [#allocation19], 0
    %74 = vsyncpa [#allocation22], 0
    %75 = vsyncpa [#allocation25], 0
    %76 = vsyncpa [#allocation28], 0
    %77 = vsyncpa [#allocation8], 0
    %s78 = scalar_lea.sflag [#allocation8], 1
    %79 = vsyncpa %s78, 0
    %80 = vsyncpa [#allocation31], 0
    %s81 = scalar_lea.sflag [#allocation31], 1
    %82 = vsyncpa %s81, 0
    loop: start=0, step=1, limit=4
    $region2: #{tpu_custom_call.1} parent=1 // loop_pre_header
      _
    $region3: #{tpu_custom_call.1} parent=1 // loop_header
      %s84 = sphi 0, %s88
      %p85 = scmp.ge.s32.totalorder %s84, 4
      %s94 = sphi 0, %s96
      %s97 = sphi 0, %s94
      %s98 = sphi 0, %s97
      %s114 = sphi 0, %s98
      %s120 = sphi 0, %s122
      %s123 = sphi 0, %s120
      %s124 = sphi 0, %s123
      %s140 = sphi 0, %s124
      %s144 = sphi 0, %s144
      %s146 = sphi 0, %s144
      %s147 = sphi 0, %s146
      %s161 = sphi 0, %s147
      %s165 = sphi 0, %s165
      %s167 = sphi 0, %s165
      %s168 = sphi 0, %s167
      %s182 = sphi 0, %s168
      %s186 = sphi 0, %s186
      %s188 = sphi 0, %s186
      %s189 = sphi 0, %s188
      %s203 = sphi 0, %s189
      %s207 = sphi 0, %s207
      %s209 = sphi 0, %s207
      %s210 = sphi 0, %s209
      %s224 = sphi 0, %s210
      %s228 = sphi 0, %s228
      %s230 = sphi 0, %s228
      %s231 = sphi 0, %s230
      %s245 = sphi 0, %s231
      %s249 = sphi 0, %s249
      %s251 = sphi 0, %s249
      %s252 = sphi 0, %s251
      %s266 = sphi 0, %s252
      %s270 = sphi 0, %s270
      %s272 = sphi 0, %s270
      %s273 = sphi 0, %s272
      %s287 = sphi 0, %s273
      %s291 = sphi 0, %s291
      %s293 = sphi 0, %s291
      %s294 = sphi 0, %s293
      %s308 = sphi 0, %s294
      %s312 = sphi 0, %s312
      %s314 = sphi 0, %s312
      %s315 = sphi 0, %s314
      %s329 = sphi 0, %s315
      %s333 = sphi 0, %s333
      %s335 = sphi 0, %s333
      %s336 = sphi 0, %s335
      %s350 = sphi 0, %s336
      %s354 = sphi 0, %s354
      %s356 = sphi 0, %s354
      %s357 = sphi 0, %s356
      %s371 = sphi 0, %s357
      %s375 = sphi 0, %s375
      %s377 = sphi 0, %s375
      %s378 = sphi 0, %s377
      %s392 = sphi 0, %s378
      %s396 = sphi 0, %s396
      %s398 = sphi 0, %s396
      %s399 = sphi 0, %s398
      %s413 = sphi 0, %s399
      %s417 = sphi 0, %s417
      %s419 = sphi 0, %s417
      %s420 = sphi 0, %s419
      %s434 = sphi 0, %s420
      %s438 = sphi 0, %s438
      %s440 = sphi 0, %s438
      %s441 = sphi 0, %s440
      %s455 = sphi 0, %s441
      %s459 = sphi 0, %s459
      %s461 = sphi 0, %s459
      %s462 = sphi 0, %s461
      %s476 = sphi 0, %s462
      %s480 = sphi 0, %s480
      %s482 = sphi 0, %s480
      %s483 = sphi 0, %s482
      %s497 = sphi 0, %s483
      %s501 = sphi 0, %s501
      %s503 = sphi 0, %s501
      %s504 = sphi 0, %s503
      %s518 = sphi 0, %s504
      %s522 = sphi 0, %s522
      %s524 = sphi 0, %s522
      %s525 = sphi 0, %s524
      %s539 = sphi 0, %s525
      %s543 = sphi 0, %s543
      %s545 = sphi 0, %s543
      %s546 = sphi 0, %s545
      %s560 = sphi 0, %s546
      %s564 = sphi 0, %s564
      %s566 = sphi 0, %s564
      %s567 = sphi 0, %s566
      %s581 = sphi 0, %s567
      %s585 = sphi 0, %s585
      %s587 = sphi 0, %s585
      %s588 = sphi 0, %s587
      %s602 = sphi 0, %s588
      %s606 = sphi 0, %s606
      %s608 = sphi 0, %s606
      %s609 = sphi 0, %s608
      %s623 = sphi 0, %s609
      %s627 = sphi 0, %s627
      %s629 = sphi 0, %s627
      %s630 = sphi 0, %s629
      %s644 = sphi 0, %s630
      %s648 = sphi 0, %s648
      %s650 = sphi 0, %s648
      %s651 = sphi 0, %s650
      %s665 = sphi 0, %s651
      %s669 = sphi 0, %s669
      %s671 = sphi 0, %s669
      %s672 = sphi 0, %s671
      %s686 = sphi 0, %s672
      %s692 = sphi 0, %s694
      %s695 = sphi 0, %s692
      %s696 = sphi 0, %s695
      %s712 = sphi 0, %s696
      %s718 = sphi 0, %s720
      %s721 = sphi 0, %s718
      %s722 = sphi 0, %s721
      %s738 = sphi 0, %s722
      %s744 = sphi 0, %s746
      %s747 = sphi 0, %s744
      %s748 = sphi 0, %s747
      %s764 = sphi 0, %s748
    $region4: #{tpu_custom_call.1} parent=1 // loop_header_branch
      %87 = sbr.rel (%p85) target = $region8
    $region5: #{tpu_custom_call.1} parent=1 // loop_body
      %s89 = ssub.s32 %s84, 1
      %s90 = ssub.s32 %s84, 2
      %s91 = sadd.s32 %s84, 1
      %s92 = ssub.s32 %s84, %s91
      %p93 = scmp.eq.s32.totalorder %s92, 0
      %s95 = sadd.s32 %s94, 1
      %s96 = scalar_select %p93, %s94, %s95
      %p99 = pneg %p93
      %p100 = scmp.eq.s32.totalorder %s84, 1
      %p101 = por %p99, %p100
      %p102 = scmp.ne.s32.totalorder %s94, %s97
      %p103 = scmp.eq.s32.totalorder %s84, 0
      %p104 = por %p102, %p103
      %p105 = scmp.ne.s32.totalorder %s94, %s97
      %p106 = scmp.eq.s32.totalorder %s89, 1
      %p107 = por %p105, %p106
      %p108 = scmp.ne.s32.totalorder %s97, %s98
      %p109 = scmp.eq.s32.totalorder %s89, 0
      %p110 = por %p108, %p109
      %p111 = scmp.ne.s32.totalorder %s97, %s98
      %p112 = scmp.eq.s32.totalorder %s90, 1
      %p113 = por %p111, %p112
      %p115 = scmp.ne.s32.totalorder %s98, %s114
      %p116 = scmp.eq.s32.totalorder %s90, 0
      %p117 = por %p115, %p116
      %s118 = ssub.s32 %s84, %s91
      %p119 = scmp.eq.s32.totalorder %s118, 0
      %s121 = sadd.s32 %s120, 1
      %s122 = scalar_select %p119, %s120, %s121
      %p125 = pneg %p119
      %p126 = scmp.eq.s32.totalorder %s84, 1
      %p127 = por %p125, %p126
      %p128 = scmp.ne.s32.totalorder %s120, %s123
      %p129 = scmp.eq.s32.totalorder %s84, 0
      %p130 = por %p128, %p129
      %p131 = scmp.ne.s32.totalorder %s120, %s123
      %p132 = scmp.eq.s32.totalorder %s89, 1
      %p133 = por %p131, %p132
      %p134 = scmp.ne.s32.totalorder %s123, %s124
      %p135 = scmp.eq.s32.totalorder %s89, 0
      %p136 = por %p134, %p135
      %p137 = scmp.ne.s32.totalorder %s123, %s124
      %p138 = scmp.eq.s32.totalorder %s90, 1
      %p139 = por %p137, %p138
      %p141 = scmp.ne.s32.totalorder %s124, %s140
      %p142 = scmp.eq.s32.totalorder %s90, 0
      %p143 = por %p141, %p142
      %s145 = sadd.s32 %s144, 1
      %p148 = scmp.eq.s32.totalorder %s84, 1
      %p149 = scmp.ne.s32.totalorder %s144, %s146
      %p150 = scmp.eq.s32.totalorder %s84, 0
      %p151 = por %p149, %p150
      %p152 = scmp.ne.s32.totalorder %s144, %s146
      %p153 = scmp.eq.s32.totalorder %s89, 1
      %p154 = por %p152, %p153
      %p155 = scmp.ne.s32.totalorder %s146, %s147
      %p156 = scmp.eq.s32.totalorder %s89, 0
      %p157 = por %p155, %p156
      %p158 = scmp.ne.s32.totalorder %s146, %s147
      %p159 = scmp.eq.s32.totalorder %s90, 1
      %p160 = por %p158, %p159
      %p162 = scmp.ne.s32.totalorder %s147, %s161
      %p163 = scmp.eq.s32.totalorder %s90, 0
      %p164 = por %p162, %p163
      %s166 = sadd.s32 %s165, 1
      %p169 = scmp.eq.s32.totalorder %s84, 1
      %p170 = scmp.ne.s32.totalorder %s165, %s167
      %p171 = scmp.eq.s32.totalorder %s84, 0
      %p172 = por %p170, %p171
      %p173 = scmp.ne.s32.totalorder %s165, %s167
      %p174 = scmp.eq.s32.totalorder %s89, 1
      %p175 = por %p173, %p174
      %p176 = scmp.ne.s32.totalorder %s167, %s168
      %p177 = scmp.eq.s32.totalorder %s89, 0
      %p178 = por %p176, %p177
      %p179 = scmp.ne.s32.totalorder %s167, %s168
      %p180 = scmp.eq.s32.totalorder %s90, 1
      %p181 = por %p179, %p180
      %p183 = scmp.ne.s32.totalorder %s168, %s182
      %p184 = scmp.eq.s32.totalorder %s90, 0
      %p185 = por %p183, %p184
      %s187 = sadd.s32 %s186, 1
      %p190 = scmp.eq.s32.totalorder %s84, 1
      %p191 = scmp.ne.s32.totalorder %s186, %s188
      %p192 = scmp.eq.s32.totalorder %s84, 0
      %p193 = por %p191, %p192
      %p194 = scmp.ne.s32.totalorder %s186, %s188
      %p195 = scmp.eq.s32.totalorder %s89, 1
      %p196 = por %p194, %p195
      %p197 = scmp.ne.s32.totalorder %s188, %s189
      %p198 = scmp.eq.s32.totalorder %s89, 0
      %p199 = por %p197, %p198
      %p200 = scmp.ne.s32.totalorder %s188, %s189
      %p201 = scmp.eq.s32.totalorder %s90, 1
      %p202 = por %p200, %p201
      %p204 = scmp.ne.s32.totalorder %s189, %s203
      %p205 = scmp.eq.s32.totalorder %s90, 0
      %p206 = por %p204, %p205
      %s208 = sadd.s32 %s207, 1
      %p211 = scmp.eq.s32.totalorder %s84, 1
      %p212 = scmp.ne.s32.totalorder %s207, %s209
      %p213 = scmp.eq.s32.totalorder %s84, 0
      %p214 = por %p212, %p213
      %p215 = scmp.ne.s32.totalorder %s207, %s209
      %p216 = scmp.eq.s32.totalorder %s89, 1
      %p217 = por %p215, %p216
      %p218 = scmp.ne.s32.totalorder %s209, %s210
      %p219 = scmp.eq.s32.totalorder %s89, 0
      %p220 = por %p218, %p219
      %p221 = scmp.ne.s32.totalorder %s209, %s210
      %p222 = scmp.eq.s32.totalorder %s90, 1
      %p223 = por %p221, %p222
      %p225 = scmp.ne.s32.totalorder %s210, %s224
      %p226 = scmp.eq.s32.totalorder %s90, 0
      %p227 = por %p225, %p226
      %s229 = sadd.s32 %s228, 1
      %p232 = scmp.eq.s32.totalorder %s84, 1
      %p233 = scmp.ne.s32.totalorder %s228, %s230
      %p234 = scmp.eq.s32.totalorder %s84, 0
      %p235 = por %p233, %p234
      %p236 = scmp.ne.s32.totalorder %s228, %s230
      %p237 = scmp.eq.s32.totalorder %s89, 1
      %p238 = por %p236, %p237
      %p239 = scmp.ne.s32.totalorder %s230, %s231
      %p240 = scmp.eq.s32.totalorder %s89, 0
      %p241 = por %p239, %p240
      %p242 = scmp.ne.s32.totalorder %s230, %s231
      %p243 = scmp.eq.s32.totalorder %s90, 1
      %p244 = por %p242, %p243
      %p246 = scmp.ne.s32.totalorder %s231, %s245
      %p247 = scmp.eq.s32.totalorder %s90, 0
      %p248 = por %p246, %p247
      %s250 = sadd.s32 %s249, 1
      %p253 = scmp.eq.s32.totalorder %s84, 1
      %p254 = scmp.ne.s32.totalorder %s249, %s251
      %p255 = scmp.eq.s32.totalorder %s84, 0
      %p256 = por %p254, %p255
      %p257 = scmp.ne.s32.totalorder %s249, %s251
      %p258 = scmp.eq.s32.totalorder %s89, 1
      %p259 = por %p257, %p258
      %p260 = scmp.ne.s32.totalorder %s251, %s252
      %p261 = scmp.eq.s32.totalorder %s89, 0
      %p262 = por %p260, %p261
      %p263 = scmp.ne.s32.totalorder %s251, %s252
      %p264 = scmp.eq.s32.totalorder %s90, 1
      %p265 = por %p263, %p264
      %p267 = scmp.ne.s32.totalorder %s252, %s266
      %p268 = scmp.eq.s32.totalorder %s90, 0
      %p269 = por %p267, %p268
      %s271 = sadd.s32 %s270, 1
      %p274 = scmp.eq.s32.totalorder %s84, 1
      %p275 = scmp.ne.s32.totalorder %s270, %s272
      %p276 = scmp.eq.s32.totalorder %s84, 0
      %p277 = por %p275, %p276
      %p278 = scmp.ne.s32.totalorder %s270, %s272
      %p279 = scmp.eq.s32.totalorder %s89, 1
      %p280 = por %p278, %p279
      %p281 = scmp.ne.s32.totalorder %s272, %s273
      %p282 = scmp.eq.s32.totalorder %s89, 0
      %p283 = por %p281, %p282
      %p284 = scmp.ne.s32.totalorder %s272, %s273
      %p285 = scmp.eq.s32.totalorder %s90, 1
      %p286 = por %p284, %p285
      %p288 = scmp.ne.s32.totalorder %s273, %s287
      %p289 = scmp.eq.s32.totalorder %s90, 0
      %p290 = por %p288, %p289
      %s292 = sadd.s32 %s291, 1
      %p295 = scmp.eq.s32.totalorder %s84, 1
      %p296 = scmp.ne.s32.totalorder %s291, %s293
      %p297 = scmp.eq.s32.totalorder %s84, 0
      %p298 = por %p296, %p297
      %p299 = scmp.ne.s32.totalorder %s291, %s293
      %p300 = scmp.eq.s32.totalorder %s89, 1
      %p301 = por %p299, %p300
      %p302 = scmp.ne.s32.totalorder %s293, %s294
      %p303 = scmp.eq.s32.totalorder %s89, 0
      %p304 = por %p302, %p303
      %p305 = scmp.ne.s32.totalorder %s293, %s294
      %p306 = scmp.eq.s32.totalorder %s90, 1
      %p307 = por %p305, %p306
      %p309 = scmp.ne.s32.totalorder %s294, %s308
      %p310 = scmp.eq.s32.totalorder %s90, 0
      %p311 = por %p309, %p310
      %s313 = sadd.s32 %s312, 1
      %p316 = scmp.eq.s32.totalorder %s84, 1
      %p317 = scmp.ne.s32.totalorder %s312, %s314
      %p318 = scmp.eq.s32.totalorder %s84, 0
      %p319 = por %p317, %p318
      %p320 = scmp.ne.s32.totalorder %s312, %s314
      %p321 = scmp.eq.s32.totalorder %s89, 1
      %p322 = por %p320, %p321
      %p323 = scmp.ne.s32.totalorder %s314, %s315
      %p324 = scmp.eq.s32.totalorder %s89, 0
      %p325 = por %p323, %p324
      %p326 = scmp.ne.s32.totalorder %s314, %s315
      %p327 = scmp.eq.s32.totalorder %s90, 1
      %p328 = por %p326, %p327
      %p330 = scmp.ne.s32.totalorder %s315, %s329
      %p331 = scmp.eq.s32.totalorder %s90, 0
      %p332 = por %p330, %p331
      %s334 = sadd.s32 %s333, 1
      %p337 = scmp.eq.s32.totalorder %s84, 1
      %p338 = scmp.ne.s32.totalorder %s333, %s335
      %p339 = scmp.eq.s32.totalorder %s84, 0
      %p340 = por %p338, %p339
      %p341 = scmp.ne.s32.totalorder %s333, %s335
      %p342 = scmp.eq.s32.totalorder %s89, 1
      %p343 = por %p341, %p342
      %p344 = scmp.ne.s32.totalorder %s335, %s336
      %p345 = scmp.eq.s32.totalorder %s89, 0
      %p346 = por %p344, %p345
      %p347 = scmp.ne.s32.totalorder %s335, %s336
      %p348 = scmp.eq.s32.totalorder %s90, 1
      %p349 = por %p347, %p348
      %p351 = scmp.ne.s32.totalorder %s336, %s350
      %p352 = scmp.eq.s32.totalorder %s90, 0
      %p353 = por %p351, %p352
      %s355 = sadd.s32 %s354, 1
      %p358 = scmp.eq.s32.totalorder %s84, 1
      %p359 = scmp.ne.s32.totalorder %s354, %s356
      %p360 = scmp.eq.s32.totalorder %s84, 0
      %p361 = por %p359, %p360
      %p362 = scmp.ne.s32.totalorder %s354, %s356
      %p363 = scmp.eq.s32.totalorder %s89, 1
      %p364 = por %p362, %p363
      %p365 = scmp.ne.s32.totalorder %s356, %s357
      %p366 = scmp.eq.s32.totalorder %s89, 0
      %p367 = por %p365, %p366
      %p368 = scmp.ne.s32.totalorder %s356, %s357
      %p369 = scmp.eq.s32.totalorder %s90, 1
      %p370 = por %p368, %p369
      %p372 = scmp.ne.s32.totalorder %s357, %s371
      %p373 = scmp.eq.s32.totalorder %s90, 0
      %p374 = por %p372, %p373
      %s376 = sadd.s32 %s375, 1
      %p379 = scmp.eq.s32.totalorder %s84, 1
      %p380 = scmp.ne.s32.totalorder %s375, %s377
      %p381 = scmp.eq.s32.totalorder %s84, 0
      %p382 = por %p380, %p381
      %p383 = scmp.ne.s32.totalorder %s375, %s377
      %p384 = scmp.eq.s32.totalorder %s89, 1
      %p385 = por %p383, %p384
      %p386 = scmp.ne.s32.totalorder %s377, %s378
      %p387 = scmp.eq.s32.totalorder %s89, 0
      %p388 = por %p386, %p387
      %p389 = scmp.ne.s32.totalorder %s377, %s378
      %p390 = scmp.eq.s32.totalorder %s90, 1
      %p391 = por %p389, %p390
      %p393 = scmp.ne.s32.totalorder %s378, %s392
      %p394 = scmp.eq.s32.totalorder %s90, 0
      %p395 = por %p393, %p394
      %s397 = sadd.s32 %s396, 1
      %p400 = scmp.eq.s32.totalorder %s84, 1
      %p401 = scmp.ne.s32.totalorder %s396, %s398
      %p402 = scmp.eq.s32.totalorder %s84, 0
      %p403 = por %p401, %p402
      %p404 = scmp.ne.s32.totalorder %s396, %s398
      %p405 = scmp.eq.s32.totalorder %s89, 1
      %p406 = por %p404, %p405
      %p407 = scmp.ne.s32.totalorder %s398, %s399
      %p408 = scmp.eq.s32.totalorder %s89, 0
      %p409 = por %p407, %p408
      %p410 = scmp.ne.s32.totalorder %s398, %s399
      %p411 = scmp.eq.s32.totalorder %s90, 1
      %p412 = por %p410, %p411
      %p414 = scmp.ne.s32.totalorder %s399, %s413
      %p415 = scmp.eq.s32.totalorder %s90, 0
      %p416 = por %p414, %p415
      %s418 = sadd.s32 %s417, 1
      %p421 = scmp.eq.s32.totalorder %s84, 1
      %p422 = scmp.ne.s32.totalorder %s417, %s419
      %p423 = scmp.eq.s32.totalorder %s84, 0
      %p424 = por %p422, %p423
      %p425 = scmp.ne.s32.totalorder %s417, %s419
      %p426 = scmp.eq.s32.totalorder %s89, 1
      %p427 = por %p425, %p426
      %p428 = scmp.ne.s32.totalorder %s419, %s420
      %p429 = scmp.eq.s32.totalorder %s89, 0
      %p430 = por %p428, %p429
      %p431 = scmp.ne.s32.totalorder %s419, %s420
      %p432 = scmp.eq.s32.totalorder %s90, 1
      %p433 = por %p431, %p432
      %p435 = scmp.ne.s32.totalorder %s420, %s434
      %p436 = scmp.eq.s32.totalorder %s90, 0
      %p437 = por %p435, %p436
      %s439 = sadd.s32 %s438, 1
      %p442 = scmp.eq.s32.totalorder %s84, 1
      %p443 = scmp.ne.s32.totalorder %s438, %s440
      %p444 = scmp.eq.s32.totalorder %s84, 0
      %p445 = por %p443, %p444
      %p446 = scmp.ne.s32.totalorder %s438, %s440
      %p447 = scmp.eq.s32.totalorder %s89, 1
      %p448 = por %p446, %p447
      %p449 = scmp.ne.s32.totalorder %s440, %s441
      %p450 = scmp.eq.s32.totalorder %s89, 0
      %p451 = por %p449, %p450
      %p452 = scmp.ne.s32.totalorder %s440, %s441
      %p453 = scmp.eq.s32.totalorder %s90, 1
      %p454 = por %p452, %p453
      %p456 = scmp.ne.s32.totalorder %s441, %s455
      %p457 = scmp.eq.s32.totalorder %s90, 0
      %p458 = por %p456, %p457
      %s460 = sadd.s32 %s459, 1
      %p463 = scmp.eq.s32.totalorder %s84, 1
      %p464 = scmp.ne.s32.totalorder %s459, %s461
      %p465 = scmp.eq.s32.totalorder %s84, 0
      %p466 = por %p464, %p465
      %p467 = scmp.ne.s32.totalorder %s459, %s461
      %p468 = scmp.eq.s32.totalorder %s89, 1
      %p469 = por %p467, %p468
      %p470 = scmp.ne.s32.totalorder %s461, %s462
      %p471 = scmp.eq.s32.totalorder %s89, 0
      %p472 = por %p470, %p471
      %p473 = scmp.ne.s32.totalorder %s461, %s462
      %p474 = scmp.eq.s32.totalorder %s90, 1
      %p475 = por %p473, %p474
      %p477 = scmp.ne.s32.totalorder %s462, %s476
      %p478 = scmp.eq.s32.totalorder %s90, 0
      %p479 = por %p477, %p478
      %s481 = sadd.s32 %s480, 1
      %p484 = scmp.eq.s32.totalorder %s84, 1
      %p485 = scmp.ne.s32.totalorder %s480, %s482
      %p486 = scmp.eq.s32.totalorder %s84, 0
      %p487 = por %p485, %p486
      %p488 = scmp.ne.s32.totalorder %s480, %s482
      %p489 = scmp.eq.s32.totalorder %s89, 1
      %p490 = por %p488, %p489
      %p491 = scmp.ne.s32.totalorder %s482, %s483
      %p492 = scmp.eq.s32.totalorder %s89, 0
      %p493 = por %p491, %p492
      %p494 = scmp.ne.s32.totalorder %s482, %s483
      %p495 = scmp.eq.s32.totalorder %s90, 1
      %p496 = por %p494, %p495
      %p498 = scmp.ne.s32.totalorder %s483, %s497
      %p499 = scmp.eq.s32.totalorder %s90, 0
      %p500 = por %p498, %p499
      %s502 = sadd.s32 %s501, 1
      %p505 = scmp.eq.s32.totalorder %s84, 1
      %p506 = scmp.ne.s32.totalorder %s501, %s503
      %p507 = scmp.eq.s32.totalorder %s84, 0
      %p508 = por %p506, %p507
      %p509 = scmp.ne.s32.totalorder %s501, %s503
      %p510 = scmp.eq.s32.totalorder %s89, 1
      %p511 = por %p509, %p510
      %p512 = scmp.ne.s32.totalorder %s503, %s504
      %p513 = scmp.eq.s32.totalorder %s89, 0
      %p514 = por %p512, %p513
      %p515 = scmp.ne.s32.totalorder %s503, %s504
      %p516 = scmp.eq.s32.totalorder %s90, 1
      %p517 = por %p515, %p516
      %p519 = scmp.ne.s32.totalorder %s504, %s518
      %p520 = scmp.eq.s32.totalorder %s90, 0
      %p521 = por %p519, %p520
      %s523 = sadd.s32 %s522, 1
      %p526 = scmp.eq.s32.totalorder %s84, 1
      %p527 = scmp.ne.s32.totalorder %s522, %s524
      %p528 = scmp.eq.s32.totalorder %s84, 0
      %p529 = por %p527, %p528
      %p530 = scmp.ne.s32.totalorder %s522, %s524
      %p531 = scmp.eq.s32.totalorder %s89, 1
      %p532 = por %p530, %p531
      %p533 = scmp.ne.s32.totalorder %s524, %s525
      %p534 = scmp.eq.s32.totalorder %s89, 0
      %p535 = por %p533, %p534
      %p536 = scmp.ne.s32.totalorder %s524, %s525
      %p537 = scmp.eq.s32.totalorder %s90, 1
      %p538 = por %p536, %p537
      %p540 = scmp.ne.s32.totalorder %s525, %s539
      %p541 = scmp.eq.s32.totalorder %s90, 0
      %p542 = por %p540, %p541
      %s544 = sadd.s32 %s543, 1
      %p547 = scmp.eq.s32.totalorder %s84, 1
      %p548 = scmp.ne.s32.totalorder %s543, %s545
      %p549 = scmp.eq.s32.totalorder %s84, 0
      %p550 = por %p548, %p549
      %p551 = scmp.ne.s32.totalorder %s543, %s545
      %p552 = scmp.eq.s32.totalorder %s89, 1
      %p553 = por %p551, %p552
      %p554 = scmp.ne.s32.totalorder %s545, %s546
      %p555 = scmp.eq.s32.totalorder %s89, 0
      %p556 = por %p554, %p555
      %p557 = scmp.ne.s32.totalorder %s545, %s546
      %p558 = scmp.eq.s32.totalorder %s90, 1
      %p559 = por %p557, %p558
      %p561 = scmp.ne.s32.totalorder %s546, %s560
      %p562 = scmp.eq.s32.totalorder %s90, 0
      %p563 = por %p561, %p562
      %s565 = sadd.s32 %s564, 1
      %p568 = scmp.eq.s32.totalorder %s84, 1
      %p569 = scmp.ne.s32.totalorder %s564, %s566
      %p570 = scmp.eq.s32.totalorder %s84, 0
      %p571 = por %p569, %p570
      %p572 = scmp.ne.s32.totalorder %s564, %s566
      %p573 = scmp.eq.s32.totalorder %s89, 1
      %p574 = por %p572, %p573
      %p575 = scmp.ne.s32.totalorder %s566, %s567
      %p576 = scmp.eq.s32.totalorder %s89, 0
      %p577 = por %p575, %p576
      %p578 = scmp.ne.s32.totalorder %s566, %s567
      %p579 = scmp.eq.s32.totalorder %s90, 1
      %p580 = por %p578, %p579
      %p582 = scmp.ne.s32.totalorder %s567, %s581
      %p583 = scmp.eq.s32.totalorder %s90, 0
      %p584 = por %p582, %p583
      %s586 = sadd.s32 %s585, 1
      %p589 = scmp.eq.s32.totalorder %s84, 1
      %p590 = scmp.ne.s32.totalorder %s585, %s587
      %p591 = scmp.eq.s32.totalorder %s84, 0
      %p592 = por %p590, %p591
      %p593 = scmp.ne.s32.totalorder %s585, %s587
      %p594 = scmp.eq.s32.totalorder %s89, 1
      %p595 = por %p593, %p594
      %p596 = scmp.ne.s32.totalorder %s587, %s588
      %p597 = scmp.eq.s32.totalorder %s89, 0
      %p598 = por %p596, %p597
      %p599 = scmp.ne.s32.totalorder %s587, %s588
      %p600 = scmp.eq.s32.totalorder %s90, 1
      %p601 = por %p599, %p600
      %p603 = scmp.ne.s32.totalorder %s588, %s602
      %p604 = scmp.eq.s32.totalorder %s90, 0
      %p605 = por %p603, %p604
      %s607 = sadd.s32 %s606, 1
      %p610 = scmp.eq.s32.totalorder %s84, 1
      %p611 = scmp.ne.s32.totalorder %s606, %s608
      %p612 = scmp.eq.s32.totalorder %s84, 0
      %p613 = por %p611, %p612
      %p614 = scmp.ne.s32.totalorder %s606, %s608
      %p615 = scmp.eq.s32.totalorder %s89, 1
      %p616 = por %p614, %p615
      %p617 = scmp.ne.s32.totalorder %s608, %s609
      %p618 = scmp.eq.s32.totalorder %s89, 0
      %p619 = por %p617, %p618
      %p620 = scmp.ne.s32.totalorder %s608, %s609
      %p621 = scmp.eq.s32.totalorder %s90, 1
      %p622 = por %p620, %p621
      %p624 = scmp.ne.s32.totalorder %s609, %s623
      %p625 = scmp.eq.s32.totalorder %s90, 0
      %p626 = por %p624, %p625
      %s628 = sadd.s32 %s627, 1
      %p631 = scmp.eq.s32.totalorder %s84, 1
      %p632 = scmp.ne.s32.totalorder %s627, %s629
      %p633 = scmp.eq.s32.totalorder %s84, 0
      %p634 = por %p632, %p633
      %p635 = scmp.ne.s32.totalorder %s627, %s629
      %p636 = scmp.eq.s32.totalorder %s89, 1
      %p637 = por %p635, %p636
      %p638 = scmp.ne.s32.totalorder %s629, %s630
      %p639 = scmp.eq.s32.totalorder %s89, 0
      %p640 = por %p638, %p639
      %p641 = scmp.ne.s32.totalorder %s629, %s630
      %p642 = scmp.eq.s32.totalorder %s90, 1
      %p643 = por %p641, %p642
      %p645 = scmp.ne.s32.totalorder %s630, %s644
      %p646 = scmp.eq.s32.totalorder %s90, 0
      %p647 = por %p645, %p646
      %s649 = sadd.s32 %s648, 1
      %p652 = scmp.eq.s32.totalorder %s84, 1
      %p653 = scmp.ne.s32.totalorder %s648, %s650
      %p654 = scmp.eq.s32.totalorder %s84, 0
      %p655 = por %p653, %p654
      %p656 = scmp.ne.s32.totalorder %s648, %s650
      %p657 = scmp.eq.s32.totalorder %s89, 1
      %p658 = por %p656, %p657
      %p659 = scmp.ne.s32.totalorder %s650, %s651
      %p660 = scmp.eq.s32.totalorder %s89, 0
      %p661 = por %p659, %p660
      %p662 = scmp.ne.s32.totalorder %s650, %s651
      %p663 = scmp.eq.s32.totalorder %s90, 1
      %p664 = por %p662, %p663
      %p666 = scmp.ne.s32.totalorder %s651, %s665
      %p667 = scmp.eq.s32.totalorder %s90, 0
      %p668 = por %p666, %p667
      %s670 = sadd.s32 %s669, 1
      %p673 = scmp.eq.s32.totalorder %s84, 1
      %p674 = scmp.ne.s32.totalorder %s669, %s671
      %p675 = scmp.eq.s32.totalorder %s84, 0
      %p676 = por %p674, %p675
      %p677 = scmp.ne.s32.totalorder %s669, %s671
      %p678 = scmp.eq.s32.totalorder %s89, 1
      %p679 = por %p677, %p678
      %p680 = scmp.ne.s32.totalorder %s671, %s672
      %p681 = scmp.eq.s32.totalorder %s89, 0
      %p682 = por %p680, %p681
      %p683 = scmp.ne.s32.totalorder %s671, %s672
      %p684 = scmp.eq.s32.totalorder %s90, 1
      %p685 = por %p683, %p684
      %p687 = scmp.ne.s32.totalorder %s672, %s686
      %p688 = scmp.eq.s32.totalorder %s90, 0
      %p689 = por %p687, %p688
      %s690 = ssub.s32 %s84, %s91
      %p691 = scmp.eq.s32.totalorder %s690, 0
      %s693 = sadd.s32 %s692, 1
      %s694 = scalar_select %p691, %s692, %s693
      %p697 = pneg %p691
      %p698 = scmp.eq.s32.totalorder %s84, 1
      %p699 = por %p697, %p698
      %p700 = scmp.ne.s32.totalorder %s692, %s695
      %p701 = scmp.eq.s32.totalorder %s84, 0
      %p702 = por %p700, %p701
      %p703 = scmp.ne.s32.totalorder %s692, %s695
      %p704 = scmp.eq.s32.totalorder %s89, 1
      %p705 = por %p703, %p704
      %p706 = scmp.ne.s32.totalorder %s695, %s696
      %p707 = scmp.eq.s32.totalorder %s89, 0
      %p708 = por %p706, %p707
      %p709 = scmp.ne.s32.totalorder %s695, %s696
      %p710 = scmp.eq.s32.totalorder %s90, 1
      %p711 = por %p709, %p710
      %p713 = scmp.ne.s32.totalorder %s696, %s712
      %p714 = scmp.eq.s32.totalorder %s90, 0
      %p715 = por %p713, %p714
      %s716 = ssub.s32 %s84, %s91
      %p717 = scmp.eq.s32.totalorder %s716, 0
      %s719 = sadd.s32 %s718, 1
      %s720 = scalar_select %p717, %s718, %s719
      %p723 = pneg %p717
      %p724 = scmp.eq.s32.totalorder %s84, 1
      %p725 = por %p723, %p724
      %p726 = scmp.ne.s32.totalorder %s718, %s721
      %p727 = scmp.eq.s32.totalorder %s84, 0
      %p728 = por %p726, %p727
      %p729 = scmp.ne.s32.totalorder %s718, %s721
      %p730 = scmp.eq.s32.totalorder %s89, 1
      %p731 = por %p729, %p730
      %p732 = scmp.ne.s32.totalorder %s721, %s722
      %p733 = scmp.eq.s32.totalorder %s89, 0
      %p734 = por %p732, %p733
      %p735 = scmp.ne.s32.totalorder %s721, %s722
      %p736 = scmp.eq.s32.totalorder %s90, 1
      %p737 = por %p735, %p736
      %p739 = scmp.ne.s32.totalorder %s722, %s738
      %p740 = scmp.eq.s32.totalorder %s90, 0
      %p741 = por %p739, %p740
      %s742 = ssub.s32 %s84, %s91
      %p743 = scmp.eq.s32.totalorder %s742, 0
      %s745 = sadd.s32 %s744, 1
      %s746 = scalar_select %p743, %s744, %s745
      %p749 = pneg %p743
      %p750 = scmp.eq.s32.totalorder %s84, 1
      %p751 = por %p749, %p750
      %p752 = scmp.ne.s32.totalorder %s744, %s747
      %p753 = scmp.eq.s32.totalorder %s84, 0
      %p754 = por %p752, %p753
      %p755 = scmp.ne.s32.totalorder %s744, %s747
      %p756 = scmp.eq.s32.totalorder %s89, 1
      %p757 = por %p755, %p756
      %p758 = scmp.ne.s32.totalorder %s747, %s748
      %p759 = scmp.eq.s32.totalorder %s89, 0
      %p760 = por %p758, %p759
      %p761 = scmp.ne.s32.totalorder %s747, %s748
      %p762 = scmp.eq.s32.totalorder %s90, 1
      %p763 = por %p761, %p762
      %p765 = scmp.ne.s32.totalorder %s748, %s764
      %p766 = scmp.eq.s32.totalorder %s90, 0
      %p767 = por %p765, %p766
      %p768 = scmp.le.s32.totalorder 1, %s84
      %p769 = scmp.lt.s32.totalorder %s84, 3
      %p770 = pnand %p768, %p769
      %p771 = pneg %p770
      // Predicated region
      $region9: #{tpu_custom_call.1} parent=5 // pred_check
        _
      $region10: #{tpu_custom_call.1} parent=5 // pred_check_branch
        %773 = sbr.rel (%p770) target = $region12
      $region11: #{tpu_custom_call.1} parent=5 // pred_region
        %s774 = ssub.s32 %s84, 1
        // Predicated region
        $region13: #{tpu_custom_call.1} parent=11 // pred_check
          %p775 = pneg %p157
        $region14: #{tpu_custom_call.1} parent=11 // pred_check_branch
          %777 = sbr.rel (%p775) target = $region16
        $region15: #{tpu_custom_call.1} parent=11 // pred_region
          _
        $region16: #{tpu_custom_call.1} parent=11 // pred_fallthru
          _
        // Predicated region
        $region17: #{tpu_custom_call.1} parent=11 // pred_check
          %p778 = pneg %p178
        $region18: #{tpu_custom_call.1} parent=11 // pred_check_branch
          %780 = sbr.rel (%p778) target = $region20
        $region19: #{tpu_custom_call.1} parent=11 // pred_region
          %s782 = ssub.s32 16, 16
          %783 = vsyncadd [#allocation10], %s782
          %s785 = sshll.u32 [#allocation9], 4
          %s786 = int_to_ptr.vmem [resolvable:$true] %s785
          %788 = dma.hbm_to_vmem [thread:$0]  %s7, 16, %s786, [#allocation10]
        $region20: #{tpu_custom_call.1} parent=11 // pred_fallthru
          _
        // Predicated region
        $region21: #{tpu_custom_call.1} parent=11 // pred_check
          %p789 = pneg %p199
        $region22: #{tpu_custom_call.1} parent=11 // pred_check_branch
          %791 = sbr.rel (%p789) target = $region24
        $region23: #{tpu_custom_call.1} parent=11 // pred_region
          %s793 = ssub.s32 256, 256
          %794 = vsyncadd [#allocation10], %s793
          %s795 = sshll.u32 [#allocation11], 4
          %s796 = int_to_ptr.vmem [resolvable:$true] %s795
          %801 = dma.hbm_to_vmem [thread:$0]  %s9, 256, %s796, [#allocation10], 64, 64, 4
        $region24: #{tpu_custom_call.1} parent=11 // pred_fallthru
          _
        // Predicated region
        $region25: #{tpu_custom_call.1} parent=11 // pred_check
          %p802 = pneg %p220
        $region26: #{tpu_custom_call.1} parent=11 // pred_check_branch
          %804 = sbr.rel (%p802) target = $region28
        $region27: #{tpu_custom_call.1} parent=11 // pred_region
          %s806 = ssub.s32 16, 16
          %807 = vsyncadd [#allocation13], %s806
          %s809 = sshll.u32 [#allocation12], 4
          %s810 = int_to_ptr.vmem [resolvable:$true] %s809
          %812 = dma.hbm_to_vmem [thread:$0]  %s11, 16, %s810, [#allocation13]
        $region28: #{tpu_custom_call.1} parent=11 // pred_fallthru
          _
        // Predicated region
        $region29: #{tpu_custom_call.1} parent=11 // pred_check
          %p813 = pneg %p241
        $region30: #{tpu_custom_call.1} parent=11 // pred_check_branch
          %815 = sbr.rel (%p813) target = $region32
        $region31: #{tpu_custom_call.1} parent=11 // pred_region
          %s817 = ssub.s32 256, 256
          %818 = vsyncadd [#allocation13], %s817
          %s819 = sshll.u32 [#allocation14], 4
          %s820 = int_to_ptr.vmem [resolvable:$true] %s819
          %825 = dma.hbm_to_vmem [thread:$0]  %s13, 256, %s820, [#allocation13], 64, 64, 4
        $region32: #{tpu_custom_call.1} parent=11 // pred_fallthru
          _
        // Predicated region
        $region33: #{tpu_custom_call.1} parent=11 // pred_check
          %p826 = pneg %p262
        $region34: #{tpu_custom_call.1} parent=11 // pred_check_branch
          %828 = sbr.rel (%p826) target = $region36
        $region35: #{tpu_custom_call.1} parent=11 // pred_region
          %s830 = ssub.s32 16, 16
          %831 = vsyncadd [#allocation16], %s830
          %s833 = sshll.u32 [#allocation15], 4
          %s834 = int_to_ptr.vmem [resolvable:$true] %s833
          %836 = dma.hbm_to_vmem [thread:$0]  %s15, 16, %s834, [#allocation16]
        $region36: #{tpu_custom_call.1} parent=11 // pred_fallthru
          _
        // Predicated region
        $region37: #{tpu_custom_call.1} parent=11 // pred_check
          %p837 = pneg %p283
        $region38: #{tpu_custom_call.1} parent=11 // pred_check_branch
          %839 = sbr.rel (%p837) target = $region40
        $region39: #{tpu_custom_call.1} parent=11 // pred_region
          %s841 = ssub.s32 256, 256
          %842 = vsyncadd [#allocation16], %s841
          %s843 = sshll.u32 [#allocation17], 4
          %s844 = int_to_ptr.vmem [resolvable:$true] %s843
          %849 = dma.hbm_to_vmem [thread:$0]  %s17, 256, %s844, [#allocation16], 64, 64, 4
        $region40: #{tpu_custom_call.1} parent=11 // pred_fallthru
          _
        // Predicated region
        $region41: #{tpu_custom_call.1} parent=11 // pred_check
          %p850 = pneg %p304
        $region42: #{tpu_custom_call.1} parent=11 // pred_check_branch
          %852 = sbr.rel (%p850) target = $region44
        $region43: #{tpu_custom_call.1} parent=11 // pred_region
          %s854 = ssub.s32 16, 16
          %855 = vsyncadd [#allocation19], %s854
          %s857 = sshll.u32 [#allocation18], 4
          %s858 = int_to_ptr.vmem [resolvable:$true] %s857
          %860 = dma.hbm_to_vmem [thread:$0]  %s19, 16, %s858, [#allocation19]
        $region44: #{tpu_custom_call.1} parent=11 // pred_fallthru
          _
        // Predicated region
        $region45: #{tpu_custom_call.1} parent=11 // pred_check
          %p861 = pneg %p325
        $region46: #{tpu_custom_call.1} parent=11 // pred_check_branch
          %863 = sbr.rel (%p861) target = $region48
        $region47: #{tpu_custom_call.1} parent=11 // pred_region
          %s865 = ssub.s32 16, 16
          %866 = vsyncadd [#allocation19], %s865
          %s868 = sshll.u32 [#allocation20], 4
          %s869 = int_to_ptr.vmem [resolvable:$true] %s868
          %871 = dma.hbm_to_vmem [thread:$0]  %s21, 16, %s869, [#allocation19]
        $region48: #{tpu_custom_call.1} parent=11 // pred_fallthru
          _
        // Predicated region
        $region49: #{tpu_custom_call.1} parent=11 // pred_check
          %p872 = pneg %p346
        $region50: #{tpu_custom_call.1} parent=11 // pred_check_branch
          %874 = sbr.rel (%p872) target = $region52
        $region51: #{tpu_custom_call.1} parent=11 // pred_region
          %s876 = ssub.s32 16, 16
          %877 = vsyncadd [#allocation22], %s876
          %s879 = sshll.u32 [#allocation21], 4
          %s880 = int_to_ptr.vmem [resolvable:$true] %s879
          %882 = dma.hbm_to_vmem [thread:$0]  %s23, 16, %s880, [#allocation22]
        $region52: #{tpu_custom_call.1} parent=11 // pred_fallthru
          _
        // Predicated region
        $region53: #{tpu_custom_call.1} parent=11 // pred_check
          %p883 = pneg %p367
        $region54: #{tpu_custom_call.1} parent=11 // pred_check_branch
          %885 = sbr.rel (%p883) target = $region56
        $region55: #{tpu_custom_call.1} parent=11 // pred_region
          _
        $region56: #{tpu_custom_call.1} parent=11 // pred_fallthru
          _
        // Predicated region
        $region57: #{tpu_custom_call.1} parent=11 // pred_check
          %p886 = pneg %p388
        $region58: #{tpu_custom_call.1} parent=11 // pred_check_branch
          %888 = sbr.rel (%p886) target = $region60
        $region59: #{tpu_custom_call.1} parent=11 // pred_region
          %s890 = ssub.s32 16, 16
          %891 = vsyncadd [#allocation22], %s890
          %s893 = sshll.u32 [#allocation23], 4
          %s894 = int_to_ptr.vmem [resolvable:$true] %s893
          %896 = dma.hbm_to_vmem [thread:$0]  %s27, 16, %s894, [#allocation22]
        $region60: #{tpu_custom_call.1} parent=11 // pred_fallthru
          _
        // Predicated region
        $region61: #{tpu_custom_call.1} parent=11 // pred_check
          %p897 = pneg %p409
        $region62: #{tpu_custom_call.1} parent=11 // pred_check_branch
          %899 = sbr.rel (%p897) target = $region64
        $region63: #{tpu_custom_call.1} parent=11 // pred_region
          _
        $region64: #{tpu_custom_call.1} parent=11 // pred_fallthru
          _
        // Predicated region
        $region65: #{tpu_custom_call.1} parent=11 // pred_check
          %p900 = pneg %p430
        $region66: #{tpu_custom_call.1} parent=11 // pred_check_branch
          %902 = sbr.rel (%p900) target = $region68
        $region67: #{tpu_custom_call.1} parent=11 // pred_region
          %s904 = ssub.s32 16, 16
          %905 = vsyncadd [#allocation25], %s904
          %s907 = sshll.u32 [#allocation24], 4
          %s908 = int_to_ptr.vmem [resolvable:$true] %s907
          %910 = dma.hbm_to_vmem [thread:$0]  %s31, 16, %s908, [#allocation25]
        $region68: #{tpu_custom_call.1} parent=11 // pred_fallthru
          _
        // Predicated region
        $region69: #{tpu_custom_call.1} parent=11 // pred_check
          %p911 = pneg %p451
        $region70: #{tpu_custom_call.1} parent=11 // pred_check_branch
          %913 = sbr.rel (%p911) target = $region72
        $region71: #{tpu_custom_call.1} parent=11 // pred_region
          %s915 = ssub.s32 256, 256
          %916 = vsyncadd [#allocation25], %s915
          %s917 = sshll.u32 [#allocation26], 4
          %s918 = int_to_ptr.vmem [resolvable:$true] %s917
          %923 = dma.hbm_to_vmem [thread:$0]  %s33, 256, %s918, [#allocation25], 64, 64, 4
        $region72: #{tpu_custom_call.1} parent=11 // pred_fallthru
          _
        // Predicated region
        $region73: #{tpu_custom_call.1} parent=11 // pred_check
          %p924 = pneg %p472
        $region74: #{tpu_custom_call.1} parent=11 // pred_check_branch
          %926 = sbr.rel (%p924) target = $region76
        $region75: #{tpu_custom_call.1} parent=11 // pred_region
          %s928 = ssub.s32 16, 16
          %929 = vsyncadd [#allocation28], %s928
          %s931 = sshll.u32 [#allocation27], 4
          %s932 = int_to_ptr.vmem [resolvable:$true] %s931
          %934 = dma.hbm_to_vmem [thread:$0]  %s35, 16, %s932, [#allocation28]
        $region76: #{tpu_custom_call.1} parent=11 // pred_fallthru
          _
        // Predicated region
        $region77: #{tpu_custom_call.1} parent=11 // pred_check
          %p935 = pneg %p493
        $region78: #{tpu_custom_call.1} parent=11 // pred_check_branch
          %937 = sbr.rel (%p935) target = $region80
        $region79: #{tpu_custom_call.1} parent=11 // pred_region
          _
        $region80: #{tpu_custom_call.1} parent=11 // pred_fallthru
          _
        // Predicated region
        $region81: #{tpu_custom_call.1} parent=11 // pred_check
          %p938 = pneg %p514
        $region82: #{tpu_custom_call.1} parent=11 // pred_check_branch
          %940 = sbr.rel (%p938) target = $region84
        $region83: #{tpu_custom_call.1} parent=11 // pred_region
          _
        $region84: #{tpu_custom_call.1} parent=11 // pred_fallthru
          _
        // Predicated region
        $region85: #{tpu_custom_call.1} parent=11 // pred_check
          %p941 = pneg %p535
        $region86: #{tpu_custom_call.1} parent=11 // pred_check_branch
          %943 = sbr.rel (%p941) target = $region88
        $region87: #{tpu_custom_call.1} parent=11 // pred_region
          _
        $region88: #{tpu_custom_call.1} parent=11 // pred_fallthru
          _
        // Predicated region
        $region89: #{tpu_custom_call.1} parent=11 // pred_check
          %p944 = pneg %p556
        $region90: #{tpu_custom_call.1} parent=11 // pred_check_branch
          %946 = sbr.rel (%p944) target = $region92
        $region91: #{tpu_custom_call.1} parent=11 // pred_region
          _
        $region92: #{tpu_custom_call.1} parent=11 // pred_fallthru
          _
        // Predicated region
        $region93: #{tpu_custom_call.1} parent=11 // pred_check
          %p947 = pneg %p577
        $region94: #{tpu_custom_call.1} parent=11 // pred_check_branch
          %949 = sbr.rel (%p947) target = $region96
        $region95: #{tpu_custom_call.1} parent=11 // pred_region
          _
        $region96: #{tpu_custom_call.1} parent=11 // pred_fallthru
          _
        // Predicated region
        $region97: #{tpu_custom_call.1} parent=11 // pred_check
          %p950 = pneg %p598
        $region98: #{tpu_custom_call.1} parent=11 // pred_check_branch
          %952 = sbr.rel (%p950) target = $region100
        $region99: #{tpu_custom_call.1} parent=11 // pred_region
          _
        $region100: #{tpu_custom_call.1} parent=11 // pred_fallthru
          _
        // Predicated region
        $region101: #{tpu_custom_call.1} parent=11 // pred_check
          %p953 = pneg %p619
        $region102: #{tpu_custom_call.1} parent=11 // pred_check_branch
          %955 = sbr.rel (%p953) target = $region104
        $region103: #{tpu_custom_call.1} parent=11 // pred_region
          _
        $region104: #{tpu_custom_call.1} parent=11 // pred_fallthru
          _
        // Predicated region
        $region105: #{tpu_custom_call.1} parent=11 // pred_check
          %p956 = pneg %p640
        $region106: #{tpu_custom_call.1} parent=11 // pred_check_branch
          %958 = sbr.rel (%p956) target = $region108
        $region107: #{tpu_custom_call.1} parent=11 // pred_region
          _
        $region108: #{tpu_custom_call.1} parent=11 // pred_fallthru
          _
        // Predicated region
        $region109: #{tpu_custom_call.1} parent=11 // pred_check
          %p959 = pneg %p661
        $region110: #{tpu_custom_call.1} parent=11 // pred_check_branch
          %961 = sbr.rel (%p959) target = $region112
        $region111: #{tpu_custom_call.1} parent=11 // pred_region
          _
        $region112: #{tpu_custom_call.1} parent=11 // pred_fallthru
          _
        // Predicated region
        $region113: #{tpu_custom_call.1} parent=11 // pred_check
          %p962 = pneg %p682
        $region114: #{tpu_custom_call.1} parent=11 // pred_check_branch
          %964 = sbr.rel (%p962) target = $region116
        $region115: #{tpu_custom_call.1} parent=11 // pred_region
          _
        $region116: #{tpu_custom_call.1} parent=11 // pred_fallthru
          _
      $region12: #{tpu_custom_call.1} parent=5 // pred_fallthru
        _
      %p965 = scmp.lt.s32.totalorder %s84, 2
      // Predicated region
      $region117: #{tpu_custom_call.1} parent=5 // pred_check
        %p966 = pneg %p965
      $region118: #{tpu_custom_call.1} parent=5 // pred_check_branch
        %968 = sbr.rel (%p966) target = $region120
      $region119: #{tpu_custom_call.1} parent=5 // pred_region
        // Predicated region
        $region121: #{tpu_custom_call.1} parent=119 // pred_check
          %p969 = pneg %p104
        $region122: #{tpu_custom_call.1} parent=119 // pred_check_branch
          %971 = sbr.rel (%p969) target = $region124
        $region123: #{tpu_custom_call.1} parent=119 // pred_region
          %s972 = smul.u32 2, %s84
          %p973 = scmp.lt.s32.totalorder %s972, 3
          %s974 = scalar_select %p973, %s972, 3
          %s975 = smul.addr %s974, 8
          %s976 = scalar_lea.vmem %s1, %s975
          %s977 = smul.u32 2, %s84
        $region124: #{tpu_custom_call.1} parent=119 // pred_fallthru
          _
        // Predicated region
        $region125: #{tpu_custom_call.1} parent=119 // pred_check
          %p978 = pneg %p130
        $region126: #{tpu_custom_call.1} parent=119 // pred_check_branch
          %980 = sbr.rel (%p978) target = $region128
        $region127: #{tpu_custom_call.1} parent=119 // pred_region
          %s981 = sand.u32 %s120, 1
          %s982 = scalar_lea.sflag [#allocation7], %s981
          %s983 = sand.u32 %s120, 1
          %s984 = smul.addr %s983, 16
          %s985 = scalar_lea.vmem [#allocation6], %s984
          %s986 = smul.u32 2, %s84
          %s988 = ssub.s32 256, 256
          %989 = vsyncadd %s982, %s988
          %s990 = smul.addr %s986, 128
          %s991 = scalar_lea.hbm %s3, %s990
          %s992 = sshll.u32 %s985, 4
          %s993 = int_to_ptr.vmem [resolvable:$true] %s992
          %998 = dma.hbm_to_vmem [thread:$0]  %s991, 256, %s993, %s982, 128, 128, 8
        $region128: #{tpu_custom_call.1} parent=119 // pred_fallthru
          _
      $region120: #{tpu_custom_call.1} parent=5 // pred_fallthru
        _
      %p999 = scmp.le.s32.totalorder 1, %s84
      %p1000 = scmp.lt.s32.totalorder %s84, 3
      %p1001 = pnand %p999, %p1000
      %p1002 = pneg %p1001
      // Predicated region
      $region129: #{tpu_custom_call.1} parent=5 // pred_check
        _
      $region130: #{tpu_custom_call.1} parent=5 // pred_check_branch
        %1004 = sbr.rel (%p1001) target = $region132
      $region131: #{tpu_custom_call.1} parent=5 // pred_region
        %s1005 = ssub.s32 %s84, 1
        %s1006 = sand.u32 %s123, 1
        %s1007 = scalar_lea.sflag [#allocation7], %s1006
        %s1008 = sand.u32 %s123, 1
        %s1009 = smul.addr %s1008, 16
        %s1010 = scalar_lea.vmem [#allocation6], %s1009
        // Predicated region
        $region133: #{tpu_custom_call.1} parent=131 // pred_check
          %p1011 = pneg %p136
        $region134: #{tpu_custom_call.1} parent=131 // pred_check_branch
          %1013 = sbr.rel (%p1011) target = $region136
        $region135: #{tpu_custom_call.1} parent=131 // pred_region
          %1014 = dma.done %s1007, 256
        $region136: #{tpu_custom_call.1} parent=131 // pred_fallthru
          _
        // Predicated region
        $region137: #{tpu_custom_call.1} parent=131 // pred_check
          %p1015 = pneg %p178
        $region138: #{tpu_custom_call.1} parent=131 // pred_check_branch
          %1017 = sbr.rel (%p1015) target = $region140
        $region139: #{tpu_custom_call.1} parent=131 // pred_region
          %1018 = dma.done [#allocation10], 16
        $region140: #{tpu_custom_call.1} parent=131 // pred_fallthru
          _
        // Predicated region
        $region141: #{tpu_custom_call.1} parent=131 // pred_check
          %p1019 = pneg %p199
        $region142: #{tpu_custom_call.1} parent=131 // pred_check_branch
          %1021 = sbr.rel (%p1019) target = $region144
        $region143: #{tpu_custom_call.1} parent=131 // pred_region
          %1022 = dma.done [#allocation10], 256
        $region144: #{tpu_custom_call.1} parent=131 // pred_fallthru
          _
        // Predicated region
        $region145: #{tpu_custom_call.1} parent=131 // pred_check
          %p1023 = pneg %p220
        $region146: #{tpu_custom_call.1} parent=131 // pred_check_branch
          %1025 = sbr.rel (%p1023) target = $region148
        $region147: #{tpu_custom_call.1} parent=131 // pred_region
          %1026 = dma.done [#allocation13], 16
        $region148: #{tpu_custom_call.1} parent=131 // pred_fallthru
          _
        // Predicated region
        $region149: #{tpu_custom_call.1} parent=131 // pred_check
          %p1027 = pneg %p241
        $region150: #{tpu_custom_call.1} parent=131 // pred_check_branch
          %1029 = sbr.rel (%p1027) target = $region152
        $region151: #{tpu_custom_call.1} parent=131 // pred_region
          %1030 = dma.done [#allocation13], 256
        $region152: #{tpu_custom_call.1} parent=131 // pred_fallthru
          _
        // Predicated region
        $region153: #{tpu_custom_call.1} parent=131 // pred_check
          %p1031 = pneg %p262
        $region154: #{tpu_custom_call.1} parent=131 // pred_check_branch
          %1033 = sbr.rel (%p1031) target = $region156
        $region155: #{tpu_custom_call.1} parent=131 // pred_region
          %1034 = dma.done [#allocation16], 16
        $region156: #{tpu_custom_call.1} parent=131 // pred_fallthru
          _
        // Predicated region
        $region157: #{tpu_custom_call.1} parent=131 // pred_check
          %p1035 = pneg %p283
        $region158: #{tpu_custom_call.1} parent=131 // pred_check_branch
          %1037 = sbr.rel (%p1035) target = $region160
        $region159: #{tpu_custom_call.1} parent=131 // pred_region
          %1038 = dma.done [#allocation16], 256
        $region160: #{tpu_custom_call.1} parent=131 // pred_fallthru
          _
        // Predicated region
        $region161: #{tpu_custom_call.1} parent=131 // pred_check
          %p1039 = pneg %p304
        $region162: #{tpu_custom_call.1} parent=131 // pred_check_branch
          %1041 = sbr.rel (%p1039) target = $region164
        $region163: #{tpu_custom_call.1} parent=131 // pred_region
          %1042 = dma.done [#allocation19], 16
        $region164: #{tpu_custom_call.1} parent=131 // pred_fallthru
          _
        // Predicated region
        $region165: #{tpu_custom_call.1} parent=131 // pred_check
          %p1043 = pneg %p325
        $region166: #{tpu_custom_call.1} parent=131 // pred_check_branch
          %1045 = sbr.rel (%p1043) target = $region168
        $region167: #{tpu_custom_call.1} parent=131 // pred_region
          %1046 = dma.done [#allocation19], 16
        $region168: #{tpu_custom_call.1} parent=131 // pred_fallthru
          _
        // Predicated region
        $region169: #{tpu_custom_call.1} parent=131 // pred_check
          %p1047 = pneg %p346
        $region170: #{tpu_custom_call.1} parent=131 // pred_check_branch
          %1049 = sbr.rel (%p1047) target = $region172
        $region171: #{tpu_custom_call.1} parent=131 // pred_region
          %1050 = dma.done [#allocation22], 16
        $region172: #{tpu_custom_call.1} parent=131 // pred_fallthru
          _
        // Predicated region
        $region173: #{tpu_custom_call.1} parent=131 // pred_check
          %p1051 = pneg %p388
        $region174: #{tpu_custom_call.1} parent=131 // pred_check_branch
          %1053 = sbr.rel (%p1051) target = $region176
        $region175: #{tpu_custom_call.1} parent=131 // pred_region
          %1054 = dma.done [#allocation22], 16
        $region176: #{tpu_custom_call.1} parent=131 // pred_fallthru
          _
        // Predicated region
        $region177: #{tpu_custom_call.1} parent=131 // pred_check
          %p1055 = pneg %p430
        $region178: #{tpu_custom_call.1} parent=131 // pred_check_branch
          %1057 = sbr.rel (%p1055) target = $region180
        $region179: #{tpu_custom_call.1} parent=131 // pred_region
          %1058 = dma.done [#allocation25], 16
        $region180: #{tpu_custom_call.1} parent=131 // pred_fallthru
          _
        // Predicated region
        $region181: #{tpu_custom_call.1} parent=131 // pred_check
          %p1059 = pneg %p451
        $region182: #{tpu_custom_call.1} parent=131 // pred_check_branch
          %1061 = sbr.rel (%p1059) target = $region184
        $region183: #{tpu_custom_call.1} parent=131 // pred_region
          %1062 = dma.done [#allocation25], 256
        $region184: #{tpu_custom_call.1} parent=131 // pred_fallthru
          _
        // Predicated region
        $region185: #{tpu_custom_call.1} parent=131 // pred_check
          %p1063 = pneg %p472
        $region186: #{tpu_custom_call.1} parent=131 // pred_check_branch
          %1065 = sbr.rel (%p1063) target = $region188
        $region187: #{tpu_custom_call.1} parent=131 // pred_region
          %1066 = dma.done [#allocation28], 16
        $region188: #{tpu_custom_call.1} parent=131 // pred_fallthru
          _
        %s1067 = smul.u32 2, %s89
        %p1068 = scmp.lt.s32.totalorder %s1067, 3
        %s1069 = scalar_select %p1068, %s1067, 3
        %s1070 = smul.addr %s1069, 8
        %s1071 = scalar_lea.vmem %s1, %s1070
        %p1072 = pneg %p110
        %p1073 = pneg %p107
        %s1074 = sand.u32 %s123, 1
        %s1075 = scalar_lea.sflag [#allocation7], %s1074
        %s1076 = sand.u32 %s123, 1
        %s1077 = smul.addr %s1076, 16
        %s1078 = scalar_lea.vmem [#allocation6], %s1077
        %p1079 = pneg %p136
        %p1080 = pneg %p133
        %p1081 = pneg %p157
        %p1082 = pneg %p154
        %p1083 = pneg %p178
        %p1084 = pneg %p175
        %p1085 = pneg %p199
        %p1086 = pneg %p196
        %p1087 = pneg %p220
        %p1088 = pneg %p217
        %p1089 = pneg %p241
        %p1090 = pneg %p238
        %p1091 = pneg %p262
        %p1092 = pneg %p259
        %p1093 = pneg %p283
        %p1094 = pneg %p280
        %p1095 = pneg %p304
        %p1096 = pneg %p301
        %p1097 = pneg %p325
        %p1098 = pneg %p322
        %p1099 = pneg %p346
        %p1100 = pneg %p343
        %p1101 = pneg %p367
        %p1102 = pneg %p364
        %p1103 = pneg %p388
        %p1104 = pneg %p385
        %p1105 = pneg %p409
        %p1106 = pneg %p406
        %p1107 = pneg %p430
        %p1108 = pneg %p427
        %p1109 = pneg %p451
        %p1110 = pneg %p448
        %p1111 = pneg %p472
        %p1112 = pneg %p469
        %p1113 = pneg %p493
        %p1114 = pneg %p490
        %p1115 = pneg %p514
        %p1116 = pneg %p511
        %p1117 = pneg %p535
        %p1118 = pneg %p532
        %p1119 = pneg %p556
        %p1120 = pneg %p553
        %p1121 = pneg %p577
        %p1122 = pneg %p574
        %p1123 = pneg %p598
        %p1124 = pneg %p595
        %p1125 = pneg %p619
        %p1126 = pneg %p616
        %p1127 = pneg %p640
        %p1128 = pneg %p637
        %p1129 = pneg %p661
        %p1130 = pneg %p658
        %p1131 = pneg %p682
        %p1132 = pneg %p679
        %p1133 = pneg %p708
        %p1134 = pneg %p705
        %s1135 = sand.u32 %s695, 1
        %s1136 = scalar_lea.sflag [#allocation8], %s1135
        %s1137 = sand.u32 %s695, 1
        %s1138 = smul.addr %s1137, 16
        %s1139 = scalar_lea.vmem [#allocation29], %s1138
        %p1140 = pneg %p734
        %p1141 = pneg %p731
        %s1142 = sand.u32 %s89, 1
        %s1143 = scalar_lea.sflag [#allocation31], %s1142
        %s1144 = sand.u32 %s721, 1
        %s1145 = smul.addr %s1144, 8
        %s1146 = scalar_lea.vmem [#allocation30], %s1145
        %p1147 = pneg %p760
        %p1148 = pneg %p757
        %s1149 = sand.u32 %s89, 1
        %s1150 = scalar_lea.sflag [#allocation31], %s1149
        %s1151 = sand.u32 %s747, 1
        %s1152 = smul.addr %s1151, 8
        %s1153 = scalar_lea.vmem [#allocation32], %s1152
        %s1154 = smul.u32 2, %s89
        %p1155 = scmp.lt.s32.totalorder %s1154, 3
        %s1156 = scalar_select %p1155, %s1154, 3
        %s1157 = smul.addr %s1156, 8
        %s1158 = scalar_lea.vmem %s1, %s1157
        %s1159 = smul.u32 2, %s89
        %s1160 = smul.u32 2, %s89
        %s1161 = smul.u32 2, %s89
        %s1162 = smul.u32 2, %s89
        %s1163 = smul.u32 2, %s89
        %v1165 = vld [vmem:[%s1158] sm:$0xff]
        %v1166 = vld [vmem:[%s1158 + $0x8] sm:$0xff]
        %v1167 = vld [vmem:[%s1010] sm:$0xff]
        %v1168 = vld [vmem:[%s1010 + $0x8] sm:$0xff]
        %v1169 = vld [vmem:[%s5] sm:$0xf]
        %v1170 = vld [vmem:[%s5 + $0x4] sm:$0xf]
        %v1171 = vld [vmem:[%s5 + $0x8] sm:$0xf]
        %v1172 = vld [vmem:[%s5 + $0xc] sm:$0xf]
        %v1173 = vld [vmem:[#allocation9] sm:$0x1]
        %v1174 = vld [vmem:[#allocation11] sm:$0xf]
        %v1175 = vld [vmem:[#allocation11 + $0x4] sm:$0xf]
        %v1176 = vld [vmem:[#allocation11 + $0x8] sm:$0xf]
        %v1177 = vld [vmem:[#allocation11 + $0xc] sm:$0xf]
        %v1178 = vld [vmem:[#allocation12] sm:$0x1]
        %v1179 = vld [vmem:[#allocation14] sm:$0xf]
        %v1180 = vld [vmem:[#allocation14 + $0x4] sm:$0xf]
        %v1181 = vld [vmem:[#allocation14 + $0x8] sm:$0xf]
        %v1182 = vld [vmem:[#allocation14 + $0xc] sm:$0xf]
        %v1183 = vld [vmem:[#allocation15] sm:$0x1]
        %v1184 = vld [vmem:[#allocation17] sm:$0xf]
        %v1185 = vld [vmem:[#allocation17 + $0x4] sm:$0xf]
        %v1186 = vld [vmem:[#allocation17 + $0x8] sm:$0xf]
        %v1187 = vld [vmem:[#allocation17 + $0xc] sm:$0xf]
        %v1188 = vld [vmem:[#allocation18] sm:$0x1]
        %v1189 = vld [vmem:[#allocation20] sm:$0x1]
        %v1190 = vld [vmem:[#allocation21] sm:$0x1]
        %v1191 = vpack.c.bf16 %v1166, %v1165
        %v1193 = vlaneseq
        %v1194 = vshrl.u32 %v1193, 7
        %v1195 = vsub.s32 0, %v1194
        %v1196 = vrot.slane %v1173, %v1195
        %v1202 = vunpack.c.l.b16 %v1169
        %v1203 = vunpack.c.l.b16 %v1170
        %v1204 = vunpack.c.l.b16 %v1171
        %v1205 = vunpack.c.l.b16 %v1172
        %v1206 = vpack.c.b16 %v1203, %v1202
        %v1207 = vpack.c.b16 %v1205, %v1204
        %vm1210 = vcmask 261120
        %v1212 = vsel %vm1210, %v1191, 0
        %1214 = vmatprep.subr.bf16.mxu0 0
        %1215 = vmatpush1.bf16.msra.mxu0 %v1206
        %1216 = vmatprep.subr.bf16.mxu0 0
        %1217 = vmatpush1.bf16.msra.mxu0 %v1207
        %1218 = vmatprep.subr.bf16.mxu0 0
        %1219 = vmatpush1.bf16.msra.mxu0 0
        %1220 = vmatprep.subr.bf16.mxu0 0
        %1221 = vmatpush1.bf16.msra.mxu0 0
        %1222 = vmatprep.subr.bf16.mxu0 0
        %1223 = vmatpush1.bf16.msra.mxu0 0
        %1224 = vmatprep.subr.bf16.mxu0 0
        %1225 = vmatpush1.bf16.msra.mxu0 0
        %1226 = vmatprep.subr.bf16.mxu0 0
        %1227 = vmatpush1.bf16.msra.mxu0 0
        %1228 = vmatprep.subr.bf16.mxu0 0
        %1229 = vmatpush1.bf16.msra.mxu0 0
        %1230 = vmatprep.subr.bf16.mxu0 0
        %1231 = vmatpush1.bf16.msra.mxu0 0
        %1232 = vmatprep.subr.bf16.mxu0 0
        %1233 = vmatpush1.bf16.msra.mxu0 0
        %1234 = vmatprep.subr.bf16.mxu0 0
        %1235 = vmatpush1.bf16.msra.mxu0 0
        %1236 = vmatprep.subr.bf16.mxu0 0
        %1237 = vmatpush1.bf16.msra.mxu0 0
        %1238 = vmatprep.subr.bf16.mxu0 0
        %1239 = vmatpush1.bf16.msra.mxu0 0
        %1240 = vmatprep.subr.bf16.mxu0 0
        %1241 = vmatpush1.bf16.msra.mxu0 0
        %1242 = vmatprep.subr.bf16.mxu0 0
        %1243 = vmatpush1.bf16.msra.mxu0 0
        %1244 = vmatprep.subr.bf16.mxu0 0
        %1245 = vmatpush1.bf16.msra.mxu0 0
        %1246 = vmatprep.mubr.bf16.mxu0 0
        %1247 = vmatmul.mubr.bf16.gmra.mrb[0].mxu0 %v1212
        %v1248 = vpop.f32.mrb[0].mxu0
        %v1249 = vadd.f32 %v1196, %v1248
        %v1250 = vpop.f32.mrb[0].mxu0
        %v1251 = vpop.f32.mrb[0].mxu0
        %v1252 = vadd.f32 %v1196, %v1251
        %v1253 = vpop.f32.mrb[0].mxu0
        %1254 = vdwg.mxu0
        %v1255 = vmul.f32 %v1249, 0.35355338
        %v1256 = vmul.f32 %v1252, 0.35355338
        %1257 = vst.msk [vmem:[#allocation2] sm:$0xff] %vm1210, %v1255
        %1258 = vst.msk [vmem:[#allocation2 + $0x8] sm:$0xff] %vm1210, %v1256
        %v1260 = vlaneseq
        %v1261 = vshrl.u32 %v1260, 7
        %v1262 = vsub.s32 0, %v1261
        %v1263 = vrot.slane %v1178, %v1262
        %v1269 = vunpack.c.l.b16 %v1174
        %v1270 = vunpack.c.l.b16 %v1175
        %v1271 = vunpack.c.l.b16 %v1176
        %v1272 = vunpack.c.l.b16 %v1177
        %v1273 = vpack.c.b16 %v1270, %v1269
        %v1274 = vpack.c.b16 %v1272, %v1271
        %1277 = vmatprep.subr.bf16.mxu0 0
        %1278 = vmatpush1.bf16.msra.mxu0 %v1273
        %1279 = vmatprep.subr.bf16.mxu0 0
        %1280 = vmatpush1.bf16.msra.mxu0 %v1274
        %1281 = vmatprep.subr.bf16.mxu0 0
        %1282 = vmatpush1.bf16.msra.mxu0 0
        %1283 = vmatprep.subr.bf16.mxu0 0
        %1284 = vmatpush1.bf16.msra.mxu0 0
        %1285 = vmatprep.subr.bf16.mxu0 0
        %1286 = vmatpush1.bf16.msra.mxu0 0
        %1287 = vmatprep.subr.bf16.mxu0 0
        %1288 = vmatpush1.bf16.msra.mxu0 0
        %1289 = vmatprep.subr.bf16.mxu0 0
        %1290 = vmatpush1.bf16.msra.mxu0 0
        %1291 = vmatprep.subr.bf16.mxu0 0
        %1292 = vmatpush1.bf16.msra.mxu0 0
        %1293 = vmatprep.subr.bf16.mxu0 0
        %1294 = vmatpush1.bf16.msra.mxu0 0
        %1295 = vmatprep.subr.bf16.mxu0 0
        %1296 = vmatpush1.bf16.msra.mxu0 0
        %1297 = vmatprep.subr.bf16.mxu0 0
        %1298 = vmatpush1.bf16.msra.mxu0 0
        %1299 = vmatprep.subr.bf16.mxu0 0
        %1300 = vmatpush1.bf16.msra.mxu0 0
        %1301 = vmatprep.subr.bf16.mxu0 0
        %1302 = vmatpush1.bf16.msra.mxu0 0
        %1303 = vmatprep.subr.bf16.mxu0 0
        %1304 = vmatpush1.bf16.msra.mxu0 0
        %1305 = vmatprep.subr.bf16.mxu0 0
        %1306 = vmatpush1.bf16.msra.mxu0 0
        %1307 = vmatprep.subr.bf16.mxu0 0
        %1308 = vmatpush1.bf16.msra.mxu0 0
        %1309 = vmatprep.mubr.bf16.mxu0 0
        %1310 = vmatmul.mubr.bf16.gmra.mrb[0].mxu0 %v1212
        %v1311 = vpop.f32.mrb[0].mxu0
        %v1312 = vadd.f32 %v1263, %v1311
        %v1313 = vpop.f32.mrb[0].mxu0
        %v1314 = vpop.f32.mrb[0].mxu0
        %v1315 = vadd.f32 %v1263, %v1314
        %v1316 = vpop.f32.mrb[0].mxu0
        %1317 = vdwg.mxu0
        %1318 = vst.msk [vmem:[#allocation3] sm:$0xff] %vm1210, %v1312
        %1319 = vst.msk [vmem:[#allocation3 + $0x8] sm:$0xff] %vm1210, %v1315
        %v1321 = vlaneseq
        %v1322 = vshrl.u32 %v1321, 7
        %v1323 = vsub.s32 0, %v1322
        %v1324 = vrot.slane %v1183, %v1323
        %v1330 = vunpack.c.l.b16 %v1179
        %v1331 = vunpack.c.l.b16 %v1180
        %v1332 = vunpack.c.l.b16 %v1181
        %v1333 = vunpack.c.l.b16 %v1182
        %v1334 = vpack.c.b16 %v1331, %v1330
        %v1335 = vpack.c.b16 %v1333, %v1332
        %1338 = vmatprep.subr.bf16.mxu0 0
        %1339 = vmatpush1.bf16.msra.mxu0 %v1334
        %1340 = vmatprep.subr.bf16.mxu0 0
        %1341 = vmatpush1.bf16.msra.mxu0 %v1335
        %1342 = vmatprep.subr.bf16.mxu0 0
        %1343 = vmatpush1.bf16.msra.mxu0 0
        %1344 = vmatprep.subr.bf16.mxu0 0
        %1345 = vmatpush1.bf16.msra.mxu0 0
        %1346 = vmatprep.subr.bf16.mxu0 0
        %1347 = vmatpush1.bf16.msra.mxu0 0
        %1348 = vmatprep.subr.bf16.mxu0 0
        %1349 = vmatpush1.bf16.msra.mxu0 0
        %1350 = vmatprep.subr.bf16.mxu0 0
        %1351 = vmatpush1.bf16.msra.mxu0 0
        %1352 = vmatprep.subr.bf16.mxu0 0
        %1353 = vmatpush1.bf16.msra.mxu0 0
        %1354 = vmatprep.subr.bf16.mxu0 0
        %1355 = vmatpush1.bf16.msra.mxu0 0
        %1356 = vmatprep.subr.bf16.mxu0 0
        %1357 = vmatpush1.bf16.msra.mxu0 0
        %1358 = vmatprep.subr.bf16.mxu0 0
        %1359 = vmatpush1.bf16.msra.mxu0 0
        %1360 = vmatprep.subr.bf16.mxu0 0
        %1361 = vmatpush1.bf16.msra.mxu0 0
        %1362 = vmatprep.subr.bf16.mxu0 0
        %1363 = vmatpush1.bf16.msra.mxu0 0
        %1364 = vmatprep.subr.bf16.mxu0 0
        %1365 = vmatpush1.bf16.msra.mxu0 0
        %1366 = vmatprep.subr.bf16.mxu0 0
        %1367 = vmatpush1.bf16.msra.mxu0 0
        %1368 = vmatprep.subr.bf16.mxu0 0
        %1369 = vmatpush1.bf16.msra.mxu0 0
        %1370 = vmatprep.mubr.bf16.mxu0 0
        %1371 = vmatmul.mubr.bf16.gmra.mrb[0].mxu0 %v1212
        %v1372 = vpop.f32.mrb[0].mxu0
        %v1373 = vadd.f32 %v1324, %v1372
        %v1374 = vpop.f32.mrb[0].mxu0
        %v1375 = vpop.f32.mrb[0].mxu0
        %v1376 = vadd.f32 %v1324, %v1375
        %v1377 = vpop.f32.mrb[0].mxu0
        %1378 = vdwg.mxu0
        %1379 = vst.msk [vmem:[#allocation4] sm:$0xff] %vm1210, %v1373
        %1380 = vst.msk [vmem:[#allocation4 + $0x8] sm:$0xff] %vm1210, %v1376
        %v1381 = vld [vmem:[#allocation2] sm:$0xff]
        %v1382 = vld [vmem:[#allocation2 + $0x8] sm:$0xff]
        %v1383 = vpack.c.bf16 %v1382, %v1381
        %v1384 = vld [vmem:[#allocation3] sm:$0xff]
        %v1385 = vld [vmem:[#allocation3 + $0x8] sm:$0xff]
        %v1386 = vpack.c.bf16 %v1385, %v1384
        %v1387 = vld [vmem:[#allocation4] sm:$0xff]
        %v1388 = vld [vmem:[#allocation4 + $0x8] sm:$0xff]
        %v1389 = vpack.c.bf16 %v1388, %v1387
        %vm1390 = vcmask 64512
        %v1392 = vsel %vm1390, %v1383, 0
        %v1395 = vsel %vm1390, %v1386, 0
        %1397 = vmatprep.subr.bf16.mxu0 0
        %1398 = vmatpush1.bf16.xpose.msra.mxu0 %v1395
        %1399 = vmatprep.subr.bf16.mxu0 0
        %1400 = vmatpush1.bf16.xpose.msra.mxu0 0
        %1401 = vmatprep.subr.bf16.mxu0 0
        %1402 = vmatpush1.bf16.xpose.msra.mxu0 0
        %1403 = vmatprep.subr.bf16.mxu0 0
        %1404 = vmatpush1.bf16.xpose.msra.mxu0 0
        %1405 = vmatprep.subr.bf16.mxu0 0
        %1406 = vmatpush1.bf16.xpose.msra.mxu0 0
        %1407 = vmatprep.subr.bf16.mxu0 0
        %1408 = vmatpush1.bf16.xpose.msra.mxu0 0
        %1409 = vmatprep.subr.bf16.mxu0 0
        %1410 = vmatpush1.bf16.xpose.msra.mxu0 0
        %1411 = vmatprep.subr.bf16.mxu0 0
        %1412 = vmatpush1.bf16.xpose.msra.mxu0 0
        %1413 = vmatprep.subr.bf16.mxu0 0
        %1414 = vmatpush1.bf16.xpose.msra.mxu0 0
        %1415 = vmatprep.subr.bf16.mxu0 0
        %1416 = vmatpush1.bf16.xpose.msra.mxu0 0
        %1417 = vmatprep.subr.bf16.mxu0 0
        %1418 = vmatpush1.bf16.xpose.msra.mxu0 0
        %1419 = vmatprep.subr.bf16.mxu0 0
        %1420 = vmatpush1.bf16.xpose.msra.mxu0 0
        %1421 = vmatprep.subr.bf16.mxu0 0
        %1422 = vmatpush1.bf16.xpose.msra.mxu0 0
        %1423 = vmatprep.subr.bf16.mxu0 0
        %1424 = vmatpush1.bf16.xpose.msra.mxu0 0
        %1425 = vmatprep.subr.bf16.mxu0 0
        %1426 = vmatpush1.bf16.xpose.msra.mxu0 0
        %1427 = vmatprep.subr.bf16.mxu0 0
        %1428 = vmatpush1.bf16.xpose.msra.mxu0 0
        %1429 = vmatprep.mubr.bf16.mxu0 0
        %1430 = vmatmul.mubr.bf16.gmra.mrb[0].mxu0 %v1392
        %v1431 = vpop.f32.mrb[0].mxu0
        %v1432 = vadd.f32 0.0, %v1431
        %v1433 = vpop.f32.mrb[0].mxu0
        %v1434 = vpop.f32.mrb[0].mxu0
        %v1435 = vadd.f32 0.0, %v1434
        %v1436 = vpop.f32.mrb[0].mxu0
        %1437 = vdwg.mxu0
        %vm1438 = vcmask 130048
        %v1439 = vsel %vm1438, %v1432, -inf
        %1440 = vmax.xlane.f32.xlu0 %v1439
        %v1441 = vpop.xlane.xlu0 %1440
        %v1442 = vsel %vm1438, %v1435, -inf
        %1443 = vmax.xlane.f32.xlu0 %v1442
        %v1444 = vpop.xlane.xlu0 %1443
        %v1445 = vsub.f32 %v1432, %v1441
        %v1446 = vsub.f32 %v1435, %v1444
        %v1447 = vmul.f32 %v1445, 1.442695
        %v1448 = vpow.pop %v1447
        %v1449 = vmul.f32 %v1446, 1.442695
        %v1450 = vpow.pop %v1449
        %v1451 = vsel %vm1438, %v1448, 0.0
        %1452 = vadd.xlane.f32.xlu0 %v1451
        %v1453 = vpop.xlane.xlu0 %1452
        %v1454 = vsel %vm1438, %v1450, 0.0
        %1455 = vadd.xlane.f32.xlu0 %v1454
        %v1456 = vpop.xlane.xlu0 %1455
        %v1457 = vrcp.pop %v1453
        %v1458 = vrcp.pop %v1456
        %v1459 = vmul.f32 %v1448, %v1457
        %v1460 = vmul.f32 %v1450, %v1458
        %v1461 = vpack.c.bf16 %v1460, %v1459
        %v1463 = vsel %vm1438, %v1461, 0
        %1465 = vmatprep.subr.bf16.mxu0 0
        %1466 = vmatpush1.bf16.msra.mxu0 %v1389
        %1467 = vmatprep.subr.bf16.mxu0 0
        %1468 = vmatpush1.bf16.msra.mxu0 0
        %1469 = vmatprep.subr.bf16.mxu0 0
        %1470 = vmatpush1.bf16.msra.mxu0 0
        %1471 = vmatprep.subr.bf16.mxu0 0
        %1472 = vmatpush1.bf16.msra.mxu0 0
        %1473 = vmatprep.subr.bf16.mxu0 0
        %1474 = vmatpush1.bf16.msra.mxu0 0
        %1475 = vmatprep.subr.bf16.mxu0 0
        %1476 = vmatpush1.bf16.msra.mxu0 0
        %1477 = vmatprep.subr.bf16.mxu0 0
        %1478 = vmatpush1.bf16.msra.mxu0 0
        %1479 = vmatprep.subr.bf16.mxu0 0
        %1480 = vmatpush1.bf16.msra.mxu0 0
        %1481 = vmatprep.subr.bf16.mxu0 0
        %1482 = vmatpush1.bf16.msra.mxu0 0
        %1483 = vmatprep.subr.bf16.mxu0 0
        %1484 = vmatpush1.bf16.msra.mxu0 0
        %1485 = vmatprep.subr.bf16.mxu0 0
        %1486 = vmatpush1.bf16.msra.mxu0 0
        %1487 = vmatprep.subr.bf16.mxu0 0
        %1488 = vmatpush1.bf16.msra.mxu0 0
        %1489 = vmatprep.subr.bf16.mxu0 0
        %1490 = vmatpush1.bf16.msra.mxu0 0
        %1491 = vmatprep.subr.bf16.mxu0 0
        %1492 = vmatpush1.bf16.msra.mxu0 0
        %1493 = vmatprep.subr.bf16.mxu0 0
        %1494 = vmatpush1.bf16.msra.mxu0 0
        %1495 = vmatprep.subr.bf16.mxu0 0
        %1496 = vmatpush1.bf16.msra.mxu0 0
        %1497 = vmatprep.mubr.bf16.mxu0 0
        %1498 = vmatmul.mubr.bf16.gmra.mrb[0].mxu0 %v1463
        %v1499 = vpop.f32.mrb[0].mxu0
        %v1500 = vadd.f32 0.0, %v1499
        %v1501 = vpop.f32.mrb[0].mxu0
        %v1502 = vpop.f32.mrb[0].mxu0
        %v1503 = vadd.f32 0.0, %v1502
        %v1504 = vpop.f32.mrb[0].mxu0
        %1505 = vdwg.mxu0
        %1506 = vst.msk [vmem:[#allocation5] sm:$0xff] %vm1390, %v1500
        %1507 = vst.msk [vmem:[#allocation5 + $0x8] sm:$0xff] %vm1390, %v1503
        %v1509 = vunpack.c.l.b16 %v1461
        %v1510 = vunpack.c.h.b16 %v1461
        %v1511 = vpack.c.b16 %v1509, %v1509
        %v1512 = vpack.c.b16 %v1510, %v1510
        %vm1515 = vcmask 125952
        %1516 = vst.msk [vmem:[%s1146] sm:$0xf] %vm1515, %v1511
        %1517 = vst.msk [vmem:[%s1146 + $0x4] sm:$0xf] %vm1515, %v1512
        %v1518 = vld [vmem:[#allocation2] sm:$0xff]
        %v1519 = vld [vmem:[#allocation2 + $0x8] sm:$0xff]
        %v1520 = vpack.c.bf16 %v1519, %v1518
        %v1521 = vld [vmem:[#allocation3] sm:$0xff]
        %v1522 = vld [vmem:[#allocation3 + $0x8] sm:$0xff]
        %v1523 = vpack.c.bf16 %v1522, %v1521
        %v1524 = vld [vmem:[#allocation4] sm:$0xff]
        %v1525 = vld [vmem:[#allocation4 + $0x8] sm:$0xff]
        %v1526 = vpack.c.bf16 %v1525, %v1524
        %1528 = vrot.lane.b32.xlu0 %v1520, 120
        %v1529 = vpop.permute.xlu0 %1528
        %1531 = vrot.lane.b32.xlu0 %v1523, 120
        %v1532 = vpop.permute.xlu0 %1531
        %v1534 = vsel %vm1390, %v1529, 0
        %v1537 = vsel %vm1390, %v1532, 0
        %1539 = vmatprep.subr.bf16.mxu0 0
        %1540 = vmatpush1.bf16.xpose.msra.mxu0 %v1537
        %1541 = vmatprep.subr.bf16.mxu0 0
        %1542 = vmatpush1.bf16.xpose.msra.mxu0 0
        %1543 = vmatprep.subr.bf16.mxu0 0
        %1544 = vmatpush1.bf16.xpose.msra.mxu0 0
        %1545 = vmatprep.subr.bf16.mxu0 0
        %1546 = vmatpush1.bf16.xpose.msra.mxu0 0
        %1547 = vmatprep.subr.bf16.mxu0 0
        %1548 = vmatpush1.bf16.xpose.msra.mxu0 0
        %1549 = vmatprep.subr.bf16.mxu0 0
        %1550 = vmatpush1.bf16.xpose.msra.mxu0 0
        %1551 = vmatprep.subr.bf16.mxu0 0
        %1552 = vmatpush1.bf16.xpose.msra.mxu0 0
        %1553 = vmatprep.subr.bf16.mxu0 0
        %1554 = vmatpush1.bf16.xpose.msra.mxu0 0
        %1555 = vmatprep.subr.bf16.mxu0 0
        %1556 = vmatpush1.bf16.xpose.msra.mxu0 0
        %1557 = vmatprep.subr.bf16.mxu0 0
        %1558 = vmatpush1.bf16.xpose.msra.mxu0 0
        %1559 = vmatprep.subr.bf16.mxu0 0
        %1560 = vmatpush1.bf16.xpose.msra.mxu0 0
        %1561 = vmatprep.subr.bf16.mxu0 0
        %1562 = vmatpush1.bf16.xpose.msra.mxu0 0
        %1563 = vmatprep.subr.bf16.mxu0 0
        %1564 = vmatpush1.bf16.xpose.msra.mxu0 0
        %1565 = vmatprep.subr.bf16.mxu0 0
        %1566 = vmatpush1.bf16.xpose.msra.mxu0 0
        %1567 = vmatprep.subr.bf16.mxu0 0
        %1568 = vmatpush1.bf16.xpose.msra.mxu0 0
        %1569 = vmatprep.subr.bf16.mxu0 0
        %1570 = vmatpush1.bf16.xpose.msra.mxu0 0
        %1571 = vmatprep.mubr.bf16.mxu0 0
        %1572 = vmatmul.mubr.bf16.gmra.mrb[0].mxu0 %v1534
        %v1573 = vpop.f32.mrb[0].mxu0
        %v1574 = vadd.f32 0.0, %v1573
        %v1575 = vpop.f32.mrb[0].mxu0
        %v1576 = vpop.f32.mrb[0].mxu0
        %v1577 = vadd.f32 0.0, %v1576
        %v1578 = vpop.f32.mrb[0].mxu0
        %1579 = vdwg.mxu0
        %v1580 = vsel %vm1438, %v1574, -inf
        %1581 = vmax.xlane.f32.xlu0 %v1580
        %v1582 = vpop.xlane.xlu0 %1581
        %v1583 = vsel %vm1438, %v1577, -inf
        %1584 = vmax.xlane.f32.xlu0 %v1583
        %v1585 = vpop.xlane.xlu0 %1584
        %v1586 = vsub.f32 %v1574, %v1582
        %v1587 = vsub.f32 %v1577, %v1585
        %v1588 = vmul.f32 %v1586, 1.442695
        %v1589 = vpow.pop %v1588
        %v1590 = vmul.f32 %v1587, 1.442695
        %v1591 = vpow.pop %v1590
        %v1592 = vsel %vm1438, %v1589, 0.0
        %1593 = vadd.xlane.f32.xlu0 %v1592
        %v1594 = vpop.xlane.xlu0 %1593
        %v1595 = vsel %vm1438, %v1591, 0.0
        %1596 = vadd.xlane.f32.xlu0 %v1595
        %v1597 = vpop.xlane.xlu0 %1596
        %v1598 = vrcp.pop %v1594
        %v1599 = vrcp.pop %v1597
        %v1600 = vmul.f32 %v1589, %v1598
        %v1601 = vmul.f32 %v1591, %v1599
        %v1602 = vpack.c.bf16 %v1601, %v1600
        %1604 = vrot.lane.b32.xlu0 %v1526, 120
        %v1605 = vpop.permute.xlu0 %1604
        %v1608 = vsel %vm1438, %v1602, 0
        %1610 = vmatprep.subr.bf16.mxu0 0
        %1611 = vmatpush1.bf16.msra.mxu0 %v1605
        %1612 = vmatprep.subr.bf16.mxu0 0
        %1613 = vmatpush1.bf16.msra.mxu0 0
        %1614 = vmatprep.subr.bf16.mxu0 0
        %1615 = vmatpush1.bf16.msra.mxu0 0
        %1616 = vmatprep.subr.bf16.mxu0 0
        %1617 = vmatpush1.bf16.msra.mxu0 0
        %1618 = vmatprep.subr.bf16.mxu0 0
        %1619 = vmatpush1.bf16.msra.mxu0 0
        %1620 = vmatprep.subr.bf16.mxu0 0
        %1621 = vmatpush1.bf16.msra.mxu0 0
        %1622 = vmatprep.subr.bf16.mxu0 0
        %1623 = vmatpush1.bf16.msra.mxu0 0
        %1624 = vmatprep.subr.bf16.mxu0 0
        %1625 = vmatpush1.bf16.msra.mxu0 0
        %1626 = vmatprep.subr.bf16.mxu0 0
        %1627 = vmatpush1.bf16.msra.mxu0 0
        %1628 = vmatprep.subr.bf16.mxu0 0
        %1629 = vmatpush1.bf16.msra.mxu0 0
        %1630 = vmatprep.subr.bf16.mxu0 0
        %1631 = vmatpush1.bf16.msra.mxu0 0
        %1632 = vmatprep.subr.bf16.mxu0 0
        %1633 = vmatpush1.bf16.msra.mxu0 0
        %1634 = vmatprep.subr.bf16.mxu0 0
        %1635 = vmatpush1.bf16.msra.mxu0 0
        %1636 = vmatprep.subr.bf16.mxu0 0
        %1637 = vmatpush1.bf16.msra.mxu0 0
        %1638 = vmatprep.subr.bf16.mxu0 0
        %1639 = vmatpush1.bf16.msra.mxu0 0
        %1640 = vmatprep.subr.bf16.mxu0 0
        %1641 = vmatpush1.bf16.msra.mxu0 0
        %1642 = vmatprep.mubr.bf16.mxu0 0
        %1643 = vmatmul.mubr.bf16.gmra.mrb[0].mxu0 %v1608
        %v1644 = vpop.f32.mrb[0].mxu0
        %v1645 = vadd.f32 0.0, %v1644
        %v1646 = vpop.f32.mrb[0].mxu0
        %v1647 = vpop.f32.mrb[0].mxu0
        %v1648 = vadd.f32 0.0, %v1647
        %v1649 = vpop.f32.mrb[0].mxu0
        %1650 = vdwg.mxu0
        %1653 = vrot.lane.b32.xlu0 %v1645, 8
        %v1654 = vpop.permute.xlu0 %1653
        %1655 = vrot.lane.b32.xlu0 %v1648, 8
        %v1656 = vpop.permute.xlu0 %1655
        %vm1659 = vcmask 130112
        %1660 = vst.msk [vmem:[#allocation5] sm:$0xff] %vm1659, %v1654
        %1661 = vst.msk [vmem:[#allocation5 + $0x8] sm:$0xff] %vm1659, %v1656
        %v1663 = vunpack.c.l.b16 %v1602
        %v1664 = vunpack.c.h.b16 %v1602
        %v1665 = vpack.c.b16 %v1663, %v1663
        %v1666 = vpack.c.b16 %v1664, %v1664
        %1667 = vrot.lane.b32.xlu0 %v1665, 16
        %v1668 = vpop.permute.xlu0 %1667
        %1669 = vrot.lane.b32.xlu0 %v1666, 16
        %v1670 = vpop.permute.xlu0 %1669
        %vm1673 = vcmask 257152
        %1674 = vst.msk [vmem:[%s1146] sm:$0xf] %vm1673, %v1668
        %1675 = vst.msk [vmem:[%s1146 + $0x4] sm:$0xf] %vm1673, %v1670
        %v1676 = vld [vmem:[#allocation2] sm:$0xff]
        %v1677 = vld [vmem:[#allocation2 + $0x8] sm:$0xff]
        %v1678 = vpack.c.bf16 %v1677, %v1676
        %v1679 = vld [vmem:[#allocation3] sm:$0xff]
        %v1680 = vld [vmem:[#allocation3 + $0x8] sm:$0xff]
        %v1681 = vpack.c.bf16 %v1680, %v1679
        %v1682 = vld [vmem:[#allocation4] sm:$0xff]
        %v1683 = vld [vmem:[#allocation4 + $0x8] sm:$0xff]
        %v1684 = vpack.c.bf16 %v1683, %v1682
        %1686 = vrot.lane.b32.xlu0 %v1678, 112
        %v1687 = vpop.permute.xlu0 %1686
        %1689 = vrot.lane.b32.xlu0 %v1681, 112
        %v1690 = vpop.permute.xlu0 %1689
        %v1692 = vsel %vm1390, %v1687, 0
        %v1695 = vsel %vm1390, %v1690, 0
        %1697 = vmatprep.subr.bf16.mxu0 0
        %1698 = vmatpush1.bf16.xpose.msra.mxu0 %v1695
        %1699 = vmatprep.subr.bf16.mxu0 0
        %1700 = vmatpush1.bf16.xpose.msra.mxu0 0
        %1701 = vmatprep.subr.bf16.mxu0 0
        %1702 = vmatpush1.bf16.xpose.msra.mxu0 0
        %1703 = vmatprep.subr.bf16.mxu0 0
        %1704 = vmatpush1.bf16.xpose.msra.mxu0 0
        %1705 = vmatprep.subr.bf16.mxu0 0
        %1706 = vmatpush1.bf16.xpose.msra.mxu0 0
        %1707 = vmatprep.subr.bf16.mxu0 0
        %1708 = vmatpush1.bf16.xpose.msra.mxu0 0
        %1709 = vmatprep.subr.bf16.mxu0 0
        %1710 = vmatpush1.bf16.xpose.msra.mxu0 0
        %1711 = vmatprep.subr.bf16.mxu0 0
        %1712 = vmatpush1.bf16.xpose.msra.mxu0 0
        %1713 = vmatprep.subr.bf16.mxu0 0
        %1714 = vmatpush1.bf16.xpose.msra.mxu0 0
        %1715 = vmatprep.subr.bf16.mxu0 0
        %1716 = vmatpush1.bf16.xpose.msra.mxu0 0
        %1717 = vmatprep.subr.bf16.mxu0 0
        %1718 = vmatpush1.bf16.xpose.msra.mxu0 0
        %1719 = vmatprep.subr.bf16.mxu0 0
        %1720 = vmatpush1.bf16.xpose.msra.mxu0 0
        %1721 = vmatprep.subr.bf16.mxu0 0
        %1722 = vmatpush1.bf16.xpose.msra.mxu0 0
        %1723 = vmatprep.subr.bf16.mxu0 0
        %1724 = vmatpush1.bf16.xpose.msra.mxu0 0
        %1725 = vmatprep.subr.bf16.mxu0 0
        %1726 = vmatpush1.bf16.xpose.msra.mxu0 0
        %1727 = vmatprep.subr.bf16.mxu0 0
        %1728 = vmatpush1.bf16.xpose.msra.mxu0 0
        %1729 = vmatprep.mubr.bf16.mxu0 0
        %1730 = vmatmul.mubr.bf16.gmra.mrb[0].mxu0 %v1692
        %v1731 = vpop.f32.mrb[0].mxu0
        %v1732 = vadd.f32 0.0, %v1731
        %v1733 = vpop.f32.mrb[0].mxu0
        %v1734 = vpop.f32.mrb[0].mxu0
        %v1735 = vadd.f32 0.0, %v1734
        %v1736 = vpop.f32.mrb[0].mxu0
        %1737 = vdwg.mxu0
        %v1738 = vsel %vm1438, %v1732, -inf
        %1739 = vmax.xlane.f32.xlu0 %v1738
        %v1740 = vpop.xlane.xlu0 %1739
        %v1741 = vsel %vm1438, %v1735, -inf
        %1742 = vmax.xlane.f32.xlu0 %v1741
        %v1743 = vpop.xlane.xlu0 %1742
        %v1744 = vsub.f32 %v1732, %v1740
        %v1745 = vsub.f32 %v1735, %v1743
        %v1746 = vmul.f32 %v1744, 1.442695
        %v1747 = vpow.pop %v1746
        %v1748 = vmul.f32 %v1745, 1.442695
        %v1749 = vpow.pop %v1748
        %v1750 = vsel %vm1438, %v1747, 0.0
        %1751 = vadd.xlane.f32.xlu0 %v1750
        %v1752 = vpop.xlane.xlu0 %1751
        %v1753 = vsel %vm1438, %v1749, 0.0
        %1754 = vadd.xlane.f32.xlu0 %v1753
        %v1755 = vpop.xlane.xlu0 %1754
        %v1756 = vrcp.pop %v1752
        %v1757 = vrcp.pop %v1755
        %v1758 = vmul.f32 %v1747, %v1756
        %v1759 = vmul.f32 %v1749, %v1757
        %v1760 = vpack.c.bf16 %v1759, %v1758
        %1762 = vrot.lane.b32.xlu0 %v1684, 112
        %v1763 = vpop.permute.xlu0 %1762
        %v1766 = vsel %vm1438, %v1760, 0
        %1768 = vmatprep.subr.bf16.mxu0 0
        %1769 = vmatpush1.bf16.msra.mxu0 %v1763
        %1770 = vmatprep.subr.bf16.mxu0 0
        %1771 = vmatpush1.bf16.msra.mxu0 0
        %1772 = vmatprep.subr.bf16.mxu0 0
        %1773 = vmatpush1.bf16.msra.mxu0 0
        %1774 = vmatprep.subr.bf16.mxu0 0
        %1775 = vmatpush1.bf16.msra.mxu0 0
        %1776 = vmatprep.subr.bf16.mxu0 0
        %1777 = vmatpush1.bf16.msra.mxu0 0
        %1778 = vmatprep.subr.bf16.mxu0 0
        %1779 = vmatpush1.bf16.msra.mxu0 0
        %1780 = vmatprep.subr.bf16.mxu0 0
        %1781 = vmatpush1.bf16.msra.mxu0 0
        %1782 = vmatprep.subr.bf16.mxu0 0
        %1783 = vmatpush1.bf16.msra.mxu0 0
        %1784 = vmatprep.subr.bf16.mxu0 0
        %1785 = vmatpush1.bf16.msra.mxu0 0
        %1786 = vmatprep.subr.bf16.mxu0 0
        %1787 = vmatpush1.bf16.msra.mxu0 0
        %1788 = vmatprep.subr.bf16.mxu0 0
        %1789 = vmatpush1.bf16.msra.mxu0 0
        %1790 = vmatprep.subr.bf16.mxu0 0
        %1791 = vmatpush1.bf16.msra.mxu0 0
        %1792 = vmatprep.subr.bf16.mxu0 0
        %1793 = vmatpush1.bf16.msra.mxu0 0
        %1794 = vmatprep.subr.bf16.mxu0 0
        %1795 = vmatpush1.bf16.msra.mxu0 0
        %1796 = vmatprep.subr.bf16.mxu0 0
        %1797 = vmatpush1.bf16.msra.mxu0 0
        %1798 = vmatprep.subr.bf16.mxu0 0
        %1799 = vmatpush1.bf16.msra.mxu0 0
        %1800 = vmatprep.mubr.bf16.mxu0 0
        %1801 = vmatmul.mubr.bf16.gmra.mrb[0].mxu0 %v1766
        %v1802 = vpop.f32.mrb[0].mxu0
        %v1803 = vadd.f32 0.0, %v1802
        %v1804 = vpop.f32.mrb[0].mxu0
        %v1805 = vpop.f32.mrb[0].mxu0
        %v1806 = vadd.f32 0.0, %v1805
        %v1807 = vpop.f32.mrb[0].mxu0
        %1808 = vdwg.mxu0
        %1811 = vrot.lane.b32.xlu0 %v1803, 16
        %v1812 = vpop.permute.xlu0 %1811
        %1813 = vrot.lane.b32.xlu0 %v1806, 16
        %v1814 = vpop.permute.xlu0 %1813
        %vm1817 = vcmask 195712
        %1818 = vst.msk [vmem:[#allocation5] sm:$0xff] %vm1817, %v1812
        %1819 = vst.msk [vmem:[#allocation5 + $0x8] sm:$0xff] %vm1817, %v1814
        %v1821 = vunpack.c.l.b16 %v1760
        %v1822 = vunpack.c.h.b16 %v1760
        %v1823 = vpack.c.b16 %v1821, %v1821
        %v1824 = vpack.c.b16 %v1822, %v1822
        %1825 = vrot.lane.b32.xlu0 %v1823, 32
        %v1826 = vpop.permute.xlu0 %1825
        %1827 = vrot.lane.b32.xlu0 %v1824, 32
        %v1828 = vpop.permute.xlu0 %1827
        %vm1831 = vcmask 388352
        %1832 = vst.msk [vmem:[%s1146] sm:$0xf] %vm1831, %v1826
        %1833 = vst.msk [vmem:[%s1146 + $0x4] sm:$0xf] %vm1831, %v1828
        %v1834 = vld [vmem:[#allocation2] sm:$0xff]
        %v1835 = vld [vmem:[#allocation2 + $0x8] sm:$0xff]
        %v1836 = vpack.c.bf16 %v1835, %v1834
        %v1837 = vld [vmem:[#allocation3] sm:$0xff]
        %v1838 = vld [vmem:[#allocation3 + $0x8] sm:$0xff]
        %v1839 = vpack.c.bf16 %v1838, %v1837
        %v1840 = vld [vmem:[#allocation4] sm:$0xff]
        %v1841 = vld [vmem:[#allocation4 + $0x8] sm:$0xff]
        %v1842 = vpack.c.bf16 %v1841, %v1840
        %1844 = vrot.lane.b32.xlu0 %v1836, 104
        %v1845 = vpop.permute.xlu0 %1844
        %1847 = vrot.lane.b32.xlu0 %v1839, 104
        %v1848 = vpop.permute.xlu0 %1847
        %v1850 = vsel %vm1390, %v1845, 0
        %v1853 = vsel %vm1390, %v1848, 0
        %1855 = vmatprep.subr.bf16.mxu0 0
        %1856 = vmatpush1.bf16.xpose.msra.mxu0 %v1853
        %1857 = vmatprep.subr.bf16.mxu0 0
        %1858 = vmatpush1.bf16.xpose.msra.mxu0 0
        %1859 = vmatprep.subr.bf16.mxu0 0
        %1860 = vmatpush1.bf16.xpose.msra.mxu0 0
        %1861 = vmatprep.subr.bf16.mxu0 0
        %1862 = vmatpush1.bf16.xpose.msra.mxu0 0
        %1863 = vmatprep.subr.bf16.mxu0 0
        %1864 = vmatpush1.bf16.xpose.msra.mxu0 0
        %1865 = vmatprep.subr.bf16.mxu0 0
        %1866 = vmatpush1.bf16.xpose.msra.mxu0 0
        %1867 = vmatprep.subr.bf16.mxu0 0
        %1868 = vmatpush1.bf16.xpose.msra.mxu0 0
        %1869 = vmatprep.subr.bf16.mxu0 0
        %1870 = vmatpush1.bf16.xpose.msra.mxu0 0
        %1871 = vmatprep.subr.bf16.mxu0 0
        %1872 = vmatpush1.bf16.xpose.msra.mxu0 0
        %1873 = vmatprep.subr.bf16.mxu0 0
        %1874 = vmatpush1.bf16.xpose.msra.mxu0 0
        %1875 = vmatprep.subr.bf16.mxu0 0
        %1876 = vmatpush1.bf16.xpose.msra.mxu0 0
        %1877 = vmatprep.subr.bf16.mxu0 0
        %1878 = vmatpush1.bf16.xpose.msra.mxu0 0
        %1879 = vmatprep.subr.bf16.mxu0 0
        %1880 = vmatpush1.bf16.xpose.msra.mxu0 0
        %1881 = vmatprep.subr.bf16.mxu0 0
        %1882 = vmatpush1.bf16.xpose.msra.mxu0 0
        %1883 = vmatprep.subr.bf16.mxu0 0
        %1884 = vmatpush1.bf16.xpose.msra.mxu0 0
        %1885 = vmatprep.subr.bf16.mxu0 0
        %1886 = vmatpush1.bf16.xpose.msra.mxu0 0
        %1887 = vmatprep.mubr.bf16.mxu0 0
        %1888 = vmatmul.mubr.bf16.gmra.mrb[0].mxu0 %v1850
        %v1889 = vpop.f32.mrb[0].mxu0
        %v1890 = vadd.f32 0.0, %v1889
        %v1891 = vpop.f32.mrb[0].mxu0
        %v1892 = vpop.f32.mrb[0].mxu0
        %v1893 = vadd.f32 0.0, %v1892
        %v1894 = vpop.f32.mrb[0].mxu0
        %1895 = vdwg.mxu0
        %v1896 = vsel %vm1438, %v1890, -inf
        %1897 = vmax.xlane.f32.xlu0 %v1896
        %v1898 = vpop.xlane.xlu0 %1897
        %v1899 = vsel %vm1438, %v1893, -inf
        %1900 = vmax.xlane.f32.xlu0 %v1899
        %v1901 = vpop.xlane.xlu0 %1900
        %v1902 = vsub.f32 %v1890, %v1898
        %v1903 = vsub.f32 %v1893, %v1901
        %v1904 = vmul.f32 %v1902, 1.442695
        %v1905 = vpow.pop %v1904
        %v1906 = vmul.f32 %v1903, 1.442695
        %v1907 = vpow.pop %v1906
        %v1908 = vsel %vm1438, %v1905, 0.0
        %1909 = vadd.xlane.f32.xlu0 %v1908
        %v1910 = vpop.xlane.xlu0 %1909
        %v1911 = vsel %vm1438, %v1907, 0.0
        %1912 = vadd.xlane.f32.xlu0 %v1911
        %v1913 = vpop.xlane.xlu0 %1912
        %v1914 = vrcp.pop %v1910
        %v1915 = vrcp.pop %v1913
        %v1916 = vmul.f32 %v1905, %v1914
        %v1917 = vmul.f32 %v1907, %v1915
        %v1918 = vpack.c.bf16 %v1917, %v1916
        %1920 = vrot.lane.b32.xlu0 %v1842, 104
        %v1921 = vpop.permute.xlu0 %1920
        %v1924 = vsel %vm1438, %v1918, 0
        %1926 = vmatprep.subr.bf16.mxu0 0
        %1927 = vmatpush1.bf16.msra.mxu0 %v1921
        %1928 = vmatprep.subr.bf16.mxu0 0
        %1929 = vmatpush1.bf16.msra.mxu0 0
        %1930 = vmatprep.subr.bf16.mxu0 0
        %1931 = vmatpush1.bf16.msra.mxu0 0
        %1932 = vmatprep.subr.bf16.mxu0 0
        %1933 = vmatpush1.bf16.msra.mxu0 0
        %1934 = vmatprep.subr.bf16.mxu0 0
        %1935 = vmatpush1.bf16.msra.mxu0 0
        %1936 = vmatprep.subr.bf16.mxu0 0
        %1937 = vmatpush1.bf16.msra.mxu0 0
        %1938 = vmatprep.subr.bf16.mxu0 0
        %1939 = vmatpush1.bf16.msra.mxu0 0
        %1940 = vmatprep.subr.bf16.mxu0 0
        %1941 = vmatpush1.bf16.msra.mxu0 0
        %1942 = vmatprep.subr.bf16.mxu0 0
        %1943 = vmatpush1.bf16.msra.mxu0 0
        %1944 = vmatprep.subr.bf16.mxu0 0
        %1945 = vmatpush1.bf16.msra.mxu0 0
        %1946 = vmatprep.subr.bf16.mxu0 0
        %1947 = vmatpush1.bf16.msra.mxu0 0
        %1948 = vmatprep.subr.bf16.mxu0 0
        %1949 = vmatpush1.bf16.msra.mxu0 0
        %1950 = vmatprep.subr.bf16.mxu0 0
        %1951 = vmatpush1.bf16.msra.mxu0 0
        %1952 = vmatprep.subr.bf16.mxu0 0
        %1953 = vmatpush1.bf16.msra.mxu0 0
        %1954 = vmatprep.subr.bf16.mxu0 0
        %1955 = vmatpush1.bf16.msra.mxu0 0
        %1956 = vmatprep.subr.bf16.mxu0 0
        %1957 = vmatpush1.bf16.msra.mxu0 0
        %1958 = vmatprep.mubr.bf16.mxu0 0
        %1959 = vmatmul.mubr.bf16.gmra.mrb[0].mxu0 %v1924
        %v1960 = vpop.f32.mrb[0].mxu0
        %v1961 = vadd.f32 0.0, %v1960
        %v1962 = vpop.f32.mrb[0].mxu0
        %v1963 = vpop.f32.mrb[0].mxu0
        %v1964 = vadd.f32 0.0, %v1963
        %v1965 = vpop.f32.mrb[0].mxu0
        %1966 = vdwg.mxu0
        %1969 = vrot.lane.b32.xlu0 %v1961, 24
        %v1970 = vpop.permute.xlu0 %1969
        %1971 = vrot.lane.b32.xlu0 %v1964, 24
        %v1972 = vpop.permute.xlu0 %1971
        %vm1975 = vcmask 261312
        %1976 = vst.msk [vmem:[#allocation5] sm:$0xff] %vm1975, %v1970
        %1977 = vst.msk [vmem:[#allocation5 + $0x8] sm:$0xff] %vm1975, %v1972
        %v1979 = vunpack.c.l.b16 %v1918
        %v1980 = vunpack.c.h.b16 %v1918
        %v1981 = vpack.c.b16 %v1979, %v1979
        %v1982 = vpack.c.b16 %v1980, %v1980
        %1983 = vrot.lane.b32.xlu0 %v1981, 48
        %v1984 = vpop.permute.xlu0 %1983
        %1985 = vrot.lane.b32.xlu0 %v1982, 48
        %v1986 = vpop.permute.xlu0 %1985
        %vm1989 = vcmask 519552
        %1990 = vst.msk [vmem:[%s1146] sm:$0xf] %vm1989, %v1984
        %1991 = vst.msk [vmem:[%s1146 + $0x4] sm:$0xf] %vm1989, %v1986
        %v1992 = vld [vmem:[#allocation5] sm:$0xff]
        %v1993 = vld [vmem:[#allocation5 + $0x8] sm:$0xff]
        %v1994 = vpack.c.bf16 %v1993, %v1992
        %v1996 = vlaneseq
        %v1997 = vshrl.u32 %v1996, 7
        %v1998 = vsub.s32 0, %v1997
        %v1999 = vrot.slane %v1188, %v1998
        %v2005 = vunpack.c.l.b16 %v1184
        %v2006 = vunpack.c.l.b16 %v1185
        %v2007 = vunpack.c.l.b16 %v1186
        %v2008 = vunpack.c.l.b16 %v1187
        %v2009 = vpack.c.b16 %v2006, %v2005
        %v2010 = vpack.c.b16 %v2008, %v2007
        %v2014 = vsel %vm1210, %v1994, 0
        %2016 = vmatprep.subr.bf16.mxu0 0
        %2017 = vmatpush1.bf16.msra.mxu0 %v2009
        %2018 = vmatprep.subr.bf16.mxu0 0
        %2019 = vmatpush1.bf16.msra.mxu0 %v2010
        %2020 = vmatprep.subr.bf16.mxu0 0
        %2021 = vmatpush1.bf16.msra.mxu0 0
        %2022 = vmatprep.subr.bf16.mxu0 0
        %2023 = vmatpush1.bf16.msra.mxu0 0
        %2024 = vmatprep.subr.bf16.mxu0 0
        %2025 = vmatpush1.bf16.msra.mxu0 0
        %2026 = vmatprep.subr.bf16.mxu0 0
        %2027 = vmatpush1.bf16.msra.mxu0 0
        %2028 = vmatprep.subr.bf16.mxu0 0
        %2029 = vmatpush1.bf16.msra.mxu0 0
        %2030 = vmatprep.subr.bf16.mxu0 0
        %2031 = vmatpush1.bf16.msra.mxu0 0
        %2032 = vmatprep.subr.bf16.mxu0 0
        %2033 = vmatpush1.bf16.msra.mxu0 0
        %2034 = vmatprep.subr.bf16.mxu0 0
        %2035 = vmatpush1.bf16.msra.mxu0 0
        %2036 = vmatprep.subr.bf16.mxu0 0
        %2037 = vmatpush1.bf16.msra.mxu0 0
        %2038 = vmatprep.subr.bf16.mxu0 0
        %2039 = vmatpush1.bf16.msra.mxu0 0
        %2040 = vmatprep.subr.bf16.mxu0 0
        %2041 = vmatpush1.bf16.msra.mxu0 0
        %2042 = vmatprep.subr.bf16.mxu0 0
        %2043 = vmatpush1.bf16.msra.mxu0 0
        %2044 = vmatprep.subr.bf16.mxu0 0
        %2045 = vmatpush1.bf16.msra.mxu0 0
        %2046 = vmatprep.subr.bf16.mxu0 0
        %2047 = vmatpush1.bf16.msra.mxu0 0
        %2048 = vmatprep.mubr.bf16.mxu0 0
        %2049 = vmatmul.mubr.bf16.gmra.mrb[0].mxu0 %v2014
        %v2050 = vpop.f32.mrb[0].mxu0
        %v2051 = vadd.f32 %v1999, %v2050
        %v2052 = vpop.f32.mrb[0].mxu0
        %v2053 = vpop.f32.mrb[0].mxu0
        %v2054 = vadd.f32 %v1999, %v2053
        %v2055 = vpop.f32.mrb[0].mxu0
        %2056 = vdwg.mxu0
        %v2057 = vadd.f32 %v2051, %v1165
        %v2058 = vadd.f32 %v2054, %v1166
        %v2059 = vsel %vm1210, %v2057, 0.0
        %2060 = vadd.xlane.f32.xlu0 %v2059
        %v2061 = vpop.xlane.xlu0 %2060
        %v2062 = vsel %vm1210, %v2058, 0.0
        %2063 = vadd.xlane.f32.xlu0 %v2062
        %v2064 = vpop.xlane.xlu0 %2063
        %v2065 = vrcp.pop 32.0
        %v2066 = vmul.f32 %v2061, %v2065
        %v2067 = vmul.f32 %v2064, %v2065
        %v2068 = vsub.f32 %v2057, %v2066
        %v2069 = vsub.f32 %v2058, %v2067
        %v2070 = vmul.f32 %v2068, %v2068
        %v2071 = vmul.f32 %v2069, %v2069
        %v2072 = vsel %vm1210, %v2070, 0.0
        %2073 = vadd.xlane.f32.xlu0 %v2072
        %v2074 = vpop.xlane.xlu0 %2073
        %v2075 = vsel %vm1210, %v2071, 0.0
        %2076 = vadd.xlane.f32.xlu0 %v2075
        %v2077 = vpop.xlane.xlu0 %2076
        %v2078 = vmul.f32 %v2074, %v2065
        %v2079 = vmul.f32 %v2077, %v2065
        %v2080 = vadd.f32 %v2078, 1e-05
        %v2081 = vadd.f32 %v2079, 1e-05
        %v2082 = vrsqrt.pop %v2080
        %v2083 = vrsqrt.pop %v2081
        %v2084 = vmul.f32 %v2068, %v2082
        %v2085 = vmul.f32 %v2069, %v2083
        %v2087 = vlaneseq
        %v2088 = vshrl.u32 %v2087, 7
        %v2089 = vsub.s32 0, %v2088
        %v2090 = vrot.slane %v1189, %v2089
        %v2092 = vmul.f32 %v2084, %v2090
        %v2093 = vmul.f32 %v2085, %v2090
        %v2095 = vlaneseq
        %v2096 = vshrl.u32 %v2095, 7
        %v2097 = vsub.s32 0, %v2096
        %v2098 = vrot.slane %v1190, %v2097
        %v2100 = vadd.f32 %v2092, %v2098
        %v2101 = vadd.f32 %v2093, %v2098
        %v2102 = vld [vmem:[%s25] sm:$0xf]
        %v2103 = vld [vmem:[%s25 + $0x4] sm:$0xf]
        %v2104 = vld [vmem:[%s25 + $0x8] sm:$0xf]
        %v2105 = vld [vmem:[%s25 + $0xc] sm:$0xf]
        %v2106 = vld [vmem:[#allocation23] sm:$0x1]
        %v2107 = vld [vmem:[%s29] sm:$0xf]
        %v2108 = vld [vmem:[%s29 + $0x4] sm:$0xf]
        %v2109 = vld [vmem:[%s29 + $0x8] sm:$0xf]
        %v2110 = vld [vmem:[%s29 + $0xc] sm:$0xf]
        %v2111 = vld [vmem:[#allocation24] sm:$0x1]
        %v2112 = vld [vmem:[#allocation26] sm:$0xf]
        %v2113 = vld [vmem:[#allocation26 + $0x4] sm:$0xf]
        %v2114 = vld [vmem:[#allocation26 + $0x8] sm:$0xf]
        %v2115 = vld [vmem:[#allocation26 + $0xc] sm:$0xf]
        %v2116 = vld [vmem:[#allocation27] sm:$0x1]
        %v2117 = vld [vmem:[%s37] sm:$0xf]
        %v2118 = vld [vmem:[%s37 + $0x4] sm:$0xf]
        %v2119 = vld [vmem:[%s37 + $0x8] sm:$0xf]
        %v2120 = vld [vmem:[%s37 + $0xc] sm:$0xf]
        %v2121 = vld [vmem:[%s39] sm:$0x1]
        %v2122 = vld [vmem:[%s41] sm:$0x1]
        %v2123 = vld [vmem:[%s43] sm:$0x1]
        %v2124 = vpack.c.bf16 %v2101, %v2100
        %v2125 = vpack.c.bf16 %v1168, %v1167
        %v2127 = vlaneseq
        %v2128 = vshrl.u32 %v2127, 7
        %v2129 = vsub.s32 0, %v2128
        %v2130 = vrot.slane %v2106, %v2129
        %v2136 = vunpack.c.l.b16 %v2102
        %v2137 = vunpack.c.l.b16 %v2103
        %v2138 = vunpack.c.l.b16 %v2104
        %v2139 = vunpack.c.l.b16 %v2105
        %v2140 = vpack.c.b16 %v2137, %v2136
        %v2141 = vpack.c.b16 %v2139, %v2138
        %v2145 = vsel %vm1210, %v2124, 0
        %2147 = vmatprep.subr.bf16.mxu0 0
        %2148 = vmatpush1.bf16.msra.mxu0 %v2140
        %2149 = vmatprep.subr.bf16.mxu0 0
        %2150 = vmatpush1.bf16.msra.mxu0 %v2141
        %2151 = vmatprep.subr.bf16.mxu0 0
        %2152 = vmatpush1.bf16.msra.mxu0 0
        %2153 = vmatprep.subr.bf16.mxu0 0
        %2154 = vmatpush1.bf16.msra.mxu0 0
        %2155 = vmatprep.subr.bf16.mxu0 0
        %2156 = vmatpush1.bf16.msra.mxu0 0
        %2157 = vmatprep.subr.bf16.mxu0 0
        %2158 = vmatpush1.bf16.msra.mxu0 0
        %2159 = vmatprep.subr.bf16.mxu0 0
        %2160 = vmatpush1.bf16.msra.mxu0 0
        %2161 = vmatprep.subr.bf16.mxu0 0
        %2162 = vmatpush1.bf16.msra.mxu0 0
        %2163 = vmatprep.subr.bf16.mxu0 0
        %2164 = vmatpush1.bf16.msra.mxu0 0
        %2165 = vmatprep.subr.bf16.mxu0 0
        %2166 = vmatpush1.bf16.msra.mxu0 0
        %2167 = vmatprep.subr.bf16.mxu0 0
        %2168 = vmatpush1.bf16.msra.mxu0 0
        %2169 = vmatprep.subr.bf16.mxu0 0
        %2170 = vmatpush1.bf16.msra.mxu0 0
        %2171 = vmatprep.subr.bf16.mxu0 0
        %2172 = vmatpush1.bf16.msra.mxu0 0
        %2173 = vmatprep.subr.bf16.mxu0 0
        %2174 = vmatpush1.bf16.msra.mxu0 0
        %2175 = vmatprep.subr.bf16.mxu0 0
        %2176 = vmatpush1.bf16.msra.mxu0 0
        %2177 = vmatprep.subr.bf16.mxu0 0
        %2178 = vmatpush1.bf16.msra.mxu0 0
        %2179 = vmatprep.mubr.bf16.mxu0 0
        %2180 = vmatmul.mubr.bf16.gmra.mrb[0].mxu0 %v2145
        %v2181 = vpop.f32.mrb[0].mxu0
        %v2182 = vadd.f32 %v2130, %v2181
        %v2183 = vpop.f32.mrb[0].mxu0
        %v2184 = vpop.f32.mrb[0].mxu0
        %v2185 = vadd.f32 %v2130, %v2184
        %v2186 = vpop.f32.mrb[0].mxu0
        %2187 = vdwg.mxu0
        %v2188 = vmul.f32 %v2182, 0.35355338
        %v2189 = vmul.f32 %v2185, 0.35355338
        %2190 = vst.msk [vmem:[#allocation2] sm:$0xff] %vm1210, %v2188
        %2191 = vst.msk [vmem:[#allocation2 + $0x8] sm:$0xff] %vm1210, %v2189
        %v2193 = vlaneseq
        %v2194 = vshrl.u32 %v2193, 7
        %v2195 = vsub.s32 0, %v2194
        %v2196 = vrot.slane %v2111, %v2195
        %v2202 = vunpack.c.l.b16 %v2107
        %v2203 = vunpack.c.l.b16 %v2108
        %v2204 = vunpack.c.l.b16 %v2109
        %v2205 = vunpack.c.l.b16 %v2110
        %v2206 = vpack.c.b16 %v2203, %v2202
        %v2207 = vpack.c.b16 %v2205, %v2204
        %v2211 = vsel %vm1210, %v2125, 0
        %2213 = vmatprep.subr.bf16.mxu0 0
        %2214 = vmatpush1.bf16.msra.mxu0 %v2206
        %2215 = vmatprep.subr.bf16.mxu0 0
        %2216 = vmatpush1.bf16.msra.mxu0 %v2207
        %2217 = vmatprep.subr.bf16.mxu0 0
        %2218 = vmatpush1.bf16.msra.mxu0 0
        %2219 = vmatprep.subr.bf16.mxu0 0
        %2220 = vmatpush1.bf16.msra.mxu0 0
        %2221 = vmatprep.subr.bf16.mxu0 0
        %2222 = vmatpush1.bf16.msra.mxu0 0
        %2223 = vmatprep.subr.bf16.mxu0 0
        %2224 = vmatpush1.bf16.msra.mxu0 0
        %2225 = vmatprep.subr.bf16.mxu0 0
        %2226 = vmatpush1.bf16.msra.mxu0 0
        %2227 = vmatprep.subr.bf16.mxu0 0
        %2228 = vmatpush1.bf16.msra.mxu0 0
        %2229 = vmatprep.subr.bf16.mxu0 0
        %2230 = vmatpush1.bf16.msra.mxu0 0
        %2231 = vmatprep.subr.bf16.mxu0 0
        %2232 = vmatpush1.bf16.msra.mxu0 0
        %2233 = vmatprep.subr.bf16.mxu0 0
        %2234 = vmatpush1.bf16.msra.mxu0 0
        %2235 = vmatprep.subr.bf16.mxu0 0
        %2236 = vmatpush1.bf16.msra.mxu0 0
        %2237 = vmatprep.subr.bf16.mxu0 0
        %2238 = vmatpush1.bf16.msra.mxu0 0
        %2239 = vmatprep.subr.bf16.mxu0 0
        %2240 = vmatpush1.bf16.msra.mxu0 0
        %2241 = vmatprep.subr.bf16.mxu0 0
        %2242 = vmatpush1.bf16.msra.mxu0 0
        %2243 = vmatprep.subr.bf16.mxu0 0
        %2244 = vmatpush1.bf16.msra.mxu0 0
        %2245 = vmatprep.mubr.bf16.mxu0 0
        %2246 = vmatmul.mubr.bf16.gmra.mrb[0].mxu0 %v2211
        %v2247 = vpop.f32.mrb[0].mxu0
        %v2248 = vadd.f32 %v2196, %v2247
        %v2249 = vpop.f32.mrb[0].mxu0
        %v2250 = vpop.f32.mrb[0].mxu0
        %v2251 = vadd.f32 %v2196, %v2250
        %v2252 = vpop.f32.mrb[0].mxu0
        %2253 = vdwg.mxu0
        %2254 = vst.msk [vmem:[#allocation3] sm:$0xff] %vm1210, %v2248
        %2255 = vst.msk [vmem:[#allocation3 + $0x8] sm:$0xff] %vm1210, %v2251
        %v2257 = vlaneseq
        %v2258 = vshrl.u32 %v2257, 7
        %v2259 = vsub.s32 0, %v2258
        %v2260 = vrot.slane %v2116, %v2259
        %v2266 = vunpack.c.l.b16 %v2112
        %v2267 = vunpack.c.l.b16 %v2113
        %v2268 = vunpack.c.l.b16 %v2114
        %v2269 = vunpack.c.l.b16 %v2115
        %v2270 = vpack.c.b16 %v2267, %v2266
        %v2271 = vpack.c.b16 %v2269, %v2268
        %2274 = vmatprep.subr.bf16.mxu0 0
        %2275 = vmatpush1.bf16.msra.mxu0 %v2270
        %2276 = vmatprep.subr.bf16.mxu0 0
        %2277 = vmatpush1.bf16.msra.mxu0 %v2271
        %2278 = vmatprep.subr.bf16.mxu0 0
        %2279 = vmatpush1.bf16.msra.mxu0 0
        %2280 = vmatprep.subr.bf16.mxu0 0
        %2281 = vmatpush1.bf16.msra.mxu0 0
        %2282 = vmatprep.subr.bf16.mxu0 0
        %2283 = vmatpush1.bf16.msra.mxu0 0
        %2284 = vmatprep.subr.bf16.mxu0 0
        %2285 = vmatpush1.bf16.msra.mxu0 0
        %2286 = vmatprep.subr.bf16.mxu0 0
        %2287 = vmatpush1.bf16.msra.mxu0 0
        %2288 = vmatprep.subr.bf16.mxu0 0
        %2289 = vmatpush1.bf16.msra.mxu0 0
        %2290 = vmatprep.subr.bf16.mxu0 0
        %2291 = vmatpush1.bf16.msra.mxu0 0
        %2292 = vmatprep.subr.bf16.mxu0 0
        %2293 = vmatpush1.bf16.msra.mxu0 0
        %2294 = vmatprep.subr.bf16.mxu0 0
        %2295 = vmatpush1.bf16.msra.mxu0 0
        %2296 = vmatprep.subr.bf16.mxu0 0
        %2297 = vmatpush1.bf16.msra.mxu0 0
        %2298 = vmatprep.subr.bf16.mxu0 0
        %2299 = vmatpush1.bf16.msra.mxu0 0
        %2300 = vmatprep.subr.bf16.mxu0 0
        %2301 = vmatpush1.bf16.msra.mxu0 0
        %2302 = vmatprep.subr.bf16.mxu0 0
        %2303 = vmatpush1.bf16.msra.mxu0 0
        %2304 = vmatprep.subr.bf16.mxu0 0
        %2305 = vmatpush1.bf16.msra.mxu0 0
        %2306 = vmatprep.mubr.bf16.mxu0 0
        %2307 = vmatmul.mubr.bf16.gmra.mrb[0].mxu0 %v2211
        %v2308 = vpop.f32.mrb[0].mxu0
        %v2309 = vadd.f32 %v2260, %v2308
        %v2310 = vpop.f32.mrb[0].mxu0
        %v2311 = vpop.f32.mrb[0].mxu0
        %v2312 = vadd.f32 %v2260, %v2311
        %v2313 = vpop.f32.mrb[0].mxu0
        %2314 = vdwg.mxu0
        %2315 = vst.msk [vmem:[#allocation4] sm:$0xff] %vm1210, %v2309
        %2316 = vst.msk [vmem:[#allocation4 + $0x8] sm:$0xff] %vm1210, %v2312
        %v2317 = vld [vmem:[#allocation2] sm:$0xff]
        %v2318 = vld [vmem:[#allocation2 + $0x8] sm:$0xff]
        %v2319 = vpack.c.bf16 %v2318, %v2317
        %v2320 = vld [vmem:[#allocation3] sm:$0xff]
        %v2321 = vld [vmem:[#allocation3 + $0x8] sm:$0xff]
        %v2322 = vpack.c.bf16 %v2321, %v2320
        %v2323 = vld [vmem:[#allocation4] sm:$0xff]
        %v2324 = vld [vmem:[#allocation4 + $0x8] sm:$0xff]
        %v2325 = vpack.c.bf16 %v2324, %v2323
        %v2327 = vsel %vm1390, %v2319, 0
        %v2330 = vsel %vm1390, %v2322, 0
        %2332 = vmatprep.subr.bf16.mxu0 0
        %2333 = vmatpush1.bf16.xpose.msra.mxu0 %v2330
        %2334 = vmatprep.subr.bf16.mxu0 0
        %2335 = vmatpush1.bf16.xpose.msra.mxu0 0
        %2336 = vmatprep.subr.bf16.mxu0 0
        %2337 = vmatpush1.bf16.xpose.msra.mxu0 0
        %2338 = vmatprep.subr.bf16.mxu0 0
        %2339 = vmatpush1.bf16.xpose.msra.mxu0 0
        %2340 = vmatprep.subr.bf16.mxu0 0
        %2341 = vmatpush1.bf16.xpose.msra.mxu0 0
        %2342 = vmatprep.subr.bf16.mxu0 0
        %2343 = vmatpush1.bf16.xpose.msra.mxu0 0
        %2344 = vmatprep.subr.bf16.mxu0 0
        %2345 = vmatpush1.bf16.xpose.msra.mxu0 0
        %2346 = vmatprep.subr.bf16.mxu0 0
        %2347 = vmatpush1.bf16.xpose.msra.mxu0 0
        %2348 = vmatprep.subr.bf16.mxu0 0
        %2349 = vmatpush1.bf16.xpose.msra.mxu0 0
        %2350 = vmatprep.subr.bf16.mxu0 0
        %2351 = vmatpush1.bf16.xpose.msra.mxu0 0
        %2352 = vmatprep.subr.bf16.mxu0 0
        %2353 = vmatpush1.bf16.xpose.msra.mxu0 0
        %2354 = vmatprep.subr.bf16.mxu0 0
        %2355 = vmatpush1.bf16.xpose.msra.mxu0 0
        %2356 = vmatprep.subr.bf16.mxu0 0
        %2357 = vmatpush1.bf16.xpose.msra.mxu0 0
        %2358 = vmatprep.subr.bf16.mxu0 0
        %2359 = vmatpush1.bf16.xpose.msra.mxu0 0
        %2360 = vmatprep.subr.bf16.mxu0 0
        %2361 = vmatpush1.bf16.xpose.msra.mxu0 0
        %2362 = vmatprep.subr.bf16.mxu0 0
        %2363 = vmatpush1.bf16.xpose.msra.mxu0 0
        %2364 = vmatprep.mubr.bf16.mxu0 0
        %2365 = vmatmul.mubr.bf16.gmra.mrb[0].mxu0 %v2327
        %v2366 = vpop.f32.mrb[0].mxu0
        %v2367 = vadd.f32 0.0, %v2366
        %v2368 = vpop.f32.mrb[0].mxu0
        %v2369 = vpop.f32.mrb[0].mxu0
        %v2370 = vadd.f32 0.0, %v2369
        %v2371 = vpop.f32.mrb[0].mxu0
        %2372 = vdwg.mxu0
        %v2373 = vsel %vm1438, %v2367, -inf
        %2374 = vmax.xlane.f32.xlu0 %v2373
        %v2375 = vpop.xlane.xlu0 %2374
        %v2376 = vsel %vm1438, %v2370, -inf
        %2377 = vmax.xlane.f32.xlu0 %v2376
        %v2378 = vpop.xlane.xlu0 %2377
        %v2379 = vsub.f32 %v2367, %v2375
        %v2380 = vsub.f32 %v2370, %v2378
        %v2381 = vmul.f32 %v2379, 1.442695
        %v2382 = vpow.pop %v2381
        %v2383 = vmul.f32 %v2380, 1.442695
        %v2384 = vpow.pop %v2383
        %v2385 = vsel %vm1438, %v2382, 0.0
        %2386 = vadd.xlane.f32.xlu0 %v2385
        %v2387 = vpop.xlane.xlu0 %2386
        %v2388 = vsel %vm1438, %v2384, 0.0
        %2389 = vadd.xlane.f32.xlu0 %v2388
        %v2390 = vpop.xlane.xlu0 %2389
        %v2391 = vrcp.pop %v2387
        %v2392 = vrcp.pop %v2390
        %v2393 = vmul.f32 %v2382, %v2391
        %v2394 = vmul.f32 %v2384, %v2392
        %v2395 = vpack.c.bf16 %v2394, %v2393
        %v2397 = vsel %vm1438, %v2395, 0
        %2399 = vmatprep.subr.bf16.mxu0 0
        %2400 = vmatpush1.bf16.msra.mxu0 %v2325
        %2401 = vmatprep.subr.bf16.mxu0 0
        %2402 = vmatpush1.bf16.msra.mxu0 0
        %2403 = vmatprep.subr.bf16.mxu0 0
        %2404 = vmatpush1.bf16.msra.mxu0 0
        %2405 = vmatprep.subr.bf16.mxu0 0
        %2406 = vmatpush1.bf16.msra.mxu0 0
        %2407 = vmatprep.subr.bf16.mxu0 0
        %2408 = vmatpush1.bf16.msra.mxu0 0
        %2409 = vmatprep.subr.bf16.mxu0 0
        %2410 = vmatpush1.bf16.msra.mxu0 0
        %2411 = vmatprep.subr.bf16.mxu0 0
        %2412 = vmatpush1.bf16.msra.mxu0 0
        %2413 = vmatprep.subr.bf16.mxu0 0
        %2414 = vmatpush1.bf16.msra.mxu0 0
        %2415 = vmatprep.subr.bf16.mxu0 0
        %2416 = vmatpush1.bf16.msra.mxu0 0
        %2417 = vmatprep.subr.bf16.mxu0 0
        %2418 = vmatpush1.bf16.msra.mxu0 0
        %2419 = vmatprep.subr.bf16.mxu0 0
        %2420 = vmatpush1.bf16.msra.mxu0 0
        %2421 = vmatprep.subr.bf16.mxu0 0
        %2422 = vmatpush1.bf16.msra.mxu0 0
        %2423 = vmatprep.subr.bf16.mxu0 0
        %2424 = vmatpush1.bf16.msra.mxu0 0
        %2425 = vmatprep.subr.bf16.mxu0 0
        %2426 = vmatpush1.bf16.msra.mxu0 0
        %2427 = vmatprep.subr.bf16.mxu0 0
        %2428 = vmatpush1.bf16.msra.mxu0 0
        %2429 = vmatprep.subr.bf16.mxu0 0
        %2430 = vmatpush1.bf16.msra.mxu0 0
        %2431 = vmatprep.mubr.bf16.mxu0 0
        %2432 = vmatmul.mubr.bf16.gmra.mrb[0].mxu0 %v2397
        %v2433 = vpop.f32.mrb[0].mxu0
        %v2434 = vadd.f32 0.0, %v2433
        %v2435 = vpop.f32.mrb[0].mxu0
        %v2436 = vpop.f32.mrb[0].mxu0
        %v2437 = vadd.f32 0.0, %v2436
        %v2438 = vpop.f32.mrb[0].mxu0
        %2439 = vdwg.mxu0
        %2440 = vst.msk [vmem:[#allocation5] sm:$0xff] %vm1390, %v2434
        %2441 = vst.msk [vmem:[#allocation5 + $0x8] sm:$0xff] %vm1390, %v2437
        %v2443 = vunpack.c.l.b16 %v2395
        %v2444 = vunpack.c.h.b16 %v2395
        %v2445 = vpack.c.b16 %v2443, %v2443
        %v2446 = vpack.c.b16 %v2444, %v2444
        %2449 = vst.msk [vmem:[%s1153] sm:$0xf] %vm1515, %v2445
        %2450 = vst.msk [vmem:[%s1153 + $0x4] sm:$0xf] %vm1515, %v2446
        %v2451 = vld [vmem:[#allocation2] sm:$0xff]
        %v2452 = vld [vmem:[#allocation2 + $0x8] sm:$0xff]
        %v2453 = vpack.c.bf16 %v2452, %v2451
        %v2454 = vld [vmem:[#allocation3] sm:$0xff]
        %v2455 = vld [vmem:[#allocation3 + $0x8] sm:$0xff]
        %v2456 = vpack.c.bf16 %v2455, %v2454
        %v2457 = vld [vmem:[#allocation4] sm:$0xff]
        %v2458 = vld [vmem:[#allocation4 + $0x8] sm:$0xff]
        %v2459 = vpack.c.bf16 %v2458, %v2457
        %2461 = vrot.lane.b32.xlu0 %v2453, 120
        %v2462 = vpop.permute.xlu0 %2461
        %2464 = vrot.lane.b32.xlu0 %v2456, 120
        %v2465 = vpop.permute.xlu0 %2464
        %v2467 = vsel %vm1390, %v2462, 0
        %v2470 = vsel %vm1390, %v2465, 0
        %2472 = vmatprep.subr.bf16.mxu0 0
        %2473 = vmatpush1.bf16.xpose.msra.mxu0 %v2470
        %2474 = vmatprep.subr.bf16.mxu0 0
        %2475 = vmatpush1.bf16.xpose.msra.mxu0 0
        %2476 = vmatprep.subr.bf16.mxu0 0
        %2477 = vmatpush1.bf16.xpose.msra.mxu0 0
        %2478 = vmatprep.subr.bf16.mxu0 0
        %2479 = vmatpush1.bf16.xpose.msra.mxu0 0
        %2480 = vmatprep.subr.bf16.mxu0 0
        %2481 = vmatpush1.bf16.xpose.msra.mxu0 0
        %2482 = vmatprep.subr.bf16.mxu0 0
        %2483 = vmatpush1.bf16.xpose.msra.mxu0 0
        %2484 = vmatprep.subr.bf16.mxu0 0
        %2485 = vmatpush1.bf16.xpose.msra.mxu0 0
        %2486 = vmatprep.subr.bf16.mxu0 0
        %2487 = vmatpush1.bf16.xpose.msra.mxu0 0
        %2488 = vmatprep.subr.bf16.mxu0 0
        %2489 = vmatpush1.bf16.xpose.msra.mxu0 0
        %2490 = vmatprep.subr.bf16.mxu0 0
        %2491 = vmatpush1.bf16.xpose.msra.mxu0 0
        %2492 = vmatprep.subr.bf16.mxu0 0
        %2493 = vmatpush1.bf16.xpose.msra.mxu0 0
        %2494 = vmatprep.subr.bf16.mxu0 0
        %2495 = vmatpush1.bf16.xpose.msra.mxu0 0
        %2496 = vmatprep.subr.bf16.mxu0 0
        %2497 = vmatpush1.bf16.xpose.msra.mxu0 0
        %2498 = vmatprep.subr.bf16.mxu0 0
        %2499 = vmatpush1.bf16.xpose.msra.mxu0 0
        %2500 = vmatprep.subr.bf16.mxu0 0
        %2501 = vmatpush1.bf16.xpose.msra.mxu0 0
        %2502 = vmatprep.subr.bf16.mxu0 0
        %2503 = vmatpush1.bf16.xpose.msra.mxu0 0
        %2504 = vmatprep.mubr.bf16.mxu0 0
        %2505 = vmatmul.mubr.bf16.gmra.mrb[0].mxu0 %v2467
        %v2506 = vpop.f32.mrb[0].mxu0
        %v2507 = vadd.f32 0.0, %v2506
        %v2508 = vpop.f32.mrb[0].mxu0
        %v2509 = vpop.f32.mrb[0].mxu0
        %v2510 = vadd.f32 0.0, %v2509
        %v2511 = vpop.f32.mrb[0].mxu0
        %2512 = vdwg.mxu0
        %v2513 = vsel %vm1438, %v2507, -inf
        %2514 = vmax.xlane.f32.xlu0 %v2513
        %v2515 = vpop.xlane.xlu0 %2514
        %v2516 = vsel %vm1438, %v2510, -inf
        %2517 = vmax.xlane.f32.xlu0 %v2516
        %v2518 = vpop.xlane.xlu0 %2517
        %v2519 = vsub.f32 %v2507, %v2515
        %v2520 = vsub.f32 %v2510, %v2518
        %v2521 = vmul.f32 %v2519, 1.442695
        %v2522 = vpow.pop %v2521
        %v2523 = vmul.f32 %v2520, 1.442695
        %v2524 = vpow.pop %v2523
        %v2525 = vsel %vm1438, %v2522, 0.0
        %2526 = vadd.xlane.f32.xlu0 %v2525
        %v2527 = vpop.xlane.xlu0 %2526
        %v2528 = vsel %vm1438, %v2524, 0.0
        %2529 = vadd.xlane.f32.xlu0 %v2528
        %v2530 = vpop.xlane.xlu0 %2529
        %v2531 = vrcp.pop %v2527
        %v2532 = vrcp.pop %v2530
        %v2533 = vmul.f32 %v2522, %v2531
        %v2534 = vmul.f32 %v2524, %v2532
        %v2535 = vpack.c.bf16 %v2534, %v2533
        %2537 = vrot.lane.b32.xlu0 %v2459, 120
        %v2538 = vpop.permute.xlu0 %2537
        %v2541 = vsel %vm1438, %v2535, 0
        %2543 = vmatprep.subr.bf16.mxu0 0
        %2544 = vmatpush1.bf16.msra.mxu0 %v2538
        %2545 = vmatprep.subr.bf16.mxu0 0
        %2546 = vmatpush1.bf16.msra.mxu0 0
        %2547 = vmatprep.subr.bf16.mxu0 0
        %2548 = vmatpush1.bf16.msra.mxu0 0
        %2549 = vmatprep.subr.bf16.mxu0 0
        %2550 = vmatpush1.bf16.msra.mxu0 0
        %2551 = vmatprep.subr.bf16.mxu0 0
        %2552 = vmatpush1.bf16.msra.mxu0 0
        %2553 = vmatprep.subr.bf16.mxu0 0
        %2554 = vmatpush1.bf16.msra.mxu0 0
        %2555 = vmatprep.subr.bf16.mxu0 0
        %2556 = vmatpush1.bf16.msra.mxu0 0
        %2557 = vmatprep.subr.bf16.mxu0 0
        %2558 = vmatpush1.bf16.msra.mxu0 0
        %2559 = vmatprep.subr.bf16.mxu0 0
        %2560 = vmatpush1.bf16.msra.mxu0 0
        %2561 = vmatprep.subr.bf16.mxu0 0
        %2562 = vmatpush1.bf16.msra.mxu0 0
        %2563 = vmatprep.subr.bf16.mxu0 0
        %2564 = vmatpush1.bf16.msra.mxu0 0
        %2565 = vmatprep.subr.bf16.mxu0 0
        %2566 = vmatpush1.bf16.msra.mxu0 0
        %2567 = vmatprep.subr.bf16.mxu0 0
        %2568 = vmatpush1.bf16.msra.mxu0 0
        %2569 = vmatprep.subr.bf16.mxu0 0
        %2570 = vmatpush1.bf16.msra.mxu0 0
        %2571 = vmatprep.subr.bf16.mxu0 0
        %2572 = vmatpush1.bf16.msra.mxu0 0
        %2573 = vmatprep.subr.bf16.mxu0 0
        %2574 = vmatpush1.bf16.msra.mxu0 0
        %2575 = vmatprep.mubr.bf16.mxu0 0
        %2576 = vmatmul.mubr.bf16.gmra.mrb[0].mxu0 %v2541
        %v2577 = vpop.f32.mrb[0].mxu0
        %v2578 = vadd.f32 0.0, %v2577
        %v2579 = vpop.f32.mrb[0].mxu0
        %v2580 = vpop.f32.mrb[0].mxu0
        %v2581 = vadd.f32 0.0, %v2580
        %v2582 = vpop.f32.mrb[0].mxu0
        %2583 = vdwg.mxu0
        %2586 = vrot.lane.b32.xlu0 %v2578, 8
        %v2587 = vpop.permute.xlu0 %2586
        %2588 = vrot.lane.b32.xlu0 %v2581, 8
        %v2589 = vpop.permute.xlu0 %2588
        %2592 = vst.msk [vmem:[#allocation5] sm:$0xff] %vm1659, %v2587
        %2593 = vst.msk [vmem:[#allocation5 + $0x8] sm:$0xff] %vm1659, %v2589
        %v2595 = vunpack.c.l.b16 %v2535
        %v2596 = vunpack.c.h.b16 %v2535
        %v2597 = vpack.c.b16 %v2595, %v2595
        %v2598 = vpack.c.b16 %v2596, %v2596
        %2599 = vrot.lane.b32.xlu0 %v2597, 16
        %v2600 = vpop.permute.xlu0 %2599
        %2601 = vrot.lane.b32.xlu0 %v2598, 16
        %v2602 = vpop.permute.xlu0 %2601
        %2605 = vst.msk [vmem:[%s1153] sm:$0xf] %vm1673, %v2600
        %2606 = vst.msk [vmem:[%s1153 + $0x4] sm:$0xf] %vm1673, %v2602
        %v2607 = vld [vmem:[#allocation2] sm:$0xff]
        %v2608 = vld [vmem:[#allocation2 + $0x8] sm:$0xff]
        %v2609 = vpack.c.bf16 %v2608, %v2607
        %v2610 = vld [vmem:[#allocation3] sm:$0xff]
        %v2611 = vld [vmem:[#allocation3 + $0x8] sm:$0xff]
        %v2612 = vpack.c.bf16 %v2611, %v2610
        %v2613 = vld [vmem:[#allocation4] sm:$0xff]
        %v2614 = vld [vmem:[#allocation4 + $0x8] sm:$0xff]
        %v2615 = vpack.c.bf16 %v2614, %v2613
        %2617 = vrot.lane.b32.xlu0 %v2609, 112
        %v2618 = vpop.permute.xlu0 %2617
        %2620 = vrot.lane.b32.xlu0 %v2612, 112
        %v2621 = vpop.permute.xlu0 %2620
        %v2623 = vsel %vm1390, %v2618, 0
        %v2626 = vsel %vm1390, %v2621, 0
        %2628 = vmatprep.subr.bf16.mxu0 0
        %2629 = vmatpush1.bf16.xpose.msra.mxu0 %v2626
        %2630 = vmatprep.subr.bf16.mxu0 0
        %2631 = vmatpush1.bf16.xpose.msra.mxu0 0
        %2632 = vmatprep.subr.bf16.mxu0 0
        %2633 = vmatpush1.bf16.xpose.msra.mxu0 0
        %2634 = vmatprep.subr.bf16.mxu0 0
        %2635 = vmatpush1.bf16.xpose.msra.mxu0 0
        %2636 = vmatprep.subr.bf16.mxu0 0
        %2637 = vmatpush1.bf16.xpose.msra.mxu0 0
        %2638 = vmatprep.subr.bf16.mxu0 0
        %2639 = vmatpush1.bf16.xpose.msra.mxu0 0
        %2640 = vmatprep.subr.bf16.mxu0 0
        %2641 = vmatpush1.bf16.xpose.msra.mxu0 0
        %2642 = vmatprep.subr.bf16.mxu0 0
        %2643 = vmatpush1.bf16.xpose.msra.mxu0 0
        %2644 = vmatprep.subr.bf16.mxu0 0
        %2645 = vmatpush1.bf16.xpose.msra.mxu0 0
        %2646 = vmatprep.subr.bf16.mxu0 0
        %2647 = vmatpush1.bf16.xpose.msra.mxu0 0
        %2648 = vmatprep.subr.bf16.mxu0 0
        %2649 = vmatpush1.bf16.xpose.msra.mxu0 0
        %2650 = vmatprep.subr.bf16.mxu0 0
        %2651 = vmatpush1.bf16.xpose.msra.mxu0 0
        %2652 = vmatprep.subr.bf16.mxu0 0
        %2653 = vmatpush1.bf16.xpose.msra.mxu0 0
        %2654 = vmatprep.subr.bf16.mxu0 0
        %2655 = vmatpush1.bf16.xpose.msra.mxu0 0
        %2656 = vmatprep.subr.bf16.mxu0 0
        %2657 = vmatpush1.bf16.xpose.msra.mxu0 0
        %2658 = vmatprep.subr.bf16.mxu0 0
        %2659 = vmatpush1.bf16.xpose.msra.mxu0 0
        %2660 = vmatprep.mubr.bf16.mxu0 0
        %2661 = vmatmul.mubr.bf16.gmra.mrb[0].mxu0 %v2623
        %v2662 = vpop.f32.mrb[0].mxu0
        %v2663 = vadd.f32 0.0, %v2662
        %v2664 = vpop.f32.mrb[0].mxu0
        %v2665 = vpop.f32.mrb[0].mxu0
        %v2666 = vadd.f32 0.0, %v2665
        %v2667 = vpop.f32.mrb[0].mxu0
        %2668 = vdwg.mxu0
        %v2669 = vsel %vm1438, %v2663, -inf
        %2670 = vmax.xlane.f32.xlu0 %v2669
        %v2671 = vpop.xlane.xlu0 %2670
        %v2672 = vsel %vm1438, %v2666, -inf
        %2673 = vmax.xlane.f32.xlu0 %v2672
        %v2674 = vpop.xlane.xlu0 %2673
        %v2675 = vsub.f32 %v2663, %v2671
        %v2676 = vsub.f32 %v2666, %v2674
        %v2677 = vmul.f32 %v2675, 1.442695
        %v2678 = vpow.pop %v2677
        %v2679 = vmul.f32 %v2676, 1.442695
        %v2680 = vpow.pop %v2679
        %v2681 = vsel %vm1438, %v2678, 0.0
        %2682 = vadd.xlane.f32.xlu0 %v2681
        %v2683 = vpop.xlane.xlu0 %2682
        %v2684 = vsel %vm1438, %v2680, 0.0
        %2685 = vadd.xlane.f32.xlu0 %v2684
        %v2686 = vpop.xlane.xlu0 %2685
        %v2687 = vrcp.pop %v2683
        %v2688 = vrcp.pop %v2686
        %v2689 = vmul.f32 %v2678, %v2687
        %v2690 = vmul.f32 %v2680, %v2688
        %v2691 = vpack.c.bf16 %v2690, %v2689
        %2693 = vrot.lane.b32.xlu0 %v2615, 112
        %v2694 = vpop.permute.xlu0 %2693
        %v2697 = vsel %vm1438, %v2691, 0
        %2699 = vmatprep.subr.bf16.mxu0 0
        %2700 = vmatpush1.bf16.msra.mxu0 %v2694
        %2701 = vmatprep.subr.bf16.mxu0 0
        %2702 = vmatpush1.bf16.msra.mxu0 0
        %2703 = vmatprep.subr.bf16.mxu0 0
        %2704 = vmatpush1.bf16.msra.mxu0 0
        %2705 = vmatprep.subr.bf16.mxu0 0
        %2706 = vmatpush1.bf16.msra.mxu0 0
        %2707 = vmatprep.subr.bf16.mxu0 0
        %2708 = vmatpush1.bf16.msra.mxu0 0
        %2709 = vmatprep.subr.bf16.mxu0 0
        %2710 = vmatpush1.bf16.msra.mxu0 0
        %2711 = vmatprep.subr.bf16.mxu0 0
        %2712 = vmatpush1.bf16.msra.mxu0 0
        %2713 = vmatprep.subr.bf16.mxu0 0
        %2714 = vmatpush1.bf16.msra.mxu0 0
        %2715 = vmatprep.subr.bf16.mxu0 0
        %2716 = vmatpush1.bf16.msra.mxu0 0
        %2717 = vmatprep.subr.bf16.mxu0 0
        %2718 = vmatpush1.bf16.msra.mxu0 0
        %2719 = vmatprep.subr.bf16.mxu0 0
        %2720 = vmatpush1.bf16.msra.mxu0 0
        %2721 = vmatprep.subr.bf16.mxu0 0
        %2722 = vmatpush1.bf16.msra.mxu0 0
        %2723 = vmatprep.subr.bf16.mxu0 0
        %2724 = vmatpush1.bf16.msra.mxu0 0
        %2725 = vmatprep.subr.bf16.mxu0 0
        %2726 = vmatpush1.bf16.msra.mxu0 0
        %2727 = vmatprep.subr.bf16.mxu0 0
        %2728 = vmatpush1.bf16.msra.mxu0 0
        %2729 = vmatprep.subr.bf16.mxu0 0
        %2730 = vmatpush1.bf16.msra.mxu0 0
        %2731 = vmatprep.mubr.bf16.mxu0 0
        %2732 = vmatmul.mubr.bf16.gmra.mrb[0].mxu0 %v2697
        %v2733 = vpop.f32.mrb[0].mxu0
        %v2734 = vadd.f32 0.0, %v2733
        %v2735 = vpop.f32.mrb[0].mxu0
        %v2736 = vpop.f32.mrb[0].mxu0
        %v2737 = vadd.f32 0.0, %v2736
        %v2738 = vpop.f32.mrb[0].mxu0
        %2739 = vdwg.mxu0
        %2742 = vrot.lane.b32.xlu0 %v2734, 16
        %v2743 = vpop.permute.xlu0 %2742
        %2744 = vrot.lane.b32.xlu0 %v2737, 16
        %v2745 = vpop.permute.xlu0 %2744
        %2748 = vst.msk [vmem:[#allocation5] sm:$0xff] %vm1817, %v2743
        %2749 = vst.msk [vmem:[#allocation5 + $0x8] sm:$0xff] %vm1817, %v2745
        %v2751 = vunpack.c.l.b16 %v2691
        %v2752 = vunpack.c.h.b16 %v2691
        %v2753 = vpack.c.b16 %v2751, %v2751
        %v2754 = vpack.c.b16 %v2752, %v2752
        %2755 = vrot.lane.b32.xlu0 %v2753, 32
        %v2756 = vpop.permute.xlu0 %2755
        %2757 = vrot.lane.b32.xlu0 %v2754, 32
        %v2758 = vpop.permute.xlu0 %2757
        %2761 = vst.msk [vmem:[%s1153] sm:$0xf] %vm1831, %v2756
        %2762 = vst.msk [vmem:[%s1153 + $0x4] sm:$0xf] %vm1831, %v2758
        %v2763 = vld [vmem:[#allocation2] sm:$0xff]
        %v2764 = vld [vmem:[#allocation2 + $0x8] sm:$0xff]
        %v2765 = vpack.c.bf16 %v2764, %v2763
        %v2766 = vld [vmem:[#allocation3] sm:$0xff]
        %v2767 = vld [vmem:[#allocation3 + $0x8] sm:$0xff]
        %v2768 = vpack.c.bf16 %v2767, %v2766
        %v2769 = vld [vmem:[#allocation4] sm:$0xff]
        %v2770 = vld [vmem:[#allocation4 + $0x8] sm:$0xff]
        %v2771 = vpack.c.bf16 %v2770, %v2769
        %2773 = vrot.lane.b32.xlu0 %v2765, 104
        %v2774 = vpop.permute.xlu0 %2773
        %2776 = vrot.lane.b32.xlu0 %v2768, 104
        %v2777 = vpop.permute.xlu0 %2776
        %v2779 = vsel %vm1390, %v2774, 0
        %v2782 = vsel %vm1390, %v2777, 0
        %2784 = vmatprep.subr.bf16.mxu0 0
        %2785 = vmatpush1.bf16.xpose.msra.mxu0 %v2782
        %2786 = vmatprep.subr.bf16.mxu0 0
        %2787 = vmatpush1.bf16.xpose.msra.mxu0 0
        %2788 = vmatprep.subr.bf16.mxu0 0
        %2789 = vmatpush1.bf16.xpose.msra.mxu0 0
        %2790 = vmatprep.subr.bf16.mxu0 0
        %2791 = vmatpush1.bf16.xpose.msra.mxu0 0
        %2792 = vmatprep.subr.bf16.mxu0 0
        %2793 = vmatpush1.bf16.xpose.msra.mxu0 0
        %2794 = vmatprep.subr.bf16.mxu0 0
        %2795 = vmatpush1.bf16.xpose.msra.mxu0 0
        %2796 = vmatprep.subr.bf16.mxu0 0
        %2797 = vmatpush1.bf16.xpose.msra.mxu0 0
        %2798 = vmatprep.subr.bf16.mxu0 0
        %2799 = vmatpush1.bf16.xpose.msra.mxu0 0
        %2800 = vmatprep.subr.bf16.mxu0 0
        %2801 = vmatpush1.bf16.xpose.msra.mxu0 0
        %2802 = vmatprep.subr.bf16.mxu0 0
        %2803 = vmatpush1.bf16.xpose.msra.mxu0 0
        %2804 = vmatprep.subr.bf16.mxu0 0
        %2805 = vmatpush1.bf16.xpose.msra.mxu0 0
        %2806 = vmatprep.subr.bf16.mxu0 0
        %2807 = vmatpush1.bf16.xpose.msra.mxu0 0
        %2808 = vmatprep.subr.bf16.mxu0 0
        %2809 = vmatpush1.bf16.xpose.msra.mxu0 0
        %2810 = vmatprep.subr.bf16.mxu0 0
        %2811 = vmatpush1.bf16.xpose.msra.mxu0 0
        %2812 = vmatprep.subr.bf16.mxu0 0
        %2813 = vmatpush1.bf16.xpose.msra.mxu0 0
        %2814 = vmatprep.subr.bf16.mxu0 0
        %2815 = vmatpush1.bf16.xpose.msra.mxu0 0
        %2816 = vmatprep.mubr.bf16.mxu0 0
        %2817 = vmatmul.mubr.bf16.gmra.mrb[0].mxu0 %v2779
        %v2818 = vpop.f32.mrb[0].mxu0
        %v2819 = vadd.f32 0.0, %v2818
        %v2820 = vpop.f32.mrb[0].mxu0
        %v2821 = vpop.f32.mrb[0].mxu0
        %v2822 = vadd.f32 0.0, %v2821
        %v2823 = vpop.f32.mrb[0].mxu0
        %2824 = vdwg.mxu0
        %v2825 = vsel %vm1438, %v2819, -inf
        %2826 = vmax.xlane.f32.xlu0 %v2825
        %v2827 = vpop.xlane.xlu0 %2826
        %v2828 = vsel %vm1438, %v2822, -inf
        %2829 = vmax.xlane.f32.xlu0 %v2828
        %v2830 = vpop.xlane.xlu0 %2829
        %v2831 = vsub.f32 %v2819, %v2827
        %v2832 = vsub.f32 %v2822, %v2830
        %v2833 = vmul.f32 %v2831, 1.442695
        %v2834 = vpow.pop %v2833
        %v2835 = vmul.f32 %v2832, 1.442695
        %v2836 = vpow.pop %v2835
        %v2837 = vsel %vm1438, %v2834, 0.0
        %2838 = vadd.xlane.f32.xlu0 %v2837
        %v2839 = vpop.xlane.xlu0 %2838
        %v2840 = vsel %vm1438, %v2836, 0.0
        %2841 = vadd.xlane.f32.xlu0 %v2840
        %v2842 = vpop.xlane.xlu0 %2841
        %v2843 = vrcp.pop %v2839
        %v2844 = vrcp.pop %v2842
        %v2845 = vmul.f32 %v2834, %v2843
        %v2846 = vmul.f32 %v2836, %v2844
        %v2847 = vpack.c.bf16 %v2846, %v2845
        %2849 = vrot.lane.b32.xlu0 %v2771, 104
        %v2850 = vpop.permute.xlu0 %2849
        %v2853 = vsel %vm1438, %v2847, 0
        %2855 = vmatprep.subr.bf16.mxu0 0
        %2856 = vmatpush1.bf16.msra.mxu0 %v2850
        %2857 = vmatprep.subr.bf16.mxu0 0
        %2858 = vmatpush1.bf16.msra.mxu0 0
        %2859 = vmatprep.subr.bf16.mxu0 0
        %2860 = vmatpush1.bf16.msra.mxu0 0
        %2861 = vmatprep.subr.bf16.mxu0 0
        %2862 = vmatpush1.bf16.msra.mxu0 0
        %2863 = vmatprep.subr.bf16.mxu0 0
        %2864 = vmatpush1.bf16.msra.mxu0 0
        %2865 = vmatprep.subr.bf16.mxu0 0
        %2866 = vmatpush1.bf16.msra.mxu0 0
        %2867 = vmatprep.subr.bf16.mxu0 0
        %2868 = vmatpush1.bf16.msra.mxu0 0
        %2869 = vmatprep.subr.bf16.mxu0 0
        %2870 = vmatpush1.bf16.msra.mxu0 0
        %2871 = vmatprep.subr.bf16.mxu0 0
        %2872 = vmatpush1.bf16.msra.mxu0 0
        %2873 = vmatprep.subr.bf16.mxu0 0
        %2874 = vmatpush1.bf16.msra.mxu0 0
        %2875 = vmatprep.subr.bf16.mxu0 0
        %2876 = vmatpush1.bf16.msra.mxu0 0
        %2877 = vmatprep.subr.bf16.mxu0 0
        %2878 = vmatpush1.bf16.msra.mxu0 0
        %2879 = vmatprep.subr.bf16.mxu0 0
        %2880 = vmatpush1.bf16.msra.mxu0 0
        %2881 = vmatprep.subr.bf16.mxu0 0
        %2882 = vmatpush1.bf16.msra.mxu0 0
        %2883 = vmatprep.subr.bf16.mxu0 0
        %2884 = vmatpush1.bf16.msra.mxu0 0
        %2885 = vmatprep.subr.bf16.mxu0 0
        %2886 = vmatpush1.bf16.msra.mxu0 0
        %2887 = vmatprep.mubr.bf16.mxu0 0
        %2888 = vmatmul.mubr.bf16.gmra.mrb[0].mxu0 %v2853
        %v2889 = vpop.f32.mrb[0].mxu0
        %v2890 = vadd.f32 0.0, %v2889
        %v2891 = vpop.f32.mrb[0].mxu0
        %v2892 = vpop.f32.mrb[0].mxu0
        %v2893 = vadd.f32 0.0, %v2892
        %v2894 = vpop.f32.mrb[0].mxu0
        %2895 = vdwg.mxu0
        %2898 = vrot.lane.b32.xlu0 %v2890, 24
        %v2899 = vpop.permute.xlu0 %2898
        %2900 = vrot.lane.b32.xlu0 %v2893, 24
        %v2901 = vpop.permute.xlu0 %2900
        %2904 = vst.msk [vmem:[#allocation5] sm:$0xff] %vm1975, %v2899
        %2905 = vst.msk [vmem:[#allocation5 + $0x8] sm:$0xff] %vm1975, %v2901
        %v2907 = vunpack.c.l.b16 %v2847
        %v2908 = vunpack.c.h.b16 %v2847
        %v2909 = vpack.c.b16 %v2907, %v2907
        %v2910 = vpack.c.b16 %v2908, %v2908
        %2911 = vrot.lane.b32.xlu0 %v2909, 48
        %v2912 = vpop.permute.xlu0 %2911
        %2913 = vrot.lane.b32.xlu0 %v2910, 48
        %v2914 = vpop.permute.xlu0 %2913
        %2917 = vst.msk [vmem:[%s1153] sm:$0xf] %vm1989, %v2912
        %2918 = vst.msk [vmem:[%s1153 + $0x4] sm:$0xf] %vm1989, %v2914
        %v2919 = vld [vmem:[#allocation5] sm:$0xff]
        %v2920 = vld [vmem:[#allocation5 + $0x8] sm:$0xff]
        %v2921 = vpack.c.bf16 %v2920, %v2919
        %v2923 = vlaneseq
        %v2924 = vshrl.u32 %v2923, 7
        %v2925 = vsub.s32 0, %v2924
        %v2926 = vrot.slane %v2121, %v2925
        %v2932 = vunpack.c.l.b16 %v2117
        %v2933 = vunpack.c.l.b16 %v2118
        %v2934 = vunpack.c.l.b16 %v2119
        %v2935 = vunpack.c.l.b16 %v2120
        %v2936 = vpack.c.b16 %v2933, %v2932
        %v2937 = vpack.c.b16 %v2935, %v2934
        %v2941 = vsel %vm1210, %v2921, 0
        %2943 = vmatprep.subr.bf16.mxu0 0
        %2944 = vmatpush1.bf16.msra.mxu0 %v2936
        %2945 = vmatprep.subr.bf16.mxu0 0
        %2946 = vmatpush1.bf16.msra.mxu0 %v2937
        %2947 = vmatprep.subr.bf16.mxu0 0
        %2948 = vmatpush1.bf16.msra.mxu0 0
        %2949 = vmatprep.subr.bf16.mxu0 0
        %2950 = vmatpush1.bf16.msra.mxu0 0
        %2951 = vmatprep.subr.bf16.mxu0 0
        %2952 = vmatpush1.bf16.msra.mxu0 0
        %2953 = vmatprep.subr.bf16.mxu0 0
        %2954 = vmatpush1.bf16.msra.mxu0 0
        %2955 = vmatprep.subr.bf16.mxu0 0
        %2956 = vmatpush1.bf16.msra.mxu0 0
        %2957 = vmatprep.subr.bf16.mxu0 0
        %2958 = vmatpush1.bf16.msra.mxu0 0
        %2959 = vmatprep.subr.bf16.mxu0 0
        %2960 = vmatpush1.bf16.msra.mxu0 0
        %2961 = vmatprep.subr.bf16.mxu0 0
        %2962 = vmatpush1.bf16.msra.mxu0 0
        %2963 = vmatprep.subr.bf16.mxu0 0
        %2964 = vmatpush1.bf16.msra.mxu0 0
        %2965 = vmatprep.subr.bf16.mxu0 0
        %2966 = vmatpush1.bf16.msra.mxu0 0
        %2967 = vmatprep.subr.bf16.mxu0 0
        %2968 = vmatpush1.bf16.msra.mxu0 0
        %2969 = vmatprep.subr.bf16.mxu0 0
        %2970 = vmatpush1.bf16.msra.mxu0 0
        %2971 = vmatprep.subr.bf16.mxu0 0
        %2972 = vmatpush1.bf16.msra.mxu0 0
        %2973 = vmatprep.subr.bf16.mxu0 0
        %2974 = vmatpush1.bf16.msra.mxu0 0
        %2975 = vmatprep.mubr.bf16.mxu0 0
        %2976 = vmatmul.mubr.bf16.gmra.mrb[0].mxu0 %v2941
        %v2977 = vpop.f32.mrb[0].mxu0
        %v2978 = vadd.f32 %v2926, %v2977
        %v2979 = vpop.f32.mrb[0].mxu0
        %v2980 = vpop.f32.mrb[0].mxu0
        %v2981 = vadd.f32 %v2926, %v2980
        %v2982 = vpop.f32.mrb[0].mxu0
        %2983 = vdwg.mxu0
        %v2984 = vadd.f32 %v2978, %v2100
        %v2985 = vadd.f32 %v2981, %v2101
        %v2986 = vsel %vm1210, %v2984, 0.0
        %2987 = vadd.xlane.f32.xlu0 %v2986
        %v2988 = vpop.xlane.xlu0 %2987
        %v2989 = vsel %vm1210, %v2985, 0.0
        %2990 = vadd.xlane.f32.xlu0 %v2989
        %v2991 = vpop.xlane.xlu0 %2990
        %v2992 = vmul.f32 %v2988, %v2065
        %v2993 = vmul.f32 %v2991, %v2065
        %v2994 = vsub.f32 %v2984, %v2992
        %v2995 = vsub.f32 %v2985, %v2993
        %v2996 = vmul.f32 %v2994, %v2994
        %v2997 = vmul.f32 %v2995, %v2995
        %v2998 = vsel %vm1210, %v2996, 0.0
        %2999 = vadd.xlane.f32.xlu0 %v2998
        %v3000 = vpop.xlane.xlu0 %2999
        %v3001 = vsel %vm1210, %v2997, 0.0
        %3002 = vadd.xlane.f32.xlu0 %v3001
        %v3003 = vpop.xlane.xlu0 %3002
        %v3004 = vmul.f32 %v3000, %v2065
        %v3005 = vmul.f32 %v3003, %v2065
        %v3006 = vadd.f32 %v3004, 1e-05
        %v3007 = vadd.f32 %v3005, 1e-05
        %v3008 = vrsqrt.pop %v3006
        %v3009 = vrsqrt.pop %v3007
        %v3010 = vmul.f32 %v2994, %v3008
        %v3011 = vmul.f32 %v2995, %v3009
        %v3013 = vlaneseq
        %v3014 = vshrl.u32 %v3013, 7
        %v3015 = vsub.s32 0, %v3014
        %v3016 = vrot.slane %v2122, %v3015
        %v3018 = vmul.f32 %v3010, %v3016
        %v3019 = vmul.f32 %v3011, %v3016
        %v3021 = vlaneseq
        %v3022 = vshrl.u32 %v3021, 7
        %v3023 = vsub.s32 0, %v3022
        %v3024 = vrot.slane %v2123, %v3023
        %v3026 = vadd.f32 %v3018, %v3024
        %v3027 = vadd.f32 %v3019, %v3024
        %v3028 = vld [vmem:[%s45] sm:$0xf]
        %v3029 = vld [vmem:[%s45 + $0x4] sm:$0xf]
        %v3030 = vld [vmem:[%s45 + $0x8] sm:$0xf]
        %v3031 = vld [vmem:[%s45 + $0xc] sm:$0xf]
        %v3032 = vld [vmem:[%s47] sm:$0x1]
        %v3033 = vld [vmem:[%s49] sm:$0xf]
        %v3034 = vld [vmem:[%s49 + $0x4] sm:$0xf]
        %v3035 = vld [vmem:[%s49 + $0x8] sm:$0xf]
        %v3036 = vld [vmem:[%s49 + $0xc] sm:$0xf]
        %v3037 = vld [vmem:[%s49 + $0x10] sm:$0xf]
        %v3038 = vld [vmem:[%s49 + $0x14] sm:$0xf]
        %v3039 = vld [vmem:[%s49 + $0x18] sm:$0xf]
        %v3040 = vld [vmem:[%s49 + $0x1c] sm:$0xf]
        %v3041 = vld [vmem:[%s51] sm:$0x1]
        %v3042 = vld [vmem:[%s53] sm:$0x1]
        %v3043 = vld [vmem:[%s55] sm:$0x1]
        %v3044 = vpack.c.bf16 %v3027, %v3026
        %v3046 = vlaneseq
        %v3047 = vshrl.u32 %v3046, 7
        %v3048 = vsub.s32 0, %v3047
        %v3049 = vrot.slane %v3032, %v3048
        %v3055 = vunpack.c.l.b16 %v3028
        %v3056 = vunpack.c.l.b16 %v3029
        %v3057 = vunpack.c.l.b16 %v3030
        %v3058 = vunpack.c.l.b16 %v3031
        %v3059 = vpack.c.b16 %v3056, %v3055
        %v3060 = vpack.c.b16 %v3058, %v3057
        %v3064 = vsel %vm1210, %v3044, 0
        %3066 = vmatprep.subr.bf16.mxu0 0
        %3067 = vmatpush1.bf16.msra.mxu0 %v3059
        %3068 = vmatprep.subr.bf16.mxu0 0
        %3069 = vmatpush1.bf16.msra.mxu0 %v3060
        %3070 = vmatprep.subr.bf16.mxu0 0
        %3071 = vmatpush1.bf16.msra.mxu0 0
        %3072 = vmatprep.subr.bf16.mxu0 0
        %3073 = vmatpush1.bf16.msra.mxu0 0
        %3074 = vmatprep.subr.bf16.mxu0 0
        %3075 = vmatpush1.bf16.msra.mxu0 0
        %3076 = vmatprep.subr.bf16.mxu0 0
        %3077 = vmatpush1.bf16.msra.mxu0 0
        %3078 = vmatprep.subr.bf16.mxu0 0
        %3079 = vmatpush1.bf16.msra.mxu0 0
        %3080 = vmatprep.subr.bf16.mxu0 0
        %3081 = vmatpush1.bf16.msra.mxu0 0
        %3082 = vmatprep.subr.bf16.mxu0 0
        %3083 = vmatpush1.bf16.msra.mxu0 0
        %3084 = vmatprep.subr.bf16.mxu0 0
        %3085 = vmatpush1.bf16.msra.mxu0 0
        %3086 = vmatprep.subr.bf16.mxu0 0
        %3087 = vmatpush1.bf16.msra.mxu0 0
        %3088 = vmatprep.subr.bf16.mxu0 0
        %3089 = vmatpush1.bf16.msra.mxu0 0
        %3090 = vmatprep.subr.bf16.mxu0 0
        %3091 = vmatpush1.bf16.msra.mxu0 0
        %3092 = vmatprep.subr.bf16.mxu0 0
        %3093 = vmatpush1.bf16.msra.mxu0 0
        %3094 = vmatprep.subr.bf16.mxu0 0
        %3095 = vmatpush1.bf16.msra.mxu0 0
        %3096 = vmatprep.subr.bf16.mxu0 0
        %3097 = vmatpush1.bf16.msra.mxu0 0
        %3098 = vmatprep.mubr.bf16.mxu0 0
        %3099 = vmatmul.mubr.bf16.gmra.mrb[0].mxu0 %v3064
        %v3100 = vpop.f32.mrb[0].mxu0
        %v3101 = vadd.f32 %v3049, %v3100
        %v3102 = vpop.f32.mrb[0].mxu0
        %v3103 = vpop.f32.mrb[0].mxu0
        %v3104 = vadd.f32 %v3049, %v3103
        %v3105 = vpop.f32.mrb[0].mxu0
        %3106 = vdwg.mxu0
        %v3107 = vmax.f32 %v3101, 0.0
        %v3108 = vmax.f32 %v3104, 0.0
        %v3109 = vpack.c.bf16 %v3108, %v3107
        %v3111 = vlaneseq
        %v3112 = vshrl.u32 %v3111, 7
        %v3113 = vsub.s32 0, %v3112
        %v3114 = vrot.slane %v3041, %v3113
        %v3124 = vunpack.c.l.b16 %v3033
        %v3125 = vunpack.c.l.b16 %v3034
        %v3126 = vunpack.c.l.b16 %v3035
        %v3127 = vunpack.c.l.b16 %v3036
        %v3128 = vunpack.c.l.b16 %v3037
        %v3129 = vunpack.c.l.b16 %v3038
        %v3130 = vunpack.c.l.b16 %v3039
        %v3131 = vunpack.c.l.b16 %v3040
        %v3132 = vpack.c.b16 %v3125, %v3124
        %v3133 = vpack.c.b16 %v3127, %v3126
        %v3134 = vpack.c.b16 %v3129, %v3128
        %v3135 = vpack.c.b16 %v3131, %v3130
        %vm3140 = vcmask 523264
        %v3142 = vsel %vm3140, %v3109, 0
        %3144 = vmatprep.subr.bf16.mxu0 0
        %3145 = vmatpush1.bf16.msra.mxu0 %v3132
        %3146 = vmatprep.subr.bf16.mxu0 0
        %3147 = vmatpush1.bf16.msra.mxu0 %v3133
        %3148 = vmatprep.subr.bf16.mxu0 0
        %3149 = vmatpush1.bf16.msra.mxu0 %v3134
        %3150 = vmatprep.subr.bf16.mxu0 0
        %3151 = vmatpush1.bf16.msra.mxu0 %v3135
        %3152 = vmatprep.subr.bf16.mxu0 0
        %3153 = vmatpush1.bf16.msra.mxu0 0
        %3154 = vmatprep.subr.bf16.mxu0 0
        %3155 = vmatpush1.bf16.msra.mxu0 0
        %3156 = vmatprep.subr.bf16.mxu0 0
        %3157 = vmatpush1.bf16.msra.mxu0 0
        %3158 = vmatprep.subr.bf16.mxu0 0
        %3159 = vmatpush1.bf16.msra.mxu0 0
        %3160 = vmatprep.subr.bf16.mxu0 0
        %3161 = vmatpush1.bf16.msra.mxu0 0
        %3162 = vmatprep.subr.bf16.mxu0 0
        %3163 = vmatpush1.bf16.msra.mxu0 0
        %3164 = vmatprep.subr.bf16.mxu0 0
        %3165 = vmatpush1.bf16.msra.mxu0 0
        %3166 = vmatprep.subr.bf16.mxu0 0
        %3167 = vmatpush1.bf16.msra.mxu0 0
        %3168 = vmatprep.subr.bf16.mxu0 0
        %3169 = vmatpush1.bf16.msra.mxu0 0
        %3170 = vmatprep.subr.bf16.mxu0 0
        %3171 = vmatpush1.bf16.msra.mxu0 0
        %3172 = vmatprep.subr.bf16.mxu0 0
        %3173 = vmatpush1.bf16.msra.mxu0 0
        %3174 = vmatprep.subr.bf16.mxu0 0
        %3175 = vmatpush1.bf16.msra.mxu0 0
        %3176 = vmatprep.mubr.bf16.mxu0 0
        %3177 = vmatmul.mubr.bf16.gmra.mrb[0].mxu0 %v3142
        %v3178 = vpop.f32.mrb[0].mxu0
        %v3179 = vadd.f32 %v3114, %v3178
        %v3180 = vpop.f32.mrb[0].mxu0
        %v3181 = vpop.f32.mrb[0].mxu0
        %v3182 = vadd.f32 %v3114, %v3181
        %v3183 = vpop.f32.mrb[0].mxu0
        %3184 = vdwg.mxu0
        %v3185 = vadd.f32 %v3179, %v3026
        %v3186 = vadd.f32 %v3182, %v3027
        %v3187 = vsel %vm1210, %v3185, 0.0
        %3188 = vadd.xlane.f32.xlu0 %v3187
        %v3189 = vpop.xlane.xlu0 %3188
        %v3190 = vsel %vm1210, %v3186, 0.0
        %3191 = vadd.xlane.f32.xlu0 %v3190
        %v3192 = vpop.xlane.xlu0 %3191
        %v3193 = vmul.f32 %v3189, %v2065
        %v3194 = vmul.f32 %v3192, %v2065
        %v3195 = vsub.f32 %v3185, %v3193
        %v3196 = vsub.f32 %v3186, %v3194
        %v3197 = vmul.f32 %v3195, %v3195
        %v3198 = vmul.f32 %v3196, %v3196
        %v3199 = vsel %vm1210, %v3197, 0.0
        %3200 = vadd.xlane.f32.xlu0 %v3199
        %v3201 = vpop.xlane.xlu0 %3200
        %v3202 = vsel %vm1210, %v3198, 0.0
        %3203 = vadd.xlane.f32.xlu0 %v3202
        %v3204 = vpop.xlane.xlu0 %3203
        %v3205 = vmul.f32 %v3201, %v2065
        %v3206 = vmul.f32 %v3204, %v2065
        %v3207 = vadd.f32 %v3205, 1e-05
        %v3208 = vadd.f32 %v3206, 1e-05
        %v3209 = vrsqrt.pop %v3207
        %v3210 = vrsqrt.pop %v3208
        %v3211 = vmul.f32 %v3195, %v3209
        %v3212 = vmul.f32 %v3196, %v3210
        %v3214 = vlaneseq
        %v3215 = vshrl.u32 %v3214, 7
        %v3216 = vsub.s32 0, %v3215
        %v3217 = vrot.slane %v3042, %v3216
        %v3219 = vmul.f32 %v3211, %v3217
        %v3220 = vmul.f32 %v3212, %v3217
        %v3222 = vlaneseq
        %v3223 = vshrl.u32 %v3222, 7
        %v3224 = vsub.s32 0, %v3223
        %v3225 = vrot.slane %v3043, %v3224
        %v3227 = vadd.f32 %v3219, %v3225
        %v3228 = vadd.f32 %v3220, %v3225
        %3229 = vst.msk [vmem:[%s1139] sm:$0xff] %vm1210, %v3227
        %3230 = vst.msk [vmem:[%s1139 + $0x8] sm:$0xff] %vm1210, %v3228
        %s3231 = sand.u32 %s695, 1
        %s3232 = scalar_lea.sflag [#allocation8], %s3231
        %s3233 = sand.u32 %s695, 1
        %s3234 = smul.addr %s3233, 16
        %s3235 = scalar_lea.vmem [#allocation29], %s3234
        %s3236 = sand.u32 %s89, 1
        %s3237 = scalar_lea.sflag [#allocation31], %s3236
        %s3238 = sand.u32 %s721, 1
        %s3239 = smul.addr %s3238, 8
        %s3240 = scalar_lea.vmem [#allocation30], %s3239
        %s3241 = sand.u32 %s89, 1
        %s3242 = scalar_lea.sflag [#allocation31], %s3241
        %s3243 = sand.u32 %s747, 1
        %s3244 = smul.addr %s3243, 8
        %s3245 = scalar_lea.vmem [#allocation32], %s3244
        // Predicated region
        $region189: #{tpu_custom_call.1} parent=131 // pred_check
          %p3246 = pneg %p705
        $region190: #{tpu_custom_call.1} parent=131 // pred_check_branch
          %3248 = sbr.rel (%p3246) target = $region192
        $region191: #{tpu_custom_call.1} parent=131 // pred_region
          %s3249 = smul.u32 2, %s89
          %s3251 = ssub.s32 256, 256
          %3252 = vsyncadd %s3232, %s3251
          %s3253 = smul.addr %s3249, 128
          %s3254 = scalar_lea.hbm %s57, %s3253
          %s3255 = sshll.u32 %s3235, 4
          %s3256 = int_to_ptr.vmem [resolvable:$true] %s3255
          %3261 = dma.vmem_to_hbm [thread:$0]  %s3256, 256, %s3254, %s3232, 128, 128, 8
        $region192: #{tpu_custom_call.1} parent=131 // pred_fallthru
          _
        // Predicated region
        $region193: #{tpu_custom_call.1} parent=131 // pred_check
          %p3262 = pneg %p731
        $region194: #{tpu_custom_call.1} parent=131 // pred_check_branch
          %3264 = sbr.rel (%p3262) target = $region196
        $region195: #{tpu_custom_call.1} parent=131 // pred_region
          %s3265 = smul.u32 2, %s89
          %s3267 = ssub.s32 128, 128
          %3268 = vsyncadd %s3237, %s3267
          %s3269 = smul.addr %s3265, 64
          %s3270 = scalar_lea.hbm %s59, %s3269
          %s3271 = sshll.u32 %s3240, 4
          %s3272 = int_to_ptr.vmem [resolvable:$true] %s3271
          %3277 = dma.vmem_to_hbm [thread:$0]  %s3272, 128, %s3270, %s3237, 64, 64, 4
        $region196: #{tpu_custom_call.1} parent=131 // pred_fallthru
          _
        // Predicated region
        $region197: #{tpu_custom_call.1} parent=131 // pred_check
          %p3278 = pneg %p757
        $region198: #{tpu_custom_call.1} parent=131 // pred_check_branch
          %3280 = sbr.rel (%p3278) target = $region200
        $region199: #{tpu_custom_call.1} parent=131 // pred_region
          %s3281 = smul.u32 2, %s89
          %s3283 = ssub.s32 128, 128
          %3284 = vsyncadd %s3242, %s3283
          %s3285 = smul.addr %s3281, 64
          %s3286 = scalar_lea.hbm %s61, %s3285
          %s3287 = sshll.u32 %s3245, 4
          %s3288 = int_to_ptr.vmem [resolvable:$true] %s3287
          %3293 = dma.vmem_to_hbm [thread:$0]  %s3288, 128, %s3286, %s3242, 64, 64, 4
        $region200: #{tpu_custom_call.1} parent=131 // pred_fallthru
          _
      $region132: #{tpu_custom_call.1} parent=5 // pred_fallthru
        _
      %p3294 = scmp.le.s32.totalorder 2, %s84
      // Predicated region
      $region201: #{tpu_custom_call.1} parent=5 // pred_check
        %p3295 = pneg %p3294
      $region202: #{tpu_custom_call.1} parent=5 // pred_check_branch
        %3297 = sbr.rel (%p3295) target = $region204
      $region203: #{tpu_custom_call.1} parent=5 // pred_region
        %s3298 = ssub.s32 %s84, 2
        // Predicated region
        $region205: #{tpu_custom_call.1} parent=203 // pred_check
          %p3299 = pneg %p711
        $region206: #{tpu_custom_call.1} parent=203 // pred_check_branch
          %3301 = sbr.rel (%p3299) target = $region208
        $region207: #{tpu_custom_call.1} parent=203 // pred_region
          %s3302 = sand.u32 %s696, 1
          %s3303 = scalar_lea.sflag [#allocation8], %s3302
          %s3304 = sand.u32 %s696, 1
          %s3305 = smul.addr %s3304, 16
          %s3306 = scalar_lea.vmem [#allocation29], %s3305
          %3307 = dma.done %s3303, 256
        $region208: #{tpu_custom_call.1} parent=203 // pred_fallthru
          _
        // Predicated region
        $region209: #{tpu_custom_call.1} parent=203 // pred_check
          %p3308 = pneg %p737
        $region210: #{tpu_custom_call.1} parent=203 // pred_check_branch
          %3310 = sbr.rel (%p3308) target = $region212
        $region211: #{tpu_custom_call.1} parent=203 // pred_region
          %s3311 = sand.u32 %s90, 1
          %s3312 = scalar_lea.sflag [#allocation31], %s3311
          %s3313 = sand.u32 %s722, 1
          %s3314 = smul.addr %s3313, 8
          %s3315 = scalar_lea.vmem [#allocation30], %s3314
          %3316 = dma.done %s3312, 128
        $region212: #{tpu_custom_call.1} parent=203 // pred_fallthru
          _
        // Predicated region
        $region213: #{tpu_custom_call.1} parent=203 // pred_check
          %p3317 = pneg %p763
        $region214: #{tpu_custom_call.1} parent=203 // pred_check_branch
          %3319 = sbr.rel (%p3317) target = $region216
        $region215: #{tpu_custom_call.1} parent=203 // pred_region
          %s3320 = sand.u32 %s90, 1
          %s3321 = scalar_lea.sflag [#allocation31], %s3320
          %s3322 = sand.u32 %s748, 1
          %s3323 = smul.addr %s3322, 8
          %s3324 = scalar_lea.vmem [#allocation32], %s3323
          %3325 = dma.done %s3321, 128
        $region216: #{tpu_custom_call.1} parent=203 // pred_fallthru
          _
      $region204: #{tpu_custom_call.1} parent=5 // pred_fallthru
        _
    $region6: #{tpu_custom_call.1} parent=1 // loop_footer
      %s88 = sadd.s32 1, %s84
    $region7: #{tpu_custom_call.1} parent=1 // loop_footer_branch
      %83 = sbr.rel target = $region3
    $region8: #{tpu_custom_call.1} parent=1 // loop_exit
      _
    %3326 = vsyncpa [#allocation7], 1
    %s3327 = scalar_lea.sflag [#allocation7], 1
    %3328 = vsyncpa %s3327, 1
    %3329 = vsyncpa [#allocation10], 1
    %3330 = vsyncpa [#allocation13], 1
    %3331 = vsyncpa [#allocation16], 1
    %3332 = vsyncpa [#allocation19], 1
    %3333 = vsyncpa [#allocation22], 1
    %3334 = vsyncpa [#allocation25], 1
    %3335 = vsyncpa [#allocation28], 1
    %3336 = vsyncpa [#allocation8], 1
    %s3337 = scalar_lea.sflag [#allocation8], 1
    %3338 = vsyncpa %s3337, 1
    %3339 = vsyncpa [#allocation31], 1
    %s3340 = scalar_lea.sflag [#allocation31], 1
    %3341 = vsyncpa %s3340, 1

// kernel: tpu_custom_call.1
$region0: #{tpu_custom_call.1}
  #allocation0 [shape = 'u32[]', space=smem, size = 0x4, offset = 0x4, fixed_abs, tag = 'smem constant byte address 0x4 - core index']
  #allocation1 [shape = 'u32[144,128]{1,0:T(1,128)}', space=vmem, size = 0x12000, scoped, tag = 'internal scratch']
  #allocation2 [shape = 'f32[16,32]{1,0:T(8,128)}', space=vmem, size = 0x2000, scoped, tag = 'scratch operand']
  #allocation3 [shape = 'f32[16,32]{1,0:T(8,128)}', space=vmem, size = 0x2000, scoped, tag = 'scratch operand']
  #allocation4 [shape = 'f32[16,32]{1,0:T(8,128)}', space=vmem, size = 0x2000, scoped, tag = 'scratch operand']
  #allocation5 [shape = 'f32[16,32]{1,0:T(8,128)}', space=vmem, size = 0x2000, scoped, tag = 'scratch operand']
  %s0 = inlined_call_operand.smem [shape: u32[31], index: -1, kind: input, shape index: {}]
  %s1 = sld [smem:[%s0]]
  %s2 = scalar_lea.smem %s0, 1
  %s3 = sld [smem:[%s2]]
  %s4 = scalar_lea.smem %s0, 2
  %s5 = sld [smem:[%s4]]
  %s6 = scalar_lea.smem %s0, 3
  %s7 = sld [smem:[%s6]]
  %s8 = scalar_lea.smem %s0, 4
  %s9 = sld [smem:[%s8]]
  %s10 = scalar_lea.smem %s0, 5
  %s11 = sld [smem:[%s10]]
  %s12 = scalar_lea.smem %s0, 6
  %s13 = sld [smem:[%s12]]
  %s14 = scalar_lea.smem %s0, 7
  %s15 = sld [smem:[%s14]]
  %s16 = scalar_lea.smem %s0, 8
  %s17 = sld [smem:[%s16]]
  %s18 = scalar_lea.smem %s0, 9
  %s19 = sld [smem:[%s18]]
  %s20 = scalar_lea.smem %s0, 10
  %s21 = sld [smem:[%s20]]
  %s22 = scalar_lea.smem %s0, 11
  %s23 = sld [smem:[%s22]]
  %s24 = scalar_lea.smem %s0, 12
  %s25 = sld [smem:[%s24]]
  %s26 = scalar_lea.smem %s0, 13
  %s27 = sld [smem:[%s26]]
  %s28 = scalar_lea.smem %s0, 14
  %s29 = sld [smem:[%s28]]
  %s30 = scalar_lea.smem %s0, 15
  %s31 = sld [smem:[%s30]]
  %s32 = scalar_lea.smem %s0, 16
  %s33 = sld [smem:[%s32]]
  %s34 = scalar_lea.smem %s0, 17
  %s35 = sld [smem:[%s34]]
  %s36 = scalar_lea.smem %s0, 18
  %s37 = sld [smem:[%s36]]
  %s38 = scalar_lea.smem %s0, 19
  %s39 = sld [smem:[%s38]]
  %s40 = scalar_lea.smem %s0, 20
  %s41 = sld [smem:[%s40]]
  %s42 = scalar_lea.smem %s0, 21
  %s43 = sld [smem:[%s42]]
  %s44 = scalar_lea.smem %s0, 22
  %s45 = sld [smem:[%s44]]
  %s46 = scalar_lea.smem %s0, 23
  %s47 = sld [smem:[%s46]]
  %s48 = scalar_lea.smem %s0, 24
  %s49 = sld [smem:[%s48]]
  %s50 = scalar_lea.smem %s0, 25
  %s51 = sld [smem:[%s50]]
  %s52 = scalar_lea.smem %s0, 26
  %s53 = sld [smem:[%s52]]
  %s54 = scalar_lea.smem %s0, 27
  %s55 = sld [smem:[%s54]]
  %s56 = scalar_lea.smem %s0, 28
  %s57 = sld [smem:[%s56]]
  %s58 = scalar_lea.smem %s0, 29
  %s59 = sld [smem:[%s58]]
  %s60 = scalar_lea.smem %s0, 30
  %s61 = sld [smem:[%s60]]
  %62 = xla_tuple %s57, %s59, %s61
  %s63 = sld [smem:[#allocation0]]
  $region217: #{tpu_custom_call.1} parent=0
    _
  %s65 = ssub.s32 1, %s63
  %s66 = scalar_select 0, %s65, %s63
  $region1: #{tpu_custom_call.1} parent=0
    #allocation6 [shape = 'u8[16384]{0}', space=vmem, size = 0x4000, scoped, tag = 'input window, operand 1']
    #allocation7 [shape = 's32[2]{0}', space=sflag, size = 0x8, scoped, tag = 'scoped memory for tpu_custom_call.1']
    #allocation8 [shape = 's32[2]{0}', space=sflag, size = 0x8, scoped, tag = 'scoped memory for tpu_custom_call.1']
    #allocation9 [shape = 'u8[512]{0}', space=vmem, size = 0x400, scoped, tag = 'input window, operand 3, single buffered']
    #allocation10 [shape = 's32[1]{0}', space=sflag, size = 0x4, scoped, tag = 'scoped memory for tpu_custom_call.1']
    #allocation11 [shape = 'u8[8192]{0}', space=vmem, size = 0x2000, scoped, tag = 'input window, operand 4, single buffered']
    #allocation12 [shape = 'u8[512]{0}', space=vmem, size = 0x400, scoped, tag = 'input window, operand 5, single buffered']
    #allocation13 [shape = 's32[1]{0}', space=sflag, size = 0x4, scoped, tag = 'scoped memory for tpu_custom_call.1']
    #allocation14 [shape = 'u8[8192]{0}', space=vmem, size = 0x2000, scoped, tag = 'input window, operand 6, single buffered']
    #allocation15 [shape = 'u8[512]{0}', space=vmem, size = 0x400, scoped, tag = 'input window, operand 7, single buffered']
    #allocation16 [shape = 's32[1]{0}', space=sflag, size = 0x4, scoped, tag = 'scoped memory for tpu_custom_call.1']
    #allocation17 [shape = 'u8[8192]{0}', space=vmem, size = 0x2000, scoped, tag = 'input window, operand 8, single buffered']
    #allocation18 [shape = 'u8[512]{0}', space=vmem, size = 0x400, scoped, tag = 'input window, operand 9, single buffered']
    #allocation19 [shape = 's32[1]{0}', space=sflag, size = 0x4, scoped, tag = 'scoped memory for tpu_custom_call.1']
    #allocation20 [shape = 'u8[512]{0}', space=vmem, size = 0x400, scoped, tag = 'input window, operand 10, single buffered']
    #allocation21 [shape = 'u8[512]{0}', space=vmem, size = 0x400, scoped, tag = 'input window, operand 11, single buffered']
    #allocation22 [shape = 's32[1]{0}', space=sflag, size = 0x4, scoped, tag = 'scoped memory for tpu_custom_call.1']
    #allocation23 [shape = 'u8[512]{0}', space=vmem, size = 0x400, scoped, tag = 'input window, operand 13, single buffered']
    #allocation24 [shape = 'u8[512]{0}', space=vmem, size = 0x400, scoped, tag = 'input window, operand 15, single buffered']
    #allocation25 [shape = 's32[1]{0}', space=sflag, size = 0x4, scoped, tag = 'scoped memory for tpu_custom_call.1']
    #allocation26 [shape = 'u8[8192]{0}', space=vmem, size = 0x2000, scoped, tag = 'input window, operand 16, single buffered']
    #allocation27 [shape = 'u8[512]{0}', space=vmem, size = 0x400, scoped, tag = 'input window, operand 17, single buffered']
    #allocation28 [shape = 's32[1]{0}', space=sflag, size = 0x4, scoped, tag = 'scoped memory for tpu_custom_call.1']
    #allocation29 [shape = 'u8[16384]{0}', space=vmem, size = 0x4000, scoped, tag = 'output window, operand 0']
    #allocation30 [shape = 'u8[8192]{0}', space=vmem, size = 0x2000, scoped, tag = 'output window, operand 1']
    #allocation31 [shape = 's32[2]{0}', space=sflag, size = 0x8, scoped, tag = 'scoped memory for tpu_custom_call.1']
    #allocation32 [shape = 'u8[8192]{0}', space=vmem, size = 0x2000, scoped, tag = 'output window, operand 2']
    %67 = vsyncpa [#allocation7], 0
    %s68 = scalar_lea.sflag [#allocation7], 1
    %69 = vsyncpa %s68, 0
    %70 = vsyncpa [#allocation10], 0
    %71 = vsyncpa [#allocation13], 0
    %72 = vsyncpa [#allocation16], 0
    %73 = vsyncpa [#allocation19], 0
    %74 = vsyncpa [#allocation22], 0
    %75 = vsyncpa [#allocation25], 0
    %76 = vsyncpa [#allocation28], 0
    %77 = vsyncpa [#allocation8], 0
    %s78 = scalar_lea.sflag [#allocation8], 1
    %79 = vsyncpa %s78, 0
    %80 = vsyncpa [#allocation31], 0
    %s81 = scalar_lea.sflag [#allocation31], 1
    %82 = vsyncpa %s81, 0
    loop: start=0, step=1, limit=4
    $region2: #{tpu_custom_call.1} parent=1 // loop_pre_header
      _
    $region3: #{tpu_custom_call.1} parent=1 // loop_header
      %s84 = sphi 0, %s88
      %p85 = scmp.ge.s32.totalorder %s84, 4
      %s94 = sphi 0, %s96
      %s97 = sphi 0, %s94
      %s98 = sphi 0, %s97
      %s114 = sphi 0, %s98
      %s120 = sphi 0, %s122
      %s123 = sphi 0, %s120
      %s124 = sphi 0, %s123
      %s140 = sphi 0, %s124
      %s144 = sphi 0, %s144
      %s146 = sphi 0, %s144
      %s147 = sphi 0, %s146
      %s161 = sphi 0, %s147
      %s165 = sphi 0, %s165
      %s167 = sphi 0, %s165
      %s168 = sphi 0, %s167
      %s182 = sphi 0, %s168
      %s186 = sphi 0, %s186
      %s188 = sphi 0, %s186
      %s189 = sphi 0, %s188
      %s203 = sphi 0, %s189
      %s207 = sphi 0, %s207
      %s209 = sphi 0, %s207
      %s210 = sphi 0, %s209
      %s224 = sphi 0, %s210
      %s228 = sphi 0, %s228
      %s230 = sphi 0, %s228
      %s231 = sphi 0, %s230
      %s245 = sphi 0, %s231
      %s249 = sphi 0, %s249
      %s251 = sphi 0, %s249
      %s252 = sphi 0, %s251
      %s266 = sphi 0, %s252
      %s270 = sphi 0, %s270
      %s272 = sphi 0, %s270
      %s273 = sphi 0, %s272
      %s287 = sphi 0, %s273
      %s291 = sphi 0, %s291
      %s293 = sphi 0, %s291
      %s294 = sphi 0, %s293
      %s308 = sphi 0, %s294
      %s312 = sphi 0, %s312
      %s314 = sphi 0, %s312
      %s315 = sphi 0, %s314
      %s329 = sphi 0, %s315
      %s333 = sphi 0, %s333
      %s335 = sphi 0, %s333
      %s336 = sphi 0, %s335
      %s350 = sphi 0, %s336
      %s354 = sphi 0, %s354
      %s356 = sphi 0, %s354
      %s357 = sphi 0, %s356
      %s371 = sphi 0, %s357
      %s375 = sphi 0, %s375
      %s377 = sphi 0, %s375
      %s378 = sphi 0, %s377
      %s392 = sphi 0, %s378
      %s396 = sphi 0, %s396
      %s398 = sphi 0, %s396
      %s399 = sphi 0, %s398
      %s413 = sphi 0, %s399
      %s417 = sphi 0, %s417
      %s419 = sphi 0, %s417
      %s420 = sphi 0, %s419
      %s434 = sphi 0, %s420
      %s438 = sphi 0, %s438
      %s440 = sphi 0, %s438
      %s441 = sphi 0, %s440
      %s455 = sphi 0, %s441
      %s459 = sphi 0, %s459
      %s461 = sphi 0, %s459
      %s462 = sphi 0, %s461
      %s476 = sphi 0, %s462
      %s480 = sphi 0, %s480
      %s482 = sphi 0, %s480
      %s483 = sphi 0, %s482
      %s497 = sphi 0, %s483
      %s501 = sphi 0, %s501
      %s503 = sphi 0, %s501
      %s504 = sphi 0, %s503
      %s518 = sphi 0, %s504
      %s522 = sphi 0, %s522
      %s524 = sphi 0, %s522
      %s525 = sphi 0, %s524
      %s539 = sphi 0, %s525
      %s543 = sphi 0, %s543
      %s545 = sphi 0, %s543
      %s546 = sphi 0, %s545
      %s560 = sphi 0, %s546
      %s564 = sphi 0, %s564
      %s566 = sphi 0, %s564
      %s567 = sphi 0, %s566
      %s581 = sphi 0, %s567
      %s585 = sphi 0, %s585
      %s587 = sphi 0, %s585
      %s588 = sphi 0, %s587
      %s602 = sphi 0, %s588
      %s606 = sphi 0, %s606
      %s608 = sphi 0, %s606
      %s609 = sphi 0, %s608
      %s623 = sphi 0, %s609
      %s627 = sphi 0, %s627
      %s629 = sphi 0, %s627
      %s630 = sphi 0, %s629
      %s644 = sphi 0, %s630
      %s648 = sphi 0, %s648
      %s650 = sphi 0, %s648
      %s651 = sphi 0, %s650
      %s665 = sphi 0, %s651
      %s669 = sphi 0, %s669
      %s671 = sphi 0, %s669
      %s672 = sphi 0, %s671
      %s686 = sphi 0, %s672
      %s692 = sphi 0, %s694
      %s695 = sphi 0, %s692
      %s696 = sphi 0, %s695
      %s712 = sphi 0, %s696
      %s718 = sphi 0, %s720
      %s721 = sphi 0, %s718
      %s722 = sphi 0, %s721
      %s738 = sphi 0, %s722
      %s744 = sphi 0, %s746
      %s747 = sphi 0, %s744
      %s748 = sphi 0, %s747
      %s764 = sphi 0, %s748
    $region4: #{tpu_custom_call.1} parent=1 // loop_header_branch
      %87 = sbr.rel (%p85) target = $region8
    $region5: #{tpu_custom_call.1} parent=1 // loop_body
      %s89 = ssub.s32 %s84, 1
      %s90 = ssub.s32 %s84, 2
      %s91 = sadd.s32 %s84, 1
      %s92 = ssub.s32 %s84, %s91
      %p93 = scmp.eq.s32.totalorder %s92, 0
      %s95 = sadd.s32 %s94, 1
      %s96 = scalar_select %p93, %s94, %s95
      %p99 = pneg %p93
      %p100 = scmp.eq.s32.totalorder %s84, 1
      %p101 = por %p99, %p100
      %p102 = scmp.ne.s32.totalorder %s94, %s97
      %p103 = scmp.eq.s32.totalorder %s84, 0
      %p104 = por %p102, %p103
      %p105 = scmp.ne.s32.totalorder %s94, %s97
      %p106 = scmp.eq.s32.totalorder %s89, 1
      %p107 = por %p105, %p106
      %p108 = scmp.ne.s32.totalorder %s97, %s98
      %p109 = scmp.eq.s32.totalorder %s89, 0
      %p110 = por %p108, %p109
      %p111 = scmp.ne.s32.totalorder %s97, %s98
      %p112 = scmp.eq.s32.totalorder %s90, 1
      %p113 = por %p111, %p112
      %p115 = scmp.ne.s32.totalorder %s98, %s114
      %p116 = scmp.eq.s32.totalorder %s90, 0
      %p117 = por %p115, %p116
      %s118 = ssub.s32 %s84, %s91
      %p119 = scmp.eq.s32.totalorder %s118, 0
      %s121 = sadd.s32 %s120, 1
      %s122 = scalar_select %p119, %s120, %s121
      %p125 = pneg %p119
      %p126 = scmp.eq.s32.totalorder %s84, 1
      %p127 = por %p125, %p126
      %p128 = scmp.ne.s32.totalorder %s120, %s123
      %p129 = scmp.eq.s32.totalorder %s84, 0
      %p130 = por %p128, %p129
      %p131 = scmp.ne.s32.totalorder %s120, %s123
      %p132 = scmp.eq.s32.totalorder %s89, 1
      %p133 = por %p131, %p132
      %p134 = scmp.ne.s32.totalorder %s123, %s124
      %p135 = scmp.eq.s32.totalorder %s89, 0
      %p136 = por %p134, %p135
      %p137 = scmp.ne.s32.totalorder %s123, %s124
      %p138 = scmp.eq.s32.totalorder %s90, 1
      %p139 = por %p137, %p138
      %p141 = scmp.ne.s32.totalorder %s124, %s140
      %p142 = scmp.eq.s32.totalorder %s90, 0
      %p143 = por %p141, %p142
      %s145 = sadd.s32 %s144, 1
      %p148 = scmp.eq.s32.totalorder %s84, 1
      %p149 = scmp.ne.s32.totalorder %s144, %s146
      %p150 = scmp.eq.s32.totalorder %s84, 0
      %p151 = por %p149, %p150
      %p152 = scmp.ne.s32.totalorder %s144, %s146
      %p153 = scmp.eq.s32.totalorder %s89, 1
      %p154 = por %p152, %p153
      %p155 = scmp.ne.s32.totalorder %s146, %s147
      %p156 = scmp.eq.s32.totalorder %s89, 0
      %p157 = por %p155, %p156
      %p158 = scmp.ne.s32.totalorder %s146, %s147
      %p159 = scmp.eq.s32.totalorder %s90, 1
      %p160 = por %p158, %p159
      %p162 = scmp.ne.s32.totalorder %s147, %s161
      %p163 = scmp.eq.s32.totalorder %s90, 0
      %p164 = por %p162, %p163
      %s166 = sadd.s32 %s165, 1
      %p169 = scmp.eq.s32.totalorder %s84, 1
      %p170 = scmp.ne.s32.totalorder %s165, %s167
      %p171 = scmp.eq.s32.totalorder %s84, 0
      %p172 = por %p170, %p171
      %p173 = scmp.ne.s32.totalorder %s165, %s167
      %p174 = scmp.eq.s32.totalorder %s89, 1
      %p175 = por %p173, %p174
      %p176 = scmp.ne.s32.totalorder %s167, %s168
      %p177 = scmp.eq.s32.totalorder %s89, 0
      %p178 = por %p176, %p177
      %p179 = scmp.ne.s32.totalorder %s167, %s168
      %p180 = scmp.eq.s32.totalorder %s90, 1
      %p181 = por %p179, %p180
      %p183 = scmp.ne.s32.totalorder %s168, %s182
      %p184 = scmp.eq.s32.totalorder %s90, 0
      %p185 = por %p183, %p184
      %s187 = sadd.s32 %s186, 1
      %p190 = scmp.eq.s32.totalorder %s84, 1
      %p191 = scmp.ne.s32.totalorder %s186, %s188
      %p192 = scmp.eq.s32.totalorder %s84, 0
      %p193 = por %p191, %p192
      %p194 = scmp.ne.s32.totalorder %s186, %s188
      %p195 = scmp.eq.s32.totalorder %s89, 1
      %p196 = por %p194, %p195
      %p197 = scmp.ne.s32.totalorder %s188, %s189
      %p198 = scmp.eq.s32.totalorder %s89, 0
      %p199 = por %p197, %p198
      %p200 = scmp.ne.s32.totalorder %s188, %s189
      %p201 = scmp.eq.s32.totalorder %s90, 1
      %p202 = por %p200, %p201
      %p204 = scmp.ne.s32.totalorder %s189, %s203
      %p205 = scmp.eq.s32.totalorder %s90, 0
      %p206 = por %p204, %p205
      %s208 = sadd.s32 %s207, 1
      %p211 = scmp.eq.s32.totalorder %s84, 1
      %p212 = scmp.ne.s32.totalorder %s207, %s209
      %p213 = scmp.eq.s32.totalorder %s84, 0
      %p214 = por %p212, %p213
      %p215 = scmp.ne.s32.totalorder %s207, %s209
      %p216 = scmp.eq.s32.totalorder %s89, 1
      %p217 = por %p215, %p216
      %p218 = scmp.ne.s32.totalorder %s209, %s210
      %p219 = scmp.eq.s32.totalorder %s89, 0
      %p220 = por %p218, %p219
      %p221 = scmp.ne.s32.totalorder %s209, %s210
      %p222 = scmp.eq.s32.totalorder %s90, 1
      %p223 = por %p221, %p222
      %p225 = scmp.ne.s32.totalorder %s210, %s224
      %p226 = scmp.eq.s32.totalorder %s90, 0
      %p227 = por %p225, %p226
      %s229 = sadd.s32 %s228, 1
      %p232 = scmp.eq.s32.totalorder %s84, 1
      %p233 = scmp.ne.s32.totalorder %s228, %s230
      %p234 = scmp.eq.s32.totalorder %s84, 0
      %p235 = por %p233, %p234
      %p236 = scmp.ne.s32.totalorder %s228, %s230
      %p237 = scmp.eq.s32.totalorder %s89, 1
      %p238 = por %p236, %p237
      %p239 = scmp.ne.s32.totalorder %s230, %s231
      %p240 = scmp.eq.s32.totalorder %s89, 0
      %p241 = por %p239, %p240
      %p242 = scmp.ne.s32.totalorder %s230, %s231
      %p243 = scmp.eq.s32.totalorder %s90, 1
      %p244 = por %p242, %p243
      %p246 = scmp.ne.s32.totalorder %s231, %s245
      %p247 = scmp.eq.s32.totalorder %s90, 0
      %p248 = por %p246, %p247
      %s250 = sadd.s32 %s249, 1
      %p253 = scmp.eq.s32.totalorder %s84, 1
      %p254 = scmp.ne.s32.totalorder %s249, %s251
      %p255 = scmp.eq.s32.totalorder %s84, 0
      %p256 = por %p254, %p255
      %p257 = scmp.ne.s32.totalorder %s249, %s251
      %p258 = scmp.eq.s32.totalorder %s89, 1
      %p259 = por %p257, %p258
      %p260 = scmp.ne.s32.totalorder %s251, %s252
      %p261 = scmp.eq.s32.totalorder %s89, 0
      %p262 = por %p260, %p261
      %p263 = scmp.ne.s32.totalorder %s251, %s252
      %p264 = scmp.eq.s32.totalorder %s90, 1
      %p265 = por %p263, %p264
      %p267 = scmp.ne.s32.totalorder %s252, %s266
      %p268 = scmp.eq.s32.totalorder %s90, 0
      %p269 = por %p267, %p268
      %s271 = sadd.s32 %s270, 1
      %p274 = scmp.eq.s32.totalorder %s84, 1
      %p275 = scmp.ne.s32.totalorder %s270, %s272
      %p276 = scmp.eq.s32.totalorder %s84, 0
      %p277 = por %p275, %p276
      %p278 = scmp.ne.s32.totalorder %s270, %s272
      %p279 = scmp.eq.s32.totalorder %s89, 1
      %p280 = por %p278, %p279
      %p281 = scmp.ne.s32.totalorder %s272, %s273
      %p282 = scmp.eq.s32.totalorder %s89, 0
      %p283 = por %p281, %p282
      %p284 = scmp.ne.s32.totalorder %s272, %s273
      %p285 = scmp.eq.s32.totalorder %s90, 1
      %p286 = por %p284, %p285
      %p288 = scmp.ne.s32.totalorder %s273, %s287
      %p289 = scmp.eq.s32.totalorder %s90, 0
      %p290 = por %p288, %p289
      %s292 = sadd.s32 %s291, 1
      %p295 = scmp.eq.s32.totalorder %s84, 1
      %p296 = scmp.ne.s32.totalorder %s291, %s293
      %p297 = scmp.eq.s32.totalorder %s84, 0
      %p298 = por %p296, %p297
      %p299 = scmp.ne.s32.totalorder %s291, %s293
      %p300 = scmp.eq.s32.totalorder %s89, 1
      %p301 = por %p299, %p300
      %p302 = scmp.ne.s32.totalorder %s293, %s294
      %p303 = scmp.eq.s32.totalorder %s89, 0
      %p304 = por %p302, %p303
      %p305 = scmp.ne.s32.totalorder %s293, %s294
      %p306 = scmp.eq.s32.totalorder %s90, 1
      %p307 = por %p305, %p306
      %p309 = scmp.ne.s32.totalorder %s294, %s308
      %p310 = scmp.eq.s32.totalorder %s90, 0
      %p311 = por %p309, %p310
      %s313 = sadd.s32 %s312, 1
      %p316 = scmp.eq.s32.totalorder %s84, 1
      %p317 = scmp.ne.s32.totalorder %s312, %s314
      %p318 = scmp.eq.s32.totalorder %s84, 0
      %p319 = por %p317, %p318
      %p320 = scmp.ne.s32.totalorder %s312, %s314
      %p321 = scmp.eq.s32.totalorder %s89, 1
      %p322 = por %p320, %p321
      %p323 = scmp.ne.s32.totalorder %s314, %s315
      %p324 = scmp.eq.s32.totalorder %s89, 0
      %p325 = por %p323, %p324
      %p326 = scmp.ne.s32.totalorder %s314, %s315
      %p327 = scmp.eq.s32.totalorder %s90, 1
      %p328 = por %p326, %p327
      %p330 = scmp.ne.s32.totalorder %s315, %s329
      %p331 = scmp.eq.s32.totalorder %s90, 0
      %p332 = por %p330, %p331
      %s334 = sadd.s32 %s333, 1
      %p337 = scmp.eq.s32.totalorder %s84, 1
      %p338 = scmp.ne.s32.totalorder %s333, %s335
      %p339 = scmp.eq.s32.totalorder %s84, 0
      %p340 = por %p338, %p339
      %p341 = scmp.ne.s32.totalorder %s333, %s335
      %p342 = scmp.eq.s32.totalorder %s89, 1
      %p343 = por %p341, %p342
      %p344 = scmp.ne.s32.totalorder %s335, %s336
      %p345 = scmp.eq.s32.totalorder %s89, 0
      %p346 = por %p344, %p345
      %p347 = scmp.ne.s32.totalorder %s335, %s336
      %p348 = scmp.eq.s32.totalorder %s90, 1
      %p349 = por %p347, %p348
      %p351 = scmp.ne.s32.totalorder %s336, %s350
      %p352 = scmp.eq.s32.totalorder %s90, 0
      %p353 = por %p351, %p352
      %s355 = sadd.s32 %s354, 1
      %p358 = scmp.eq.s32.totalorder %s84, 1
      %p359 = scmp.ne.s32.totalorder %s354, %s356
      %p360 = scmp.eq.s32.totalorder %s84, 0
      %p361 = por %p359, %p360
      %p362 = scmp.ne.s32.totalorder %s354, %s356
      %p363 = scmp.eq.s32.totalorder %s89, 1
      %p364 = por %p362, %p363
      %p365 = scmp.ne.s32.totalorder %s356, %s357
      %p366 = scmp.eq.s32.totalorder %s89, 0
      %p367 = por %p365, %p366
      %p368 = scmp.ne.s32.totalorder %s356, %s357
      %p369 = scmp.eq.s32.totalorder %s90, 1
      %p370 = por %p368, %p369
      %p372 = scmp.ne.s32.totalorder %s357, %s371
      %p373 = scmp.eq.s32.totalorder %s90, 0
      %p374 = por %p372, %p373
      %s376 = sadd.s32 %s375, 1
      %p379 = scmp.eq.s32.totalorder %s84, 1
      %p380 = scmp.ne.s32.totalorder %s375, %s377
      %p381 = scmp.eq.s32.totalorder %s84, 0
      %p382 = por %p380, %p381
      %p383 = scmp.ne.s32.totalorder %s375, %s377
      %p384 = scmp.eq.s32.totalorder %s89, 1
      %p385 = por %p383, %p384
      %p386 = scmp.ne.s32.totalorder %s377, %s378
      %p387 = scmp.eq.s32.totalorder %s89, 0
      %p388 = por %p386, %p387
      %p389 = scmp.ne.s32.totalorder %s377, %s378
      %p390 = scmp.eq.s32.totalorder %s90, 1
      %p391 = por %p389, %p390
      %p393 = scmp.ne.s32.totalorder %s378, %s392
      %p394 = scmp.eq.s32.totalorder %s90, 0
      %p395 = por %p393, %p394
      %s397 = sadd.s32 %s396, 1
      %p400 = scmp.eq.s32.totalorder %s84, 1
      %p401 = scmp.ne.s32.totalorder %s396, %s398
      %p402 = scmp.eq.s32.totalorder %s84, 0
      %p403 = por %p401, %p402
      %p404 = scmp.ne.s32.totalorder %s396, %s398
      %p405 = scmp.eq.s32.totalorder %s89, 1
      %p406 = por %p404, %p405
      %p407 = scmp.ne.s32.totalorder %s398, %s399
      %p408 = scmp.eq.s32.totalorder %s89, 0
      %p409 = por %p407, %p408
      %p410 = scmp.ne.s32.totalorder %s398, %s399
      %p411 = scmp.eq.s32.totalorder %s90, 1
      %p412 = por %p410, %p411
      %p414 = scmp.ne.s32.totalorder %s399, %s413
      %p415 = scmp.eq.s32.totalorder %s90, 0
      %p416 = por %p414, %p415
      %s418 = sadd.s32 %s417, 1
      %p421 = scmp.eq.s32.totalorder %s84, 1
      %p422 = scmp.ne.s32.totalorder %s417, %s419
      %p423 = scmp.eq.s32.totalorder %s84, 0
      %p424 = por %p422, %p423
      %p425 = scmp.ne.s32.totalorder %s417, %s419
      %p426 = scmp.eq.s32.totalorder %s89, 1
      %p427 = por %p425, %p426
      %p428 = scmp.ne.s32.totalorder %s419, %s420
      %p429 = scmp.eq.s32.totalorder %s89, 0
      %p430 = por %p428, %p429
      %p431 = scmp.ne.s32.totalorder %s419, %s420
      %p432 = scmp.eq.s32.totalorder %s90, 1
      %p433 = por %p431, %p432
      %p435 = scmp.ne.s32.totalorder %s420, %s434
      %p436 = scmp.eq.s32.totalorder %s90, 0
      %p437 = por %p435, %p436
      %s439 = sadd.s32 %s438, 1
      %p442 = scmp.eq.s32.totalorder %s84, 1
      %p443 = scmp.ne.s32.totalorder %s438, %s440
      %p444 = scmp.eq.s32.totalorder %s84, 0
      %p445 = por %p443, %p444
      %p446 = scmp.ne.s32.totalorder %s438, %s440
      %p447 = scmp.eq.s32.totalorder %s89, 1
      %p448 = por %p446, %p447
      %p449 = scmp.ne.s32.totalorder %s440, %s441
      %p450 = scmp.eq.s32.totalorder %s89, 0
      %p451 = por %p449, %p450
      %p452 = scmp.ne.s32.totalorder %s440, %s441
      %p453 = scmp.eq.s32.totalorder %s90, 1
      %p454 = por %p452, %p453
      %p456 = scmp.ne.s32.totalorder %s441, %s455
      %p457 = scmp.eq.s32.totalorder %s90, 0
      %p458 = por %p456, %p457
      %s460 = sadd.s32 %s459, 1
      %p463 = scmp.eq.s32.totalorder %s84, 1
      %p464 = scmp.ne.s32.totalorder %s459, %s461
      %p465 = scmp.eq.s32.totalorder %s84, 0
      %p466 = por %p464, %p465
      %p467 = scmp.ne.s32.totalorder %s459, %s461
      %p468 = scmp.eq.s32.totalorder %s89, 1
      %p469 = por %p467, %p468
      %p470 = scmp.ne.s32.totalorder %s461, %s462
      %p471 = scmp.eq.s32.totalorder %s89, 0
      %p472 = por %p470, %p471
      %p473 = scmp.ne.s32.totalorder %s461, %s462
      %p474 = scmp.eq.s32.totalorder %s90, 1
      %p475 = por %p473, %p474
      %p477 = scmp.ne.s32.totalorder %s462, %s476
      %p478 = scmp.eq.s32.totalorder %s90, 0
      %p479 = por %p477, %p478
      %s481 = sadd.s32 %s480, 1
      %p484 = scmp.eq.s32.totalorder %s84, 1
      %p485 = scmp.ne.s32.totalorder %s480, %s482
      %p486 = scmp.eq.s32.totalorder %s84, 0
      %p487 = por %p485, %p486
      %p488 = scmp.ne.s32.totalorder %s480, %s482
      %p489 = scmp.eq.s32.totalorder %s89, 1
      %p490 = por %p488, %p489
      %p491 = scmp.ne.s32.totalorder %s482, %s483
      %p492 = scmp.eq.s32.totalorder %s89, 0
      %p493 = por %p491, %p492
      %p494 = scmp.ne.s32.totalorder %s482, %s483
      %p495 = scmp.eq.s32.totalorder %s90, 1
      %p496 = por %p494, %p495
      %p498 = scmp.ne.s32.totalorder %s483, %s497
      %p499 = scmp.eq.s32.totalorder %s90, 0
      %p500 = por %p498, %p499
      %s502 = sadd.s32 %s501, 1
      %p505 = scmp.eq.s32.totalorder %s84, 1
      %p506 = scmp.ne.s32.totalorder %s501, %s503
      %p507 = scmp.eq.s32.totalorder %s84, 0
      %p508 = por %p506, %p507
      %p509 = scmp.ne.s32.totalorder %s501, %s503
      %p510 = scmp.eq.s32.totalorder %s89, 1
      %p511 = por %p509, %p510
      %p512 = scmp.ne.s32.totalorder %s503, %s504
      %p513 = scmp.eq.s32.totalorder %s89, 0
      %p514 = por %p512, %p513
      %p515 = scmp.ne.s32.totalorder %s503, %s504
      %p516 = scmp.eq.s32.totalorder %s90, 1
      %p517 = por %p515, %p516
      %p519 = scmp.ne.s32.totalorder %s504, %s518
      %p520 = scmp.eq.s32.totalorder %s90, 0
      %p521 = por %p519, %p520
      %s523 = sadd.s32 %s522, 1
      %p526 = scmp.eq.s32.totalorder %s84, 1
      %p527 = scmp.ne.s32.totalorder %s522, %s524
      %p528 = scmp.eq.s32.totalorder %s84, 0
      %p529 = por %p527, %p528
      %p530 = scmp.ne.s32.totalorder %s522, %s524
      %p531 = scmp.eq.s32.totalorder %s89, 1
      %p532 = por %p530, %p531
      %p533 = scmp.ne.s32.totalorder %s524, %s525
      %p534 = scmp.eq.s32.totalorder %s89, 0
      %p535 = por %p533, %p534
      %p536 = scmp.ne.s32.totalorder %s524, %s525
      %p537 = scmp.eq.s32.totalorder %s90, 1
      %p538 = por %p536, %p537
      %p540 = scmp.ne.s32.totalorder %s525, %s539
      %p541 = scmp.eq.s32.totalorder %s90, 0
      %p542 = por %p540, %p541
      %s544 = sadd.s32 %s543, 1
      %p547 = scmp.eq.s32.totalorder %s84, 1
      %p548 = scmp.ne.s32.totalorder %s543, %s545
      %p549 = scmp.eq.s32.totalorder %s84, 0
      %p550 = por %p548, %p549
      %p551 = scmp.ne.s32.totalorder %s543, %s545
      %p552 = scmp.eq.s32.totalorder %s89, 1
      %p553 = por %p551, %p552
      %p554 = scmp.ne.s32.totalorder %s545, %s546
      %p555 = scmp.eq.s32.totalorder %s89, 0
      %p556 = por %p554, %p555
      %p557 = scmp.ne.s32.totalorder %s545, %s546
      %p558 = scmp.eq.s32.totalorder %s90, 1
      %p559 = por %p557, %p558
      %p561 = scmp.ne.s32.totalorder %s546, %s560
      %p562 = scmp.eq.s32.totalorder %s90, 0
      %p563 = por %p561, %p562
      %s565 = sadd.s32 %s564, 1
      %p568 = scmp.eq.s32.totalorder %s84, 1
      %p569 = scmp.ne.s32.totalorder %s564, %s566
      %p570 = scmp.eq.s32.totalorder %s84, 0
      %p571 = por %p569, %p570
      %p572 = scmp.ne.s32.totalorder %s564, %s566
      %p573 = scmp.eq.s32.totalorder %s89, 1
      %p574 = por %p572, %p573
      %p575 = scmp.ne.s32.totalorder %s566, %s567
      %p576 = scmp.eq.s32.totalorder %s89, 0
      %p577 = por %p575, %p576
      %p578 = scmp.ne.s32.totalorder %s566, %s567
      %p579 = scmp.eq.s32.totalorder %s90, 1
      %p580 = por %p578, %p579
      %p582 = scmp.ne.s32.totalorder %s567, %s581
      %p583 = scmp.eq.s32.totalorder %s90, 0
      %p584 = por %p582, %p583
      %s586 = sadd.s32 %s585, 1
      %p589 = scmp.eq.s32.totalorder %s84, 1
      %p590 = scmp.ne.s32.totalorder %s585, %s587
      %p591 = scmp.eq.s32.totalorder %s84, 0
      %p592 = por %p590, %p591
      %p593 = scmp.ne.s32.totalorder %s585, %s587
      %p594 = scmp.eq.s32.totalorder %s89, 1
      %p595 = por %p593, %p594
      %p596 = scmp.ne.s32.totalorder %s587, %s588
      %p597 = scmp.eq.s32.totalorder %s89, 0
      %p598 = por %p596, %p597
      %p599 = scmp.ne.s32.totalorder %s587, %s588
      %p600 = scmp.eq.s32.totalorder %s90, 1
      %p601 = por %p599, %p600
      %p603 = scmp.ne.s32.totalorder %s588, %s602
      %p604 = scmp.eq.s32.totalorder %s90, 0
      %p605 = por %p603, %p604
      %s607 = sadd.s32 %s606, 1
      %p610 = scmp.eq.s32.totalorder %s84, 1
      %p611 = scmp.ne.s32.totalorder %s606, %s608
      %p612 = scmp.eq.s32.totalorder %s84, 0
      %p613 = por %p611, %p612
      %p614 = scmp.ne.s32.totalorder %s606, %s608
      %p615 = scmp.eq.s32.totalorder %s89, 1
      %p616 = por %p614, %p615
      %p617 = scmp.ne.s32.totalorder %s608, %s609
      %p618 = scmp.eq.s32.totalorder %s89, 0
      %p619 = por %p617, %p618
      %p620 = scmp.ne.s32.totalorder %s608, %s609
      %p621 = scmp.eq.s32.totalorder %s90, 1
      %p622 = por %p620, %p621
      %p624 = scmp.ne.s32.totalorder %s609, %s623
      %p625 = scmp.eq.s32.totalorder %s90, 0
      %p626 = por %p624, %p625
      %s628 = sadd.s32 %s627, 1
      %p631 = scmp.eq.s32.totalorder %s84, 1
      %p632 = scmp.ne.s32.totalorder %s627, %s629
      %p633 = scmp.eq.s32.totalorder %s84, 0
      %p634 = por %p632, %p633
      %p635 = scmp.ne.s32.totalorder %s627, %s629
      %p636 = scmp.eq.s32.totalorder %s89, 1
      %p637 = por %p635, %p636
      %p638 = scmp.ne.s32.totalorder %s629, %s630
      %p639 = scmp.eq.s32.totalorder %s89, 0
      %p640 = por %p638, %p639
      %p641 = scmp.ne.s32.totalorder %s629, %s630
      %p642 = scmp.eq.s32.totalorder %s90, 1
      %p643 = por %p641, %p642
      %p645 = scmp.ne.s32.totalorder %s630, %s644
      %p646 = scmp.eq.s32.totalorder %s90, 0
      %p647 = por %p645, %p646
      %s649 = sadd.s32 %s648, 1
      %p652 = scmp.eq.s32.totalorder %s84, 1
      %p653 = scmp.ne.s32.totalorder %s648, %s650
      %p654 = scmp.eq.s32.totalorder %s84, 0
      %p655 = por %p653, %p654
      %p656 = scmp.ne.s32.totalorder %s648, %s650
      %p657 = scmp.eq.s32.totalorder %s89, 1
      %p658 = por %p656, %p657
      %p659 = scmp.ne.s32.totalorder %s650, %s651
      %p660 = scmp.eq.s32.totalorder %s89, 0
      %p661 = por %p659, %p660
      %p662 = scmp.ne.s32.totalorder %s650, %s651
      %p663 = scmp.eq.s32.totalorder %s90, 1
      %p664 = por %p662, %p663
      %p666 = scmp.ne.s32.totalorder %s651, %s665
      %p667 = scmp.eq.s32.totalorder %s90, 0
      %p668 = por %p666, %p667
      %s670 = sadd.s32 %s669, 1
      %p673 = scmp.eq.s32.totalorder %s84, 1
      %p674 = scmp.ne.s32.totalorder %s669, %s671
      %p675 = scmp.eq.s32.totalorder %s84, 0
      %p676 = por %p674, %p675
      %p677 = scmp.ne.s32.totalorder %s669, %s671
      %p678 = scmp.eq.s32.totalorder %s89, 1
      %p679 = por %p677, %p678
      %p680 = scmp.ne.s32.totalorder %s671, %s672
      %p681 = scmp.eq.s32.totalorder %s89, 0
      %p682 = por %p680, %p681
      %p683 = scmp.ne.s32.totalorder %s671, %s672
      %p684 = scmp.eq.s32.totalorder %s90, 1
      %p685 = por %p683, %p684
      %p687 = scmp.ne.s32.totalorder %s672, %s686
      %p688 = scmp.eq.s32.totalorder %s90, 0
      %p689 = por %p687, %p688
      %s690 = ssub.s32 %s84, %s91
      %p691 = scmp.eq.s32.totalorder %s690, 0
      %s693 = sadd.s32 %s692, 1
      %s694 = scalar_select %p691, %s692, %s693
      %p697 = pneg %p691
      %p698 = scmp.eq.s32.totalorder %s84, 1
      %p699 = por %p697, %p698
      %p700 = scmp.ne.s32.totalorder %s692, %s695
      %p701 = scmp.eq.s32.totalorder %s84, 0
      %p702 = por %p700, %p701
      %p703 = scmp.ne.s32.totalorder %s692, %s695
      %p704 = scmp.eq.s32.totalorder %s89, 1
      %p705 = por %p703, %p704
      %p706 = scmp.ne.s32.totalorder %s695, %s696
      %p707 = scmp.eq.s32.totalorder %s89, 0
      %p708 = por %p706, %p707
      %p709 = scmp.ne.s32.totalorder %s695, %s696
      %p710 = scmp.eq.s32.totalorder %s90, 1
      %p711 = por %p709, %p710
      %p713 = scmp.ne.s32.totalorder %s696, %s712
      %p714 = scmp.eq.s32.totalorder %s90, 0
      %p715 = por %p713, %p714
      %s716 = ssub.s32 %s84, %s91
      %p717 = scmp.eq.s32.totalorder %s716, 0
      %s719 = sadd.s32 %s718, 1
      %s720 = scalar_select %p717, %s718, %s719
      %p723 = pneg %p717
      %p724 = scmp.eq.s32.totalorder %s84, 1
      %p725 = por %p723, %p724
      %p726 = scmp.ne.s32.totalorder %s718, %s721
      %p727 = scmp.eq.s32.totalorder %s84, 0
      %p728 = por %p726, %p727
      %p729 = scmp.ne.s32.totalorder %s718, %s721
      %p730 = scmp.eq.s32.totalorder %s89, 1
      %p731 = por %p729, %p730
      %p732 = scmp.ne.s32.totalorder %s721, %s722
      %p733 = scmp.eq.s32.totalorder %s89, 0
      %p734 = por %p732, %p733
      %p735 = scmp.ne.s32.totalorder %s721, %s722
      %p736 = scmp.eq.s32.totalorder %s90, 1
      %p737 = por %p735, %p736
      %p739 = scmp.ne.s32.totalorder %s722, %s738
      %p740 = scmp.eq.s32.totalorder %s90, 0
      %p741 = por %p739, %p740
      %s742 = ssub.s32 %s84, %s91
      %p743 = scmp.eq.s32.totalorder %s742, 0
      %s745 = sadd.s32 %s744, 1
      %s746 = scalar_select %p743, %s744, %s745
      %p749 = pneg %p743
      %p750 = scmp.eq.s32.totalorder %s84, 1
      %p751 = por %p749, %p750
      %p752 = scmp.ne.s32.totalorder %s744, %s747
      %p753 = scmp.eq.s32.totalorder %s84, 0
      %p754 = por %p752, %p753
      %p755 = scmp.ne.s32.totalorder %s744, %s747
      %p756 = scmp.eq.s32.totalorder %s89, 1
      %p757 = por %p755, %p756
      %p758 = scmp.ne.s32.totalorder %s747, %s748
      %p759 = scmp.eq.s32.totalorder %s89, 0
      %p760 = por %p758, %p759
      %p761 = scmp.ne.s32.totalorder %s747, %s748
      %p762 = scmp.eq.s32.totalorder %s90, 1
      %p763 = por %p761, %p762
      %p765 = scmp.ne.s32.totalorder %s748, %s764
      %p766 = scmp.eq.s32.totalorder %s90, 0
      %p767 = por %p765, %p766
      %p768 = scmp.le.s32.totalorder 1, %s84
      %p769 = scmp.lt.s32.totalorder %s84, 3
      %p770 = pnand %p768, %p769
      %p771 = pneg %p770
      // Predicated region
      $region9: #{tpu_custom_call.1} parent=5 // pred_check
        _
      $region10: #{tpu_custom_call.1} parent=5 // pred_check_branch
        %773 = sbr.rel (%p770) target = $region12
      $region11: #{tpu_custom_call.1} parent=5 // pred_region
        %s774 = ssub.s32 %s84, 1
        // Predicated region
        $region13: #{tpu_custom_call.1} parent=11 // pred_check
          %p775 = pneg %p157
        $region14: #{tpu_custom_call.1} parent=11 // pred_check_branch
          %777 = sbr.rel (%p775) target = $region16
        $region15: #{tpu_custom_call.1} parent=11 // pred_region
          _
        $region16: #{tpu_custom_call.1} parent=11 // pred_fallthru
          _
        // Predicated region
        $region17: #{tpu_custom_call.1} parent=11 // pred_check
          %p778 = pneg %p178
        $region18: #{tpu_custom_call.1} parent=11 // pred_check_branch
          %780 = sbr.rel (%p778) target = $region20
        $region19: #{tpu_custom_call.1} parent=11 // pred_region
          %s782 = ssub.s32 16, 16
          %783 = vsyncadd [#allocation10], %s782
          %s785 = sshll.u32 [#allocation9], 4
          %s786 = int_to_ptr.vmem [resolvable:$true] %s785
          %788 = dma.hbm_to_vmem [thread:$0]  %s7, 16, %s786, [#allocation10]
        $region20: #{tpu_custom_call.1} parent=11 // pred_fallthru
          _
        // Predicated region
        $region21: #{tpu_custom_call.1} parent=11 // pred_check
          %p789 = pneg %p199
        $region22: #{tpu_custom_call.1} parent=11 // pred_check_branch
          %791 = sbr.rel (%p789) target = $region24
        $region23: #{tpu_custom_call.1} parent=11 // pred_region
          %s793 = ssub.s32 256, 256
          %794 = vsyncadd [#allocation10], %s793
          %s795 = sshll.u32 [#allocation11], 4
          %s796 = int_to_ptr.vmem [resolvable:$true] %s795
          %801 = dma.hbm_to_vmem [thread:$0]  %s9, 256, %s796, [#allocation10], 64, 64, 4
        $region24: #{tpu_custom_call.1} parent=11 // pred_fallthru
          _
        // Predicated region
        $region25: #{tpu_custom_call.1} parent=11 // pred_check
          %p802 = pneg %p220
        $region26: #{tpu_custom_call.1} parent=11 // pred_check_branch
          %804 = sbr.rel (%p802) target = $region28
        $region27: #{tpu_custom_call.1} parent=11 // pred_region
          %s806 = ssub.s32 16, 16
          %807 = vsyncadd [#allocation13], %s806
          %s809 = sshll.u32 [#allocation12], 4
          %s810 = int_to_ptr.vmem [resolvable:$true] %s809
          %812 = dma.hbm_to_vmem [thread:$0]  %s11, 16, %s810, [#allocation13]
        $region28: #{tpu_custom_call.1} parent=11 // pred_fallthru
          _
        // Predicated region
        $region29: #{tpu_custom_call.1} parent=11 // pred_check
          %p813 = pneg %p241
        $region30: #{tpu_custom_call.1} parent=11 // pred_check_branch
          %815 = sbr.rel (%p813) target = $region32
        $region31: #{tpu_custom_call.1} parent=11 // pred_region
          %s817 = ssub.s32 256, 256
          %818 = vsyncadd [#allocation13], %s817
          %s819 = sshll.u32 [#allocation14], 4
          %s820 = int_to_ptr.vmem [resolvable:$true] %s819
          %825 = dma.hbm_to_vmem [thread:$0]  %s13, 256, %s820, [#allocation13], 64, 64, 4
        $region32: #{tpu_custom_call.1} parent=11 // pred_fallthru
          _
        // Predicated region
        $region33: #{tpu_custom_call.1} parent=11 // pred_check
          %p826 = pneg %p262
        $region34: #{tpu_custom_call.1} parent=11 // pred_check_branch
          %828 = sbr.rel (%p826) target = $region36
        $region35: #{tpu_custom_call.1} parent=11 // pred_region
          %s830 = ssub.s32 16, 16
          %831 = vsyncadd [#allocation16], %s830
          %s833 = sshll.u32 [#allocation15], 4
          %s834 = int_to_ptr.vmem [resolvable:$true] %s833
          %836 = dma.hbm_to_vmem [thread:$0]  %s15, 16, %s834, [#allocation16]
        $region36: #{tpu_custom_call.1} parent=11 // pred_fallthru
          _
        // Predicated region
        $region37: #{tpu_custom_call.1} parent=11 // pred_check
          %p837 = pneg %p283
        $region38: #{tpu_custom_call.1} parent=11 // pred_check_branch
          %839 = sbr.rel (%p837) target = $region40
        $region39: #{tpu_custom_call.1} parent=11 // pred_region
          %s841 = ssub.s32 256, 256
          %842 = vsyncadd [#allocation16], %s841
          %s843 = sshll.u32 [#allocation17], 4
          %s844 = int_to_ptr.vmem [resolvable:$true] %s843
          %849 = dma.hbm_to_vmem [thread:$0]  %s17, 256, %s844, [#allocation16], 64, 64, 4
        $region40: #{tpu_custom_call.1} parent=11 // pred_fallthru
          _
        // Predicated region
        $region41: #{tpu_custom_call.1} parent=11 // pred_check
          %p850 = pneg %p304
        $region42: #{tpu_custom_call.1} parent=11 // pred_check_branch
          %852 = sbr.rel (%p850) target = $region44
        $region43: #{tpu_custom_call.1} parent=11 // pred_region
          %s854 = ssub.s32 16, 16
          %855 = vsyncadd [#allocation19], %s854
          %s857 = sshll.u32 [#allocation18], 4
          %s858 = int_to_ptr.vmem [resolvable:$true] %s857
          %860 = dma.hbm_to_vmem [thread:$0]  %s19, 16, %s858, [#allocation19]
        $region44: #{tpu_custom_call.1} parent=11 // pred_fallthru
          _
        // Predicated region
        $region45: #{tpu_custom_call.1} parent=11 // pred_check
          %p861 = pneg %p325
        $region46: #{tpu_custom_call.1} parent=11 // pred_check_branch
          %863 = sbr.rel (%p861) target = $region48
        $region47: #{tpu_custom_call.1} parent=11 // pred_region
          %s865 = ssub.s32 16, 16
          %866 = vsyncadd [#allocation19], %s865
          %s868 = sshll.u32 [#allocation20], 4
          %s869 = int_to_ptr.vmem [resolvable:$true] %s868
          %871 = dma.hbm_to_vmem [thread:$0]  %s21, 16, %s869, [#allocation19]
        $region48: #{tpu_custom_call.1} parent=11 // pred_fallthru
          _
        // Predicated region
        $region49: #{tpu_custom_call.1} parent=11 // pred_check
          %p872 = pneg %p346
        $region50: #{tpu_custom_call.1} parent=11 // pred_check_branch
          %874 = sbr.rel (%p872) target = $region52
        $region51: #{tpu_custom_call.1} parent=11 // pred_region
          %s876 = ssub.s32 16, 16
          %877 = vsyncadd [#allocation22], %s876
          %s879 = sshll.u32 [#allocation21], 4
          %s880 = int_to_ptr.vmem [resolvable:$true] %s879
          %882 = dma.hbm_to_vmem [thread:$0]  %s23, 16, %s880, [#allocation22]
        $region52: #{tpu_custom_call.1} parent=11 // pred_fallthru
          _
        // Predicated region
        $region53: #{tpu_custom_call.1} parent=11 // pred_check
          %p883 = pneg %p367
        $region54: #{tpu_custom_call.1} parent=11 // pred_check_branch
          %885 = sbr.rel (%p883) target = $region56
        $region55: #{tpu_custom_call.1} parent=11 // pred_region
          _
        $region56: #{tpu_custom_call.1} parent=11 // pred_fallthru
          _
        // Predicated region
        $region57: #{tpu_custom_call.1} parent=11 // pred_check
          %p886 = pneg %p388
        $region58: #{tpu_custom_call.1} parent=11 // pred_check_branch
          %888 = sbr.rel (%p886) target = $region60
        $region59: #{tpu_custom_call.1} parent=11 // pred_region
          %s890 = ssub.s32 16, 16
          %891 = vsyncadd [#allocation22], %s890
          %s893 = sshll.u32 [#allocation23], 4
          %s894 = int_to_ptr.vmem [resolvable:$true] %s893
          %896 = dma.hbm_to_vmem [thread:$0]  %s27, 16, %s894, [#allocation22]
        $region60: #{tpu_custom_call.1} parent=11 // pred_fallthru
          _
        // Predicated region
        $region61: #{tpu_custom_call.1} parent=11 // pred_check
          %p897 = pneg %p409
        $region62: #{tpu_custom_call.1} parent=11 // pred_check_branch
          %899 = sbr.rel (%p897) target = $region64
        $region63: #{tpu_custom_call.1} parent=11 // pred_region
          _
        $region64: #{tpu_custom_call.1} parent=11 // pred_fallthru
          _
        // Predicated region
        $region65: #{tpu_custom_call.1} parent=11 // pred_check
          %p900 = pneg %p430
        $region66: #{tpu_custom_call.1} parent=11 // pred_check_branch
          %902 = sbr.rel (%p900) target = $region68
        $region67: #{tpu_custom_call.1} parent=11 // pred_region
          %s904 = ssub.s32 16, 16
          %905 = vsyncadd [#allocation25], %s904
          %s907 = sshll.u32 [#allocation24], 4
          %s908 = int_to_ptr.vmem [resolvable:$true] %s907
          %910 = dma.hbm_to_vmem [thread:$0]  %s31, 16, %s908, [#allocation25]
        $region68: #{tpu_custom_call.1} parent=11 // pred_fallthru
          _
        // Predicated region
        $region69: #{tpu_custom_call.1} parent=11 // pred_check
          %p911 = pneg %p451
        $region70: #{tpu_custom_call.1} parent=11 // pred_check_branch
          %913 = sbr.rel (%p911) target = $region72
        $region71: #{tpu_custom_call.1} parent=11 // pred_region
          %s915 = ssub.s32 256, 256
          %916 = vsyncadd [#allocation25], %s915
          %s917 = sshll.u32 [#allocation26], 4
          %s918 = int_to_ptr.vmem [resolvable:$true] %s917
          %923 = dma.hbm_to_vmem [thread:$0]  %s33, 256, %s918, [#allocation25], 64, 64, 4
        $region72: #{tpu_custom_call.1} parent=11 // pred_fallthru
          _
        // Predicated region
        $region73: #{tpu_custom_call.1} parent=11 // pred_check
          %p924 = pneg %p472
        $region74: #{tpu_custom_call.1} parent=11 // pred_check_branch
          %926 = sbr.rel (%p924) target = $region76
        $region75: #{tpu_custom_call.1} parent=11 // pred_region
          %s928 = ssub.s32 16, 16
          %929 = vsyncadd [#allocation28], %s928
          %s931 = sshll.u32 [#allocation27], 4
          %s932 = int_to_ptr.vmem [resolvable:$true] %s931
          %934 = dma.hbm_to_vmem [thread:$0]  %s35, 16, %s932, [#allocation28]
        $region76: #{tpu_custom_call.1} parent=11 // pred_fallthru
          _
        // Predicated region
        $region77: #{tpu_custom_call.1} parent=11 // pred_check
          %p935 = pneg %p493
        $region78: #{tpu_custom_call.1} parent=11 // pred_check_branch
          %937 = sbr.rel (%p935) target = $region80
        $region79: #{tpu_custom_call.1} parent=11 // pred_region
          _
        $region80: #{tpu_custom_call.1} parent=11 // pred_fallthru
          _
        // Predicated region
        $region81: #{tpu_custom_call.1} parent=11 // pred_check
          %p938 = pneg %p514
        $region82: #{tpu_custom_call.1} parent=11 // pred_check_branch
          %940 = sbr.rel (%p938) target = $region84
        $region83: #{tpu_custom_call.1} parent=11 // pred_region
          _
        $region84: #{tpu_custom_call.1} parent=11 // pred_fallthru
          _
        // Predicated region
        $region85: #{tpu_custom_call.1} parent=11 // pred_check
          %p941 = pneg %p535
        $region86: #{tpu_custom_call.1} parent=11 // pred_check_branch
          %943 = sbr.rel (%p941) target = $region88
        $region87: #{tpu_custom_call.1} parent=11 // pred_region
          _
        $region88: #{tpu_custom_call.1} parent=11 // pred_fallthru
          _
        // Predicated region
        $region89: #{tpu_custom_call.1} parent=11 // pred_check
          %p944 = pneg %p556
        $region90: #{tpu_custom_call.1} parent=11 // pred_check_branch
          %946 = sbr.rel (%p944) target = $region92
        $region91: #{tpu_custom_call.1} parent=11 // pred_region
          _
        $region92: #{tpu_custom_call.1} parent=11 // pred_fallthru
          _
        // Predicated region
        $region93: #{tpu_custom_call.1} parent=11 // pred_check
          %p947 = pneg %p577
        $region94: #{tpu_custom_call.1} parent=11 // pred_check_branch
          %949 = sbr.rel (%p947) target = $region96
        $region95: #{tpu_custom_call.1} parent=11 // pred_region
          _
        $region96: #{tpu_custom_call.1} parent=11 // pred_fallthru
          _
        // Predicated region
        $region97: #{tpu_custom_call.1} parent=11 // pred_check
          %p950 = pneg %p598
        $region98: #{tpu_custom_call.1} parent=11 // pred_check_branch
          %952 = sbr.rel (%p950) target = $region100
        $region99: #{tpu_custom_call.1} parent=11 // pred_region
          _
        $region100: #{tpu_custom_call.1} parent=11 // pred_fallthru
          _
        // Predicated region
        $region101: #{tpu_custom_call.1} parent=11 // pred_check
          %p953 = pneg %p619
        $region102: #{tpu_custom_call.1} parent=11 // pred_check_branch
          %955 = sbr.rel (%p953) target = $region104
        $region103: #{tpu_custom_call.1} parent=11 // pred_region
          _
        $region104: #{tpu_custom_call.1} parent=11 // pred_fallthru
          _
        // Predicated region
        $region105: #{tpu_custom_call.1} parent=11 // pred_check
          %p956 = pneg %p640
        $region106: #{tpu_custom_call.1} parent=11 // pred_check_branch
          %958 = sbr.rel (%p956) target = $region108
        $region107: #{tpu_custom_call.1} parent=11 // pred_region
          _
        $region108: #{tpu_custom_call.1} parent=11 // pred_fallthru
          _
        // Predicated region
        $region109: #{tpu_custom_call.1} parent=11 // pred_check
          %p959 = pneg %p661
        $region110: #{tpu_custom_call.1} parent=11 // pred_check_branch
          %961 = sbr.rel (%p959) target = $region112
        $region111: #{tpu_custom_call.1} parent=11 // pred_region
          _
        $region112: #{tpu_custom_call.1} parent=11 // pred_fallthru
          _
        // Predicated region
        $region113: #{tpu_custom_call.1} parent=11 // pred_check
          %p962 = pneg %p682
        $region114: #{tpu_custom_call.1} parent=11 // pred_check_branch
          %964 = sbr.rel (%p962) target = $region116
        $region115: #{tpu_custom_call.1} parent=11 // pred_region
          _
        $region116: #{tpu_custom_call.1} parent=11 // pred_fallthru
          _
      $region12: #{tpu_custom_call.1} parent=5 // pred_fallthru
        _
      %p965 = scmp.lt.s32.totalorder %s84, 2
      // Predicated region
      $region117: #{tpu_custom_call.1} parent=5 // pred_check
        %p966 = pneg %p965
      $region118: #{tpu_custom_call.1} parent=5 // pred_check_branch
        %968 = sbr.rel (%p966) target = $region120
      $region119: #{tpu_custom_call.1} parent=5 // pred_region
        // Predicated region
        $region121: #{tpu_custom_call.1} parent=119 // pred_check
          %p969 = pneg %p104
        $region122: #{tpu_custom_call.1} parent=119 // pred_check_branch
          %971 = sbr.rel (%p969) target = $region124
        $region123: #{tpu_custom_call.1} parent=119 // pred_region
          %s972 = smul.u32 2, %s84
          %p973 = scmp.lt.s32.totalorder %s972, 3
          %s974 = scalar_select %p973, %s972, 3
          %s975 = smul.addr %s974, 8
          %s976 = scalar_lea.vmem %s1, %s975
          %s977 = smul.u32 2, %s84
        $region124: #{tpu_custom_call.1} parent=119 // pred_fallthru
          _
        // Predicated region
        $region125: #{tpu_custom_call.1} parent=119 // pred_check
          %p978 = pneg %p130
        $region126: #{tpu_custom_call.1} parent=119 // pred_check_branch
          %980 = sbr.rel (%p978) target = $region128
        $region127: #{tpu_custom_call.1} parent=119 // pred_region
          %s981 = sand.u32 %s120, 1
          %s982 = scalar_lea.sflag [#allocation7], %s981
          %s983 = sand.u32 %s120, 1
          %s984 = smul.addr %s983, 16
          %s985 = scalar_lea.vmem [#allocation6], %s984
          %s986 = smul.u32 2, %s84
          %s988 = ssub.s32 256, 256
          %989 = vsyncadd %s982, %s988
          %s990 = smul.addr %s986, 128
          %s991 = scalar_lea.hbm %s3, %s990
          %s992 = sshll.u32 %s985, 4
          %s993 = int_to_ptr.vmem [resolvable:$true] %s992
          %998 = dma.hbm_to_vmem [thread:$0]  %s991, 256, %s993, %s982, 128, 128, 8
        $region128: #{tpu_custom_call.1} parent=119 // pred_fallthru
          _
      $region120: #{tpu_custom_call.1} parent=5 // pred_fallthru
        _
      %p999 = scmp.le.s32.totalorder 1, %s84
      %p1000 = scmp.lt.s32.totalorder %s84, 3
      %p1001 = pnand %p999, %p1000
      %p1002 = pneg %p1001
      // Predicated region
      $region129: #{tpu_custom_call.1} parent=5 // pred_check
        _
      $region130: #{tpu_custom_call.1} parent=5 // pred_check_branch
        %1004 = sbr.rel (%p1001) target = $region132
      $region131: #{tpu_custom_call.1} parent=5 // pred_region
        %s1005 = ssub.s32 %s84, 1
        %s1006 = sand.u32 %s123, 1
        %s1007 = scalar_lea.sflag [#allocation7], %s1006
        %s1008 = sand.u32 %s123, 1
        %s1009 = smul.addr %s1008, 16
        %s1010 = scalar_lea.vmem [#allocation6], %s1009
        // Predicated region
        $region133: #{tpu_custom_call.1} parent=131 // pred_check
          %p1011 = pneg %p136
        $region134: #{tpu_custom_call.1} parent=131 // pred_check_branch
          %1013 = sbr.rel (%p1011) target = $region136
        $region135: #{tpu_custom_call.1} parent=131 // pred_region
          %1014 = dma.done %s1007, 256
        $region136: #{tpu_custom_call.1} parent=131 // pred_fallthru
          _
        // Predicated region
        $region137: #{tpu_custom_call.1} parent=131 // pred_check
          %p1015 = pneg %p178
        $region138: #{tpu_custom_call.1} parent=131 // pred_check_branch
          %1017 = sbr.rel (%p1015) target = $region140
        $region139: #{tpu_custom_call.1} parent=131 // pred_region
          %1018 = dma.done [#allocation10], 16
        $region140: #{tpu_custom_call.1} parent=131 // pred_fallthru
          _
        // Predicated region
        $region141: #{tpu_custom_call.1} parent=131 // pred_check
          %p1019 = pneg %p199
        $region142: #{tpu_custom_call.1} parent=131 // pred_check_branch
          %1021 = sbr.rel (%p1019) target = $region144
        $region143: #{tpu_custom_call.1} parent=131 // pred_region
          %1022 = dma.done [#allocation10], 256
        $region144: #{tpu_custom_call.1} parent=131 // pred_fallthru
          _
        // Predicated region
        $region145: #{tpu_custom_call.1} parent=131 // pred_check
          %p1023 = pneg %p220
        $region146: #{tpu_custom_call.1} parent=131 // pred_check_branch
          %1025 = sbr.rel (%p1023) target = $region148
        $region147: #{tpu_custom_call.1} parent=131 // pred_region
          %1026 = dma.done [#allocation13], 16
        $region148: #{tpu_custom_call.1} parent=131 // pred_fallthru
          _
        // Predicated region
        $region149: #{tpu_custom_call.1} parent=131 // pred_check
          %p1027 = pneg %p241
        $region150: #{tpu_custom_call.1} parent=131 // pred_check_branch
          %1029 = sbr.rel (%p1027) target = $region152
        $region151: #{tpu_custom_call.1} parent=131 // pred_region
          %1030 = dma.done [#allocation13], 256
        $region152: #{tpu_custom_call.1} parent=131 // pred_fallthru
          _
        // Predicated region
        $region153: #{tpu_custom_call.1} parent=131 // pred_check
          %p1031 = pneg %p262
        $region154: #{tpu_custom_call.1} parent=131 // pred_check_branch
          %1033 = sbr.rel (%p1031) target = $region156
        $region155: #{tpu_custom_call.1} parent=131 // pred_region
          %1034 = dma.done [#allocation16], 16
        $region156: #{tpu_custom_call.1} parent=131 // pred_fallthru
          _
        // Predicated region
        $region157: #{tpu_custom_call.1} parent=131 // pred_check
          %p1035 = pneg %p283
        $region158: #{tpu_custom_call.1} parent=131 // pred_check_branch
          %1037 = sbr.rel (%p1035) target = $region160
        $region159: #{tpu_custom_call.1} parent=131 // pred_region
          %1038 = dma.done [#allocation16], 256
        $region160: #{tpu_custom_call.1} parent=131 // pred_fallthru
          _
        // Predicated region
        $region161: #{tpu_custom_call.1} parent=131 // pred_check
          %p1039 = pneg %p304
        $region162: #{tpu_custom_call.1} parent=131 // pred_check_branch
          %1041 = sbr.rel (%p1039) target = $region164
        $region163: #{tpu_custom_call.1} parent=131 // pred_region
          %1042 = dma.done [#allocation19], 16
        $region164: #{tpu_custom_call.1} parent=131 // pred_fallthru
          _
        // Predicated region
        $region165: #{tpu_custom_call.1} parent=131 // pred_check
          %p1043 = pneg %p325
        $region166: #{tpu_custom_call.1} parent=131 // pred_check_branch
          %1045 = sbr.rel (%p1043) target = $region168
        $region167: #{tpu_custom_call.1} parent=131 // pred_region
          %1046 = dma.done [#allocation19], 16
        $region168: #{tpu_custom_call.1} parent=131 // pred_fallthru
          _
        // Predicated region
        $region169: #{tpu_custom_call.1} parent=131 // pred_check
          %p1047 = pneg %p346
        $region170: #{tpu_custom_call.1} parent=131 // pred_check_branch
          %1049 = sbr.rel (%p1047) target = $region172
        $region171: #{tpu_custom_call.1} parent=131 // pred_region
          %1050 = dma.done [#allocation22], 16
        $region172: #{tpu_custom_call.1} parent=131 // pred_fallthru
          _
        // Predicated region
        $region173: #{tpu_custom_call.1} parent=131 // pred_check
          %p1051 = pneg %p388
        $region174: #{tpu_custom_call.1} parent=131 // pred_check_branch
          %1053 = sbr.rel (%p1051) target = $region176
        $region175: #{tpu_custom_call.1} parent=131 // pred_region
          %1054 = dma.done [#allocation22], 16
        $region176: #{tpu_custom_call.1} parent=131 // pred_fallthru
          _
        // Predicated region
        $region177: #{tpu_custom_call.1} parent=131 // pred_check
          %p1055 = pneg %p430
        $region178: #{tpu_custom_call.1} parent=131 // pred_check_branch
          %1057 = sbr.rel (%p1055) target = $region180
        $region179: #{tpu_custom_call.1} parent=131 // pred_region
          %1058 = dma.done [#allocation25], 16
        $region180: #{tpu_custom_call.1} parent=131 // pred_fallthru
          _
        // Predicated region
        $region181: #{tpu_custom_call.1} parent=131 // pred_check
          %p1059 = pneg %p451
        $region182: #{tpu_custom_call.1} parent=131 // pred_check_branch
          %1061 = sbr.rel (%p1059) target = $region184
        $region183: #{tpu_custom_call.1} parent=131 // pred_region
          %1062 = dma.done [#allocation25], 256
        $region184: #{tpu_custom_call.1} parent=131 // pred_fallthru
          _
        // Predicated region
        $region185: #{tpu_custom_call.1} parent=131 // pred_check
          %p1063 = pneg %p472
        $region186: #{tpu_custom_call.1} parent=131 // pred_check_branch
          %1065 = sbr.rel (%p1063) target = $region188
        $region187: #{tpu_custom_call.1} parent=131 // pred_region
          %1066 = dma.done [#allocation28], 16
        $region188: #{tpu_custom_call.1} parent=131 // pred_fallthru
          _
        %s1067 = smul.u32 2, %s89
        %p1068 = scmp.lt.s32.totalorder %s1067, 3
        %s1069 = scalar_select %p1068, %s1067, 3
        %s1070 = smul.addr %s1069, 8
        %s1071 = scalar_lea.vmem %s1, %s1070
        %p1072 = pneg %p110
        %p1073 = pneg %p107
        %s1074 = sand.u32 %s123, 1
        %s1075 = scalar_lea.sflag [#allocation7], %s1074
        %s1076 = sand.u32 %s123, 1
        %s1077 = smul.addr %s1076, 16
        %s1078 = scalar_lea.vmem [#allocation6], %s1077
        %p1079 = pneg %p136
        %p1080 = pneg %p133
        %p1081 = pneg %p157
        %p1082 = pneg %p154
        %p1083 = pneg %p178
        %p1084 = pneg %p175
        %p1085 = pneg %p199
        %p1086 = pneg %p196
        %p1087 = pneg %p220
        %p1088 = pneg %p217
        %p1089 = pneg %p241
        %p1090 = pneg %p238
        %p1091 = pneg %p262
        %p1092 = pneg %p259
        %p1093 = pneg %p283
        %p1094 = pneg %p280
        %p1095 = pneg %p304
        %p1096 = pneg %p301
        %p1097 = pneg %p325
        %p1098 = pneg %p322
        %p1099 = pneg %p346
        %p1100 = pneg %p343
        %p1101 = pneg %p367
        %p1102 = pneg %p364
        %p1103 = pneg %p388
        %p1104 = pneg %p385
        %p1105 = pneg %p409
        %p1106 = pneg %p406
        %p1107 = pneg %p430
        %p1108 = pneg %p427
        %p1109 = pneg %p451
        %p1110 = pneg %p448
        %p1111 = pneg %p472
        %p1112 = pneg %p469
        %p1113 = pneg %p493
        %p1114 = pneg %p490
        %p1115 = pneg %p514
        %p1116 = pneg %p511
        %p1117 = pneg %p535
        %p1118 = pneg %p532
        %p1119 = pneg %p556
        %p1120 = pneg %p553
        %p1121 = pneg %p577
        %p1122 = pneg %p574
        %p1123 = pneg %p598
        %p1124 = pneg %p595
        %p1125 = pneg %p619
        %p1126 = pneg %p616
        %p1127 = pneg %p640
        %p1128 = pneg %p637
        %p1129 = pneg %p661
        %p1130 = pneg %p658
        %p1131 = pneg %p682
        %p1132 = pneg %p679
        %p1133 = pneg %p708
        %p1134 = pneg %p705
        %s1135 = sand.u32 %s695, 1
        %s1136 = scalar_lea.sflag [#allocation8], %s1135
        %s1137 = sand.u32 %s695, 1
        %s1138 = smul.addr %s1137, 16
        %s1139 = scalar_lea.vmem [#allocation29], %s1138
        %p1140 = pneg %p734
        %p1141 = pneg %p731
        %s1142 = sand.u32 %s89, 1
        %s1143 = scalar_lea.sflag [#allocation31], %s1142
        %s1144 = sand.u32 %s721, 1
        %s1145 = smul.addr %s1144, 8
        %s1146 = scalar_lea.vmem [#allocation30], %s1145
        %p1147 = pneg %p760
        %p1148 = pneg %p757
        %s1149 = sand.u32 %s89, 1
        %s1150 = scalar_lea.sflag [#allocation31], %s1149
        %s1151 = sand.u32 %s747, 1
        %s1152 = smul.addr %s1151, 8
        %s1153 = scalar_lea.vmem [#allocation32], %s1152
        %s1154 = smul.u32 2, %s89
        %p1155 = scmp.lt.s32.totalorder %s1154, 3
        %s1156 = scalar_select %p1155, %s1154, 3
        %s1157 = smul.addr %s1156, 8
        %s1158 = scalar_lea.vmem %s1, %s1157
        %s1159 = smul.u32 2, %s89
        %s1160 = smul.u32 2, %s89
        %s1161 = smul.u32 2, %s89
        %s1162 = smul.u32 2, %s89
        %s1163 = smul.u32 2, %s89
        %v1165 = vld [vmem:[%s1158] sm:$0xff]
        %v1166 = vld [vmem:[%s1158 + $0x8] sm:$0xff]
        %v1167 = vld [vmem:[%s1010] sm:$0xff]
        %v1168 = vld [vmem:[%s1010 + $0x8] sm:$0xff]
        %v1169 = vld [vmem:[%s5] sm:$0xf]
        %v1170 = vld [vmem:[%s5 + $0x4] sm:$0xf]
        %v1171 = vld [vmem:[%s5 + $0x8] sm:$0xf]
        %v1172 = vld [vmem:[%s5 + $0xc] sm:$0xf]
        %v1173 = vld [vmem:[#allocation9] sm:$0x1]
        %v1174 = vld [vmem:[#allocation11] sm:$0xf]
        %v1175 = vld [vmem:[#allocation11 + $0x4] sm:$0xf]
        %v1176 = vld [vmem:[#allocation11 + $0x8] sm:$0xf]
        %v1177 = vld [vmem:[#allocation11 + $0xc] sm:$0xf]
        %v1178 = vld [vmem:[#allocation12] sm:$0x1]
        %v1179 = vld [vmem:[#allocation14] sm:$0xf]
        %v1180 = vld [vmem:[#allocation14 + $0x4] sm:$0xf]
        %v1181 = vld [vmem:[#allocation14 + $0x8] sm:$0xf]
        %v1182 = vld [vmem:[#allocation14 + $0xc] sm:$0xf]
        %v1183 = vld [vmem:[#allocation15] sm:$0x1]
        %v1184 = vld [vmem:[#allocation17] sm:$0xf]
        %v1185 = vld [vmem:[#allocation17 + $0x4] sm:$0xf]
        %v1186 = vld [vmem:[#allocation17 + $0x8] sm:$0xf]
        %v1187 = vld [vmem:[#allocation17 + $0xc] sm:$0xf]
        %v1188 = vld [vmem:[#allocation18] sm:$0x1]
        %v1189 = vld [vmem:[#allocation20] sm:$0x1]
        %v1190 = vld [vmem:[#allocation21] sm:$0x1]
        %v1191 = vpack.c.bf16 %v1166, %v1165
        %v1193 = vlaneseq
        %v1194 = vshrl.u32 %v1193, 7
        %v1195 = vsub.s32 0, %v1194
        %v1196 = vrot.slane %v1173, %v1195
        %v1202 = vunpack.c.l.b16 %v1169
        %v1203 = vunpack.c.l.b16 %v1170
        %v1204 = vunpack.c.l.b16 %v1171
        %v1205 = vunpack.c.l.b16 %v1172
        %v1206 = vpack.c.b16 %v1203, %v1202
        %v1207 = vpack.c.b16 %v1205, %v1204
        %vm1210 = vcmask 261120
        %v1212 = vsel %vm1210, %v1191, 0
        %1214 = vmatprep.subr.bf16.mxu0 0
        %1215 = vmatpush1.bf16.msra.mxu0 %v1206
        %1216 = vmatprep.subr.bf16.mxu0 0
        %1217 = vmatpush1.bf16.msra.mxu0 %v1207
        %1218 = vmatprep.subr.bf16.mxu0 0
        %1219 = vmatpush1.bf16.msra.mxu0 0
        %1220 = vmatprep.subr.bf16.mxu0 0
        %1221 = vmatpush1.bf16.msra.mxu0 0
        %1222 = vmatprep.subr.bf16.mxu0 0
        %1223 = vmatpush1.bf16.msra.mxu0 0
        %1224 = vmatprep.subr.bf16.mxu0 0
        %1225 = vmatpush1.bf16.msra.mxu0 0
        %1226 = vmatprep.subr.bf16.mxu0 0
        %1227 = vmatpush1.bf16.msra.mxu0 0
        %1228 = vmatprep.subr.bf16.mxu0 0
        %1229 = vmatpush1.bf16.msra.mxu0 0
        %1230 = vmatprep.subr.bf16.mxu0 0
        %1231 = vmatpush1.bf16.msra.mxu0 0
        %1232 = vmatprep.subr.bf16.mxu0 0
        %1233 = vmatpush1.bf16.msra.mxu0 0
        %1234 = vmatprep.subr.bf16.mxu0 0
        %1235 = vmatpush1.bf16.msra.mxu0 0
        %1236 = vmatprep.subr.bf16.mxu0 0
        %1237 = vmatpush1.bf16.msra.mxu0 0
        %1238 = vmatprep.subr.bf16.mxu0 0
        %1239 = vmatpush1.bf16.msra.mxu0 0
        %1240 = vmatprep.subr.bf16.mxu0 0
        %1241 = vmatpush1.bf16.msra.mxu0 0
        %1242 = vmatprep.subr.bf16.mxu0 0
        %1243 = vmatpush1.bf16.msra.mxu0 0
        %1244 = vmatprep.subr.bf16.mxu0 0
        %1245 = vmatpush1.bf16.msra.mxu0 0
        %1246 = vmatprep.mubr.bf16.mxu0 0
        %1247 = vmatmul.mubr.bf16.gmra.mrb[0].mxu0 %v1212
        %v1248 = vpop.f32.mrb[0].mxu0
        %v1249 = vadd.f32 %v1196, %v1248
        %v1250 = vpop.f32.mrb[0].mxu0
        %v1251 = vpop.f32.mrb[0].mxu0
        %v1252 = vadd.f32 %v1196, %v1251
        %v1253 = vpop.f32.mrb[0].mxu0
        %1254 = vdwg.mxu0
        %v1255 = vmul.f32 %v1249, 0.35355338
        %v1256 = vmul.f32 %v1252, 0.35355338
        %1257 = vst.msk [vmem:[#allocation2] sm:$0xff] %vm1210, %v1255
        %1258 = vst.msk [vmem:[#allocation2 + $0x8] sm:$0xff] %vm1210, %v1256
        %v1260 = vlaneseq
        %v1261 = vshrl.u32 %v1260, 7
        %v1262 = vsub.s32 0, %v1261
        %v1263 = vrot.slane %v1178, %v1262
        %v1269 = vunpack.c.l.b16 %v1174
        %v1270 = vunpack.c.l.b16 %v1175
        %v1271 = vunpack.c.l.b16 %v1176
        %v1272 = vunpack.c.l.b16 %v1177
        %v1273 = vpack.c.b16 %v1270, %v1269
        %v1274 = vpack.c.b16 %v1272, %v1271
        %1277 = vmatprep.subr.bf16.mxu0 0
        %1278 = vmatpush1.bf16.msra.mxu0 %v1273
        %1279 = vmatprep.subr.bf16.mxu0 0
        %1280 = vmatpush1.bf16.msra.mxu0 %v1274
        %1281 = vmatprep.subr.bf16.mxu0 0
        %1282 = vmatpush1.bf16.msra.mxu0 0
        %1283 = vmatprep.subr.bf16.mxu0 0
        %1284 = vmatpush1.bf16.msra.mxu0 0
        %1285 = vmatprep.subr.bf16.mxu0 0
        %1286 = vmatpush1.bf16.msra.mxu0 0
        %1287 = vmatprep.subr.bf16.mxu0 0
        %1288 = vmatpush1.bf16.msra.mxu0 0
        %1289 = vmatprep.subr.bf16.mxu0 0
        %1290 = vmatpush1.bf16.msra.mxu0 0
        %1291 = vmatprep.subr.bf16.mxu0 0
        %1292 = vmatpush1.bf16.msra.mxu0 0
        %1293 = vmatprep.subr.bf16.mxu0 0
        %1294 = vmatpush1.bf16.msra.mxu0 0
        %1295 = vmatprep.subr.bf16.mxu0 0
        %1296 = vmatpush1.bf16.msra.mxu0 0
        %1297 = vmatprep.subr.bf16.mxu0 0
        %1298 = vmatpush1.bf16.msra.mxu0 0
        %1299 = vmatprep.subr.bf16.mxu0 0
        %1300 = vmatpush1.bf16.msra.mxu0 0
        %1301 = vmatprep.subr.bf16.mxu0 0
        %1302 = vmatpush1.bf16.msra.mxu0 0
        %1303 = vmatprep.subr.bf16.mxu0 0
        %1304 = vmatpush1.bf16.msra.mxu0 0
        %1305 = vmatprep.subr.bf16.mxu0 0
        %1306 = vmatpush1.bf16.msra.mxu0 0
        %1307 = vmatprep.subr.bf16.mxu0 0
        %1308 = vmatpush1.bf16.msra.mxu0 0
        %1309 = vmatprep.mubr.bf16.mxu0 0
        %1310 = vmatmul.mubr.bf16.gmra.mrb[0].mxu0 %v1212
        %v1311 = vpop.f32.mrb[0].mxu0
        %v1312 = vadd.f32 %v1263, %v1311
        %v1313 = vpop.f32.mrb[0].mxu0
        %v1314 = vpop.f32.mrb[0].mxu0
        %v1315 = vadd.f32 %v1263, %v1314
        %v1316 = vpop.f32.mrb[0].mxu0
        %1317 = vdwg.mxu0
        %1318 = vst.msk [vmem:[#allocation3] sm:$0xff] %vm1210, %v1312
        %1319 = vst.msk [vmem:[#allocation3 + $0x8] sm:$0xff] %vm1210, %v1315
        %v1321 = vlaneseq
        %v1322 = vshrl.u32 %v1321, 7
        %v1323 = vsub.s32 0, %v1322
        %v1324 = vrot.slane %v1183, %v1323
        %v1330 = vunpack.c.l.b16 %v1179
        %v1331 = vunpack.c.l.b16 %v1180
        %v1332 = vunpack.c.l.b16 %v1181
        %v1333 = vunpack.c.l.b16 %v1182
        %v1334 = vpack.c.b16 %v1331, %v1330
        %v1335 = vpack.c.b16 %v1333, %v1332
        %1338 = vmatprep.subr.bf16.mxu0 0
        %1339 = vmatpush1.bf16.msra.mxu0 %v1334
        %1340 = vmatprep.subr.bf16.mxu0 0
        %1341 = vmatpush1.bf16.msra.mxu0 %v1335
        %1342 = vmatprep.subr.bf16.mxu0 0
        %1343 = vmatpush1.bf16.msra.mxu0 0
        %1344 = vmatprep.subr.bf16.mxu0 0
        %1345 = vmatpush1.bf16.msra.mxu0 0
        %1346 = vmatprep.subr.bf16.mxu0 0
        %1347 = vmatpush1.bf16.msra.mxu0 0
        %1348 = vmatprep.subr.bf16.mxu0 0
        %1349 = vmatpush1.bf16.msra.mxu0 0
        %1350 = vmatprep.subr.bf16.mxu0 0
        %1351 = vmatpush1.bf16.msra.mxu0 0
        %1352 = vmatprep.subr.bf16.mxu0 0
        %1353 = vmatpush1.bf16.msra.mxu0 0
        %1354 = vmatprep.subr.bf16.mxu0 0
        %1355 = vmatpush1.bf16.msra.mxu0 0
        %1356 = vmatprep.subr.bf16.mxu0 0
        %1357 = vmatpush1.bf16.msra.mxu0 0
        %1358 = vmatprep.subr.bf16.mxu0 0
        %1359 = vmatpush1.bf16.msra.mxu0 0
        %1360 = vmatprep.subr.bf16.mxu0 0
        %1361 = vmatpush1.bf16.msra.mxu0 0
        %1362 = vmatprep.subr.bf16.mxu0 0
        %1363 = vmatpush1.bf16.msra.mxu0 0
        %1364 = vmatprep.subr.bf16.mxu0 0
        %1365 = vmatpush1.bf16.msra.mxu0 0
        %1366 = vmatprep.subr.bf16.mxu0 0
        %1367 = vmatpush1.bf16.msra.mxu0 0
        %1368 = vmatprep.subr.bf16.mxu0 0
        %1369 = vmatpush1.bf16.msra.mxu0 0
        %1370 = vmatprep.mubr.bf16.mxu0 0
        %1371 = vmatmul.mubr.bf16.gmra.mrb[0].mxu0 %v1212
        %v1372 = vpop.f32.mrb[0].mxu0
        %v1373 = vadd.f32 %v1324, %v1372
        %v1374 = vpop.f32.mrb[0].mxu0
        %v1375 = vpop.f32.mrb[0].mxu0
        %v1376 = vadd.f32 %v1324, %v1375
        %v1377 = vpop.f32.mrb[0].mxu0
        %1378 = vdwg.mxu0
        %1379 = vst.msk [vmem:[#allocation4] sm:$0xff] %vm1210, %v1373
        %1380 = vst.msk [vmem:[#allocation4 + $0x8] sm:$0xff] %vm1210, %v1376
        %v1381 = vld [vmem:[#allocation2] sm:$0xff]
        %v1382 = vld [vmem:[#allocation2 + $0x8] sm:$0xff]
        %v1383 = vpack.c.bf16 %v1382, %v1381
        %v1384 = vld [vmem:[#allocation3] sm:$0xff]
        %v1385 = vld [vmem:[#allocation3 + $0x8] sm:$0xff]
        %v1386 = vpack.c.bf16 %v1385, %v1384
        %v1387 = vld [vmem:[#allocation4] sm:$0xff]
        %v1388 = vld [vmem:[#allocation4 + $0x8] sm:$0xff]
        %v1389 = vpack.c.bf16 %v1388, %v1387
        %vm1390 = vcmask 64512
        %v1392 = vsel %vm1390, %v1383, 0
        %v1395 = vsel %vm1390, %v1386, 0
        %1397 = vmatprep.subr.bf16.mxu0 0
        %1398 = vmatpush1.bf16.xpose.msra.mxu0 %v1395
        %1399 = vmatprep.subr.bf16.mxu0 0
        %1400 = vmatpush1.bf16.xpose.msra.mxu0 0
        %1401 = vmatprep.subr.bf16.mxu0 0
        %1402 = vmatpush1.bf16.xpose.msra.mxu0 0
        %1403 = vmatprep.subr.bf16.mxu0 0
        %1404 = vmatpush1.bf16.xpose.msra.mxu0 0
        %1405 = vmatprep.subr.bf16.mxu0 0
        %1406 = vmatpush1.bf16.xpose.msra.mxu0 0
        %1407 = vmatprep.subr.bf16.mxu0 0
        %1408 = vmatpush1.bf16.xpose.msra.mxu0 0
        %1409 = vmatprep.subr.bf16.mxu0 0
        %1410 = vmatpush1.bf16.xpose.msra.mxu0 0
        %1411 = vmatprep.subr.bf16.mxu0 0
        %1412 = vmatpush1.bf16.xpose.msra.mxu0 0
        %1413 = vmatprep.subr.bf16.mxu0 0
        %1414 = vmatpush1.bf16.xpose.msra.mxu0 0
        %1415 = vmatprep.subr.bf16.mxu0 0
        %1416 = vmatpush1.bf16.xpose.msra.mxu0 0
        %1417 = vmatprep.subr.bf16.mxu0 0
        %1418 = vmatpush1.bf16.xpose.msra.mxu0 0
        %1419 = vmatprep.subr.bf16.mxu0 0
        %1420 = vmatpush1.bf16.xpose.msra.mxu0 0
        %1421 = vmatprep.subr.bf16.mxu0 0
        %1422 = vmatpush1.bf16.xpose.msra.mxu0 0
        %1423 = vmatprep.subr.bf16.mxu0 0
        %1424 = vmatpush1.bf16.xpose.msra.mxu0 0
        %1425 = vmatprep.subr.bf16.mxu0 0
        %1426 = vmatpush1.bf16.xpose.msra.mxu0 0
        %1427 = vmatprep.subr.bf16.mxu0 0
        %1428 = vmatpush1.bf16.xpose.msra.mxu0 0
        %1429 = vmatprep.mubr.bf16.mxu0 0
        %1430 = vmatmul.mubr.bf16.gmra.mrb[0].mxu0 %v1392
        %v1431 = vpop.f32.mrb[0].mxu0
        %v1432 = vadd.f32 0.0, %v1431
        %v1433 = vpop.f32.mrb[0].mxu0
        %v1434 = vpop.f32.mrb[0].mxu0
        %v1435 = vadd.f32 0.0, %v1434
        %v1436 = vpop.f32.mrb[0].mxu0
        %1437 = vdwg.mxu0
        %vm1438 = vcmask 130048
        %v1439 = vsel %vm1438, %v1432, -inf
        %1440 = vmax.xlane.f32.xlu0 %v1439
        %v1441 = vpop.xlane.xlu0 %1440
        %v1442 = vsel %vm1438, %v1435, -inf
        %1443 = vmax.xlane.f32.xlu0 %v1442
        %v1444 = vpop.xlane.xlu0 %1443
        %v1445 = vsub.f32 %v1432, %v1441
        %v1446 = vsub.f32 %v1435, %v1444
        %v1447 = vmul.f32 %v1445, 1.442695
        %v1448 = vpow.pop %v1447
        %v1449 = vmul.f32 %v1446, 1.442695
        %v1450 = vpow.pop %v1449
        %v1451 = vsel %vm1438, %v1448, 0.0
        %1452 = vadd.xlane.f32.xlu0 %v1451
        %v1453 = vpop.xlane.xlu0 %1452
        %v1454 = vsel %vm1438, %v1450, 0.0
        %1455 = vadd.xlane.f32.xlu0 %v1454
        %v1456 = vpop.xlane.xlu0 %1455
        %v1457 = vrcp.pop %v1453
        %v1458 = vrcp.pop %v1456
        %v1459 = vmul.f32 %v1448, %v1457
        %v1460 = vmul.f32 %v1450, %v1458
        %v1461 = vpack.c.bf16 %v1460, %v1459
        %v1463 = vsel %vm1438, %v1461, 0
        %1465 = vmatprep.subr.bf16.mxu0 0
        %1466 = vmatpush1.bf16.msra.mxu0 %v1389
        %1467 = vmatprep.subr.bf16.mxu0 0
        %1468 = vmatpush1.bf16.msra.mxu0 0
        %1469 = vmatprep.subr.bf16.mxu0 0
        %1470 = vmatpush1.bf16.msra.mxu0 0
        %1471 = vmatprep.subr.bf16.mxu0 0
        %1472 = vmatpush1.bf16.msra.mxu0 0
        %1473 = vmatprep.subr.bf16.mxu0 0
        %1474 = vmatpush1.bf16.msra.mxu0 0
        %1475 = vmatprep.subr.bf16.mxu0 0
        %1476 = vmatpush1.bf16.msra.mxu0 0
        %1477 = vmatprep.subr.bf16.mxu0 0
        %1478 = vmatpush1.bf16.msra.mxu0 0
        %1479 = vmatprep.subr.bf16.mxu0 0
        %1480 = vmatpush1.bf16.msra.mxu0 0
        %1481 = vmatprep.subr.bf16.mxu0 0
        %1482 = vmatpush1.bf16.msra.mxu0 0
        %1483 = vmatprep.subr.bf16.mxu0 0
        %1484 = vmatpush1.bf16.msra.mxu0 0
        %1485 = vmatprep.subr.bf16.mxu0 0
        %1486 = vmatpush1.bf16.msra.mxu0 0
        %1487 = vmatprep.subr.bf16.mxu0 0
        %1488 = vmatpush1.bf16.msra.mxu0 0
        %1489 = vmatprep.subr.bf16.mxu0 0
        %1490 = vmatpush1.bf16.msra.mxu0 0
        %1491 = vmatprep.subr.bf16.mxu0 0
        %1492 = vmatpush1.bf16.msra.mxu0 0
        %1493 = vmatprep.subr.bf16.mxu0 0
        %1494 = vmatpush1.bf16.msra.mxu0 0
        %1495 = vmatprep.subr.bf16.mxu0 0
        %1496 = vmatpush1.bf16.msra.mxu0 0
        %1497 = vmatprep.mubr.bf16.mxu0 0
        %1498 = vmatmul.mubr.bf16.gmra.mrb[0].mxu0 %v1463
        %v1499 = vpop.f32.mrb[0].mxu0
        %v1500 = vadd.f32 0.0, %v1499
        %v1501 = vpop.f32.mrb[0].mxu0
        %v1502 = vpop.f32.mrb[0].mxu0
        %v1503 = vadd.f32 0.0, %v1502
        %v1504 = vpop.f32.mrb[0].mxu0
        %1505 = vdwg.mxu0
        %1506 = vst.msk [vmem:[#allocation5] sm:$0xff] %vm1390, %v1500
        %1507 = vst.msk [vmem:[#allocation5 + $0x8] sm:$0xff] %vm1390, %v1503
        %v1509 = vunpack.c.l.b16 %v1461
        %v1510 = vunpack.c.h.b16 %v1461
        %v1511 = vpack.c.b16 %v1509, %v1509
        %v1512 = vpack.c.b16 %v1510, %v1510
        %vm1515 = vcmask 125952
        %1516 = vst.msk [vmem:[%s1146] sm:$0xf] %vm1515, %v1511
        %1517 = vst.msk [vmem:[%s1146 + $0x4] sm:$0xf] %vm1515, %v1512
        %v1518 = vld [vmem:[#allocation2] sm:$0xff]
        %v1519 = vld [vmem:[#allocation2 + $0x8] sm:$0xff]
        %v1520 = vpack.c.bf16 %v1519, %v1518
        %v1521 = vld [vmem:[#allocation3] sm:$0xff]
        %v1522 = vld [vmem:[#allocation3 + $0x8] sm:$0xff]
        %v1523 = vpack.c.bf16 %v1522, %v1521
        %v1524 = vld [vmem:[#allocation4] sm:$0xff]
        %v1525 = vld [vmem:[#allocation4 + $0x8] sm:$0xff]
        %v1526 = vpack.c.bf16 %v1525, %v1524
        %1528 = vrot.lane.b32.xlu0 %v1520, 120
        %v1529 = vpop.permute.xlu0 %1528
        %1531 = vrot.lane.b32.xlu0 %v1523, 120
        %v1532 = vpop.permute.xlu0 %1531
        %v1534 = vsel %vm1390, %v1529, 0
        %v1537 = vsel %vm1390, %v1532, 0
        %1539 = vmatprep.subr.bf16.mxu0 0
        %1540 = vmatpush1.bf16.xpose.msra.mxu0 %v1537
        %1541 = vmatprep.subr.bf16.mxu0 0
        %1542 = vmatpush1.bf16.xpose.msra.mxu0 0
        %1543 = vmatprep.subr.bf16.mxu0 0
        %1544 = vmatpush1.bf16.xpose.msra.mxu0 0
        %1545 = vmatprep.subr.bf16.mxu0 0
        %1546 = vmatpush1.bf16.xpose.msra.mxu0 0
        %1547 = vmatprep.subr.bf16.mxu0 0
        %1548 = vmatpush1.bf16.xpose.msra.mxu0 0
        %1549 = vmatprep.subr.bf16.mxu0 0
        %1550 = vmatpush1.bf16.xpose.msra.mxu0 0
        %1551 = vmatprep.subr.bf16.mxu0 0
        %1552 = vmatpush1.bf16.xpose.msra.mxu0 0
        %1553 = vmatprep.subr.bf16.mxu0 0
        %1554 = vmatpush1.bf16.xpose.msra.mxu0 0
        %1555 = vmatprep.subr.bf16.mxu0 0
        %1556 = vmatpush1.bf16.xpose.msra.mxu0 0
        %1557 = vmatprep.subr.bf16.mxu0 0
        %1558 = vmatpush1.bf16.xpose.msra.mxu0 0
        %1559 = vmatprep.subr.bf16.mxu0 0
        %1560 = vmatpush1.bf16.xpose.msra.mxu0 0
        %1561 = vmatprep.subr.bf16.mxu0 0
        %1562 = vmatpush1.bf16.xpose.msra.mxu0 0
        %1563 = vmatprep.subr.bf16.mxu0 0
        %1564 = vmatpush1.bf16.xpose.msra.mxu0 0
        %1565 = vmatprep.subr.bf16.mxu0 0
        %1566 = vmatpush1.bf16.xpose.msra.mxu0 0
        %1567 = vmatprep.subr.bf16.mxu0 0
        %1568 = vmatpush1.bf16.xpose.msra.mxu0 0
        %1569 = vmatprep.subr.bf16.mxu0 0
        %1570 = vmatpush1.bf16.xpose.msra.mxu0 0
        %1571 = vmatprep.mubr.bf16.mxu0 0
        %1572 = vmatmul.mubr.bf16.gmra.mrb[0].mxu0 %v1534
        %v1573 = vpop.f32.mrb[0].mxu0
        %v1574 = vadd.f32 0.0, %v1573
        %v1575 = vpop.f32.mrb[0].mxu0
        %v1576 = vpop.f32.mrb[0].mxu0
        %v1577 = vadd.f32 0.0, %v1576
        %v1578 = vpop.f32.mrb[0].mxu0
        %1579 = vdwg.mxu0
        %v1580 = vsel %vm1438, %v1574, -inf
        %1581 = vmax.xlane.f32.xlu0 %v1580
        %v1582 = vpop.xlane.xlu0 %1581
        %v1583 = vsel %vm1438, %v1577, -inf
        %1584 = vmax.xlane.f32.xlu0 %v1583
        %v1585 = vpop.xlane.xlu0 %1584
        %v1586 = vsub.f32 %v1574, %v1582
        %v1587 = vsub.f32 %v1577, %v1585
        %v1588 = vmul.f32 %v1586, 1.442695
        %v1589 = vpow.pop %v1588
        %v1590 = vmul.f32 %v1587, 1.442695
        %v1591 = vpow.pop %v1590
        %v1592 = vsel %vm1438, %v1589, 0.0
        %1593 = vadd.xlane.f32.xlu0 %v1592
        %v1594 = vpop.xlane.xlu0 %1593
        %v1595 = vsel %vm1438, %v1591, 0.0
        %1596 = vadd.xlane.f32.xlu0 %v1595
        %v1597 = vpop.xlane.xlu0 %1596
        %v1598 = vrcp.pop %v1594
        %v1599 = vrcp.pop %v1597
        %v1600 = vmul.f32 %v1589, %v1598
        %v1601 = vmul.f32 %v1591, %v1599
        %v1602 = vpack.c.bf16 %v1601, %v1600
        %1604 = vrot.lane.b32.xlu0 %v1526, 120
        %v1605 = vpop.permute.xlu0 %1604
        %v1608 = vsel %vm1438, %v1602, 0
        %1610 = vmatprep.subr.bf16.mxu0 0
        %1611 = vmatpush1.bf16.msra.mxu0 %v1605
        %1612 = vmatprep.subr.bf16.mxu0 0
        %1613 = vmatpush1.bf16.msra.mxu0 0
        %1614 = vmatprep.subr.bf16.mxu0 0
        %1615 = vmatpush1.bf16.msra.mxu0 0
        %1616 = vmatprep.subr.bf16.mxu0 0
        %1617 = vmatpush1.bf16.msra.mxu0 0
        %1618 = vmatprep.subr.bf16.mxu0 0
        %1619 = vmatpush1.bf16.msra.mxu0 0
        %1620 = vmatprep.subr.bf16.mxu0 0
        %1621 = vmatpush1.bf16.msra.mxu0 0
        %1622 = vmatprep.subr.bf16.mxu0 0
        %1623 = vmatpush1.bf16.msra.mxu0 0
        %1624 = vmatprep.subr.bf16.mxu0 0
        %1625 = vmatpush1.bf16.msra.mxu0 0
        %1626 = vmatprep.subr.bf16.mxu0 0
        %1627 = vmatpush1.bf16.msra.mxu0 0
        %1628 = vmatprep.subr.bf16.mxu0 0
        %1629 = vmatpush1.bf16.msra.mxu0 0
        %1630 = vmatprep.subr.bf16.mxu0 0
        %1631 = vmatpush1.bf16.msra.mxu0 0
        %1632 = vmatprep.subr.bf16.mxu0 0
        %1633 = vmatpush1.bf16.msra.mxu0 0
        %1634 = vmatprep.subr.bf16.mxu0 0
        %1635 = vmatpush1.bf16.msra.mxu0 0
        %1636 = vmatprep.subr.bf16.mxu0 0
        %1637 = vmatpush1.bf16.msra.mxu0 0
        %1638 = vmatprep.subr.bf16.mxu0 0
        %1639 = vmatpush1.bf16.msra.mxu0 0
        %1640 = vmatprep.subr.bf16.mxu0 0
        %1641 = vmatpush1.bf16.msra.mxu0 0
        %1642 = vmatprep.mubr.bf16.mxu0 0
        %1643 = vmatmul.mubr.bf16.gmra.mrb[0].mxu0 %v1608
        %v1644 = vpop.f32.mrb[0].mxu0
        %v1645 = vadd.f32 0.0, %v1644
        %v1646 = vpop.f32.mrb[0].mxu0
        %v1647 = vpop.f32.mrb[0].mxu0
        %v1648 = vadd.f32 0.0, %v1647
        %v1649 = vpop.f32.mrb[0].mxu0
        %1650 = vdwg.mxu0
        %1653 = vrot.lane.b32.xlu0 %v1645, 8
        %v1654 = vpop.permute.xlu0 %1653
        %1655 = vrot.lane.b32.xlu0 %v1648, 8
        %v1656 = vpop.permute.xlu0 %1655
        %vm1659 = vcmask 130112
        %1660 = vst.msk [vmem:[#allocation5] sm:$0xff] %vm1659, %v1654
        %1661 = vst.msk [vmem:[#allocation5 + $0x8] sm:$0xff] %vm1659, %v1656
        %v1663 = vunpack.c.l.b16 %v1602
        %v1664 = vunpack.c.h.b16 %v1602
        %v1665 = vpack.c.b16 %v1663, %v1663
        %v1666 = vpack.c.b16 %v1664, %v1664
        %1667 = vrot.lane.b32.xlu0 %v1665, 16
        %v1668 = vpop.permute.xlu0 %1667
        %1669 = vrot.lane.b32.xlu0 %v1666, 16
        %v1670 = vpop.permute.xlu0 %1669
        %vm1673 = vcmask 257152
        %1674 = vst.msk [vmem:[%s1146] sm:$0xf] %vm1673, %v1668
        %1675 = vst.msk [vmem:[%s1146 + $0x4] sm:$0xf] %vm1673, %v1670
        %v1676 = vld [vmem:[#allocation2] sm:$0xff]
        %v1677 = vld [vmem:[#allocation2 + $0x8] sm:$0xff]
        %v1678 = vpack.c.bf16 %v1677, %v1676
        %v1679 = vld [vmem:[#allocation3] sm:$0xff]
        %v1680 = vld [vmem:[#allocation3 + $0x8] sm:$0xff]
        %v1681 = vpack.c.bf16 %v1680, %v1679
        %v1682 = vld [vmem:[#allocation4] sm:$0xff]
        %v1683 = vld [vmem:[#allocation4 + $0x8] sm:$0xff]
        %v1684 = vpack.c.bf16 %v1683, %v1682
        %1686 = vrot.lane.b32.xlu0 %v1678, 112
        %v1687 = vpop.permute.xlu0 %1686
        %1689 = vrot.lane.b32.xlu0 %v1681, 112
        %v1690 = vpop.permute.xlu0 %1689
        %v1692 = vsel %vm1390, %v1687, 0
        %v1695 = vsel %vm1390, %v1690, 0
        %1697 = vmatprep.subr.bf16.mxu0 0
        %1698 = vmatpush1.bf16.xpose.msra.mxu0 %v1695
        %1699 = vmatprep.subr.bf16.mxu0 0
        %1700 = vmatpush1.bf16.xpose.msra.mxu0 0
        %1701 = vmatprep.subr.bf16.mxu0 0
        %1702 = vmatpush1.bf16.xpose.msra.mxu0 0
        %1703 = vmatprep.subr.bf16.mxu0 0
        %1704 = vmatpush1.bf16.xpose.msra.mxu0 0
        %1705 = vmatprep.subr.bf16.mxu0 0
        %1706 = vmatpush1.bf16.xpose.msra.mxu0 0
        %1707 = vmatprep.subr.bf16.mxu0 0
        %1708 = vmatpush1.bf16.xpose.msra.mxu0 0
        %1709 = vmatprep.subr.bf16.mxu0 0
        %1710 = vmatpush1.bf16.xpose.msra.mxu0 0
        %1711 = vmatprep.subr.bf16.mxu0 0
        %1712 = vmatpush1.bf16.xpose.msra.mxu0 0
        %1713 = vmatprep.subr.bf16.mxu0 0
        %1714 = vmatpush1.bf16.xpose.msra.mxu0 0
        %1715 = vmatprep.subr.bf16.mxu0 0
        %1716 = vmatpush1.bf16.xpose.msra.mxu0 0
        %1717 = vmatprep.subr.bf16.mxu0 0
        %1718 = vmatpush1.bf16.xpose.msra.mxu0 0
        %1719 = vmatprep.subr.bf16.mxu0 0
        %1720 = vmatpush1.bf16.xpose.msra.mxu0 0
        %1721 = vmatprep.subr.bf16.mxu0 0
        %1722 = vmatpush1.bf16.xpose.msra.mxu0 0
        %1723 = vmatprep.subr.bf16.mxu0 0
        %1724 = vmatpush1.bf16.xpose.msra.mxu0 0
        %1725 = vmatprep.subr.bf16.mxu0 0
        %1726 = vmatpush1.bf16.xpose.msra.mxu0 0
        %1727 = vmatprep.subr.bf16.mxu0 0
        %1728 = vmatpush1.bf16.xpose.msra.mxu0 0
        %1729 = vmatprep.mubr.bf16.mxu0 0
        %1730 = vmatmul.mubr.bf16.gmra.mrb[0].mxu0 %v1692
        %v1731 = vpop.f32.mrb[0].mxu0
        %v1732 = vadd.f32 0.0, %v1731
        %v1733 = vpop.f32.mrb[0].mxu0
        %v1734 = vpop.f32.mrb[0].mxu0
        %v1735 = vadd.f32 0.0, %v1734
        %v1736 = vpop.f32.mrb[0].mxu0
        %1737 = vdwg.mxu0
        %v1738 = vsel %vm1438, %v1732, -inf
        %1739 = vmax.xlane.f32.xlu0 %v1738
        %v1740 = vpop.xlane.xlu0 %1739
        %v1741 = vsel %vm1438, %v1735, -inf
        %1742 = vmax.xlane.f32.xlu0 %v1741
        %v1743 = vpop.xlane.xlu0 %1742
        %v1744 = vsub.f32 %v1732, %v1740
        %v1745 = vsub.f32 %v1735, %v1743
        %v1746 = vmul.f32 %v1744, 1.442695
        %v1747 = vpow.pop %v1746
        %v1748 = vmul.f32 %v1745, 1.442695
        %v1749 = vpow.pop %v1748
        %v1750 = vsel %vm1438, %v1747, 0.0
        %1751 = vadd.xlane.f32.xlu0 %v1750
        %v1752 = vpop.xlane.xlu0 %1751
        %v1753 = vsel %vm1438, %v1749, 0.0
        %1754 = vadd.xlane.f32.xlu0 %v1753
        %v1755 = vpop.xlane.xlu0 %1754
        %v1756 = vrcp.pop %v1752
        %v1757 = vrcp.pop %v1755
        %v1758 = vmul.f32 %v1747, %v1756
        %v1759 = vmul.f32 %v1749, %v1757
        %v1760 = vpack.c.bf16 %v1759, %v1758
        %1762 = vrot.lane.b32.xlu0 %v1684, 112
        %v1763 = vpop.permute.xlu0 %1762
        %v1766 = vsel %vm1438, %v1760, 0
        %1768 = vmatprep.subr.bf16.mxu0 0
        %1769 = vmatpush1.bf16.msra.mxu0 %v1763
        %1770 = vmatprep.subr.bf16.mxu0 0
        %1771 = vmatpush1.bf16.msra.mxu0 0
        %1772 = vmatprep.subr.bf16.mxu0 0
        %1773 = vmatpush1.bf16.msra.mxu0 0
        %1774 = vmatprep.subr.bf16.mxu0 0
        %1775 = vmatpush1.bf16.msra.mxu0 0
        %1776 = vmatprep.subr.bf16.mxu0 0
        %1777 = vmatpush1.bf16.msra.mxu0 0
        %1778 = vmatprep.subr.bf16.mxu0 0
        %1779 = vmatpush1.bf16.msra.mxu0 0
        %1780 = vmatprep.subr.bf16.mxu0 0
        %1781 = vmatpush1.bf16.msra.mxu0 0
        %1782 = vmatprep.subr.bf16.mxu0 0
        %1783 = vmatpush1.bf16.msra.mxu0 0
        %1784 = vmatprep.subr.bf16.mxu0 0
        %1785 = vmatpush1.bf16.msra.mxu0 0
        %1786 = vmatprep.subr.bf16.mxu0 0
        %1787 = vmatpush1.bf16.msra.mxu0 0
        %1788 = vmatprep.subr.bf16.mxu0 0
        %1789 = vmatpush1.bf16.msra.mxu0 0
        %1790 = vmatprep.subr.bf16.mxu0 0
        %1791 = vmatpush1.bf16.msra.mxu0 0
        %1792 = vmatprep.subr.bf16.mxu0 0
        %1793 = vmatpush1.bf16.msra.mxu0 0
        %1794 = vmatprep.subr.bf16.mxu0 0
        %1795 = vmatpush1.bf16.msra.mxu0 0
        %1796 = vmatprep.subr.bf16.mxu0 0
        %1797 = vmatpush1.bf16.msra.mxu0 0
        %1798 = vmatprep.subr.bf16.mxu0 0
        %1799 = vmatpush1.bf16.msra.mxu0 0
        %1800 = vmatprep.mubr.bf16.mxu0 0
        %1801 = vmatmul.mubr.bf16.gmra.mrb[0].mxu0 %v1766
        %v1802 = vpop.f32.mrb[0].mxu0
        %v1803 = vadd.f32 0.0, %v1802
        %v1804 = vpop.f32.mrb[0].mxu0
        %v1805 = vpop.f32.mrb[0].mxu0
        %v1806 = vadd.f32 0.0, %v1805
        %v1807 = vpop.f32.mrb[0].mxu0
        %1808 = vdwg.mxu0
        %1811 = vrot.lane.b32.xlu0 %v1803, 16
        %v1812 = vpop.permute.xlu0 %1811
        %1813 = vrot.lane.b32.xlu0 %v1806, 16
        %v1814 = vpop.permute.xlu0 %1813
        %vm1817 = vcmask 195712
        %1818 = vst.msk [vmem:[#allocation5] sm:$0xff] %vm1817, %v1812
        %1819 = vst.msk [vmem:[#allocation5 + $0x8] sm:$0xff] %vm1817, %v1814
        %v1821 = vunpack.c.l.b16 %v1760
        %v1822 = vunpack.c.h.b16 %v1760
        %v1823 = vpack.c.b16 %v1821, %v1821
        %v1824 = vpack.c.b16 %v1822, %v1822
        %1825 = vrot.lane.b32.xlu0 %v1823, 32
        %v1826 = vpop.permute.xlu0 %1825
        %1827 = vrot.lane.b32.xlu0 %v1824, 32
        %v1828 = vpop.permute.xlu0 %1827
        %vm1831 = vcmask 388352
        %1832 = vst.msk [vmem:[%s1146] sm:$0xf] %vm1831, %v1826
        %1833 = vst.msk [vmem:[%s1146 + $0x4] sm:$0xf] %vm1831, %v1828
        %v1834 = vld [vmem:[#allocation2] sm:$0xff]
        %v1835 = vld [vmem:[#allocation2 + $0x8] sm:$0xff]
        %v1836 = vpack.c.bf16 %v1835, %v1834
        %v1837 = vld [vmem:[#allocation3] sm:$0xff]
        %v1838 = vld [vmem:[#allocation3 + $0x8] sm:$0xff]
        %v1839 = vpack.c.bf16 %v1838, %v1837
        %v1840 = vld [vmem:[#allocation4] sm:$0xff]
        %v1841 = vld [vmem:[#allocation4 + $0x8] sm:$0xff]
        %v1842 = vpack.c.bf16 %v1841, %v1840
        %1844 = vrot.lane.b32.xlu0 %v1836, 104
        %v1845 = vpop.permute.xlu0 %1844
        %1847 = vrot.lane.b32.xlu0 %v1839, 104
        %v1848 = vpop.permute.xlu0 %1847
        %v1850 = vsel %vm1390, %v1845, 0
        %v1853 = vsel %vm1390, %v1848, 0
        %1855 = vmatprep.subr.bf16.mxu0 0
        %1856 = vmatpush1.bf16.xpose.msra.mxu0 %v1853
        %1857 = vmatprep.subr.bf16.mxu0 0
        %1858 = vmatpush1.bf16.xpose.msra.mxu0 0
        %1859 = vmatprep.subr.bf16.mxu0 0
        %1860 = vmatpush1.bf16.xpose.msra.mxu0 0
        %1861 = vmatprep.subr.bf16.mxu0 0
        %1862 = vmatpush1.bf16.xpose.msra.mxu0 0
        %1863 = vmatprep.subr.bf16.mxu0 0
        %1864 = vmatpush1.bf16.xpose.msra.mxu0 0
        %1865 = vmatprep.subr.bf16.mxu0 0
        %1866 = vmatpush1.bf16.xpose.msra.mxu0 0
        %1867 = vmatprep.subr.bf16.mxu0 0
        %1868 = vmatpush1.bf16.xpose.msra.mxu0 0
        %1869 = vmatprep.subr.bf16.mxu0 0
        %1870 = vmatpush1.bf16.xpose.msra.mxu0 0
        %1871 = vmatprep.subr.bf16.mxu0 0
        %1872 = vmatpush1.bf16.xpose.msra.mxu0 0
        %1873 = vmatprep.subr.bf16.mxu0 0
        %1874 = vmatpush1.bf16.xpose.msra.mxu0 0
        %1875 = vmatprep.subr.bf16.mxu0 0
        %1876 = vmatpush1.bf16.xpose.msra.mxu0 0
        %1877 = vmatprep.subr.bf16.mxu0 0
        %1878 = vmatpush1.bf16.xpose.msra.mxu0 0
        %1879 = vmatprep.subr.bf16.mxu0 0
        %1880 = vmatpush1.bf16.xpose.msra.mxu0 0
        %1881 = vmatprep.subr.bf16.mxu0 0
        %1882 = vmatpush1.bf16.xpose.msra.mxu0 0
        %1883 = vmatprep.subr.bf16.mxu0 0
        %1884 = vmatpush1.bf16.xpose.msra.mxu0 0
        %1885 = vmatprep.subr.bf16.mxu0 0
        %1886 = vmatpush1.bf16.xpose.msra.mxu0 0
        %1887 = vmatprep.mubr.bf16.mxu0 0
        %1888 = vmatmul.mubr.bf16.gmra.mrb[0].mxu0 %v1850
        %v1889 = vpop.f32.mrb[0].mxu0
        %v1890 = vadd.f32 0.0, %v1889
        %v1891 = vpop.f32.mrb[0].mxu0
        %v1892 = vpop.f32.mrb[0].mxu0
        %v1893 = vadd.f32 0.0, %v1892
        %v1894 = vpop.f32.mrb[0].mxu0
        %1895 = vdwg.mxu0
        %v1896 = vsel %vm1438, %v1890, -inf
        %1897 = vmax.xlane.f32.xlu0 %v1896
        %v1898 = vpop.xlane.xlu0 %1897
        %v1899 = vsel %vm1438, %v1893, -inf
        %1900 = vmax.xlane.f32.xlu0 %v1899
        %v1901 = vpop.xlane.xlu0 %1900
        %v1902 = vsub.f32 %v1890, %v1898
        %v1903 = vsub.f32 %v1893, %v1901
        %v1904 = vmul.f32 %v1902, 1.442695
        %v1905 = vpow.pop %v1904
        %v1906 = vmul.f32 %v1903, 1.442695
        %v1907 = vpow.pop %v1906
        %v1908 = vsel %vm1438, %v1905, 0.0
        %1909 = vadd.xlane.f32.xlu0 %v1908
        %v1910 = vpop.xlane.xlu0 %1909
        %v1911 = vsel %vm1438, %v1907, 0.0
        %1912 = vadd.xlane.f32.xlu0 %v1911
        %v1913 = vpop.xlane.xlu0 %1912
        %v1914 = vrcp.pop %v1910
        %v1915 = vrcp.pop %v1913
        %v1916 = vmul.f32 %v1905, %v1914
        %v1917 = vmul.f32 %v1907, %v1915
        %v1918 = vpack.c.bf16 %v1917, %v1916
        %1920 = vrot.lane.b32.xlu0 %v1842, 104
        %v1921 = vpop.permute.xlu0 %1920
        %v1924 = vsel %vm1438, %v1918, 0
        %1926 = vmatprep.subr.bf16.mxu0 0
        %1927 = vmatpush1.bf16.msra.mxu0 %v1921
        %1928 = vmatprep.subr.bf16.mxu0 0
        %1929 = vmatpush1.bf16.msra.mxu0 0
        %1930 = vmatprep.subr.bf16.mxu0 0
        %1931 = vmatpush1.bf16.msra.mxu0 0
        %1932 = vmatprep.subr.bf16.mxu0 0
        %1933 = vmatpush1.bf16.msra.mxu0 0
        %1934 = vmatprep.subr.bf16.mxu0 0
        %1935 = vmatpush1.bf16.msra.mxu0 0
        %1936 = vmatprep.subr.bf16.mxu0 0
        %1937 = vmatpush1.bf16.msra.mxu0 0
        %1938 = vmatprep.subr.bf16.mxu0 0
        %1939 = vmatpush1.bf16.msra.mxu0 0
        %1940 = vmatprep.subr.bf16.mxu0 0
        %1941 = vmatpush1.bf16.msra.mxu0 0
        %1942 = vmatprep.subr.bf16.mxu0 0
        %1943 = vmatpush1.bf16.msra.mxu0 0
        %1944 = vmatprep.subr.bf16.mxu0 0
        %1945 = vmatpush1.bf16.msra.mxu0 0
        %1946 = vmatprep.subr.bf16.mxu0 0
        %1947 = vmatpush1.bf16.msra.mxu0 0
        %1948 = vmatprep.subr.bf16.mxu0 0
        %1949 = vmatpush1.bf16.msra.mxu0 0
        %1950 = vmatprep.subr.bf16.mxu0 0
        %1951 = vmatpush1.bf16.msra.mxu0 0
        %1952 = vmatprep.subr.bf16.mxu0 0
        %1953 = vmatpush1.bf16.msra.mxu0 0
        %1954 = vmatprep.subr.bf16.mxu0 0
        %1955 = vmatpush1.bf16.msra.mxu0 0
        %1956 = vmatprep.subr.bf16.mxu0 0
        %1957 = vmatpush1.bf16.msra.mxu0 0
        %1958 = vmatprep.mubr.bf16.mxu0 0
        %1959 = vmatmul.mubr.bf16.gmra.mrb[0].mxu0 %v1924
        %v1960 = vpop.f32.mrb[0].mxu0
        %v1961 = vadd.f32 0.0, %v1960
        %v1962 = vpop.f32.mrb[0].mxu0
        %v1963 = vpop.f32.mrb[0].mxu0
        %v1964 = vadd.f32 0.0, %v1963
        %v1965 = vpop.f32.mrb[0].mxu0
        %1966 = vdwg.mxu0
        %1969 = vrot.lane.b32.xlu0 %v1961, 24
        %v1970 = vpop.permute.xlu0 %1969
        %1971 = vrot.lane.b32.xlu0 %v1964, 24
        %v1972 = vpop.permute.xlu0 %1971
        %vm1975 = vcmask 261312
        %1976 = vst.msk [vmem:[#allocation5] sm:$0xff] %vm1975, %v1970
        %1977 = vst.msk [vmem:[#allocation5 + $0x8] sm:$0xff] %vm1975, %v1972
        %v1979 = vunpack.c.l.b16 %v1918
        %v1980 = vunpack.c.h.b16 %v1918
        %v1981 = vpack.c.b16 %v1979, %v1979
        %v1982 = vpack.c.b16 %v1980, %v1980
        %1983 = vrot.lane.b32.xlu0 %v1981, 48
        %v1984 = vpop.permute.xlu0 %1983
        %1985 = vrot.lane.b32.xlu0 %v1982, 48
        %v1986 = vpop.permute.xlu0 %1985
        %vm1989 = vcmask 519552
        %1990 = vst.msk [vmem:[%s1146] sm:$0xf] %vm1989, %v1984
        %1991 = vst.msk [vmem:[%s1146 + $0x4] sm:$0xf] %vm1989, %v1986
        %v1992 = vld [vmem:[#allocation5] sm:$0xff]
        %v1993 = vld [vmem:[#allocation5 + $0x8] sm:$0xff]
        %v1994 = vpack.c.bf16 %v1993, %v1992
        %v1996 = vlaneseq
        %v1997 = vshrl.u32 %v1996, 7
        %v1998 = vsub.s32 0, %v1997
        %v1999 = vrot.slane %v1188, %v1998
        %v2005 = vunpack.c.l.b16 %v1184
        %v2006 = vunpack.c.l.b16 %v1185
        %v2007 = vunpack.c.l.b16 %v1186
        %v2008 = vunpack.c.l.b16 %v1187
        %v2009 = vpack.c.b16 %v2006, %v2005
        %v2010 = vpack.c.b16 %v2008, %v2007
        %v2014 = vsel %vm1210, %v1994, 0
        %2016 = vmatprep.subr.bf16.mxu0 0
        %2017 = vmatpush1.bf16.msra.mxu0 %v2009
        %2018 = vmatprep.subr.bf16.mxu0 0
        %2019 = vmatpush1.bf16.msra.mxu0 %v2010
        %2020 = vmatprep.subr.bf16.mxu0 0
        %2021 = vmatpush1.bf16.msra.mxu0 0
        %2022 = vmatprep.subr.bf16.mxu0 0
        %2023 = vmatpush1.bf16.msra.mxu0 0
        %2024 = vmatprep.subr.bf16.mxu0 0
        %2025 = vmatpush1.bf16.msra.mxu0 0
        %2026 = vmatprep.subr.bf16.mxu0 0
        %2027 = vmatpush1.bf16.msra.mxu0 0
        %2028 = vmatprep.subr.bf16.mxu0 0
        %2029 = vmatpush1.bf16.msra.mxu0 0
        %2030 = vmatprep.subr.bf16.mxu0 0
        %2031 = vmatpush1.bf16.msra.mxu0 0
        %2032 = vmatprep.subr.bf16.mxu0 0
        %2033 = vmatpush1.bf16.msra.mxu0 0
        %2034 = vmatprep.subr.bf16.mxu0 0
        %2035 = vmatpush1.bf16.msra.mxu0 0
        %2036 = vmatprep.subr.bf16.mxu0 0
        %2037 = vmatpush1.bf16.msra.mxu0 0
        %2038 = vmatprep.subr.bf16.mxu0 0
        %2039 = vmatpush1.bf16.msra.mxu0 0
        %2040 = vmatprep.subr.bf16.mxu0 0
        %2041 = vmatpush1.bf16.msra.mxu0 0
        %2042 = vmatprep.subr.bf16.mxu0 0
        %2043 = vmatpush1.bf16.msra.mxu0 0
        %2044 = vmatprep.subr.bf16.mxu0 0
        %2045 = vmatpush1.bf16.msra.mxu0 0
        %2046 = vmatprep.subr.bf16.mxu0 0
        %2047 = vmatpush1.bf16.msra.mxu0 0
        %2048 = vmatprep.mubr.bf16.mxu0 0
        %2049 = vmatmul.mubr.bf16.gmra.mrb[0].mxu0 %v2014
        %v2050 = vpop.f32.mrb[0].mxu0
        %v2051 = vadd.f32 %v1999, %v2050
        %v2052 = vpop.f32.mrb[0].mxu0
        %v2053 = vpop.f32.mrb[0].mxu0
        %v2054 = vadd.f32 %v1999, %v2053
        %v2055 = vpop.f32.mrb[0].mxu0
        %2056 = vdwg.mxu0
        %v2057 = vadd.f32 %v2051, %v1165
        %v2058 = vadd.f32 %v2054, %v1166
        %v2059 = vsel %vm1210, %v2057, 0.0
        %2060 = vadd.xlane.f32.xlu0 %v2059
        %v2061 = vpop.xlane.xlu0 %2060
        %v2062 = vsel %vm1210, %v2058, 0.0
        %2063 = vadd.xlane.f32.xlu0 %v2062
        %v2064 = vpop.xlane.xlu0 %2063
        %v2065 = vrcp.pop 32.0
        %v2066 = vmul.f32 %v2061, %v2065
        %v2067 = vmul.f32 %v2064, %v2065
        %v2068 = vsub.f32 %v2057, %v2066
        %v2069 = vsub.f32 %v2058, %v2067
        %v2070 = vmul.f32 %v2068, %v2068
        %v2071 = vmul.f32 %v2069, %v2069
        %v2072 = vsel %vm1210, %v2070, 0.0
        %2073 = vadd.xlane.f32.xlu0 %v2072
        %v2074 = vpop.xlane.xlu0 %2073
        %v2075 = vsel %vm1210, %v2071, 0.0
        %2076 = vadd.xlane.f32.xlu0 %v2075
        %v2077 = vpop.xlane.xlu0 %2076
        %v2078 = vmul.f32 %v2074, %v2065
        %v2079 = vmul.f32 %v2077, %v2065
        %v2080 = vadd.f32 %v2078, 1e-05
        %v2081 = vadd.f32 %v2079, 1e-05
        %v2082 = vrsqrt.pop %v2080
        %v2083 = vrsqrt.pop %v2081
        %v2084 = vmul.f32 %v2068, %v2082
        %v2085 = vmul.f32 %v2069, %v2083
        %v2087 = vlaneseq
        %v2088 = vshrl.u32 %v2087, 7
        %v2089 = vsub.s32 0, %v2088
        %v2090 = vrot.slane %v1189, %v2089
        %v2092 = vmul.f32 %v2084, %v2090
        %v2093 = vmul.f32 %v2085, %v2090
        %v2095 = vlaneseq
        %v2096 = vshrl.u32 %v2095, 7
        %v2097 = vsub.s32 0, %v2096
        %v2098 = vrot.slane %v1190, %v2097
        %v2100 = vadd.f32 %v2092, %v2098
        %v2101 = vadd.f32 %v2093, %v2098
        %v2102 = vld [vmem:[%s25] sm:$0xf]
        %v2103 = vld [vmem:[%s25 + $0x4] sm:$0xf]
        %v2104 = vld [vmem:[%s25 + $0x8] sm:$0xf]
        %v2105 = vld [vmem:[%s25 + $0xc] sm:$0xf]
        %v2106 = vld [vmem:[#allocation23] sm:$0x1]
        %v2107 = vld [vmem:[%s29] sm:$0xf]
        %v2108 = vld [vmem:[%s29 + $0x4] sm:$0xf]
        %v2109 = vld [vmem:[%s29 + $0x8] sm:$0xf]
        %v2110 = vld [vmem:[%s29 + $0xc] sm:$0xf]
        %v2111 = vld [vmem:[#allocation24] sm:$0x1]
        %v2112 = vld [vmem:[#allocation26] sm:$0xf]
        %v2113 = vld [vmem:[#allocation26 + $0x4] sm:$0xf]
        %v2114 = vld [vmem:[#allocation26 + $0x8] sm:$0xf]
        %v2115 = vld [vmem:[#allocation26 + $0xc] sm:$0xf]
        %v2116 = vld [vmem:[#allocation27] sm:$0x1]
        %v2117 = vld [vmem:[%s37] sm:$0xf]
        %v2118 = vld [vmem:[%s37 + $0x4] sm:$0xf]
        %v2119 = vld [vmem:[%s37 + $0x8] sm:$0xf]
        %v2120 = vld [vmem:[%s37 + $0xc] sm:$0xf]
        %v2121 = vld [vmem:[%s39] sm:$0x1]
        %v2122 = vld [vmem:[%s41] sm:$0x1]
        %v2123 = vld [vmem:[%s43] sm:$0x1]
        %v2124 = vpack.c.bf16 %v2101, %v2100
        %v2125 = vpack.c.bf16 %v1168, %v1167
        %v2127 = vlaneseq
        %v2128 = vshrl.u32 %v2127, 7
        %v2129 = vsub.s32 0, %v2128
        %v2130 = vrot.slane %v2106, %v2129
        %v2136 = vunpack.c.l.b16 %v2102
        %v2137 = vunpack.c.l.b16 %v2103
        %v2138 = vunpack.c.l.b16 %v2104
        %v2139 = vunpack.c.l.b16 %v2105
        %v2140 = vpack.c.b16 %v2137, %v2136
        %v2141 = vpack.c.b16 %v2139, %v2138
        %v2145 = vsel %vm1210, %v2124, 0
        %2147 = vmatprep.subr.bf16.mxu0 0
        %2148 = vmatpush1.bf16.msra.mxu0 %v2140
        %2149 = vmatprep.subr.bf16.mxu0 0
        %2150 = vmatpush1.bf16.msra.mxu0 %v2141
        %2151 = vmatprep.subr.bf16.mxu0 0
        %2152 = vmatpush1.bf16.msra.mxu0 0
        %2153 = vmatprep.subr.bf16.mxu0 0
        %2154 = vmatpush1.bf16.msra.mxu0 0
        %2155 = vmatprep.subr.bf16.mxu0 0
        %2156 = vmatpush1.bf16.msra.mxu0 0
        %2157 = vmatprep.subr.bf16.mxu0 0
        %2158 = vmatpush1.bf16.msra.mxu0 0
        %2159 = vmatprep.subr.bf16.mxu0 0
        %2160 = vmatpush1.bf16.msra.mxu0 0
        %2161 = vmatprep.subr.bf16.mxu0 0
        %2162 = vmatpush1.bf16.msra.mxu0 0
        %2163 = vmatprep.subr.bf16.mxu0 0
        %2164 = vmatpush1.bf16.msra.mxu0 0
        %2165 = vmatprep.subr.bf16.mxu0 0
        %2166 = vmatpush1.bf16.msra.mxu0 0
        %2167 = vmatprep.subr.bf16.mxu0 0
        %2168 = vmatpush1.bf16.msra.mxu0 0
        %2169 = vmatprep.subr.bf16.mxu0 0
        %2170 = vmatpush1.bf16.msra.mxu0 0
        %2171 = vmatprep.subr.bf16.mxu0 0
        %2172 = vmatpush1.bf16.msra.mxu0 0
        %2173 = vmatprep.subr.bf16.mxu0 0
        %2174 = vmatpush1.bf16.msra.mxu0 0
        %2175 = vmatprep.subr.bf16.mxu0 0
        %2176 = vmatpush1.bf16.msra.mxu0 0
        %2177 = vmatprep.subr.bf16.mxu0 0
        %2178 = vmatpush1.bf16.msra.mxu0 0
        %2179 = vmatprep.mubr.bf16.mxu0 0
        %2180 = vmatmul.mubr.bf16.gmra.mrb[0].mxu0 %v2145
        %v2181 = vpop.f32.mrb[0].mxu0
        %v2182 = vadd.f32 %v2130, %v2181
        %v2183 = vpop.f32.mrb[0].mxu0
        %v2184 = vpop.f32.mrb[0].mxu0
        %v2185 = vadd.f32 %v2130, %v2184
        %v2186 = vpop.f32.mrb[0].mxu0
        %2187 = vdwg.mxu0
        %v2188 = vmul.f32 %v2182, 0.35355338
        %v2189 = vmul.f32 %v2185, 0.35355338
        %2190 = vst.msk [vmem:[#allocation2] sm:$0xff] %vm1210, %v2188
        %2191 = vst.msk [vmem:[#allocation2 + $0x8] sm:$0xff] %vm1210, %v2189
        %v2193 = vlaneseq
        %v2194 = vshrl.u32 %v2193, 7
        %v2195 = vsub.s32 0, %v2194
        %v2196 = vrot.slane %v2111, %v2195
        %v2202 = vunpack.c.l.b16 %v2107
        %v2203 = vunpack.c.l.b16 %v2108
        %v2204 = vunpack.c.l.b16 %v2109
        %v2205 = vunpack.c.l.b16 %v2110
        %v2206 = vpack.c.b16 %v2203, %v2202
        %v2207 = vpack.c.b16 %v2205, %v2204
        %v2211 = vsel %vm1210, %v2125, 0
        %2213 = vmatprep.subr.bf16.mxu0 0
        %2214 = vmatpush1.bf16.msra.mxu0 %v2206
        %2215 = vmatprep.subr.bf16.mxu0 0
        %2216 = vmatpush1.bf16.msra.mxu0 %v2207
        %2217 = vmatprep.subr.bf16.mxu0 0
        %2218 = vmatpush1.bf16.msra.mxu0 0
        %2219 = vmatprep.subr.bf16.mxu0 0
        %2220 = vmatpush1.bf16.msra.mxu0 0
        %2221 = vmatprep.subr.bf16.mxu0 0
        %2222 = vmatpush1.bf16.msra.mxu0 0
        %2223 = vmatprep.subr.bf16.mxu0 0
        %2224 = vmatpush1.bf16.msra.mxu0 0
        %2225 = vmatprep.subr.bf16.mxu0 0
        %2226 = vmatpush1.bf16.msra.mxu0 0
        %2227 = vmatprep.subr.bf16.mxu0 0
        %2228 = vmatpush1.bf16.msra.mxu0 0
        %2229 = vmatprep.subr.bf16.mxu0 0
        %2230 = vmatpush1.bf16.msra.mxu0 0
        %2231 = vmatprep.subr.bf16.mxu0 0
        %2232 = vmatpush1.bf16.msra.mxu0 0
        %2233 = vmatprep.subr.bf16.mxu0 0
        %2234 = vmatpush1.bf16.msra.mxu0 0
        %2235 = vmatprep.subr.bf16.mxu0 0
        %2236 = vmatpush1.bf16.msra.mxu0 0
        %2237 = vmatprep.subr.bf16.mxu0 0
        %2238 = vmatpush1.bf16.msra.mxu0 0
        %2239 = vmatprep.subr.bf16.mxu0 0
        %2240 = vmatpush1.bf16.msra.mxu0 0
        %2241 = vmatprep.subr.bf16.mxu0 0
        %2242 = vmatpush1.bf16.msra.mxu0 0
        %2243 = vmatprep.subr.bf16.mxu0 0
        %2244 = vmatpush1.bf16.msra.mxu0 0
        %2245 = vmatprep.mubr.bf16.mxu0 0
        %2246 = vmatmul.mubr.bf16.gmra.mrb[0].mxu0 %v2211
        %v2247 = vpop.f32.mrb[0].mxu0
        %v2248 = vadd.f32 %v2196, %v2247
        %v2249 = vpop.f32.mrb[0].mxu0
        %v2250 = vpop.f32.mrb[0].mxu0
        %v2251 = vadd.f32 %v2196, %v2250
        %v2252 = vpop.f32.mrb[0].mxu0
        %2253 = vdwg.mxu0
        %2254 = vst.msk [vmem:[#allocation3] sm:$0xff] %vm1210, %v2248
        %2255 = vst.msk [vmem:[#allocation3 + $0x8] sm:$0xff] %vm1210, %v2251
        %v2257 = vlaneseq
        %v2258 = vshrl.u32 %v2257, 7
        %v2259 = vsub.s32 0, %v2258
        %v2260 = vrot.slane %v2116, %v2259
        %v2266 = vunpack.c.l.b16 %v2112
        %v2267 = vunpack.c.l.b16 %v2113
        %v2268 = vunpack.c.l.b16 %v2114
        %v2269 = vunpack.c.l.b16 %v2115
        %v2270 = vpack.c.b16 %v2267, %v2266
        %v2271 = vpack.c.b16 %v2269, %v2268
        %2274 = vmatprep.subr.bf16.mxu0 0
        %2275 = vmatpush1.bf16.msra.mxu0 %v2270
        %2276 = vmatprep.subr.bf16.mxu0 0
        %2277 = vmatpush1.bf16.msra.mxu0 %v2271
        %2278 = vmatprep.subr.bf16.mxu0 0
        %2279 = vmatpush1.bf16.msra.mxu0 0
        %2280 = vmatprep.subr.bf16.mxu0 0
        %2281 = vmatpush1.bf16.msra.mxu0 0
        %2282 = vmatprep.subr.bf16.mxu0 0
        %2283 = vmatpush1.bf16.msra.mxu0 0
        %2284 = vmatprep.subr.bf16.mxu0 0
        %2285 = vmatpush1.bf16.msra.mxu0 0
        %2286 = vmatprep.subr.bf16.mxu0 0
        %2287 = vmatpush1.bf16.msra.mxu0 0
        %2288 = vmatprep.subr.bf16.mxu0 0
        %2289 = vmatpush1.bf16.msra.mxu0 0
        %2290 = vmatprep.subr.bf16.mxu0 0
        %2291 = vmatpush1.bf16.msra.mxu0 0
        %2292 = vmatprep.subr.bf16.mxu0 0
        %2293 = vmatpush1.bf16.msra.mxu0 0
        %2294 = vmatprep.subr.bf16.mxu0 0
        %2295 = vmatpush1.bf16.msra.mxu0 0
        %2296 = vmatprep.subr.bf16.mxu0 0
        %2297 = vmatpush1.bf16.msra.mxu0 0
        %2298 = vmatprep.subr.bf16.mxu0 0
        %2299 = vmatpush1.bf16.msra.mxu0 0
        %2300 = vmatprep.subr.bf16.mxu0 0
        %2301 = vmatpush1.bf16.msra.mxu0 0
        %2302 = vmatprep.subr.bf16.mxu0 0
        %2303 = vmatpush1.bf16.msra.mxu0 0
        %2304 = vmatprep.subr.bf16.mxu0 0
        %2305 = vmatpush1.bf16.msra.mxu0 0
        %2306 = vmatprep.mubr.bf16.mxu0 0
        %2307 = vmatmul.mubr.bf16.gmra.mrb[0].mxu0 %v2211
        %v2308 = vpop.f32.mrb[0].mxu0
        %v2309 = vadd.f32 %v2260, %v2308
        %v2310 = vpop.f32.mrb[0].mxu0
        %v2311 = vpop.f32.mrb[0].mxu0
        %v2312 = vadd.f32 %v2260, %v2311
        %v2313 = vpop.f32.mrb[0].mxu0
        %2314 = vdwg.mxu0
        %2315 = vst.msk [vmem:[#allocation4] sm:$0xff] %vm1210, %v2309
        %2316 = vst.msk [vmem:[#allocation4 + $0x8] sm:$0xff] %vm1210, %v2312
        %v2317 = vld [vmem:[#allocation2] sm:$0xff]
        %v2318 = vld [vmem:[#allocation2 + $0x8] sm:$0xff]
        %v2319 = vpack.c.bf16 %v2318, %v2317
        %v2320 = vld [vmem:[#allocation3] sm:$0xff]
        %v2321 = vld [vmem:[#allocation3 + $0x8] sm:$0xff]
        %v2322 = vpack.c.bf16 %v2321, %v2320
        %v2323 = vld [vmem:[#allocation4] sm:$0xff]
        %v2324 = vld [vmem:[#allocation4 + $0x8] sm:$0xff]
        %v2325 = vpack.c.bf16 %v2324, %v2323
        %v2327 = vsel %vm1390, %v2319, 0
        %v2330 = vsel %vm1390, %v2322, 0
        %2332 = vmatprep.subr.bf16.mxu0 0
        %2333 = vmatpush1.bf16.xpose.msra.mxu0 %v2330
        %2334 = vmatprep.subr.bf16.mxu0 0
        %2335 = vmatpush1.bf16.xpose.msra.mxu0 0
        %2336 = vmatprep.subr.bf16.mxu0 0
        %2337 = vmatpush1.bf16.xpose.msra.mxu0 0
        %2338 = vmatprep.subr.bf16.mxu0 0
        %2339 = vmatpush1.bf16.xpose.msra.mxu0 0
        %2340 = vmatprep.subr.bf16.mxu0 0
        %2341 = vmatpush1.bf16.xpose.msra.mxu0 0
        %2342 = vmatprep.subr.bf16.mxu0 0
        %2343 = vmatpush1.bf16.xpose.msra.mxu0 0
        %2344 = vmatprep.subr.bf16.mxu0 0
        %2345 = vmatpush1.bf16.xpose.msra.mxu0 0
        %2346 = vmatprep.subr.bf16.mxu0 0
        %2347 = vmatpush1.bf16.xpose.msra.mxu0 0
        %2348 = vmatprep.subr.bf16.mxu0 0
        %2349 = vmatpush1.bf16.xpose.msra.mxu0 0
        %2350 = vmatprep.subr.bf16.mxu0 0
        %2351 = vmatpush1.bf16.xpose.msra.mxu0 0
        %2352 = vmatprep.subr.bf16.mxu0 0
        %2353 = vmatpush1.bf16.xpose.msra.mxu0 0
        %2354 = vmatprep.subr.bf16.mxu0 0
        %2355 = vmatpush1.bf16.xpose.msra.mxu0 0
        %2356 = vmatprep.subr.bf16.mxu0 0
        %2357 = vmatpush1.bf16.xpose.msra.mxu0 0
        %2358 = vmatprep.subr.bf16.mxu0 0
        %2359 = vmatpush1.bf16.xpose.msra.mxu0 0
        %2360 = vmatprep.subr.bf16.mxu0 0
        %2361 = vmatpush1.bf16.xpose.msra.mxu0 0
        %2362 = vmatprep.subr.bf16.mxu0 0
        %2363 = vmatpush1.bf16.xpose.msra.mxu0 0
        %2364 = vmatprep.mubr.bf16.mxu0 0
        %2365 = vmatmul.mubr.bf16.gmra.mrb[0].mxu0 %v2327
        %v2366 = vpop.f32.mrb[0].mxu0
        %v2367 = vadd.f32 0.0, %v2366
        %v2368 = vpop.f32.mrb[0].mxu0
        %v2369 = vpop.f32.mrb[0].mxu0
        %v2370 = vadd.f32 0.0, %v2369
        %v2371 = vpop.f32.mrb[0].mxu0
        %2372 = vdwg.mxu0
        %v2373 = vsel %vm1438, %v2367, -inf
        %2374 = vmax.xlane.f32.xlu0 %v2373
        %v2375 = vpop.xlane.xlu0 %2374
        %v2376 = vsel %vm1438, %v2370, -inf
        %2377 = vmax.xlane.f32.xlu0 %v2376
        %v2378 = vpop.xlane.xlu0 %2377
        %v2379 = vsub.f32 %v2367, %v2375
        %v2380 = vsub.f32 %v2370, %v2378
        %v2381 = vmul.f32 %v2379, 1.442695
        %v2382 = vpow.pop %v2381
        %v2383 = vmul.f32 %v2380, 1.442695
        %v2384 = vpow.pop %v2383
        %v2385 = vsel %vm1438, %v2382, 0.0
        %2386 = vadd.xlane.f32.xlu0 %v2385
        %v2387 = vpop.xlane.xlu0 %2386
        %v2388 = vsel %vm1438, %v2384, 0.0
        %2389 = vadd.xlane.f32.xlu0 %v2388
        %v2390 = vpop.xlane.xlu0 %2389
        %v2391 = vrcp.pop %v2387
        %v2392 = vrcp.pop %v2390
        %v2393 = vmul.f32 %v2382, %v2391
        %v2394 = vmul.f32 %v2384, %v2392
        %v2395 = vpack.c.bf16 %v2394, %v2393
        %v2397 = vsel %vm1438, %v2395, 0
        %2399 = vmatprep.subr.bf16.mxu0 0
        %2400 = vmatpush1.bf16.msra.mxu0 %v2325
        %2401 = vmatprep.subr.bf16.mxu0 0
        %2402 = vmatpush1.bf16.msra.mxu0 0
        %2403 = vmatprep.subr.bf16.mxu0 0
        %2404 = vmatpush1.bf16.msra.mxu0 0
        %2405 = vmatprep.subr.bf16.mxu0 0
        %2406 = vmatpush1.bf16.msra.mxu0 0
        %2407 = vmatprep.subr.bf16.mxu0 0
        %2408 = vmatpush1.bf16.msra.mxu0 0
        %2409 = vmatprep.subr.bf16.mxu0 0
        %2410 = vmatpush1.bf16.msra.mxu0 0
        %2411 = vmatprep.subr.bf16.mxu0 0
        %2412 = vmatpush1.bf16.msra.mxu0 0
        %2413 = vmatprep.subr.bf16.mxu0 0
        %2414 = vmatpush1.bf16.msra.mxu0 0
        %2415 = vmatprep.subr.bf16.mxu0 0
        %2416 = vmatpush1.bf16.msra.mxu0 0
        %2417 = vmatprep.subr.bf16.mxu0 0
        %2418 = vmatpush1.bf16.msra.mxu0 0
        %2419 = vmatprep.subr.bf16.mxu0 0
        %2420 = vmatpush1.bf16.msra.mxu0 0
        %2421 = vmatprep.subr.bf16.mxu0 0
        %2422 = vmatpush1.bf16.msra.mxu0 0
        %2423 = vmatprep.subr.bf16.mxu0 0
        %2424 = vmatpush1.bf16.msra.mxu0 0
        %2425 = vmatprep.subr.bf16.mxu0 0
        %2426 = vmatpush1.bf16.msra.mxu0 0
        %2427 = vmatprep.subr.bf16.mxu0 0
        %2428 = vmatpush1.bf16.msra.mxu0 0
        %2429 = vmatprep.subr.bf16.mxu0 0
        %2430 = vmatpush1.bf16.msra.mxu0 0
        %2431 = vmatprep.mubr.bf16.mxu0 0
        %2432 = vmatmul.mubr.bf16.gmra.mrb[0].mxu0 %v2397
        %v2433 = vpop.f32.mrb[0].mxu0
        %v2434 = vadd.f32 0.0, %v2433
        %v2435 = vpop.f32.mrb[0].mxu0
        %v2436 = vpop.f32.mrb[0].mxu0
        %v2437 = vadd.f32 0.0, %v2436
        %v2438 = vpop.f32.mrb[0].mxu0
        %2439 = vdwg.mxu0
        %2440 = vst.msk [vmem:[#allocation5] sm:$0xff] %vm1390, %v2434
        %2441 = vst.msk [vmem:[#allocation5 + $0x8] sm:$0xff] %vm1390, %v2437
        %v2443 = vunpack.c.l.b16 %v2395
        %v2444 = vunpack.c.h.b16 %v2395
        %v2445 = vpack.c.b16 %v2443, %v2443
        %v2446 = vpack.c.b16 %v2444, %v2444
        %2449 = vst.msk [vmem:[%s1153] sm:$0xf] %vm1515, %v2445
        %2450 = vst.msk [vmem:[%s1153 + $0x4] sm:$0xf] %vm1515, %v2446
        %v2451 = vld [vmem:[#allocation2] sm:$0xff]
        %v2452 = vld [vmem:[#allocation2 + $0x8] sm:$0xff]
        %v2453 = vpack.c.bf16 %v2452, %v2451
        %v2454 = vld [vmem:[#allocation3] sm:$0xff]
        %v2455 = vld [vmem:[#allocation3 + $0x8] sm:$0xff]
        %v2456 = vpack.c.bf16 %v2455, %v2454
        %v2457 = vld [vmem:[#allocation4] sm:$0xff]
        %v2458 = vld [vmem:[#allocation4 + $0x8] sm:$0xff]
        %v2459 = vpack.c.bf16 %v2458, %v2457
        %2461 = vrot.lane.b32.xlu0 %v2453, 120
        %v2462 = vpop.permute.xlu0 %2461
        %2464 = vrot.lane.b32.xlu0 %v2456, 120
        %v2465 = vpop.permute.xlu0 %2464
        %v2467 = vsel %vm1390, %v2462, 0
        %v2470 = vsel %vm1390, %v2465, 0
        %2472 = vmatprep.subr.bf16.mxu0 0
        %2473 = vmatpush1.bf16.xpose.msra.mxu0 %v2470
        %2474 = vmatprep.subr.bf16.mxu0 0
        %2475 = vmatpush1.bf16.xpose.msra.mxu0 0
        %2476 = vmatprep.subr.bf16.mxu0 0
        %2477 = vmatpush1.bf16.xpose.msra.mxu0 0
        %2478 = vmatprep.subr.bf16.mxu0 0
        %2479 = vmatpush1.bf16.xpose.msra.mxu0 0
        %2480 = vmatprep.subr.bf16.mxu0 0
        %2481 = vmatpush1.bf16.xpose.msra.mxu0 0
        %2482 = vmatprep.subr.bf16.mxu0 0
        %2483 = vmatpush1.bf16.xpose.msra.mxu0 0
        %2484 = vmatprep.subr.bf16.mxu0 0
        %2485 = vmatpush1.bf16.xpose.msra.mxu0 0
        %2486 = vmatprep.subr.bf16.mxu0 0
        %2487 = vmatpush1.bf16.xpose.msra.mxu0 0
        %2488 = vmatprep.subr.bf16.mxu0 0
        %2489 = vmatpush1.bf16.xpose.msra.mxu0 0
        %2490 = vmatprep.subr.bf16.mxu0 0
        %2491 = vmatpush1.bf16.xpose.msra.mxu0 0
        %2492 = vmatprep.subr.bf16.mxu0 0
        %2493 = vmatpush1.bf16.xpose.msra.mxu0 0
        %2494 = vmatprep.subr.bf16.mxu0 0
        %2495 = vmatpush1.bf16.xpose.msra.mxu0 0
        %2496 = vmatprep.subr.bf16.mxu0 0
        %2497 = vmatpush1.bf16.xpose.msra.mxu0 0
        %2498 = vmatprep.subr.bf16.mxu0 0
        %2499 = vmatpush1.bf16.xpose.msra.mxu0 0
        %2500 = vmatprep.subr.bf16.mxu0 0
        %2501 = vmatpush1.bf16.xpose.msra.mxu0 0
        %2502 = vmatprep.subr.bf16.mxu0 0
        %2503 = vmatpush1.bf16.xpose.msra.mxu0 0
        %2504 = vmatprep.mubr.bf16.mxu0 0
        %2505 = vmatmul.mubr.bf16.gmra.mrb[0].mxu0 %v2467
        %v2506 = vpop.f32.mrb[0].mxu0
        %v2507 = vadd.f32 0.0, %v2506
        %v2508 = vpop.f32.mrb[0].mxu0
        %v2509 = vpop.f32.mrb[0].mxu0
        %v2510 = vadd.f32 0.0, %v2509
        %v2511 = vpop.f32.mrb[0].mxu0
        %2512 = vdwg.mxu0
        %v2513 = vsel %vm1438, %v2507, -inf
        %2514 = vmax.xlane.f32.xlu0 %v2513
        %v2515 = vpop.xlane.xlu0 %2514
        %v2516 = vsel %vm1438, %v2510, -inf
        %2517 = vmax.xlane.f32.xlu0 %v2516
        %v2518 = vpop.xlane.xlu0 %2517
        %v2519 = vsub.f32 %v2507, %v2515
        %v2520 = vsub.f32 %v2510, %v2518
        %v2521 = vmul.f32 %v2519, 1.442695
        %v2522 = vpow.pop %v2521
        %v2523 = vmul.f32 %v2520, 1.442695
        %v2524 = vpow.pop %v2523
        %v2525 = vsel %vm1438, %v2522, 0.0
        %2526 = vadd.xlane.f32.xlu0 %v2525
        %v2527 = vpop.xlane.xlu0 %2526
        %v2528 = vsel %vm1438, %v2524, 0.0
        %2529 = vadd.xlane.f32.xlu0 %v2528
        %v2530 = vpop.xlane.xlu0 %2529
        %v2531 = vrcp.pop %v2527
        %v2532 = vrcp.pop %v2530
        %v2533 = vmul.f32 %v2522, %v2531
        %v2534 = vmul.f32 %v2524, %v2532
        %v2535 = vpack.c.bf16 %v2534, %v2533
        %2537 = vrot.lane.b32.xlu0 %v2459, 120
        %v2538 = vpop.permute.xlu0 %2537
        %v2541 = vsel %vm1438, %v2535, 0
        %2543 = vmatprep.subr.bf16.mxu0 0
        %2544 = vmatpush1.bf16.msra.mxu0 %v2538
        %2545 = vmatprep.subr.bf16.mxu0 0
        %2546 = vmatpush1.bf16.msra.mxu0 0
        %2547 = vmatprep.subr.bf16.mxu0 0
        %2548 = vmatpush1.bf16.msra.mxu0 0
        %2549 = vmatprep.subr.bf16.mxu0 0
        %2550 = vmatpush1.bf16.msra.mxu0 0
        %2551 = vmatprep.subr.bf16.mxu0 0
        %2552 = vmatpush1.bf16.msra.mxu0 0
        %2553 = vmatprep.subr.bf16.mxu0 0
        %2554 = vmatpush1.bf16.msra.mxu0 0
        %2555 = vmatprep.subr.bf16.mxu0 0
        %2556 = vmatpush1.bf16.msra.mxu0 0
        %2557 = vmatprep.subr.bf16.mxu0 0
        %2558 = vmatpush1.bf16.msra.mxu0 0
        %2559 = vmatprep.subr.bf16.mxu0 0
        %2560 = vmatpush1.bf16.msra.mxu0 0
        %2561 = vmatprep.subr.bf16.mxu0 0
        %2562 = vmatpush1.bf16.msra.mxu0 0
        %2563 = vmatprep.subr.bf16.mxu0 0
        %2564 = vmatpush1.bf16.msra.mxu0 0
        %2565 = vmatprep.subr.bf16.mxu0 0
        %2566 = vmatpush1.bf16.msra.mxu0 0
        %2567 = vmatprep.subr.bf16.mxu0 0
        %2568 = vmatpush1.bf16.msra.mxu0 0
        %2569 = vmatprep.subr.bf16.mxu0 0
        %2570 = vmatpush1.bf16.msra.mxu0 0
        %2571 = vmatprep.subr.bf16.mxu0 0
        %2572 = vmatpush1.bf16.msra.mxu0 0
        %2573 = vmatprep.subr.bf16.mxu0 0
        %2574 = vmatpush1.bf16.msra.mxu0 0
        %2575 = vmatprep.mubr.bf16.mxu0 0
        %2576 = vmatmul.mubr.bf16.gmra.mrb[0].mxu0 %v2541
        %v2577 = vpop.f32.mrb[0].mxu0
        %v2578 = vadd.f32 0.0, %v2577
        %v2579 = vpop.f32.mrb[0].mxu0
        %v2580 = vpop.f32.mrb[0].mxu0
        %v2581 = vadd.f32 0.0, %v2580
        %v2582 = vpop.f32.mrb[0].mxu0
        %2583 = vdwg.mxu0
        %2586 = vrot.lane.b32.xlu0 %v2578, 8
        %v2587 = vpop.permute.xlu0 %2586
        %2588 = vrot.lane.b32.xlu0 %v2581, 8
        %v2589 = vpop.permute.xlu0 %2588
        %2592 = vst.msk [vmem:[#allocation5] sm:$0xff] %vm1659, %v2587
        %2593 = vst.msk [vmem:[#allocation5 + $0x8] sm:$0xff] %vm1659, %v2589
        %v2595 = vunpack.c.l.b16 %v2535
        %v2596 = vunpack.c.h.b16 %v2535
        %v2597 = vpack.c.b16 %v2595, %v2595
        %v2598 = vpack.c.b16 %v2596, %v2596
        %2599 = vrot.lane.b32.xlu0 %v2597, 16
        %v2600 = vpop.permute.xlu0 %2599
        %2601 = vrot.lane.b32.xlu0 %v2598, 16
        %v2602 = vpop.permute.xlu0 %2601
        %2605 = vst.msk [vmem:[%s1153] sm:$0xf] %vm1673, %v2600
        %2606 = vst.msk [vmem:[%s1153 + $0x4] sm:$0xf] %vm1673, %v2602
        %v2607 = vld [vmem:[#allocation2] sm:$0xff]
        %v2608 = vld [vmem:[#allocation2 + $0x8] sm:$0xff]
        %v2609 = vpack.c.bf16 %v2608, %v2607
        %v2610 = vld [vmem:[#allocation3] sm:$0xff]
        %v2611 = vld [vmem:[#allocation3 + $0x8] sm:$0xff]
        %v2612 = vpack.c.bf16 %v2611, %v2610
        %v2613 = vld [vmem:[#allocation4] sm:$0xff]
        %v2614 = vld [vmem:[#allocation4 + $0x8] sm:$0xff]
        %v2615 = vpack.c.bf16 %v2614, %v2613
        %2617 = vrot.lane.b32.xlu0 %v2609, 112
        %v2618 = vpop.permute.xlu0 %2617
        %2620 = vrot.lane.b32.xlu0 %v2612, 112
        %v2621 = vpop.permute.xlu0 %2620
        %v2623 = vsel %vm1390, %v2618, 0
        %v2626 = vsel %vm1390, %v2621, 0
        %2628 = vmatprep.subr.bf16.mxu0 0
        %2629 = vmatpush1.bf16.xpose.msra.mxu0 %v2626
        %2630 = vmatprep.subr.bf16.mxu0 0
        %2631 = vmatpush1.bf16.xpose.msra.mxu0 0
        %2632 = vmatprep.subr.bf16.mxu0 0
        %2633 = vmatpush1.bf16.xpose.msra.mxu0 0
        %2634 = vmatprep.subr.bf16.mxu0 0
        %2635 = vmatpush1.bf16.xpose.msra.mxu0 0
        %2636 = vmatprep.subr.bf16.mxu0 0
        %2637 = vmatpush1.bf16.xpose.msra.mxu0 0
        %2638 = vmatprep.subr.bf16.mxu0 0
        %2639 = vmatpush1.bf16.xpose.msra.mxu0 0
        %2640 = vmatprep.subr.bf16.mxu0 0
        %2641 = vmatpush1.bf16.xpose.msra.mxu0 0
        %2642 = vmatprep.subr.bf16.mxu0 0
        %2643 = vmatpush1.bf16.xpose.msra.mxu0 0
        %2644 = vmatprep.subr.bf16.mxu0 0
        %2645 = vmatpush1.bf16.xpose.msra.mxu0 0
        %2646 = vmatprep.subr.bf16.mxu0 0
        %2647 = vmatpush1.bf16.xpose.msra.mxu0 0
        %2648 = vmatprep.subr.bf16.mxu0 0
        %2649 = vmatpush1.bf16.xpose.msra.mxu0 0
        %2650 = vmatprep.subr.bf16.mxu0 0
        %2651 = vmatpush1.bf16.xpose.msra.mxu0 0
        %2652 = vmatprep.subr.bf16.mxu0 0
        %2653 = vmatpush1.bf16.xpose.msra.mxu0 0
        %2654 = vmatprep.subr.bf16.mxu0 0
        %2655 = vmatpush1.bf16.xpose.msra.mxu0 0
        %2656 = vmatprep.subr.bf16.mxu0 0
        %2657 = vmatpush1.bf16.xpose.msra.mxu0 0
        %2658 = vmatprep.subr.bf16.mxu0 0
        %2659 = vmatpush1.bf16.xpose.msra.mxu0 0
        %2660 = vmatprep.mubr.bf16.mxu0 0
        %2661 = vmatmul.mubr.bf16.gmra.mrb[0].mxu0 %v2623
        %v2662 = vpop.f32.mrb[0].mxu0
        %v2663 = vadd.f32 0.0, %v2662
        %v2664 = vpop.f32.mrb[0].mxu0
        %v2665 = vpop.f32.mrb[0].mxu0
        %v2666 = vadd.f32 0.0, %v2665
        %v2667 = vpop.f32.mrb[0].mxu0
        %2668 = vdwg.mxu0
        %v2669 = vsel %vm1438, %v2663, -inf
        %2670 = vmax.xlane.f32.xlu0 %v2669
        %v2671 = vpop.xlane.xlu0 %2670
        %v2672 = vsel %vm1438, %v2666, -inf
        %2673 = vmax.xlane.f32.xlu0 %v2672
        %v2674 = vpop.xlane.xlu0 %2673
        %v2675 = vsub.f32 %v2663, %v2671
        %v2676 = vsub.f32 %v2666, %v2674
        %v2677 = vmul.f32 %v2675, 1.442695
        %v2678 = vpow.pop %v2677
        %v2679 = vmul.f32 %v2676, 1.442695
        %v2680 = vpow.pop %v2679
        %v2681 = vsel %vm1438, %v2678, 0.0
        %2682 = vadd.xlane.f32.xlu0 %v2681
        %v2683 = vpop.xlane.xlu0 %2682
        %v2684 = vsel %vm1438, %v2680, 0.0
        %2685 = vadd.xlane.f32.xlu0 %v2684
        %v2686 = vpop.xlane.xlu0 %2685
        %v2687 = vrcp.pop %v2683
        %v2688 = vrcp.pop %v2686
        %v2689 = vmul.f32 %v2678, %v2687
        %v2690 = vmul.f32 %v2680, %v2688
        %v2691 = vpack.c.bf16 %v2690, %v2689
        %2693 = vrot.lane.b32.xlu0 %v2615, 112
        %v2694 = vpop.permute.xlu0 %2693
        %v2697 = vsel %vm1438, %v2691, 0
        %2699 = vmatprep.subr.bf16.mxu0 0
        %2700 = vmatpush1.bf16.msra.mxu0 %v2694
        %2701 = vmatprep.subr.bf16.mxu0 0
        %2702 = vmatpush1.bf16.msra.mxu0 0
        %2703 = vmatprep.subr.bf16.mxu0 0
        %2704 = vmatpush1.bf16.msra.mxu0 0
        %2705 = vmatprep.subr.bf16.mxu0 0
        %2706 = vmatpush1.bf16.msra.mxu0 0
        %2707 = vmatprep.subr.bf16.mxu0 0
        %2708 = vmatpush1.bf16.msra.mxu0 0
        %2709 = vmatprep.subr.bf16.mxu0 0
        %2710 = vmatpush1.bf16.msra.mxu0 0
        %2711 = vmatprep.subr.bf16.mxu0 0
        %2712 = vmatpush1.bf16.msra.mxu0 0
        %2713 = vmatprep.subr.bf16.mxu0 0
        %2714 = vmatpush1.bf16.msra.mxu0 0
        %2715 = vmatprep.subr.bf16.mxu0 0
        %2716 = vmatpush1.bf16.msra.mxu0 0
        %2717 = vmatprep.subr.bf16.mxu0 0
        %2718 = vmatpush1.bf16.msra.mxu0 0
        %2719 = vmatprep.subr.bf16.mxu0 0
        %2720 = vmatpush1.bf16.msra.mxu0 0
        %2721 = vmatprep.subr.bf16.mxu0 0
        %2722 = vmatpush1.bf16.msra.mxu0 0
        %2723 = vmatprep.subr.bf16.mxu0 0
        %2724 = vmatpush1.bf16.msra.mxu0 0
        %2725 = vmatprep.subr.bf16.mxu0 0
        %2726 = vmatpush1.bf16.msra.mxu0 0
        %2727 = vmatprep.subr.bf16.mxu0 0
        %2728 = vmatpush1.bf16.msra.mxu0 0
        %2729 = vmatprep.subr.bf16.mxu0 0
        %2730 = vmatpush1.bf16.msra.mxu0 0
        %2731 = vmatprep.mubr.bf16.mxu0 0
        %2732 = vmatmul.mubr.bf16.gmra.mrb[0].mxu0 %v2697
        %v2733 = vpop.f32.mrb[0].mxu0
        %v2734 = vadd.f32 0.0, %v2733
        %v2735 = vpop.f32.mrb[0].mxu0
        %v2736 = vpop.f32.mrb[0].mxu0
        %v2737 = vadd.f32 0.0, %v2736
        %v2738 = vpop.f32.mrb[0].mxu0
        %2739 = vdwg.mxu0
        %2742 = vrot.lane.b32.xlu0 %v2734, 16
        %v2743 = vpop.permute.xlu0 %2742
        %2744 = vrot.lane.b32.xlu0 %v2737, 16
        %v2745 = vpop.permute.xlu0 %2744
        %2748 = vst.msk [vmem:[#allocation5] sm:$0xff] %vm1817, %v2743
        %2749 = vst.msk [vmem:[#allocation5 + $0x8] sm:$0xff] %vm1817, %v2745
        %v2751 = vunpack.c.l.b16 %v2691
        %v2752 = vunpack.c.h.b16 %v2691
        %v2753 = vpack.c.b16 %v2751, %v2751
        %v2754 = vpack.c.b16 %v2752, %v2752
        %2755 = vrot.lane.b32.xlu0 %v2753, 32
        %v2756 = vpop.permute.xlu0 %2755
        %2757 = vrot.lane.b32.xlu0 %v2754, 32
        %v2758 = vpop.permute.xlu0 %2757
        %2761 = vst.msk [vmem:[%s1153] sm:$0xf] %vm1831, %v2756
        %2762 = vst.msk [vmem:[%s1153 + $0x4] sm:$0xf] %vm1831, %v2758
        %v2763 = vld [vmem:[#allocation2] sm:$0xff]
        %v2764 = vld [vmem:[#allocation2 + $0x8] sm:$0xff]
        %v2765 = vpack.c.bf16 %v2764, %v2763
        %v2766 = vld [vmem:[#allocation3] sm:$0xff]
        %v2767 = vld [vmem:[#allocation3 + $0x8] sm:$0xff]
        %v2768 = vpack.c.bf16 %v2767, %v2766
        %v2769 = vld [vmem:[#allocation4] sm:$0xff]
        %v2770 = vld [vmem:[#allocation4 + $0x8] sm:$0xff]
        %v2771 = vpack.c.bf16 %v2770, %v2769
        %2773 = vrot.lane.b32.xlu0 %v2765, 104
        %v2774 = vpop.permute.xlu0 %2773
        %2776 = vrot.lane.b32.xlu0 %v2768, 104
        %v2777 = vpop.permute.xlu0 %2776
        %v2779 = vsel %vm1390, %v2774, 0
        %v2782 = vsel %vm1390, %v2777, 0
        %2784 = vmatprep.subr.bf16.mxu0 0
        %2785 = vmatpush1.bf16.xpose.msra.mxu0 %v2782
        %2786 = vmatprep.subr.bf16.mxu0 0
        %2787 = vmatpush1.bf16.xpose.msra.mxu0 0
        %2788 = vmatprep.subr.bf16.mxu0 0
        %2789 = vmatpush1.bf16.xpose.msra.mxu0 0
        %2790 = vmatprep.subr.bf16.mxu0 0
        %2791 = vmatpush1.bf16.xpose.msra.mxu0 0
        %2792 = vmatprep.subr.bf16.mxu0 0
        %2793 = vmatpush1.bf16.xpose.msra.mxu0 0
        %2794 = vmatprep.subr.bf16.mxu0 0
        %2795 = vmatpush1.bf16.xpose.msra.mxu0 0
        %2796 = vmatprep.subr.bf16.mxu0 0
        %2797 = vmatpush1.bf16.xpose.msra.mxu0 0
        %2798 = vmatprep.subr.bf16.mxu0 0
        %2799 = vmatpush1.bf16.xpose.msra.mxu0 0
        %2800 = vmatprep.subr.bf16.mxu0 0
        %2801 = vmatpush1.bf16.xpose.msra.mxu0 0
        %2802 = vmatprep.subr.bf16.mxu0 0
        %2803 = vmatpush1.bf16.xpose.msra.mxu0 0
        %2804 = vmatprep.subr.bf16.mxu0 0
        %2805 = vmatpush1.bf16.xpose.msra.mxu0 0
        %2806 = vmatprep.subr.bf16.mxu0 0
        %2807 = vmatpush1.bf16.xpose.msra.mxu0 0
        %2808 = vmatprep.subr.bf16.mxu0 0
        %2809 = vmatpush1.bf16.xpose.msra.mxu0 0
        %2810 = vmatprep.subr.bf16.mxu0 0
        %2811 = vmatpush1.bf16.xpose.msra.mxu0 0
        %2812 = vmatprep.subr.bf16.mxu0 0
        %2813 = vmatpush1.bf16.xpose.msra.mxu0 0
        %2814 = vmatprep.subr.bf16.mxu0 0
        %2815 = vmatpush1.bf16.xpose.msra.mxu0 0
        %2816 = vmatprep.mubr.bf16.mxu0 0
        %2817 = vmatmul.mubr.bf16.gmra.mrb[0].mxu0 %v2779
        %v2818 = vpop.f32.mrb[0].mxu0
        %v2819 = vadd.f32 0.0, %v2818
        %v2820 = vpop.f32.mrb[0].mxu0
        %v2821 = vpop.f32.mrb[0].mxu0
        %v2822 = vadd.f32 0.0, %v2821
        %v2823 = vpop.f32.mrb[0].mxu0
        %2824 = vdwg.mxu0
        %v2825 = vsel %vm1438, %v2819, -inf
        %2826 = vmax.xlane.f32.xlu0 %v2825
        %v2827 = vpop.xlane.xlu0 %2826
        %v2828 = vsel %vm1438, %v2822, -inf
        %2829 = vmax.xlane.f32.xlu0 %v2828
        %v2830 = vpop.xlane.xlu0 %2829
        %v2831 = vsub.f32 %v2819, %v2827
        %v2832 = vsub.f32 %v2822, %v2830
        %v2833 = vmul.f32 %v2831, 1.442695
        %v2834 = vpow.pop %v2833
        %v2835 = vmul.f32 %v2832, 1.442695
        %v2836 = vpow.pop %v2835
        %v2837 = vsel %vm1438, %v2834, 0.0
        %2838 = vadd.xlane.f32.xlu0 %v2837
        %v2839 = vpop.xlane.xlu0 %2838
        %v2840 = vsel %vm1438, %v2836, 0.0
        %2841 = vadd.xlane.f32.xlu0 %v2840
        %v2842 = vpop.xlane.xlu0 %2841
        %v2843 = vrcp.pop %v2839
        %v2844 = vrcp.pop %v2842
        %v2845 = vmul.f32 %v2834, %v2843
        %v2846 = vmul.f32 %v2836, %v2844
        %v2847 = vpack.c.bf16 %v2846, %v2845
        %2849 = vrot.lane.b32.xlu0 %v2771, 104
        %v2850 = vpop.permute.xlu0 %2849
        %v2853 = vsel %vm1438, %v2847, 0
        %2855 = vmatprep.subr.bf16.mxu0 0
        %2856 = vmatpush1.bf16.msra.mxu0 %v2850
        %2857 = vmatprep.subr.bf16.mxu0 0
        %2858 = vmatpush1.bf16.msra.mxu0 0
        %2859 = vmatprep.subr.bf16.mxu0 0
        %2860 = vmatpush1.bf16.msra.mxu0 0
        %2861 = vmatprep.subr.bf16.mxu0 0
        %2862 = vmatpush1.bf16.msra.mxu0 0
        %2863 = vmatprep.subr.bf16.mxu0 0
        %2864 = vmatpush1.bf16.msra.mxu0 0
        %2865 = vmatprep.subr.bf16.mxu0 0
        %2866 = vmatpush1.bf16.msra.mxu0 0
        %2867 = vmatprep.subr.bf16.mxu0 0
        %2868 = vmatpush1.bf16.msra.mxu0 0
        %2869 = vmatprep.subr.bf16.mxu0 0
        %2870 = vmatpush1.bf16.msra.mxu0 0
        %2871 = vmatprep.subr.bf16.mxu0 0
        %2872 = vmatpush1.bf16.msra.mxu0 0
        %2873 = vmatprep.subr.bf16.mxu0 0
        %2874 = vmatpush1.bf16.msra.mxu0 0
        %2875 = vmatprep.subr.bf16.mxu0 0
        %2876 = vmatpush1.bf16.msra.mxu0 0
        %2877 = vmatprep.subr.bf16.mxu0 0
        %2878 = vmatpush1.bf16.msra.mxu0 0
        %2879 = vmatprep.subr.bf16.mxu0 0
        %2880 = vmatpush1.bf16.msra.mxu0 0
        %2881 = vmatprep.subr.bf16.mxu0 0
        %2882 = vmatpush1.bf16.msra.mxu0 0
        %2883 = vmatprep.subr.bf16.mxu0 0
        %2884 = vmatpush1.bf16.msra.mxu0 0
        %2885 = vmatprep.subr.bf16.mxu0 0
        %2886 = vmatpush1.bf16.msra.mxu0 0
        %2887 = vmatprep.mubr.bf16.mxu0 0
        %2888 = vmatmul.mubr.bf16.gmra.mrb[0].mxu0 %v2853
        %v2889 = vpop.f32.mrb[0].mxu0
        %v2890 = vadd.f32 0.0, %v2889
        %v2891 = vpop.f32.mrb[0].mxu0
        %v2892 = vpop.f32.mrb[0].mxu0
        %v2893 = vadd.f32 0.0, %v2892
        %v2894 = vpop.f32.mrb[0].mxu0
        %2895 = vdwg.mxu0
        %2898 = vrot.lane.b32.xlu0 %v2890, 24
        %v2899 = vpop.permute.xlu0 %2898
        %2900 = vrot.lane.b32.xlu0 %v2893, 24
        %v2901 = vpop.permute.xlu0 %2900
        %2904 = vst.msk [vmem:[#allocation5] sm:$0xff] %vm1975, %v2899
        %2905 = vst.msk [vmem:[#allocation5 + $0x8] sm:$0xff] %vm1975, %v2901
        %v2907 = vunpack.c.l.b16 %v2847
        %v2908 = vunpack.c.h.b16 %v2847
        %v2909 = vpack.c.b16 %v2907, %v2907
        %v2910 = vpack.c.b16 %v2908, %v2908
        %2911 = vrot.lane.b32.xlu0 %v2909, 48
        %v2912 = vpop.permute.xlu0 %2911
        %2913 = vrot.lane.b32.xlu0 %v2910, 48
        %v2914 = vpop.permute.xlu0 %2913
        %2917 = vst.msk [vmem:[%s1153] sm:$0xf] %vm1989, %v2912
        %2918 = vst.msk [vmem:[%s1153 + $0x4] sm:$0xf] %vm1989, %v2914
        %v2919 = vld [vmem:[#allocation5] sm:$0xff]
        %v2920 = vld [vmem:[#allocation5 + $0x8] sm:$0xff]
        %v2921 = vpack.c.bf16 %v2920, %v2919
        %v2923 = vlaneseq
        %v2924 = vshrl.u32 %v2923, 7
        %v2925 = vsub.s32 0, %v2924
        %v2926 = vrot.slane %v2121, %v2925
        %v2932 = vunpack.c.l.b16 %v2117
        %v2933 = vunpack.c.l.b16 %v2118
        %v2934 = vunpack.c.l.b16 %v2119
        %v2935 = vunpack.c.l.b16 %v2120
        %v2936 = vpack.c.b16 %v2933, %v2932
        %v2937 = vpack.c.b16 %v2935, %v2934
        %v2941 = vsel %vm1210, %v2921, 0
        %2943 = vmatprep.subr.bf16.mxu0 0
        %2944 = vmatpush1.bf16.msra.mxu0 %v2936
        %2945 = vmatprep.subr.bf16.mxu0 0
        %2946 = vmatpush1.bf16.msra.mxu0 %v2937
        %2947 = vmatprep.subr.bf16.mxu0 0
        %2948 = vmatpush1.bf16.msra.mxu0 0
        %2949 = vmatprep.subr.bf16.mxu0 0
        %2950 = vmatpush1.bf16.msra.mxu0 0
        %2951 = vmatprep.subr.bf16.mxu0 0
        %2952 = vmatpush1.bf16.msra.mxu0 0
        %2953 = vmatprep.subr.bf16.mxu0 0
        %2954 = vmatpush1.bf16.msra.mxu0 0
        %2955 = vmatprep.subr.bf16.mxu0 0
        %2956 = vmatpush1.bf16.msra.mxu0 0
        %2957 = vmatprep.subr.bf16.mxu0 0
        %2958 = vmatpush1.bf16.msra.mxu0 0
        %2959 = vmatprep.subr.bf16.mxu0 0
        %2960 = vmatpush1.bf16.msra.mxu0 0
        %2961 = vmatprep.subr.bf16.mxu0 0
        %2962 = vmatpush1.bf16.msra.mxu0 0
        %2963 = vmatprep.subr.bf16.mxu0 0
        %2964 = vmatpush1.bf16.msra.mxu0 0
        %2965 = vmatprep.subr.bf16.mxu0 0
        %2966 = vmatpush1.bf16.msra.mxu0 0
        %2967 = vmatprep.subr.bf16.mxu0 0
        %2968 = vmatpush1.bf16.msra.mxu0 0
        %2969 = vmatprep.subr.bf16.mxu0 0
        %2970 = vmatpush1.bf16.msra.mxu0 0
        %2971 = vmatprep.subr.bf16.mxu0 0
        %2972 = vmatpush1.bf16.msra.mxu0 0
        %2973 = vmatprep.subr.bf16.mxu0 0
        %2974 = vmatpush1.bf16.msra.mxu0 0
        %2975 = vmatprep.mubr.bf16.mxu0 0
        %2976 = vmatmul.mubr.bf16.gmra.mrb[0].mxu0 %v2941
        %v2977 = vpop.f32.mrb[0].mxu0
        %v2978 = vadd.f32 %v2926, %v2977
        %v2979 = vpop.f32.mrb[0].mxu0
        %v2980 = vpop.f32.mrb[0].mxu0
        %v2981 = vadd.f32 %v2926, %v2980
        %v2982 = vpop.f32.mrb[0].mxu0
        %2983 = vdwg.mxu0
        %v2984 = vadd.f32 %v2978, %v2100
        %v2985 = vadd.f32 %v2981, %v2101
        %v2986 = vsel %vm1210, %v2984, 0.0
        %2987 = vadd.xlane.f32.xlu0 %v2986
        %v2988 = vpop.xlane.xlu0 %2987
        %v2989 = vsel %vm1210, %v2985, 0.0
        %2990 = vadd.xlane.f32.xlu0 %v2989
        %v2991 = vpop.xlane.xlu0 %2990
        %v2992 = vmul.f32 %v2988, %v2065
        %v2993 = vmul.f32 %v2991, %v2065
        %v2994 = vsub.f32 %v2984, %v2992
        %v2995 = vsub.f32 %v2985, %v2993
        %v2996 = vmul.f32 %v2994, %v2994
        %v2997 = vmul.f32 %v2995, %v2995
        %v2998 = vsel %vm1210, %v2996, 0.0
        %2999 = vadd.xlane.f32.xlu0 %v2998
        %v3000 = vpop.xlane.xlu0 %2999
        %v3001 = vsel %vm1210, %v2997, 0.0
        %3002 = vadd.xlane.f32.xlu0 %v3001
        %v3003 = vpop.xlane.xlu0 %3002
        %v3004 = vmul.f32 %v3000, %v2065
        %v3005 = vmul.f32 %v3003, %v2065
        %v3006 = vadd.f32 %v3004, 1e-05
        %v3007 = vadd.f32 %v3005, 1e-05
        %v3008 = vrsqrt.pop %v3006
        %v3009 = vrsqrt.pop %v3007
        %v3010 = vmul.f32 %v2994, %v3008
        %v3011 = vmul.f32 %v2995, %v3009
        %v3013 = vlaneseq
        %v3014 = vshrl.u32 %v3013, 7
        %v3015 = vsub.s32 0, %v3014
        %v3016 = vrot.slane %v2122, %v3015
        %v3018 = vmul.f32 %v3010, %v3016
        %v3019 = vmul.f32 %v3011, %v3016
        %v3021 = vlaneseq
        %v3022 = vshrl.u32 %v3021, 7
        %v3023 = vsub.s32 0, %v3022
        %v3024 = vrot.slane %v2123, %v3023
        %v3026 = vadd.f32 %v3018, %v3024
        %v3027 = vadd.f32 %v3019, %v3024
        %v3028 = vld [vmem:[%s45] sm:$0xf]
        %v3029 = vld [vmem:[%s45 + $0x4] sm:$0xf]
        %v3030 = vld [vmem:[%s45 + $0x8] sm:$0xf]
        %v3031 = vld [vmem:[%s45 + $0xc] sm:$0xf]
        %v3032 = vld [vmem:[%s47] sm:$0x1]
        %v3033 = vld [vmem:[%s49] sm:$0xf]
        %v3034 = vld [vmem:[%s49 + $0x4] sm:$0xf]
        %v3035 = vld [vmem:[%s49 + $0x8] sm:$0xf]
        %v3036 = vld [vmem:[%s49 + $0xc] sm:$0xf]
        %v3037 = vld [vmem:[%s49 + $0x10] sm:$0xf]
        %v3038 = vld [vmem:[%s49 + $0x14] sm:$0xf]
        %v3039 = vld [vmem:[%s49 + $0x18] sm:$0xf]
        %v3040 = vld [vmem:[%s49 + $0x1c] sm:$0xf]
        %v3041 = vld [vmem:[%s51] sm:$0x1]
        %v3042 = vld [vmem:[%s53] sm:$0x1]
        %v3043 = vld [vmem:[%s55] sm:$0x1]
        %v3044 = vpack.c.bf16 %v3027, %v3026
        %v3046 = vlaneseq
        %v3047 = vshrl.u32 %v3046, 7
        %v3048 = vsub.s32 0, %v3047
        %v3049 = vrot.slane %v3032, %v3048
        %v3055 = vunpack.c.l.b16 %v3028
        %v3056 = vunpack.c.l.b16 %v3029
        %v3057 = vunpack.c.l.b16 %v3030
        %v3058 = vunpack.c.l.b16 %v3031
        %v3059 = vpack.c.b16 %v3056, %v3055
        %v3060 = vpack.c.b16 %v3058, %v3057
        %v3064 = vsel %vm1210, %v3044, 0
        %3066 = vmatprep.subr.bf16.mxu0 0
        %3067 = vmatpush1.bf16.msra.mxu0 %v3059
        %3068 = vmatprep.subr.bf16.mxu0 0
        %3069 = vmatpush1.bf16.msra.mxu0 %v3060
        %3070 = vmatprep.subr.bf16.mxu0 0
        %3071 = vmatpush1.bf16.msra.mxu0 0
        %3072 = vmatprep.subr.bf16.mxu0 0
        %3073 = vmatpush1.bf16.msra.mxu0 0
        %3074 = vmatprep.subr.bf16.mxu0 0
        %3075 = vmatpush1.bf16.msra.mxu0 0
        %3076 = vmatprep.subr.bf16.mxu0 0
        %3077 = vmatpush1.bf16.msra.mxu0 0
        %3078 = vmatprep.subr.bf16.mxu0 0
        %3079 = vmatpush1.bf16.msra.mxu0 0
        %3080 = vmatprep.subr.bf16.mxu0 0
        %3081 = vmatpush1.bf16.msra.mxu0 0
        %3082 = vmatprep.subr.bf16.mxu0 0
        %3083 = vmatpush1.bf16.msra.mxu0 0
        %3084 = vmatprep.subr.bf16.mxu0 0
        %3085 = vmatpush1.bf16.msra.mxu0 0
        %3086 = vmatprep.subr.bf16.mxu0 0
        %3087 = vmatpush1.bf16.msra.mxu0 0
        %3088 = vmatprep.subr.bf16.mxu0 0
        %3089 = vmatpush1.bf16.msra.mxu0 0
        %3090 = vmatprep.subr.bf16.mxu0 0
        %3091 = vmatpush1.bf16.msra.mxu0 0
        %3092 = vmatprep.subr.bf16.mxu0 0
        %3093 = vmatpush1.bf16.msra.mxu0 0
        %3094 = vmatprep.subr.bf16.mxu0 0
        %3095 = vmatpush1.bf16.msra.mxu0 0
        %3096 = vmatprep.subr.bf16.mxu0 0
        %3097 = vmatpush1.bf16.msra.mxu0 0
        %3098 = vmatprep.mubr.bf16.mxu0 0
        %3099 = vmatmul.mubr.bf16.gmra.mrb[0].mxu0 %v3064
        %v3100 = vpop.f32.mrb[0].mxu0
        %v3101 = vadd.f32 %v3049, %v3100
        %v3102 = vpop.f32.mrb[0].mxu0
        %v3103 = vpop.f32.mrb[0].mxu0
        %v3104 = vadd.f32 %v3049, %v3103
        %v3105 = vpop.f32.mrb[0].mxu0
        %3106 = vdwg.mxu0
        %v3107 = vmax.f32 %v3101, 0.0
        %v3108 = vmax.f32 %v3104, 0.0
        %v3109 = vpack.c.bf16 %v3108, %v3107
        %v3111 = vlaneseq
        %v3112 = vshrl.u32 %v3111, 7
        %v3113 = vsub.s32 0, %v3112
        %v3114 = vrot.slane %v3041, %v3113
        %v3124 = vunpack.c.l.b16 %v3033
        %v3125 = vunpack.c.l.b16 %v3034
        %v3126 = vunpack.c.l.b16 %v3035
        %v3127 = vunpack.c.l.b16 %v3036
        %v3128 = vunpack.c.l.b16 %v3037
        %v3129 = vunpack.c.l.b16 %v3038
        %v3130 = vunpack.c.l.b16 %v3039
        %v3131 = vunpack.c.l.b16 %v3040
        %v3132 = vpack.c.b16 %v3125, %v3124
        %v3133 = vpack.c.b16 %v3127, %v3126
        %v3134 = vpack.c.b16 %v3129, %v3128
        %v3135 = vpack.c.b16 %v3131, %v3130
        %vm3140 = vcmask 523264
        %v3142 = vsel %vm3140, %v3109, 0
        %3144 = vmatprep.subr.bf16.mxu0 0
        %3145 = vmatpush1.bf16.msra.mxu0 %v3132
        %3146 = vmatprep.subr.bf16.mxu0 0
        %3147 = vmatpush1.bf16.msra.mxu0 %v3133
        %3148 = vmatprep.subr.bf16.mxu0 0
        %3149 = vmatpush1.bf16.msra.mxu0 %v3134
        %3150 = vmatprep.subr.bf16.mxu0 0
        %3151 = vmatpush1.bf16.msra.mxu0 %v3135
        %3152 = vmatprep.subr.bf16.mxu0 0
        %3153 = vmatpush1.bf16.msra.mxu0 0
        %3154 = vmatprep.subr.bf16.mxu0 0
        %3155 = vmatpush1.bf16.msra.mxu0 0
        %3156 = vmatprep.subr.bf16.mxu0 0
        %3157 = vmatpush1.bf16.msra.mxu0 0
        %3158 = vmatprep.subr.bf16.mxu0 0
        %3159 = vmatpush1.bf16.msra.mxu0 0
        %3160 = vmatprep.subr.bf16.mxu0 0
        %3161 = vmatpush1.bf16.msra.mxu0 0
        %3162 = vmatprep.subr.bf16.mxu0 0
        %3163 = vmatpush1.bf16.msra.mxu0 0
        %3164 = vmatprep.subr.bf16.mxu0 0
        %3165 = vmatpush1.bf16.msra.mxu0 0
        %3166 = vmatprep.subr.bf16.mxu0 0
        %3167 = vmatpush1.bf16.msra.mxu0 0
        %3168 = vmatprep.subr.bf16.mxu0 0
        %3169 = vmatpush1.bf16.msra.mxu0 0
        %3170 = vmatprep.subr.bf16.mxu0 0
        %3171 = vmatpush1.bf16.msra.mxu0 0
        %3172 = vmatprep.subr.bf16.mxu0 0
        %3173 = vmatpush1.bf16.msra.mxu0 0
        %3174 = vmatprep.subr.bf16.mxu0 0
        %3175 = vmatpush1.bf16.msra.mxu0 0
        %3176 = vmatprep.mubr.bf16.mxu0 0
        %3177 = vmatmul.mubr.bf16.gmra.mrb[0].mxu0 %v3142
        %v3178 = vpop.f32.mrb[0].mxu0
        %v3179 = vadd.f32 %v3114, %v3178
        %v3180 = vpop.f32.mrb[0].mxu0
        %v3181 = vpop.f32.mrb[0].mxu0
        %v3182 = vadd.f32 %v3114, %v3181
        %v3183 = vpop.f32.mrb[0].mxu0
        %3184 = vdwg.mxu0
        %v3185 = vadd.f32 %v3179, %v3026
        %v3186 = vadd.f32 %v3182, %v3027
        %v3187 = vsel %vm1210, %v3185, 0.0
        %3188 = vadd.xlane.f32.xlu0 %v3187
        %v3189 = vpop.xlane.xlu0 %3188
        %v3190 = vsel %vm1210, %v3186, 0.0
        %3191 = vadd.xlane.f32.xlu0 %v3190
        %v3192 = vpop.xlane.xlu0 %3191
        %v3193 = vmul.f32 %v3189, %v2065
        %v3194 = vmul.f32 %v3192, %v2065
        %v3195 = vsub.f32 %v3185, %v3193
        %v3196 = vsub.f32 %v3186, %v3194
        %v3197 = vmul.f32 %v3195, %v3195
        %v3198 = vmul.f32 %v3196, %v3196
        %v3199 = vsel %vm1210, %v3197, 0.0
        %3200 = vadd.xlane.f32.xlu0 %v3199
        %v3201 = vpop.xlane.xlu0 %3200
        %v3202 = vsel %vm1210, %v3198, 0.0
        %3203 = vadd.xlane.f32.xlu0 %v3202
        %v3204 = vpop.xlane.xlu0 %3203
        %v3205 = vmul.f32 %v3201, %v2065
        %v3206 = vmul.f32 %v3204, %v2065
        %v3207 = vadd.f32 %v3205, 1e-05
        %v3208 = vadd.f32 %v3206, 1e-05
        %v3209 = vrsqrt.pop %v3207
        %v3210 = vrsqrt.pop %v3208
        %v3211 = vmul.f32 %v3195, %v3209
        %v3212 = vmul.f32 %v3196, %v3210
        %v3214 = vlaneseq
        %v3215 = vshrl.u32 %v3214, 7
        %v3216 = vsub.s32 0, %v3215
        %v3217 = vrot.slane %v3042, %v3216
        %v3219 = vmul.f32 %v3211, %v3217
        %v3220 = vmul.f32 %v3212, %v3217
        %v3222 = vlaneseq
        %v3223 = vshrl.u32 %v3222, 7
        %v3224 = vsub.s32 0, %v3223
        %v3225 = vrot.slane %v3043, %v3224
        %v3227 = vadd.f32 %v3219, %v3225
        %v3228 = vadd.f32 %v3220, %v3225
        %3229 = vst.msk [vmem:[%s1139] sm:$0xff] %vm1210, %v3227
        %3230 = vst.msk [vmem:[%s1139 + $0x8] sm:$0xff] %vm1210, %v3228
        %s3231 = sand.u32 %s695, 1
        %s3232 = scalar_lea.sflag [#allocation8], %s3231
        %s3233 = sand.u32 %s695, 1
        %s3234 = smul.addr %s3233, 16
        %s3235 = scalar_lea.vmem [#allocation29], %s3234
        %s3236 = sand.u32 %s89, 1
        %s3237 = scalar_lea.sflag [#allocation31], %s3236
        %s3238 = sand.u32 %s721, 1
        %s3239 = smul.addr %s3238, 8
        %s3240 = scalar_lea.vmem [#allocation30], %s3239
        %s3241 = sand.u32 %s89, 1
        %s3242 = scalar_lea.sflag [#allocation31], %s3241
        %s3243 = sand.u32 %s747, 1
        %s3244 = smul.addr %s3243, 8
        %s3245 = scalar_lea.vmem [#allocation32], %s3244
        // Predicated region
        $region189: #{tpu_custom_call.1} parent=131 // pred_check
          %p3246 = pneg %p705
        $region190: #{tpu_custom_call.1} parent=131 // pred_check_branch
          %3248 = sbr.rel (%p3246) target = $region192
        $region191: #{tpu_custom_call.1} parent=131 // pred_region
          %s3249 = smul.u32 2, %s89
          %s3251 = ssub.s32 256, 256
          %3252 = vsyncadd %s3232, %s3251
          %s3253 = smul.addr %s3249, 128
          %s3254 = scalar_lea.hbm %s57, %s3253
          %s3255 = sshll.u32 %s3235, 4
          %s3256 = int_to_ptr.vmem [resolvable:$true] %s3255
          %3261 = dma.vmem_to_hbm [thread:$0]  %s3256, 256, %s3254, %s3232, 128, 128, 8
        $region192: #{tpu_custom_call.1} parent=131 // pred_fallthru
          _
        // Predicated region
        $region193: #{tpu_custom_call.1} parent=131 // pred_check
          %p3262 = pneg %p731
        $region194: #{tpu_custom_call.1} parent=131 // pred_check_branch
          %3264 = sbr.rel (%p3262) target = $region196
        $region195: #{tpu_custom_call.1} parent=131 // pred_region
          %s3265 = smul.u32 2, %s89
          %s3267 = ssub.s32 128, 128
          %3268 = vsyncadd %s3237, %s3267
          %s3269 = smul.addr %s3265, 64
          %s3270 = scalar_lea.hbm %s59, %s3269
          %s3271 = sshll.u32 %s3240, 4
          %s3272 = int_to_ptr.vmem [resolvable:$true] %s3271
          %3277 = dma.vmem_to_hbm [thread:$0]  %s3272, 128, %s3270, %s3237, 64, 64, 4
        $region196: #{tpu_custom_call.1} parent=131 // pred_fallthru
          _
        // Predicated region
        $region197: #{tpu_custom_call.1} parent=131 // pred_check
          %p3278 = pneg %p757
        $region198: #{tpu_custom_call.1} parent=131 // pred_check_branch
          %3280 = sbr.rel (%p3278) target = $region200
        $region199: #{tpu_custom_call.1} parent=131 // pred_region
          %s3281 = smul.u32 2, %s89
          %s3283 = ssub.s32 128, 128
          %3284 = vsyncadd %s3242, %s3283
          %s3285 = smul.addr %s3281, 64
          %s3286 = scalar_lea.hbm %s61, %s3285
          %s3287 = sshll.u32 %s3245, 4
          %s3288 = int_to_ptr.vmem [resolvable:$true] %s3287
          %3293 = dma.vmem_to_hbm [thread:$0]  %s3288, 128, %s3286, %s3242, 64, 64, 4
        $region200: #{tpu_custom_call.1} parent=131 // pred_fallthru
          _
      $region132: #{tpu_custom_call.1} parent=5 // pred_fallthru
        _
      %p3294 = scmp.le.s32.totalorder 2, %s84
      // Predicated region
      $region201: #{tpu_custom_call.1} parent=5 // pred_check
        %p3295 = pneg %p3294
      $region202: #{tpu_custom_call.1} parent=5 // pred_check_branch
        %3297 = sbr.rel (%p3295) target = $region204
      $region203: #{tpu_custom_call.1} parent=5 // pred_region
        %s3298 = ssub.s32 %s84, 2
        // Predicated region
        $region205: #{tpu_custom_call.1} parent=203 // pred_check
          %p3299 = pneg %p711
        $region206: #{tpu_custom_call.1} parent=203 // pred_check_branch
          %3301 = sbr.rel (%p3299) target = $region208
        $region207: #{tpu_custom_call.1} parent=203 // pred_region
          %s3302 = sand.u32 %s696, 1
          %s3303 = scalar_lea.sflag [#allocation8], %s3302
          %s3304 = sand.u32 %s696, 1
          %s3305 = smul.addr %s3304, 16
          %s3306 = scalar_lea.vmem [#allocation29], %s3305
          %3307 = dma.done %s3303, 256
        $region208: #{tpu_custom_call.1} parent=203 // pred_fallthru
          _
        // Predicated region
        $region209: #{tpu_custom_call.1} parent=203 // pred_check
          %p3308 = pneg %p737
        $region210: #{tpu_custom_call.1} parent=203 // pred_check_branch
          %3310 = sbr.rel (%p3308) target = $region212
        $region211: #{tpu_custom_call.1} parent=203 // pred_region
          %s3311 = sand.u32 %s90, 1
          %s3312 = scalar_lea.sflag [#allocation31], %s3311
          %s3313 = sand.u32 %s722, 1
          %s3314 = smul.addr %s3313, 8
          %s3315 = scalar_lea.vmem [#allocation30], %s3314
          %3316 = dma.done %s3312, 128
        $region212: #{tpu_custom_call.1} parent=203 // pred_fallthru
          _
        // Predicated region
        $region213: #{tpu_custom_call.1} parent=203 // pred_check
          %p3317 = pneg %p763
        $region214: #{tpu_custom_call.1} parent=203 // pred_check_branch
          %3319 = sbr.rel (%p3317) target = $region216
        $region215: #{tpu_custom_call.1} parent=203 // pred_region
          %s3320 = sand.u32 %s90, 1
          %s3321 = scalar_lea.sflag [#allocation31], %s3320
          %s3322 = sand.u32 %s748, 1
          %s3323 = smul.addr %s3322, 8
          %s3324 = scalar_lea.vmem [#allocation32], %s3323
          %3325 = dma.done %s3321, 128
        $region216: #{tpu_custom_call.1} parent=203 // pred_fallthru
          _
      $region204: #{tpu_custom_call.1} parent=5 // pred_fallthru
        _
    $region6: #{tpu_custom_call.1} parent=1 // loop_footer
      %s88 = sadd.s32 1, %s84
    $region7: #{tpu_custom_call.1} parent=1 // loop_footer_branch
      %83 = sbr.rel target = $region3
    $region8: #{tpu_custom_call.1} parent=1 // loop_exit
      _
    %3326 = vsyncpa [#allocation7], 1
    %s3327 = scalar_lea.sflag [#allocation7], 1
    %3328 = vsyncpa %s3327, 1
    %3329 = vsyncpa [#allocation10], 1
    %3330 = vsyncpa [#allocation13], 1
    %3331 = vsyncpa [#allocation16], 1
    %3332 = vsyncpa [#allocation19], 1
    %3333 = vsyncpa [#allocation22], 1
    %3334 = vsyncpa [#allocation25], 1
    %3335 = vsyncpa [#allocation28], 1
    %3336 = vsyncpa [#allocation8], 1
    %s3337 = scalar_lea.sflag [#allocation8], 1
    %3338 = vsyncpa %s3337, 1
    %3339 = vsyncpa [#allocation31], 1
    %s3340 = scalar_lea.sflag [#allocation31], 1
    %3341 = vsyncpa %s3340, 1

</llo_original>
